<compile_context>
chip_gen: v6e
topology: v6e:2x2x1
jax: 0.10.0
libtpu: 0.0.40
codegen_flags: <defaults>
</compile_context>

<pallas_src>
from functools import partial

import jax
import jax.numpy as jnp
from jax import lax
from jax.experimental import pallas as pl
from jax.experimental.pallas import tpu as pltpu

# bf16 MXU operands (f32 accumulation) per the v6e/v7x review items.  Flip to
# jnp.float32 for bit-faithful f32 matmuls (tolerance in __main__ adapts).
MXU_OPERAND_DTYPE = jnp.bfloat16


# ----------------------------------------------------------------------------
# Fused Pallas kernel: both heads, one batch element per grid step.
# ----------------------------------------------------------------------------
def _fused_head_kernel(x_ref, dwt_ref, dwb_ref, pw_ref, pwb_ref,
                       cls_ref, clsb_ref, out_ref, xpad_ref):
    # x_ref:    (1, H, W*C)           NHWC input, (W, C) flattened onto lanes
    # dwt_ref:  (nh, 25, W*C)  f32    depthwise taps with BN scale folded in, tiled over W
    # dwb_ref:  (nh, W*C)      f32    folded BN bias after depthwise (tiled over W)
    # pw_ref:   (nh*W*C, nh*W*Ch)     W-replicated block-diag pointwise weights (BN scale folded)
    # pwb_ref:  (1, nh*W*Ch)   f32    folded BN bias after pointwise (tiled over W)
    # cls_ref:  (nh*W*Ch, W*NC)       W-replicated classifier weights, NC = sum(num_classes)
    # clsb_ref: (1, W*NC)      f32    classifier bias (tiled over W)
    # out_ref:  (1, H, W*NC)          pixel-major output (tiny; NCHW repack done by XLA)
    # xpad_ref: (H+4, (W+4)*C) f32    VMEM scratch holding the zero-padded input
    _, H, WC = x_ref.shape
    Hp, WpC = xpad_ref.shape
    nh = dwt_ref.shape[0]
    C = (WpC - WC) // 4
    f32 = jnp.float32

    # ---- padded input tile in VMEM: zero ONLY the halo (interior overwritten) ----
    # Done every step (scratch persists across steps; do not gate on program_id).
    xpad_ref[0:2, :] = jnp.zeros((2, WpC), f32)                         # top rows
    xpad_ref[2 + H:Hp, :] = jnp.zeros((Hp - H - 2, WpC), f32)           # bottom rows
    xpad_ref[2:2 + H, 0:2 * C] = jnp.zeros((H, 2 * C), f32)             # left strip
    xpad_ref[2:2 + H, 2 * C + WC:WpC] = jnp.zeros((H, 2 * C), f32)      # right strip
    xpad_ref[2:2 + H, 2 * C:2 * C + WC] = x_ref[0].astype(f32)          # interior
    xp = xpad_ref[...]

    # ---- depthwise 5x5 (pad=2), both heads; kj-outer: 5 lane shifts, 25 taps ----
    # BN scale is already folded into dwt, so the loop is pure mul+add.
    # TODO(synk): if an MLIR dump shows select/copy chains for the unaligned lane
    # slices, switch `col` to pltpu.roll(xp, shift=kj*C, axis=-1)[:, :WC] (XLU slot).
    accs = [jnp.zeros((H, WC), f32) for _ in range(nh)]
    for kj in range(5):
        col = xp[:, kj * C:kj * C + WC]                      # (Hp, W*C) lane shift
        for ki in range(5):
            tap = col[ki:ki + H, :]                          # row shift: leading-dim slice
            t = ki * 5 + kj
            for h in range(nh):
                accs[h] = accs[h] + tap * dwt_ref[h, t:t + 1, :]

    # folded BN bias + ReLU; heads concatenated on (128-aligned) lane blocks — no relayout
    ys = [jnp.maximum(accs[h] + dwb_ref[h:h + 1, :], 0.0) for h in range(nh)]
    z = ys[0] if nh == 1 else jnp.concatenate(ys, axis=1)    # (H, nh*W*C)

    mxu_dt = pw_ref.dtype
    # ---- pointwise 1x1, both heads, W-replicated block-diag -> bias -> ReLU (MXU) ----
    y2 = jnp.dot(z.astype(mxu_dt), pw_ref[...], preferred_element_type=f32)
    y2 = jnp.maximum(y2 + pwb_ref[...], 0.0)                 # (H, nh*W*Ch)

    # ---- classifier 1x1 (+bias), both heads, still in the pixel-major lane layout ----
    y3 = jnp.dot(y2.astype(mxu_dt), cls_ref[...], preferred_element_type=f32) + clsb_ref[...]

    out_ref[0] = y3.astype(out_ref.dtype)                    # (H, W*NC)


def _run_fused(x_nchw, fused):
    """x_nchw: (B, C, H, W) float32. Returns (B, H, W*NC) float32 (pixel-major)."""
    B, C, H, W = x_nchw.shape
    WC = W * C
    Hp, WpC = H + 4, (W + 4) * C
    nh = fused["dw_t"].shape[0]
    WCh2 = fused["pw_rep"].shape[1]      # nh * W * Ch
    WNC = fused["cls_rep"].shape[1]      # W * NC

    # NCHW -> NHWC -> (B, H, W*C); trailing reshape is free (contiguous).
    # TODO(synk): accept NHWC activations from the decoder to drop this transpose.
    x2d = jnp.transpose(x_nchw, (0, 2, 3, 1)).reshape(B, H, WC)

    return pl.pallas_call(
        _fused_head_kernel,
        out_shape=jax.ShapeDtypeStruct((B, H, WNC), jnp.float32),
        grid_spec=pltpu.PrefetchScalarGridSpec(
            num_scalar_prefetch=0,
            grid=(B,),
            in_specs=[
                pl.BlockSpec((1, H, WC), lambda b: (b, 0, 0)),
                pl.BlockSpec((nh, 25, WC), lambda b: (0, 0, 0)),
                pl.BlockSpec((nh, WC), lambda b: (0, 0)),
                pl.BlockSpec(fused["pw_rep"].shape, lambda b: (0, 0)),
                pl.BlockSpec((1, WCh2), lambda b: (0, 0)),
                pl.BlockSpec(fused["cls_rep"].shape, lambda b: (0, 0)),
                pl.BlockSpec((1, WNC), lambda b: (0, 0)),
            ],
            out_specs=pl.BlockSpec((1, H, WNC), lambda b: (b, 0, 0)),
            scratch_shapes=[pltpu.VMEM((Hp, WpC), jnp.float32)],
        ),
        compiler_params=pltpu.CompilerParams(
            dimension_semantics=("parallel",)),
    )(x2d, fused["dw_t"], fused["dw_b"], fused["pw_rep"], fused["pw_b"],
      fused["cls_rep"], fused["cls_b"])


# ----------------------------------------------------------------------------
# Parameter construction (deterministic, synthetic) + one-time head fusion.
# ----------------------------------------------------------------------------
def _fold_bn(key, ch, eps=1e-5):
    k1, k2, k3, k4 = jax.random.split(key, 4)
    gamma = 1.0 + 0.1 * jax.random.normal(k1, (ch,), jnp.float32)
    beta = 0.1 * jax.random.normal(k2, (ch,), jnp.float32)
    mean = 0.1 * jax.random.normal(k3, (ch,), jnp.float32)
    var = jnp.abs(jax.random.normal(k4, (ch,), jnp.float32)) + 0.5
    scale = gamma / jnp.sqrt(var + eps)
    bias = beta - mean * scale
    return scale, bias


def make_head_params(key, in_ch, head_ch, ncls):
    ks = jax.random.split(key, 5)
    dw_w_torch = 0.1 * jax.random.normal(ks[0], (in_ch, 1, 5, 5), jnp.float32)   # (C,1,5,5)
    pw_w_torch = 0.1 * jax.random.normal(ks[1], (head_ch, in_ch, 1, 1), jnp.float32)
    cls_w_torch = 0.1 * jax.random.normal(ks[2], (ncls, head_ch, 1, 1), jnp.float32)
    cls_b = 0.1 * jax.random.normal(ks[3], (ncls,), jnp.float32)
    dw_s, dw_b = _fold_bn(jax.random.fold_in(ks[4], 0), in_ch)
    pw_s, pw_b = _fold_bn(jax.random.fold_in(ks[4], 1), head_ch)
    return {
        "dw_w_torch": dw_w_torch, "pw_w_torch": pw_w_torch, "cls_w_torch": cls_w_torch,
        "dw_s": dw_s, "dw_b": dw_b, "pw_s": pw_s, "pw_b": pw_b, "cls_b": cls_b,
    }


def fuse_head_params(params_by_key, class_key, num_classes, W):
    """One-time prepack: fold BN scales into weights and build the W-replicated
    block-diagonal 1x1 weights used by the fused kernel.  Call ONCE, outside the
    per-forward path."""
    nh = len(class_key)
    p0 = params_by_key[class_key[0]]
    C = p0["dw_w_torch"].shape[0]
    Ch = p0["pw_w_torch"].shape[0]
    NC = int(sum(num_classes))
    eyeW = jnp.eye(W, dtype=jnp.float32)

    dw_t, dw_b, pw_b, cls_b, cls_blocks = [], [], [], [], []
    pw_rep = jnp.zeros((nh * W * C, nh * W * Ch), jnp.float32)
    col = 0
    for h, k in enumerate(class_key):
        p = params_by_key[k]
        ncls = int(num_classes[h])
        # depthwise taps, BN scale folded in, tiled over W onto the lane axis
        dw = jnp.transpose(p["dw_w_torch"][:, 0], (1, 2, 0)).reshape(25, C)       # (25, C)
        dw = dw * p["dw_s"][None, :]
        dw_t.append(jnp.tile(dw, (1, W)))                                         # (25, W*C)
        dw_b.append(jnp.tile(p["dw_b"], W))                                       # (W*C,)
        # pointwise 1x1, BN scale folded into columns, W-replicated block-diagonal
        pw = jnp.transpose(p["pw_w_torch"][:, :, 0, 0], (1, 0)) * p["pw_s"][None, :]  # (C, Ch)
        pw_rep = pw_rep.at[h * W * C:(h + 1) * W * C,
                           h * W * Ch:(h + 1) * W * Ch].set(jnp.kron(eyeW, pw))
        pw_b.append(jnp.tile(p["pw_b"], W))                                       # (W*Ch,)
        # classifier 1x1, columns placed at this head's class offsets inside NC
        cw = jnp.transpose(p["cls_w_torch"][:, :, 0, 0], (1, 0))                  # (Ch, ncls)
        cw_pad = jnp.zeros((Ch, NC), jnp.float32).at[:, col:col + ncls].set(cw)
        cls_blocks.append(jnp.kron(eyeW, cw_pad))                                 # (W*Ch, W*NC)
        cls_b.append(p["cls_b"])
        col += ncls

    cls_rep = jnp.concatenate(cls_blocks, axis=0)                                 # (nh*W*Ch, W*NC)
    cls_b_all = jnp.concatenate(cls_b)                                            # (NC,)
    return {
        "dw_t": jnp.stack(dw_t),                          # (nh, 25, W*C)   f32
        "dw_b": jnp.stack(dw_b),                          # (nh, W*C)       f32
        "pw_rep": pw_rep.astype(MXU_OPERAND_DTYPE),       # (nh*W*C, nh*W*Ch)
        "pw_b": jnp.concatenate(pw_b)[None, :],           # (1, nh*W*Ch)    f32
        "cls_rep": cls_rep.astype(MXU_OPERAND_DTYPE),     # (nh*W*Ch, W*NC)
        "cls_b": jnp.tile(cls_b_all, W)[None, :],         # (1, W*NC)       f32
    }


# ----------------------------------------------------------------------------
# Pure-JAX reference in PyTorch NCHW semantics (for verification).
# ----------------------------------------------------------------------------
def _ref_head(x_nchw, p):
    C = x_nchw.shape[1]
    y = lax.conv_general_dilated(
        x_nchw, p["dw_w_torch"], (1, 1), ((2, 2), (2, 2)),
        feature_group_count=C, dimension_numbers=("NCHW", "OIHW", "NCHW"))
    y = y * p["dw_s"][None, :, None, None] + p["dw_b"][None, :, None, None]
    y = jnp.maximum(y, 0.0)
    y = lax.conv_general_dilated(
        y, p["pw_w_torch"], (1, 1), ((0, 0), (0, 0)),
        dimension_numbers=("NCHW", "OIHW", "NCHW"))
    y = y * p["pw_s"][None, :, None, None] + p["pw_b"][None, :, None, None]
    y = jnp.maximum(y, 0.0)
    y = lax.conv_general_dilated(
        y, p["cls_w_torch"], (1, 1), ((0, 0), (0, 0)),
        dimension_numbers=("NCHW", "OIHW", "NCHW"))
    return y + p["cls_b"][None, :, None, None]


# ----------------------------------------------------------------------------
# Module wrapper (forward returns (center, offset) in NCHW like PyTorch).
# Fused params are an input (prepacked once), so the per-forward path only runs
# the NCHW->(H,W*C) input repack, the kernel, and a 6 KB output repack.
# ----------------------------------------------------------------------------
@partial(jax.jit, static_argnames=("num_classes", "class_key"))
def single_panoptic_deeplab_head(x_nchw, fused, *, num_classes, class_key):
    B, _, H, W = x_nchw.shape
    NC = int(sum(num_classes))
    y = _run_fused(x_nchw, fused)                               # (B, H, W*NC)
    y = jnp.transpose(y.reshape(B, H, W, NC), (0, 3, 1, 2))     # tiny XLA repack to NCHW
    outs, off = {}, 0
    for k, n in zip(class_key, num_classes):
        outs[k] = y[:, off:off + n]
        off += n
    return outs["center"], outs["offset"]


if __name__ == "__main__":
    B, C, H, W = 2, 32, 16, 16          # decoder_channels = 32  (W*C = 512 lanes)
    head_channels = 32
    num_classes = (1, 2)
    class_key = ("center", "offset")

    key = jax.random.PRNGKey(0)
    kx, kc, ko = jax.random.split(key, 3)
    x = jax.random.normal(kx, (B, C, H, W), jnp.float32)   # PyTorch NCHW input

    params = {
        "center": make_head_params(kc, C, head_channels, num_classes[0]),
        "offset": make_head_params(ko, C, head_channels, num_classes[1]),
    }
    # one-time prepack (hoisted out of the forward path)
    fused = fuse_head_params(params, class_key, num_classes, W)

    center, offset = single_panoptic_deeplab_head(
        x, fused, num_classes=num_classes, class_key=class_key)
    center = jax.block_until_ready(center)
    offset = jax.block_until_ready(offset)

    # verify against pure-JAX f32 NCHW reference; tolerance accounts for bf16
    # MXU operands (f32 accumulation) when MXU_OPERAND_DTYPE is bfloat16.
    tol = 3e-2 if MXU_OPERAND_DTYPE == jnp.bfloat16 else 1e-4
    center_ref = _ref_head(x, params["center"])
    offset_ref = _ref_head(x, params["offset"])
    assert center.shape == (B, num_classes[0], H, W)
    assert offset.shape == (B, num_classes[1], H, W)
    assert jnp.allclose(center, center_ref, atol=tol, rtol=tol)
    assert jnp.allclose(offset, offset_ref, atol=tol, rtol=tol)

    print("KERNEL_OK")
</pallas_src>

<mosaic_0001>
module attributes {stable_mosaic.version = 11 : i64} {
  func.func @_fused_head_kernel(%arg0: i32, %arg1: memref<1x16x512xf32, #tpu.memory_space<vmem>>, %arg2: memref<2x25x512xf32, #tpu.memory_space<vmem>>, %arg3: memref<2x512xf32, #tpu.memory_space<vmem>>, %arg4: memref<1024x1024xbf16, #tpu.memory_space<vmem>>, %arg5: memref<1x1024xf32, #tpu.memory_space<vmem>>, %arg6: memref<1024x48xbf16, #tpu.memory_space<vmem>>, %arg7: memref<1x48xf32, #tpu.memory_space<vmem>>, %arg8: memref<1x16x48xf32, #tpu.memory_space<vmem>>, %arg9: memref<20x640xf32, #tpu.memory_space<vmem>>) attributes {dimension_semantics = [#tpu.dimension_semantics<parallel>], iteration_bounds = array<i64: 2>, scalar_prefetch = 0 : i64, scratch_operands = 1 : i64, tpu.core_type = #tpu.core_type<tc>, window_params = [{transform_indices = @transform_0, window_bounds = array<i64: 1, 16, 512>}, {pipeline_mode = #tpu.pipeline_mode<synchronous>, transform_indices = @transform_1, window_bounds = array<i64: 2, 25, 512>}, {pipeline_mode = #tpu.pipeline_mode<synchronous>, transform_indices = @transform_2, window_bounds = array<i64: 2, 512>}, {pipeline_mode = #tpu.pipeline_mode<synchronous>, transform_indices = @transform_3, window_bounds = array<i64: 1024, 1024>}, {pipeline_mode = #tpu.pipeline_mode<synchronous>, transform_indices = @transform_4, window_bounds = array<i64: 1, 1024>}, {pipeline_mode = #tpu.pipeline_mode<synchronous>, transform_indices = @transform_5, window_bounds = array<i64: 1024, 48>}, {pipeline_mode = #tpu.pipeline_mode<synchronous>, transform_indices = @transform_6, window_bounds = array<i64: 1, 48>}, {transform_indices = @transform_7, window_bounds = array<i64: 1, 16, 48>}]} {
    %cst = arith.constant 0.000000e+00 : f32
    %0 = vector.broadcast %cst : f32 to vector<2x640xf32>
    %c0 = arith.constant 0 : index
    %c0_0 = arith.constant 0 : index
    %1 = vector.load %arg9[%c0, %c0_0] : memref<20x640xf32, #tpu.memory_space<vmem>>, vector<2x640xf32>
    tpu.vector_store %arg9[%c0, %c0_0], %0 {strides = array<i32>} : memref<20x640xf32, #tpu.memory_space<vmem>>, vector<2x640xf32>,
    %cst_1 = arith.constant 0.000000e+00 : f32
    %2 = vector.broadcast %cst_1 : f32 to vector<2x640xf32>
    %c18 = arith.constant 18 : index
    %c0_2 = arith.constant 0 : index
    %3 = vector.load %arg9[%c18, %c0_2] : memref<20x640xf32, #tpu.memory_space<vmem>>, vector<2x640xf32>
    tpu.vector_store %arg9[%c18, %c0_2], %2 {strides = array<i32>} : memref<20x640xf32, #tpu.memory_space<vmem>>, vector<2x640xf32>,
    %cst_3 = arith.constant 0.000000e+00 : f32
    %4 = vector.broadcast %cst_3 : f32 to vector<16x64xf32>
    %c2 = arith.constant 2 : index
    %c0_4 = arith.constant 0 : index
    %5 = vector.load %arg9[%c2, %c0_4] : memref<20x640xf32, #tpu.memory_space<vmem>>, vector<16x64xf32>
    tpu.vector_store %arg9[%c2, %c0_4], %4 {strides = array<i32>} : memref<20x640xf32, #tpu.memory_space<vmem>>, vector<16x64xf32>,
    %cst_5 = arith.constant 0.000000e+00 : f32
    %6 = vector.broadcast %cst_5 : f32 to vector<16x64xf32>
    %c2_6 = arith.constant 2 : index
    %c576 = arith.constant 576 : index
    %7 = vector.load %arg9[%c2_6, %c576] : memref<20x640xf32, #tpu.memory_space<vmem>>, vector<16x64xf32>
    tpu.vector_store %arg9[%c2_6, %c576], %6 {strides = array<i32>} : memref<20x640xf32, #tpu.memory_space<vmem>>, vector<16x64xf32>,
    %c0_7 = arith.constant 0 : index
    %c0_8 = arith.constant 0 : index
    %c0_9 = arith.constant 0 : index
    %8 = vector.load %arg1[%c0_7, %c0_8, %c0_9] : memref<1x16x512xf32, #tpu.memory_space<vmem>>, vector<1x16x512xf32>
    %9 = vector.shape_cast %8 : vector<1x16x512xf32> to vector<16x512xf32>
    %c2_10 = arith.constant 2 : index
    %c64 = arith.constant 64 : index
    %10 = vector.load %arg9[%c2_10, %c64] : memref<20x640xf32, #tpu.memory_space<vmem>>, vector<16x512xf32>
    tpu.vector_store %arg9[%c2_10, %c64], %9 {strides = array<i32>} : memref<20x640xf32, #tpu.memory_space<vmem>>, vector<16x512xf32>,
    %c0_11 = arith.constant 0 : index
    %c0_12 = arith.constant 0 : index
    %11 = vector.load %arg9[%c0_11, %c0_12] : memref<20x640xf32, #tpu.memory_space<vmem>>, vector<20x640xf32>
    %cst_13 = arith.constant 0.000000e+00 : f32
    %12 = vector.broadcast %cst_13 : f32 to vector<16x512xf32>
    %cst_14 = arith.constant 0.000000e+00 : f32
    %13 = vector.broadcast %cst_14 : f32 to vector<16x512xf32>
    %14 = vector.extract_strided_slice %11 {offsets = [0, 0], sizes = [20, 512], strides = [1, 1]} : vector<20x640xf32> to vector<20x512xf32>
    %15 = vector.extract_strided_slice %14 {offsets = [0, 0], sizes = [16, 512], strides = [1, 1]} : vector<20x512xf32> to vector<16x512xf32>
    %c0_15 = arith.constant 0 : index
    %c0_16 = arith.constant 0 : index
    %c0_17 = arith.constant 0 : index
    %16 = vector.load %arg2[%c0_15, %c0_16, %c0_17] : memref<2x25x512xf32, #tpu.memory_space<vmem>>, vector<1x1x512xf32>
    %17 = vector.shape_cast %16 : vector<1x1x512xf32> to vector<1x512xf32>
    %18 = vector.broadcast %17 : vector<1x512xf32> to vector<16x512xf32>
    %19 = arith.mulf %15, %18 : vector<16x512xf32>
    %20 = arith.addf %12, %19 : vector<16x512xf32>
    %c1 = arith.constant 1 : index
    %c0_18 = arith.constant 0 : index
    %c0_19 = arith.constant 0 : index
    %21 = vector.load %arg2[%c1, %c0_18, %c0_19] : memref<2x25x512xf32, #tpu.memory_space<vmem>>, vector<1x1x512xf32>
    %22 = vector.shape_cast %21 : vector<1x1x512xf32> to vector<1x512xf32>
    %23 = vector.broadcast %22 : vector<1x512xf32> to vector<16x512xf32>
    %24 = arith.mulf %15, %23 : vector<16x512xf32>
    %25 = arith.addf %13, %24 : vector<16x512xf32>
    %26 = vector.extract_strided_slice %14 {offsets = [1, 0], sizes = [16, 512], strides = [1, 1]} : vector<20x512xf32> to vector<16x512xf32>
    %c0_20 = arith.constant 0 : index
    %c5 = arith.constant 5 : index
    %c0_21 = arith.constant 0 : index
    %27 = vector.load %arg2[%c0_20, %c5, %c0_21] : memref<2x25x512xf32, #tpu.memory_space<vmem>>, vector<1x1x512xf32>
    %28 = vector.shape_cast %27 : vector<1x1x512xf32> to vector<1x512xf32>
    %29 = vector.broadcast %28 : vector<1x512xf32> to vector<16x512xf32>
    %30 = arith.mulf %26, %29 : vector<16x512xf32>
    %31 = arith.addf %20, %30 : vector<16x512xf32>
    %c1_22 = arith.constant 1 : index
    %c5_23 = arith.constant 5 : index
    %c0_24 = arith.constant 0 : index
    %32 = vector.load %arg2[%c1_22, %c5_23, %c0_24] : memref<2x25x512xf32, #tpu.memory_space<vmem>>, vector<1x1x512xf32>
    %33 = vector.shape_cast %32 : vector<1x1x512xf32> to vector<1x512xf32>
    %34 = vector.broadcast %33 : vector<1x512xf32> to vector<16x512xf32>
    %35 = arith.mulf %26, %34 : vector<16x512xf32>
    %36 = arith.addf %25, %35 : vector<16x512xf32>
    %37 = vector.extract_strided_slice %14 {offsets = [2, 0], sizes = [16, 512], strides = [1, 1]} : vector<20x512xf32> to vector<16x512xf32>
    %c0_25 = arith.constant 0 : index
    %c10 = arith.constant 10 : index
    %c0_26 = arith.constant 0 : index
    %38 = vector.load %arg2[%c0_25, %c10, %c0_26] : memref<2x25x512xf32, #tpu.memory_space<vmem>>, vector<1x1x512xf32>
    %39 = vector.shape_cast %38 : vector<1x1x512xf32> to vector<1x512xf32>
    %40 = vector.broadcast %39 : vector<1x512xf32> to vector<16x512xf32>
    %41 = arith.mulf %37, %40 : vector<16x512xf32>
    %42 = arith.addf %31, %41 : vector<16x512xf32>
    %c1_27 = arith.constant 1 : index
    %c10_28 = arith.constant 10 : index
    %c0_29 = arith.constant 0 : index
    %43 = vector.load %arg2[%c1_27, %c10_28, %c0_29] : memref<2x25x512xf32, #tpu.memory_space<vmem>>, vector<1x1x512xf32>
    %44 = vector.shape_cast %43 : vector<1x1x512xf32> to vector<1x512xf32>
    %45 = vector.broadcast %44 : vector<1x512xf32> to vector<16x512xf32>
    %46 = arith.mulf %37, %45 : vector<16x512xf32>
    %47 = arith.addf %36, %46 : vector<16x512xf32>
    %48 = vector.extract_strided_slice %14 {offsets = [3, 0], sizes = [16, 512], strides = [1, 1]} : vector<20x512xf32> to vector<16x512xf32>
    %c0_30 = arith.constant 0 : index
    %c15 = arith.constant 15 : index
    %c0_31 = arith.constant 0 : index
    %49 = vector.load %arg2[%c0_30, %c15, %c0_31] : memref<2x25x512xf32, #tpu.memory_space<vmem>>, vector<1x1x512xf32>
    %50 = vector.shape_cast %49 : vector<1x1x512xf32> to vector<1x512xf32>
    %51 = vector.broadcast %50 : vector<1x512xf32> to vector<16x512xf32>
    %52 = arith.mulf %48, %51 : vector<16x512xf32>
    %53 = arith.addf %42, %52 : vector<16x512xf32>
    %c1_32 = arith.constant 1 : index
    %c15_33 = arith.constant 15 : index
    %c0_34 = arith.constant 0 : index
    %54 = vector.load %arg2[%c1_32, %c15_33, %c0_34] : memref<2x25x512xf32, #tpu.memory_space<vmem>>, vector<1x1x512xf32>
    %55 = vector.shape_cast %54 : vector<1x1x512xf32> to vector<1x512xf32>
    %56 = vector.broadcast %55 : vector<1x512xf32> to vector<16x512xf32>
    %57 = arith.mulf %48, %56 : vector<16x512xf32>
    %58 = arith.addf %47, %57 : vector<16x512xf32>
    %59 = vector.extract_strided_slice %14 {offsets = [4, 0], sizes = [16, 512], strides = [1, 1]} : vector<20x512xf32> to vector<16x512xf32>
    %c0_35 = arith.constant 0 : index
    %c20 = arith.constant 20 : index
    %c0_36 = arith.constant 0 : index
    %60 = vector.load %arg2[%c0_35, %c20, %c0_36] : memref<2x25x512xf32, #tpu.memory_space<vmem>>, vector<1x1x512xf32>
    %61 = vector.shape_cast %60 : vector<1x1x512xf32> to vector<1x512xf32>
    %62 = vector.broadcast %61 : vector<1x512xf32> to vector<16x512xf32>
    %63 = arith.mulf %59, %62 : vector<16x512xf32>
    %64 = arith.addf %53, %63 : vector<16x512xf32>
    %c1_37 = arith.constant 1 : index
    %c20_38 = arith.constant 20 : index
    %c0_39 = arith.constant 0 : index
    %65 = vector.load %arg2[%c1_37, %c20_38, %c0_39] : memref<2x25x512xf32, #tpu.memory_space<vmem>>, vector<1x1x512xf32>
    %66 = vector.shape_cast %65 : vector<1x1x512xf32> to vector<1x512xf32>
    %67 = vector.broadcast %66 : vector<1x512xf32> to vector<16x512xf32>
    %68 = arith.mulf %59, %67 : vector<16x512xf32>
    %69 = arith.addf %58, %68 : vector<16x512xf32>
    %70 = vector.extract_strided_slice %11 {offsets = [0, 32], sizes = [20, 512], strides = [1, 1]} : vector<20x640xf32> to vector<20x512xf32>
    %71 = vector.extract_strided_slice %70 {offsets = [0, 0], sizes = [16, 512], strides = [1, 1]} : vector<20x512xf32> to vector<16x512xf32>
    %c0_40 = arith.constant 0 : index
    %c1_41 = arith.constant 1 : index
    %c0_42 = arith.constant 0 : index
    %72 = vector.load %arg2[%c0_40, %c1_41, %c0_42] : memref<2x25x512xf32, #tpu.memory_space<vmem>>, vector<1x1x512xf32>
    %73 = vector.shape_cast %72 : vector<1x1x512xf32> to vector<1x512xf32>
    %74 = vector.broadcast %73 : vector<1x512xf32> to vector<16x512xf32>
    %75 = arith.mulf %71, %74 : vector<16x512xf32>
    %76 = arith.addf %64, %75 : vector<16x512xf32>
    %c1_43 = arith.constant 1 : index
    %c1_44 = arith.constant 1 : index
    %c0_45 = arith.constant 0 : index
    %77 = vector.load %arg2[%c1_43, %c1_44, %c0_45] : memref<2x25x512xf32, #tpu.memory_space<vmem>>, vector<1x1x512xf32>
    %78 = vector.shape_cast %77 : vector<1x1x512xf32> to vector<1x512xf32>
    %79 = vector.broadcast %78 : vector<1x512xf32> to vector<16x512xf32>
    %80 = arith.mulf %71, %79 : vector<16x512xf32>
    %81 = arith.addf %69, %80 : vector<16x512xf32>
    %82 = vector.extract_strided_slice %70 {offsets = [1, 0], sizes = [16, 512], strides = [1, 1]} : vector<20x512xf32> to vector<16x512xf32>
    %c0_46 = arith.constant 0 : index
    %c6 = arith.constant 6 : index
    %c0_47 = arith.constant 0 : index
    %83 = vector.load %arg2[%c0_46, %c6, %c0_47] : memref<2x25x512xf32, #tpu.memory_space<vmem>>, vector<1x1x512xf32>
    %84 = vector.shape_cast %83 : vector<1x1x512xf32> to vector<1x512xf32>
    %85 = vector.broadcast %84 : vector<1x512xf32> to vector<16x512xf32>
    %86 = arith.mulf %82, %85 : vector<16x512xf32>
    %87 = arith.addf %76, %86 : vector<16x512xf32>
    %c1_48 = arith.constant 1 : index
    %c6_49 = arith.constant 6 : index
    %c0_50 = arith.constant 0 : index
    %88 = vector.load %arg2[%c1_48, %c6_49, %c0_50] : memref<2x25x512xf32, #tpu.memory_space<vmem>>, vector<1x1x512xf32>
    %89 = vector.shape_cast %88 : vector<1x1x512xf32> to vector<1x512xf32>
    %90 = vector.broadcast %89 : vector<1x512xf32> to vector<16x512xf32>
    %91 = arith.mulf %82, %90 : vector<16x512xf32>
    %92 = arith.addf %81, %91 : vector<16x512xf32>
    %93 = vector.extract_strided_slice %70 {offsets = [2, 0], sizes = [16, 512], strides = [1, 1]} : vector<20x512xf32> to vector<16x512xf32>
    %c0_51 = arith.constant 0 : index
    %c11 = arith.constant 11 : index
    %c0_52 = arith.constant 0 : index
    %94 = vector.load %arg2[%c0_51, %c11, %c0_52] : memref<2x25x512xf32, #tpu.memory_space<vmem>>, vector<1x1x512xf32>
    %95 = vector.shape_cast %94 : vector<1x1x512xf32> to vector<1x512xf32>
    %96 = vector.broadcast %95 : vector<1x512xf32> to vector<16x512xf32>
    %97 = arith.mulf %93, %96 : vector<16x512xf32>
    %98 = arith.addf %87, %97 : vector<16x512xf32>
    %c1_53 = arith.constant 1 : index
    %c11_54 = arith.constant 11 : index
    %c0_55 = arith.constant 0 : index
    %99 = vector.load %arg2[%c1_53, %c11_54, %c0_55] : memref<2x25x512xf32, #tpu.memory_space<vmem>>, vector<1x1x512xf32>
    %100 = vector.shape_cast %99 : vector<1x1x512xf32> to vector<1x512xf32>
    %101 = vector.broadcast %100 : vector<1x512xf32> to vector<16x512xf32>
    %102 = arith.mulf %93, %101 : vector<16x512xf32>
    %103 = arith.addf %92, %102 : vector<16x512xf32>
    %104 = vector.extract_strided_slice %70 {offsets = [3, 0], sizes = [16, 512], strides = [1, 1]} : vector<20x512xf32> to vector<16x512xf32>
    %c0_56 = arith.constant 0 : index
    %c16 = arith.constant 16 : index
    %c0_57 = arith.constant 0 : index
    %105 = vector.load %arg2[%c0_56, %c16, %c0_57] : memref<2x25x512xf32, #tpu.memory_space<vmem>>, vector<1x1x512xf32>
    %106 = vector.shape_cast %105 : vector<1x1x512xf32> to vector<1x512xf32>
    %107 = vector.broadcast %106 : vector<1x512xf32> to vector<16x512xf32>
    %108 = arith.mulf %104, %107 : vector<16x512xf32>
    %109 = arith.addf %98, %108 : vector<16x512xf32>
    %c1_58 = arith.constant 1 : index
    %c16_59 = arith.constant 16 : index
    %c0_60 = arith.constant 0 : index
    %110 = vector.load %arg2[%c1_58, %c16_59, %c0_60] : memref<2x25x512xf32, #tpu.memory_space<vmem>>, vector<1x1x512xf32>
    %111 = vector.shape_cast %110 : vector<1x1x512xf32> to vector<1x512xf32>
    %112 = vector.broadcast %111 : vector<1x512xf32> to vector<16x512xf32>
    %113 = arith.mulf %104, %112 : vector<16x512xf32>
    %114 = arith.addf %103, %113 : vector<16x512xf32>
    %115 = vector.extract_strided_slice %70 {offsets = [4, 0], sizes = [16, 512], strides = [1, 1]} : vector<20x512xf32> to vector<16x512xf32>
    %c0_61 = arith.constant 0 : index
    %c21 = arith.constant 21 : index
    %c0_62 = arith.constant 0 : index
    %116 = vector.load %arg2[%c0_61, %c21, %c0_62] : memref<2x25x512xf32, #tpu.memory_space<vmem>>, vector<1x1x512xf32>
    %117 = vector.shape_cast %116 : vector<1x1x512xf32> to vector<1x512xf32>
    %118 = vector.broadcast %117 : vector<1x512xf32> to vector<16x512xf32>
    %119 = arith.mulf %115, %118 : vector<16x512xf32>
    %120 = arith.addf %109, %119 : vector<16x512xf32>
    %c1_63 = arith.constant 1 : index
    %c21_64 = arith.constant 21 : index
    %c0_65 = arith.constant 0 : index
    %121 = vector.load %arg2[%c1_63, %c21_64, %c0_65] : memref<2x25x512xf32, #tpu.memory_space<vmem>>, vector<1x1x512xf32>
    %122 = vector.shape_cast %121 : vector<1x1x512xf32> to vector<1x512xf32>
    %123 = vector.broadcast %122 : vector<1x512xf32> to vector<16x512xf32>
    %124 = arith.mulf %115, %123 : vector<16x512xf32>
    %125 = arith.addf %114, %124 : vector<16x512xf32>
    %126 = vector.extract_strided_slice %11 {offsets = [0, 64], sizes = [20, 512], strides = [1, 1]} : vector<20x640xf32> to vector<20x512xf32>
    %127 = vector.extract_strided_slice %126 {offsets = [0, 0], sizes = [16, 512], strides = [1, 1]} : vector<20x512xf32> to vector<16x512xf32>
    %c0_66 = arith.constant 0 : index
    %c2_67 = arith.constant 2 : index
    %c0_68 = arith.constant 0 : index
    %128 = vector.load %arg2[%c0_66, %c2_67, %c0_68] : memref<2x25x512xf32, #tpu.memory_space<vmem>>, vector<1x1x512xf32>
    %129 = vector.shape_cast %128 : vector<1x1x512xf32> to vector<1x512xf32>
    %130 = vector.broadcast %129 : vector<1x512xf32> to vector<16x512xf32>
    %131 = arith.mulf %127, %130 : vector<16x512xf32>
    %132 = arith.addf %120, %131 : vector<16x512xf32>
    %c1_69 = arith.constant 1 : index
    %c2_70 = arith.constant 2 : index
    %c0_71 = arith.constant 0 : index
    %133 = vector.load %arg2[%c1_69, %c2_70, %c0_71] : memref<2x25x512xf32, #tpu.memory_space<vmem>>, vector<1x1x512xf32>
    %134 = vector.shape_cast %133 : vector<1x1x512xf32> to vector<1x512xf32>
    %135 = vector.broadcast %134 : vector<1x512xf32> to vector<16x512xf32>
    %136 = arith.mulf %127, %135 : vector<16x512xf32>
    %137 = arith.addf %125, %136 : vector<16x512xf32>
    %138 = vector.extract_strided_slice %126 {offsets = [1, 0], sizes = [16, 512], strides = [1, 1]} : vector<20x512xf32> to vector<16x512xf32>
    %c0_72 = arith.constant 0 : index
    %c7 = arith.constant 7 : index
    %c0_73 = arith.constant 0 : index
    %139 = vector.load %arg2[%c0_72, %c7, %c0_73] : memref<2x25x512xf32, #tpu.memory_space<vmem>>, vector<1x1x512xf32>
    %140 = vector.shape_cast %139 : vector<1x1x512xf32> to vector<1x512xf32>
    %141 = vector.broadcast %140 : vector<1x512xf32> to vector<16x512xf32>
    %142 = arith.mulf %138, %141 : vector<16x512xf32>
    %143 = arith.addf %132, %142 : vector<16x512xf32>
    %c1_74 = arith.constant 1 : index
    %c7_75 = arith.constant 7 : index
    %c0_76 = arith.constant 0 : index
    %144 = vector.load %arg2[%c1_74, %c7_75, %c0_76] : memref<2x25x512xf32, #tpu.memory_space<vmem>>, vector<1x1x512xf32>
    %145 = vector.shape_cast %144 : vector<1x1x512xf32> to vector<1x512xf32>
    %146 = vector.broadcast %145 : vector<1x512xf32> to vector<16x512xf32>
    %147 = arith.mulf %138, %146 : vector<16x512xf32>
    %148 = arith.addf %137, %147 : vector<16x512xf32>
    %149 = vector.extract_strided_slice %126 {offsets = [2, 0], sizes = [16, 512], strides = [1, 1]} : vector<20x512xf32> to vector<16x512xf32>
    %c0_77 = arith.constant 0 : index
    %c12 = arith.constant 12 : index
    %c0_78 = arith.constant 0 : index
    %150 = vector.load %arg2[%c0_77, %c12, %c0_78] : memref<2x25x512xf32, #tpu.memory_space<vmem>>, vector<1x1x512xf32>
    %151 = vector.shape_cast %150 : vector<1x1x512xf32> to vector<1x512xf32>
    %152 = vector.broadcast %151 : vector<1x512xf32> to vector<16x512xf32>
    %153 = arith.mulf %149, %152 : vector<16x512xf32>
    %154 = arith.addf %143, %153 : vector<16x512xf32>
    %c1_79 = arith.constant 1 : index
    %c12_80 = arith.constant 12 : index
    %c0_81 = arith.constant 0 : index
    %155 = vector.load %arg2[%c1_79, %c12_80, %c0_81] : memref<2x25x512xf32, #tpu.memory_space<vmem>>, vector<1x1x512xf32>
    %156 = vector.shape_cast %155 : vector<1x1x512xf32> to vector<1x512xf32>
    %157 = vector.broadcast %156 : vector<1x512xf32> to vector<16x512xf32>
    %158 = arith.mulf %149, %157 : vector<16x512xf32>
    %159 = arith.addf %148, %158 : vector<16x512xf32>
    %160 = vector.extract_strided_slice %126 {offsets = [3, 0], sizes = [16, 512], strides = [1, 1]} : vector<20x512xf32> to vector<16x512xf32>
    %c0_82 = arith.constant 0 : index
    %c17 = arith.constant 17 : index
    %c0_83 = arith.constant 0 : index
    %161 = vector.load %arg2[%c0_82, %c17, %c0_83] : memref<2x25x512xf32, #tpu.memory_space<vmem>>, vector<1x1x512xf32>
    %162 = vector.shape_cast %161 : vector<1x1x512xf32> to vector<1x512xf32>
    %163 = vector.broadcast %162 : vector<1x512xf32> to vector<16x512xf32>
    %164 = arith.mulf %160, %163 : vector<16x512xf32>
    %165 = arith.addf %154, %164 : vector<16x512xf32>
    %c1_84 = arith.constant 1 : index
    %c17_85 = arith.constant 17 : index
    %c0_86 = arith.constant 0 : index
    %166 = vector.load %arg2[%c1_84, %c17_85, %c0_86] : memref<2x25x512xf32, #tpu.memory_space<vmem>>, vector<1x1x512xf32>
    %167 = vector.shape_cast %166 : vector<1x1x512xf32> to vector<1x512xf32>
    %168 = vector.broadcast %167 : vector<1x512xf32> to vector<16x512xf32>
    %169 = arith.mulf %160, %168 : vector<16x512xf32>
    %170 = arith.addf %159, %169 : vector<16x512xf32>
    %171 = vector.extract_strided_slice %126 {offsets = [4, 0], sizes = [16, 512], strides = [1, 1]} : vector<20x512xf32> to vector<16x512xf32>
    %c0_87 = arith.constant 0 : index
    %c22 = arith.constant 22 : index
    %c0_88 = arith.constant 0 : index
    %172 = vector.load %arg2[%c0_87, %c22, %c0_88] : memref<2x25x512xf32, #tpu.memory_space<vmem>>, vector<1x1x512xf32>
    %173 = vector.shape_cast %172 : vector<1x1x512xf32> to vector<1x512xf32>
    %174 = vector.broadcast %173 : vector<1x512xf32> to vector<16x512xf32>
    %175 = arith.mulf %171, %174 : vector<16x512xf32>
    %176 = arith.addf %165, %175 : vector<16x512xf32>
    %c1_89 = arith.constant 1 : index
    %c22_90 = arith.constant 22 : index
    %c0_91 = arith.constant 0 : index
    %177 = vector.load %arg2[%c1_89, %c22_90, %c0_91] : memref<2x25x512xf32, #tpu.memory_space<vmem>>, vector<1x1x512xf32>
    %178 = vector.shape_cast %177 : vector<1x1x512xf32> to vector<1x512xf32>
    %179 = vector.broadcast %178 : vector<1x512xf32> to vector<16x512xf32>
    %180 = arith.mulf %171, %179 : vector<16x512xf32>
    %181 = arith.addf %170, %180 : vector<16x512xf32>
    %182 = vector.extract_strided_slice %11 {offsets = [0, 96], sizes = [20, 512], strides = [1, 1]} : vector<20x640xf32> to vector<20x512xf32>
    %183 = vector.extract_strided_slice %182 {offsets = [0, 0], sizes = [16, 512], strides = [1, 1]} : vector<20x512xf32> to vector<16x512xf32>
    %c0_92 = arith.constant 0 : index
    %c3 = arith.constant 3 : index
    %c0_93 = arith.constant 0 : index
    %184 = vector.load %arg2[%c0_92, %c3, %c0_93] : memref<2x25x512xf32, #tpu.memory_space<vmem>>, vector<1x1x512xf32>
    %185 = vector.shape_cast %184 : vector<1x1x512xf32> to vector<1x512xf32>
    %186 = vector.broadcast %185 : vector<1x512xf32> to vector<16x512xf32>
    %187 = arith.mulf %183, %186 : vector<16x512xf32>
    %188 = arith.addf %176, %187 : vector<16x512xf32>
    %c1_94 = arith.constant 1 : index
    %c3_95 = arith.constant 3 : index
    %c0_96 = arith.constant 0 : index
    %189 = vector.load %arg2[%c1_94, %c3_95, %c0_96] : memref<2x25x512xf32, #tpu.memory_space<vmem>>, vector<1x1x512xf32>
    %190 = vector.shape_cast %189 : vector<1x1x512xf32> to vector<1x512xf32>
    %191 = vector.broadcast %190 : vector<1x512xf32> to vector<16x512xf32>
    %192 = arith.mulf %183, %191 : vector<16x512xf32>
    %193 = arith.addf %181, %192 : vector<16x512xf32>
    %194 = vector.extract_strided_slice %182 {offsets = [1, 0], sizes = [16, 512], strides = [1, 1]} : vector<20x512xf32> to vector<16x512xf32>
    %c0_97 = arith.constant 0 : index
    %c8 = arith.constant 8 : index
    %c0_98 = arith.constant 0 : index
    %195 = vector.load %arg2[%c0_97, %c8, %c0_98] : memref<2x25x512xf32, #tpu.memory_space<vmem>>, vector<1x1x512xf32>
    %196 = vector.shape_cast %195 : vector<1x1x512xf32> to vector<1x512xf32>
    %197 = vector.broadcast %196 : vector<1x512xf32> to vector<16x512xf32>
    %198 = arith.mulf %194, %197 : vector<16x512xf32>
    %199 = arith.addf %188, %198 : vector<16x512xf32>
    %c1_99 = arith.constant 1 : index
    %c8_100 = arith.constant 8 : index
    %c0_101 = arith.constant 0 : index
    %200 = vector.load %arg2[%c1_99, %c8_100, %c0_101] : memref<2x25x512xf32, #tpu.memory_space<vmem>>, vector<1x1x512xf32>
    %201 = vector.shape_cast %200 : vector<1x1x512xf32> to vector<1x512xf32>
    %202 = vector.broadcast %201 : vector<1x512xf32> to vector<16x512xf32>
    %203 = arith.mulf %194, %202 : vector<16x512xf32>
    %204 = arith.addf %193, %203 : vector<16x512xf32>
    %205 = vector.extract_strided_slice %182 {offsets = [2, 0], sizes = [16, 512], strides = [1, 1]} : vector<20x512xf32> to vector<16x512xf32>
    %c0_102 = arith.constant 0 : index
    %c13 = arith.constant 13 : index
    %c0_103 = arith.constant 0 : index
    %206 = vector.load %arg2[%c0_102, %c13, %c0_103] : memref<2x25x512xf32, #tpu.memory_space<vmem>>, vector<1x1x512xf32>
    %207 = vector.shape_cast %206 : vector<1x1x512xf32> to vector<1x512xf32>
    %208 = vector.broadcast %207 : vector<1x512xf32> to vector<16x512xf32>
    %209 = arith.mulf %205, %208 : vector<16x512xf32>
    %210 = arith.addf %199, %209 : vector<16x512xf32>
    %c1_104 = arith.constant 1 : index
    %c13_105 = arith.constant 13 : index
    %c0_106 = arith.constant 0 : index
    %211 = vector.load %arg2[%c1_104, %c13_105, %c0_106] : memref<2x25x512xf32, #tpu.memory_space<vmem>>, vector<1x1x512xf32>
    %212 = vector.shape_cast %211 : vector<1x1x512xf32> to vector<1x512xf32>
    %213 = vector.broadcast %212 : vector<1x512xf32> to vector<16x512xf32>
    %214 = arith.mulf %205, %213 : vector<16x512xf32>
    %215 = arith.addf %204, %214 : vector<16x512xf32>
    %216 = vector.extract_strided_slice %182 {offsets = [3, 0], sizes = [16, 512], strides = [1, 1]} : vector<20x512xf32> to vector<16x512xf32>
    %c0_107 = arith.constant 0 : index
    %c18_108 = arith.constant 18 : index
    %c0_109 = arith.constant 0 : index
    %217 = vector.load %arg2[%c0_107, %c18_108, %c0_109] : memref<2x25x512xf32, #tpu.memory_space<vmem>>, vector<1x1x512xf32>
    %218 = vector.shape_cast %217 : vector<1x1x512xf32> to vector<1x512xf32>
    %219 = vector.broadcast %218 : vector<1x512xf32> to vector<16x512xf32>
    %220 = arith.mulf %216, %219 : vector<16x512xf32>
    %221 = arith.addf %210, %220 : vector<16x512xf32>
    %c1_110 = arith.constant 1 : index
    %c18_111 = arith.constant 18 : index
    %c0_112 = arith.constant 0 : index
    %222 = vector.load %arg2[%c1_110, %c18_111, %c0_112] : memref<2x25x512xf32, #tpu.memory_space<vmem>>, vector<1x1x512xf32>
    %223 = vector.shape_cast %222 : vector<1x1x512xf32> to vector<1x512xf32>
    %224 = vector.broadcast %223 : vector<1x512xf32> to vector<16x512xf32>
    %225 = arith.mulf %216, %224 : vector<16x512xf32>
    %226 = arith.addf %215, %225 : vector<16x512xf32>
    %227 = vector.extract_strided_slice %182 {offsets = [4, 0], sizes = [16, 512], strides = [1, 1]} : vector<20x512xf32> to vector<16x512xf32>
    %c0_113 = arith.constant 0 : index
    %c23 = arith.constant 23 : index
    %c0_114 = arith.constant 0 : index
    %228 = vector.load %arg2[%c0_113, %c23, %c0_114] : memref<2x25x512xf32, #tpu.memory_space<vmem>>, vector<1x1x512xf32>
    %229 = vector.shape_cast %228 : vector<1x1x512xf32> to vector<1x512xf32>
    %230 = vector.broadcast %229 : vector<1x512xf32> to vector<16x512xf32>
    %231 = arith.mulf %227, %230 : vector<16x512xf32>
    %232 = arith.addf %221, %231 : vector<16x512xf32>
    %c1_115 = arith.constant 1 : index
    %c23_116 = arith.constant 23 : index
    %c0_117 = arith.constant 0 : index
    %233 = vector.load %arg2[%c1_115, %c23_116, %c0_117] : memref<2x25x512xf32, #tpu.memory_space<vmem>>, vector<1x1x512xf32>
    %234 = vector.shape_cast %233 : vector<1x1x512xf32> to vector<1x512xf32>
    %235 = vector.broadcast %234 : vector<1x512xf32> to vector<16x512xf32>
    %236 = arith.mulf %227, %235 : vector<16x512xf32>
    %237 = arith.addf %226, %236 : vector<16x512xf32>
    %238 = vector.extract_strided_slice %11 {offsets = [0, 128], sizes = [20, 512], strides = [1, 1]} : vector<20x640xf32> to vector<20x512xf32>
    %239 = vector.extract_strided_slice %238 {offsets = [0, 0], sizes = [16, 512], strides = [1, 1]} : vector<20x512xf32> to vector<16x512xf32>
    %c0_118 = arith.constant 0 : index
    %c4 = arith.constant 4 : index
    %c0_119 = arith.constant 0 : index
    %240 = vector.load %arg2[%c0_118, %c4, %c0_119] : memref<2x25x512xf32, #tpu.memory_space<vmem>>, vector<1x1x512xf32>
    %241 = vector.shape_cast %240 : vector<1x1x512xf32> to vector<1x512xf32>
    %242 = vector.broadcast %241 : vector<1x512xf32> to vector<16x512xf32>
    %243 = arith.mulf %239, %242 : vector<16x512xf32>
    %244 = arith.addf %232, %243 : vector<16x512xf32>
    %c1_120 = arith.constant 1 : index
    %c4_121 = arith.constant 4 : index
    %c0_122 = arith.constant 0 : index
    %245 = vector.load %arg2[%c1_120, %c4_121, %c0_122] : memref<2x25x512xf32, #tpu.memory_space<vmem>>, vector<1x1x512xf32>
    %246 = vector.shape_cast %245 : vector<1x1x512xf32> to vector<1x512xf32>
    %247 = vector.broadcast %246 : vector<1x512xf32> to vector<16x512xf32>
    %248 = arith.mulf %239, %247 : vector<16x512xf32>
    %249 = arith.addf %237, %248 : vector<16x512xf32>
    %250 = vector.extract_strided_slice %238 {offsets = [1, 0], sizes = [16, 512], strides = [1, 1]} : vector<20x512xf32> to vector<16x512xf32>
    %c0_123 = arith.constant 0 : index
    %c9 = arith.constant 9 : index
    %c0_124 = arith.constant 0 : index
    %251 = vector.load %arg2[%c0_123, %c9, %c0_124] : memref<2x25x512xf32, #tpu.memory_space<vmem>>, vector<1x1x512xf32>
    %252 = vector.shape_cast %251 : vector<1x1x512xf32> to vector<1x512xf32>
    %253 = vector.broadcast %252 : vector<1x512xf32> to vector<16x512xf32>
    %254 = arith.mulf %250, %253 : vector<16x512xf32>
    %255 = arith.addf %244, %254 : vector<16x512xf32>
    %c1_125 = arith.constant 1 : index
    %c9_126 = arith.constant 9 : index
    %c0_127 = arith.constant 0 : index
    %256 = vector.load %arg2[%c1_125, %c9_126, %c0_127] : memref<2x25x512xf32, #tpu.memory_space<vmem>>, vector<1x1x512xf32>
    %257 = vector.shape_cast %256 : vector<1x1x512xf32> to vector<1x512xf32>
    %258 = vector.broadcast %257 : vector<1x512xf32> to vector<16x512xf32>
    %259 = arith.mulf %250, %258 : vector<16x512xf32>
    %260 = arith.addf %249, %259 : vector<16x512xf32>
    %261 = vector.extract_strided_slice %238 {offsets = [2, 0], sizes = [16, 512], strides = [1, 1]} : vector<20x512xf32> to vector<16x512xf32>
    %c0_128 = arith.constant 0 : index
    %c14 = arith.constant 14 : index
    %c0_129 = arith.constant 0 : index
    %262 = vector.load %arg2[%c0_128, %c14, %c0_129] : memref<2x25x512xf32, #tpu.memory_space<vmem>>, vector<1x1x512xf32>
    %263 = vector.shape_cast %262 : vector<1x1x512xf32> to vector<1x512xf32>
    %264 = vector.broadcast %263 : vector<1x512xf32> to vector<16x512xf32>
    %265 = arith.mulf %261, %264 : vector<16x512xf32>
    %266 = arith.addf %255, %265 : vector<16x512xf32>
    %c1_130 = arith.constant 1 : index
    %c14_131 = arith.constant 14 : index
    %c0_132 = arith.constant 0 : index
    %267 = vector.load %arg2[%c1_130, %c14_131, %c0_132] : memref<2x25x512xf32, #tpu.memory_space<vmem>>, vector<1x1x512xf32>
    %268 = vector.shape_cast %267 : vector<1x1x512xf32> to vector<1x512xf32>
    %269 = vector.broadcast %268 : vector<1x512xf32> to vector<16x512xf32>
    %270 = arith.mulf %261, %269 : vector<16x512xf32>
    %271 = arith.addf %260, %270 : vector<16x512xf32>
    %272 = vector.extract_strided_slice %238 {offsets = [3, 0], sizes = [16, 512], strides = [1, 1]} : vector<20x512xf32> to vector<16x512xf32>
    %c0_133 = arith.constant 0 : index
    %c19 = arith.constant 19 : index
    %c0_134 = arith.constant 0 : index
    %273 = vector.load %arg2[%c0_133, %c19, %c0_134] : memref<2x25x512xf32, #tpu.memory_space<vmem>>, vector<1x1x512xf32>
    %274 = vector.shape_cast %273 : vector<1x1x512xf32> to vector<1x512xf32>
    %275 = vector.broadcast %274 : vector<1x512xf32> to vector<16x512xf32>
    %276 = arith.mulf %272, %275 : vector<16x512xf32>
    %277 = arith.addf %266, %276 : vector<16x512xf32>
    %c1_135 = arith.constant 1 : index
    %c19_136 = arith.constant 19 : index
    %c0_137 = arith.constant 0 : index
    %278 = vector.load %arg2[%c1_135, %c19_136, %c0_137] : memref<2x25x512xf32, #tpu.memory_space<vmem>>, vector<1x1x512xf32>
    %279 = vector.shape_cast %278 : vector<1x1x512xf32> to vector<1x512xf32>
    %280 = vector.broadcast %279 : vector<1x512xf32> to vector<16x512xf32>
    %281 = arith.mulf %272, %280 : vector<16x512xf32>
    %282 = arith.addf %271, %281 : vector<16x512xf32>
    %283 = vector.extract_strided_slice %238 {offsets = [4, 0], sizes = [16, 512], strides = [1, 1]} : vector<20x512xf32> to vector<16x512xf32>
    %c0_138 = arith.constant 0 : index
    %c24 = arith.constant 24 : index
    %c0_139 = arith.constant 0 : index
    %284 = vector.load %arg2[%c0_138, %c24, %c0_139] : memref<2x25x512xf32, #tpu.memory_space<vmem>>, vector<1x1x512xf32>
    %285 = vector.shape_cast %284 : vector<1x1x512xf32> to vector<1x512xf32>
    %286 = vector.broadcast %285 : vector<1x512xf32> to vector<16x512xf32>
    %287 = arith.mulf %283, %286 : vector<16x512xf32>
    %288 = arith.addf %277, %287 : vector<16x512xf32>
    %c1_140 = arith.constant 1 : index
    %c24_141 = arith.constant 24 : index
    %c0_142 = arith.constant 0 : index
    %289 = vector.load %arg2[%c1_140, %c24_141, %c0_142] : memref<2x25x512xf32, #tpu.memory_space<vmem>>, vector<1x1x512xf32>
    %290 = vector.shape_cast %289 : vector<1x1x512xf32> to vector<1x512xf32>
    %291 = vector.broadcast %290 : vector<1x512xf32> to vector<16x512xf32>
    %292 = arith.mulf %283, %291 : vector<16x512xf32>
    %293 = arith.addf %282, %292 : vector<16x512xf32>
    %c0_143 = arith.constant 0 : index
    %c0_144 = arith.constant 0 : index
    %294 = vector.load %arg3[%c0_143, %c0_144] : memref<2x512xf32, #tpu.memory_space<vmem>>, vector<1x512xf32>
    %295 = vector.broadcast %294 : vector<1x512xf32> to vector<16x512xf32>
    %296 = arith.addf %288, %295 : vector<16x512xf32>
    %cst_145 = arith.constant 0.000000e+00 : f32
    %297 = vector.broadcast %cst_145 : f32 to vector<16x512xf32>
    %298 = arith.maximumf %296, %297 : vector<16x512xf32>
    %c1_146 = arith.constant 1 : index
    %c0_147 = arith.constant 0 : index
    %299 = vector.load %arg3[%c1_146, %c0_147] : memref<2x512xf32, #tpu.memory_space<vmem>>, vector<1x512xf32>
    %300 = vector.broadcast %299 : vector<1x512xf32> to vector<16x512xf32>
    %301 = arith.addf %293, %300 : vector<16x512xf32>
    %cst_148 = arith.constant 0.000000e+00 : f32
    %302 = vector.broadcast %cst_148 : f32 to vector<16x512xf32>
    %303 = arith.maximumf %301, %302 : vector<16x512xf32>
    %304 = tpu.concatenate %298, %303 in 1 : vector<16x512xf32>, vector<16x512xf32> -> vector<16x1024xf32>
    %305 = arith.truncf %304 : vector<16x1024xf32> to vector<16x1024xbf16>
    %c0_149 = arith.constant 0 : index
    %c0_150 = arith.constant 0 : index
    %306 = vector.load %arg4[%c0_149, %c0_150] : memref<1024x1024xbf16, #tpu.memory_space<vmem>>, vector<1024x1024xbf16>
    %cst_151 = arith.constant dense<0.000000e+00> : vector<16x1024xf32>
    %307 = tpu.matmul %305, %306, %cst_151 {dimension_numbers = #tpu.dot_dimension_numbers<[1], [0], [0], [1], [0, 0, 1, 1], [], []>} : vector<16x1024xbf16>, vector<1024x1024xbf16>, vector<16x1024xf32> -> vector<16x1024xf32>
    %c0_152 = arith.constant 0 : index
    %c0_153 = arith.constant 0 : index
    %308 = vector.load %arg5[%c0_152, %c0_153] : memref<1x1024xf32, #tpu.memory_space<vmem>>, vector<1x1024xf32>
    %309 = vector.broadcast %308 : vector<1x1024xf32> to vector<16x1024xf32>
    %310 = arith.addf %307, %309 : vector<16x1024xf32>
    %cst_154 = arith.constant 0.000000e+00 : f32
    %311 = vector.broadcast %cst_154 : f32 to vector<16x1024xf32>
    %312 = arith.maximumf %310, %311 : vector<16x1024xf32>
    %313 = arith.truncf %312 : vector<16x1024xf32> to vector<16x1024xbf16>
    %c0_155 = arith.constant 0 : index
    %c0_156 = arith.constant 0 : index
    %314 = vector.load %arg6[%c0_155, %c0_156] : memref<1024x48xbf16, #tpu.memory_space<vmem>>, vector<1024x48xbf16>
    %cst_157 = arith.constant dense<0.000000e+00> : vector<16x48xf32>
    %315 = tpu.matmul %313, %314, %cst_157 {dimension_numbers = #tpu.dot_dimension_numbers<[1], [0], [0], [1], [0, 0, 1, 1], [], []>} : vector<16x1024xbf16>, vector<1024x48xbf16>, vector<16x48xf32> -> vector<16x48xf32>
    %c0_158 = arith.constant 0 : index
    %c0_159 = arith.constant 0 : index
    %316 = vector.load %arg7[%c0_158, %c0_159] : memref<1x48xf32, #tpu.memory_space<vmem>>, vector<1x48xf32>
    %317 = vector.broadcast %316 : vector<1x48xf32> to vector<16x48xf32>
    %318 = arith.addf %315, %317 : vector<16x48xf32>
    %c0_160 = arith.constant 0 : index
    %c0_161 = arith.constant 0 : index
    %c0_162 = arith.constant 0 : index
    %319 = vector.load %arg8[%c0_160, %c0_161, %c0_162] : memref<1x16x48xf32, #tpu.memory_space<vmem>>, vector<1x16x48xf32>
    %320 = vector.shape_cast %319 : vector<1x16x48xf32> to vector<16x48xf32>
    %321 = vector.shape_cast %318 : vector<16x48xf32> to vector<1x16x48xf32>
    tpu.vector_store %arg8[%c0_160, %c0_161, %c0_162], %321 {strides = array<i32>} : memref<1x16x48xf32, #tpu.memory_space<vmem>>, vector<1x16x48xf32>,
    return
  }
  func.func @transform_0(%arg0: i32) -> (i32, i32, i32) {
    %c0_i32 = arith.constant 0 : i32
    %c0_i32_0 = arith.constant 0 : i32
    %c0_i32_1 = arith.constant 0 : i32
    return %arg0, %c0_i32, %c0_i32_0 : i32, i32, i32
  }
  func.func @transform_1(%arg0: i32) -> (i32, i32, i32) {
    %c0_i32 = arith.constant 0 : i32
    %c0_i32_0 = arith.constant 0 : i32
    %c0_i32_1 = arith.constant 0 : i32
    %c0_i32_2 = arith.constant 0 : i32
    return %c0_i32, %c0_i32_0, %c0_i32_1 : i32, i32, i32
  }
  func.func @transform_2(%arg0: i32) -> (i32, i32) {
    %c0_i32 = arith.constant 0 : i32
    %c0_i32_0 = arith.constant 0 : i32
    %c0_i32_1 = arith.constant 0 : i32
    return %c0_i32, %c0_i32_0 : i32, i32
  }
  func.func @transform_3(%arg0: i32) -> (i32, i32) {
    %c0_i32 = arith.constant 0 : i32
    %c0_i32_0 = arith.constant 0 : i32
    %c0_i32_1 = arith.constant 0 : i32
    return %c0_i32, %c0_i32_0 : i32, i32
  }
  func.func @transform_4(%arg0: i32) -> (i32, i32) {
    %c0_i32 = arith.constant 0 : i32
    %c0_i32_0 = arith.constant 0 : i32
    %c0_i32_1 = arith.constant 0 : i32
    return %c0_i32, %c0_i32_0 : i32, i32
  }
  func.func @transform_5(%arg0: i32) -> (i32, i32) {
    %c0_i32 = arith.constant 0 : i32
    %c0_i32_0 = arith.constant 0 : i32
    %c0_i32_1 = arith.constant 0 : i32
    return %c0_i32, %c0_i32_0 : i32, i32
  }
  func.func @transform_6(%arg0: i32) -> (i32, i32) {
    %c0_i32 = arith.constant 0 : i32
    %c0_i32_0 = arith.constant 0 : i32
    %c0_i32_1 = arith.constant 0 : i32
    return %c0_i32, %c0_i32_0 : i32, i32
  }
  func.func @transform_7(%arg0: i32) -> (i32, i32, i32) {
    %c0_i32 = arith.constant 0 : i32
    %c0_i32_0 = arith.constant 0 : i32
    %c0_i32_1 = arith.constant 0 : i32
    return %arg0, %c0_i32, %c0_i32_0 : i32, i32, i32
  }
}

</mosaic_0001>

<llo_original>
// kernel: single_panoptic_deeplab_head.1
$region0: #{single_panoptic_deeplab_head.1}
  #allocation0 [shape = 'u32[]', space=smem, size = 0x4, offset = 0x4, fixed_abs, tag = 'smem constant byte address 0x4 - core index']
  #allocation1 [shape = 'u32[144,128]{1,0:T(1,128)}', space=vmem, size = 0x12000, scoped, tag = 'internal scratch']
  #allocation2 [shape = 'f32[20,640]{1,0:T(8,128)}', space=vmem, size = 0xf000, scoped, tag = 'scratch operand']
  %s0 = inlined_call_operand.vmem [shape: f32[2,16,512], index: 0, kind: input, shape index: {}]
  %s1 = inlined_call_operand.vmem [shape: f32[2,25,512], index: 1, kind: input, shape index: {}]
  %s2 = inlined_call_operand.hbm [shape: f32[2,512], index: 2, kind: input, shape index: {}]
  %s3 = inlined_call_operand.hbm [shape: bf16[1024,1024], index: 3, kind: input, shape index: {}]
  %s4 = inlined_call_operand.hbm [shape: f32[1,1024], index: 4, kind: input, shape index: {}]
  %s5 = inlined_call_operand.vmem [shape: bf16[1024,48], index: 5, kind: input, shape index: {}]
  %s6 = inlined_call_operand.hbm [shape: f32[1,48], index: 6, kind: input, shape index: {}]
  %s7 = inlined_call_operand.vmem [shape: f32[2,16,48], index: 7, kind: output, shape index: {}]
  %s8 = sld [smem:[#allocation0]]
  $region77: #{single_panoptic_deeplab_head.1} parent=0
    _
  %s10 = ssub.s32 1, %s8
  %s11 = scalar_select 0, %s10, %s8
  $region1: #{single_panoptic_deeplab_head.1} parent=0
    #allocation3 [shape = 'u8[4096]{0}', space=vmem, size = 0x1000, scoped, tag = 'input window, operand 2, single buffered']
    #allocation4 [shape = 's32[2]{0}', space=sflag, size = 0x8, scoped, tag = 'scoped memory for single_panoptic_deeplab_head.1']
    #allocation5 [shape = 'u8[2097152]{0}', space=vmem, size = 0x200000, scoped, tag = 'input window, operand 3, single buffered']
    #allocation6 [shape = 's32[1]{0}', space=sflag, size = 0x4, scoped, tag = 'scoped memory for single_panoptic_deeplab_head.1']
    #allocation7 [shape = 'u8[4096]{0}', space=vmem, size = 0x1000, scoped, tag = 'input window, operand 4, single buffered']
    #allocation8 [shape = 'u8[512]{0}', space=vmem, size = 0x400, scoped, tag = 'input window, operand 6, single buffered']
    #allocation9 [shape = 's32[1]{0}', space=sflag, size = 0x4, scoped, tag = 'scoped memory for single_panoptic_deeplab_head.1']
    %12 = vsyncpa [#allocation4], 0
    %13 = vsyncpa [#allocation6], 0
    %14 = vsyncpa [#allocation9], 0
    loop: start=0, step=1, limit=4
    $region2: #{single_panoptic_deeplab_head.1} parent=1 // loop_pre_header
      _
    $region3: #{single_panoptic_deeplab_head.1} parent=1 // loop_header
      %s16 = sphi 0, %s20
      %p17 = scmp.ge.s32.totalorder %s16, 4
      %s26 = sphi 0, %s28
      %s29 = sphi 0, %s26
      %s30 = sphi 0, %s29
      %s46 = sphi 0, %s30
      %s50 = sphi 0, %s50
      %s52 = sphi 0, %s50
      %s53 = sphi 0, %s52
      %s67 = sphi 0, %s53
      %s71 = sphi 0, %s71
      %s73 = sphi 0, %s71
      %s74 = sphi 0, %s73
      %s88 = sphi 0, %s74
      %s92 = sphi 0, %s92
      %s94 = sphi 0, %s92
      %s95 = sphi 0, %s94
      %s109 = sphi 0, %s95
      %s113 = sphi 0, %s113
      %s115 = sphi 0, %s113
      %s116 = sphi 0, %s115
      %s130 = sphi 0, %s116
      %s134 = sphi 0, %s134
      %s136 = sphi 0, %s134
      %s137 = sphi 0, %s136
      %s151 = sphi 0, %s137
      %s155 = sphi 0, %s155
      %s157 = sphi 0, %s155
      %s158 = sphi 0, %s157
      %s172 = sphi 0, %s158
      %s178 = sphi 0, %s180
      %s181 = sphi 0, %s178
      %s182 = sphi 0, %s181
      %s198 = sphi 0, %s182
    $region4: #{single_panoptic_deeplab_head.1} parent=1 // loop_header_branch
      %19 = sbr.rel (%p17) target = $region8
    $region5: #{single_panoptic_deeplab_head.1} parent=1 // loop_body
      %s21 = ssub.s32 %s16, 1
      %s22 = ssub.s32 %s16, 2
      %s23 = sadd.s32 %s16, 1
      %s24 = ssub.s32 %s16, %s23
      %p25 = scmp.eq.s32.totalorder %s24, 0
      %s27 = sadd.s32 %s26, 1
      %s28 = scalar_select %p25, %s26, %s27
      %p31 = pneg %p25
      %p32 = scmp.eq.s32.totalorder %s16, 1
      %p33 = por %p31, %p32
      %p34 = scmp.ne.s32.totalorder %s26, %s29
      %p35 = scmp.eq.s32.totalorder %s16, 0
      %p36 = por %p34, %p35
      %p37 = scmp.ne.s32.totalorder %s26, %s29
      %p38 = scmp.eq.s32.totalorder %s21, 1
      %p39 = por %p37, %p38
      %p40 = scmp.ne.s32.totalorder %s29, %s30
      %p41 = scmp.eq.s32.totalorder %s21, 0
      %p42 = por %p40, %p41
      %p43 = scmp.ne.s32.totalorder %s29, %s30
      %p44 = scmp.eq.s32.totalorder %s22, 1
      %p45 = por %p43, %p44
      %p47 = scmp.ne.s32.totalorder %s30, %s46
      %p48 = scmp.eq.s32.totalorder %s22, 0
      %p49 = por %p47, %p48
      %s51 = sadd.s32 %s50, 1
      %p54 = scmp.eq.s32.totalorder %s16, 1
      %p55 = scmp.ne.s32.totalorder %s50, %s52
      %p56 = scmp.eq.s32.totalorder %s16, 0
      %p57 = por %p55, %p56
      %p58 = scmp.ne.s32.totalorder %s50, %s52
      %p59 = scmp.eq.s32.totalorder %s21, 1
      %p60 = por %p58, %p59
      %p61 = scmp.ne.s32.totalorder %s52, %s53
      %p62 = scmp.eq.s32.totalorder %s21, 0
      %p63 = por %p61, %p62
      %p64 = scmp.ne.s32.totalorder %s52, %s53
      %p65 = scmp.eq.s32.totalorder %s22, 1
      %p66 = por %p64, %p65
      %p68 = scmp.ne.s32.totalorder %s53, %s67
      %p69 = scmp.eq.s32.totalorder %s22, 0
      %p70 = por %p68, %p69
      %s72 = sadd.s32 %s71, 1
      %p75 = scmp.eq.s32.totalorder %s16, 1
      %p76 = scmp.ne.s32.totalorder %s71, %s73
      %p77 = scmp.eq.s32.totalorder %s16, 0
      %p78 = por %p76, %p77
      %p79 = scmp.ne.s32.totalorder %s71, %s73
      %p80 = scmp.eq.s32.totalorder %s21, 1
      %p81 = por %p79, %p80
      %p82 = scmp.ne.s32.totalorder %s73, %s74
      %p83 = scmp.eq.s32.totalorder %s21, 0
      %p84 = por %p82, %p83
      %p85 = scmp.ne.s32.totalorder %s73, %s74
      %p86 = scmp.eq.s32.totalorder %s22, 1
      %p87 = por %p85, %p86
      %p89 = scmp.ne.s32.totalorder %s74, %s88
      %p90 = scmp.eq.s32.totalorder %s22, 0
      %p91 = por %p89, %p90
      %s93 = sadd.s32 %s92, 1
      %p96 = scmp.eq.s32.totalorder %s16, 1
      %p97 = scmp.ne.s32.totalorder %s92, %s94
      %p98 = scmp.eq.s32.totalorder %s16, 0
      %p99 = por %p97, %p98
      %p100 = scmp.ne.s32.totalorder %s92, %s94
      %p101 = scmp.eq.s32.totalorder %s21, 1
      %p102 = por %p100, %p101
      %p103 = scmp.ne.s32.totalorder %s94, %s95
      %p104 = scmp.eq.s32.totalorder %s21, 0
      %p105 = por %p103, %p104
      %p106 = scmp.ne.s32.totalorder %s94, %s95
      %p107 = scmp.eq.s32.totalorder %s22, 1
      %p108 = por %p106, %p107
      %p110 = scmp.ne.s32.totalorder %s95, %s109
      %p111 = scmp.eq.s32.totalorder %s22, 0
      %p112 = por %p110, %p111
      %s114 = sadd.s32 %s113, 1
      %p117 = scmp.eq.s32.totalorder %s16, 1
      %p118 = scmp.ne.s32.totalorder %s113, %s115
      %p119 = scmp.eq.s32.totalorder %s16, 0
      %p120 = por %p118, %p119
      %p121 = scmp.ne.s32.totalorder %s113, %s115
      %p122 = scmp.eq.s32.totalorder %s21, 1
      %p123 = por %p121, %p122
      %p124 = scmp.ne.s32.totalorder %s115, %s116
      %p125 = scmp.eq.s32.totalorder %s21, 0
      %p126 = por %p124, %p125
      %p127 = scmp.ne.s32.totalorder %s115, %s116
      %p128 = scmp.eq.s32.totalorder %s22, 1
      %p129 = por %p127, %p128
      %p131 = scmp.ne.s32.totalorder %s116, %s130
      %p132 = scmp.eq.s32.totalorder %s22, 0
      %p133 = por %p131, %p132
      %s135 = sadd.s32 %s134, 1
      %p138 = scmp.eq.s32.totalorder %s16, 1
      %p139 = scmp.ne.s32.totalorder %s134, %s136
      %p140 = scmp.eq.s32.totalorder %s16, 0
      %p141 = por %p139, %p140
      %p142 = scmp.ne.s32.totalorder %s134, %s136
      %p143 = scmp.eq.s32.totalorder %s21, 1
      %p144 = por %p142, %p143
      %p145 = scmp.ne.s32.totalorder %s136, %s137
      %p146 = scmp.eq.s32.totalorder %s21, 0
      %p147 = por %p145, %p146
      %p148 = scmp.ne.s32.totalorder %s136, %s137
      %p149 = scmp.eq.s32.totalorder %s22, 1
      %p150 = por %p148, %p149
      %p152 = scmp.ne.s32.totalorder %s137, %s151
      %p153 = scmp.eq.s32.totalorder %s22, 0
      %p154 = por %p152, %p153
      %s156 = sadd.s32 %s155, 1
      %p159 = scmp.eq.s32.totalorder %s16, 1
      %p160 = scmp.ne.s32.totalorder %s155, %s157
      %p161 = scmp.eq.s32.totalorder %s16, 0
      %p162 = por %p160, %p161
      %p163 = scmp.ne.s32.totalorder %s155, %s157
      %p164 = scmp.eq.s32.totalorder %s21, 1
      %p165 = por %p163, %p164
      %p166 = scmp.ne.s32.totalorder %s157, %s158
      %p167 = scmp.eq.s32.totalorder %s21, 0
      %p168 = por %p166, %p167
      %p169 = scmp.ne.s32.totalorder %s157, %s158
      %p170 = scmp.eq.s32.totalorder %s22, 1
      %p171 = por %p169, %p170
      %p173 = scmp.ne.s32.totalorder %s158, %s172
      %p174 = scmp.eq.s32.totalorder %s22, 0
      %p175 = por %p173, %p174
      %s176 = ssub.s32 %s16, %s23
      %p177 = scmp.eq.s32.totalorder %s176, 0
      %s179 = sadd.s32 %s178, 1
      %s180 = scalar_select %p177, %s178, %s179
      %p183 = pneg %p177
      %p184 = scmp.eq.s32.totalorder %s16, 1
      %p185 = por %p183, %p184
      %p186 = scmp.ne.s32.totalorder %s178, %s181
      %p187 = scmp.eq.s32.totalorder %s16, 0
      %p188 = por %p186, %p187
      %p189 = scmp.ne.s32.totalorder %s178, %s181
      %p190 = scmp.eq.s32.totalorder %s21, 1
      %p191 = por %p189, %p190
      %p192 = scmp.ne.s32.totalorder %s181, %s182
      %p193 = scmp.eq.s32.totalorder %s21, 0
      %p194 = por %p192, %p193
      %p195 = scmp.ne.s32.totalorder %s181, %s182
      %p196 = scmp.eq.s32.totalorder %s22, 1
      %p197 = por %p195, %p196
      %p199 = scmp.ne.s32.totalorder %s182, %s198
      %p200 = scmp.eq.s32.totalorder %s22, 0
      %p201 = por %p199, %p200
      %p202 = scmp.le.s32.totalorder 1, %s16
      %p203 = scmp.lt.s32.totalorder %s16, 3
      %p204 = pnand %p202, %p203
      %p205 = pneg %p204
      // Predicated region
      $region9: #{single_panoptic_deeplab_head.1} parent=5 // pred_check
        _
      $region10: #{single_panoptic_deeplab_head.1} parent=5 // pred_check_branch
        %207 = sbr.rel (%p204) target = $region12
      $region11: #{single_panoptic_deeplab_head.1} parent=5 // pred_region
        %s208 = ssub.s32 %s16, 1
        // Predicated region
        $region13: #{single_panoptic_deeplab_head.1} parent=11 // pred_check
          %p209 = pneg %p63
        $region14: #{single_panoptic_deeplab_head.1} parent=11 // pred_check_branch
          %211 = sbr.rel (%p209) target = $region16
        $region15: #{single_panoptic_deeplab_head.1} parent=11 // pred_region
          _
        $region16: #{single_panoptic_deeplab_head.1} parent=11 // pred_fallthru
          _
        // Predicated region
        $region17: #{single_panoptic_deeplab_head.1} parent=11 // pred_check
          %p212 = pneg %p84
        $region18: #{single_panoptic_deeplab_head.1} parent=11 // pred_check_branch
          %214 = sbr.rel (%p212) target = $region20
        $region19: #{single_panoptic_deeplab_head.1} parent=11 // pred_region
          %s216 = ssub.s32 128, 128
          %217 = vsyncadd [#allocation4], %s216
          %s219 = sshll.u32 [#allocation3], 4
          %s220 = int_to_ptr.vmem [resolvable:$true] %s219
          %222 = dma.hbm_to_vmem [thread:$0]  %s2, 128, %s220, [#allocation4]
        $region20: #{single_panoptic_deeplab_head.1} parent=11 // pred_fallthru
          _
        // Predicated region
        $region21: #{single_panoptic_deeplab_head.1} parent=11 // pred_check
          %p223 = pneg %p105
        $region22: #{single_panoptic_deeplab_head.1} parent=11 // pred_check_branch
          %225 = sbr.rel (%p223) target = $region24
        $region23: #{single_panoptic_deeplab_head.1} parent=11 // pred_region
          %s227 = ssub.s32 65536, 65536
          %228 = vsyncadd [#allocation6], %s227
          %s229 = sshll.u32 [#allocation5], 4
          %s230 = int_to_ptr.vmem [resolvable:$true] %s229
          %235 = dma.hbm_to_vmem [thread:$0]  %s3, 65536, %s230, [#allocation6], 512, 512, 32
        $region24: #{single_panoptic_deeplab_head.1} parent=11 // pred_fallthru
          _
        // Predicated region
        $region25: #{single_panoptic_deeplab_head.1} parent=11 // pred_check
          %p236 = pneg %p126
        $region26: #{single_panoptic_deeplab_head.1} parent=11 // pred_check_branch
          %238 = sbr.rel (%p236) target = $region28
        $region27: #{single_panoptic_deeplab_head.1} parent=11 // pred_region
          %s240 = ssub.s32 128, 128
          %241 = vsyncadd [#allocation6], %s240
          %s243 = sshll.u32 [#allocation7], 4
          %s244 = int_to_ptr.vmem [resolvable:$true] %s243
          %246 = dma.hbm_to_vmem [thread:$0]  %s4, 128, %s244, [#allocation6]
        $region28: #{single_panoptic_deeplab_head.1} parent=11 // pred_fallthru
          _
        // Predicated region
        $region29: #{single_panoptic_deeplab_head.1} parent=11 // pred_check
          %p247 = pneg %p147
        $region30: #{single_panoptic_deeplab_head.1} parent=11 // pred_check_branch
          %249 = sbr.rel (%p247) target = $region32
        $region31: #{single_panoptic_deeplab_head.1} parent=11 // pred_region
          _
        $region32: #{single_panoptic_deeplab_head.1} parent=11 // pred_fallthru
          _
        // Predicated region
        $region33: #{single_panoptic_deeplab_head.1} parent=11 // pred_check
          %p250 = pneg %p168
        $region34: #{single_panoptic_deeplab_head.1} parent=11 // pred_check_branch
          %252 = sbr.rel (%p250) target = $region36
        $region35: #{single_panoptic_deeplab_head.1} parent=11 // pred_region
          %s254 = ssub.s32 16, 16
          %255 = vsyncadd [#allocation9], %s254
          %s257 = sshll.u32 [#allocation8], 4
          %s258 = int_to_ptr.vmem [resolvable:$true] %s257
          %260 = dma.hbm_to_vmem [thread:$0]  %s6, 16, %s258, [#allocation9]
        $region36: #{single_panoptic_deeplab_head.1} parent=11 // pred_fallthru
          _
      $region12: #{single_panoptic_deeplab_head.1} parent=5 // pred_fallthru
        _
      %p261 = scmp.lt.s32.totalorder %s16, 2
      // Predicated region
      $region37: #{single_panoptic_deeplab_head.1} parent=5 // pred_check
        %p262 = pneg %p261
      $region38: #{single_panoptic_deeplab_head.1} parent=5 // pred_check_branch
        %264 = sbr.rel (%p262) target = $region40
      $region39: #{single_panoptic_deeplab_head.1} parent=5 // pred_region
        // Predicated region
        $region41: #{single_panoptic_deeplab_head.1} parent=39 // pred_check
          %p265 = pneg %p36
        $region42: #{single_panoptic_deeplab_head.1} parent=39 // pred_check_branch
          %267 = sbr.rel (%p265) target = $region44
        $region43: #{single_panoptic_deeplab_head.1} parent=39 // pred_region
          %p268 = scmp.lt.s32.totalorder %s16, 1
          %s269 = scalar_select %p268, %s16, 1
          %s270 = smul.addr %s269, 8
          %s271 = smul.addr %s270, 8
          %s272 = scalar_lea.vmem %s0, %s271
        $region44: #{single_panoptic_deeplab_head.1} parent=39 // pred_fallthru
          _
      $region40: #{single_panoptic_deeplab_head.1} parent=5 // pred_fallthru
        _
      %p273 = scmp.le.s32.totalorder 1, %s16
      %p274 = scmp.lt.s32.totalorder %s16, 3
      %p275 = pnand %p273, %p274
      %p276 = pneg %p275
      // Predicated region
      $region45: #{single_panoptic_deeplab_head.1} parent=5 // pred_check
        _
      $region46: #{single_panoptic_deeplab_head.1} parent=5 // pred_check_branch
        %278 = sbr.rel (%p275) target = $region48
      $region47: #{single_panoptic_deeplab_head.1} parent=5 // pred_region
        %s279 = ssub.s32 %s16, 1
        // Predicated region
        $region49: #{single_panoptic_deeplab_head.1} parent=47 // pred_check
          %p280 = pneg %p84
        $region50: #{single_panoptic_deeplab_head.1} parent=47 // pred_check_branch
          %282 = sbr.rel (%p280) target = $region52
        $region51: #{single_panoptic_deeplab_head.1} parent=47 // pred_region
          %283 = dma.done [#allocation4], 128
        $region52: #{single_panoptic_deeplab_head.1} parent=47 // pred_fallthru
          _
        // Predicated region
        $region53: #{single_panoptic_deeplab_head.1} parent=47 // pred_check
          %p284 = pneg %p105
        $region54: #{single_panoptic_deeplab_head.1} parent=47 // pred_check_branch
          %286 = sbr.rel (%p284) target = $region56
        $region55: #{single_panoptic_deeplab_head.1} parent=47 // pred_region
          %287 = dma.done [#allocation6], 65536
        $region56: #{single_panoptic_deeplab_head.1} parent=47 // pred_fallthru
          _
        // Predicated region
        $region57: #{single_panoptic_deeplab_head.1} parent=47 // pred_check
          %p288 = pneg %p126
        $region58: #{single_panoptic_deeplab_head.1} parent=47 // pred_check_branch
          %290 = sbr.rel (%p288) target = $region60
        $region59: #{single_panoptic_deeplab_head.1} parent=47 // pred_region
          %291 = dma.done [#allocation6], 128
        $region60: #{single_panoptic_deeplab_head.1} parent=47 // pred_fallthru
          _
        // Predicated region
        $region61: #{single_panoptic_deeplab_head.1} parent=47 // pred_check
          %p292 = pneg %p168
        $region62: #{single_panoptic_deeplab_head.1} parent=47 // pred_check_branch
          %294 = sbr.rel (%p292) target = $region64
        $region63: #{single_panoptic_deeplab_head.1} parent=47 // pred_region
          %295 = dma.done [#allocation9], 16
        $region64: #{single_panoptic_deeplab_head.1} parent=47 // pred_fallthru
          _
        %p296 = scmp.lt.s32.totalorder %s21, 1
        %s297 = scalar_select %p296, %s21, 1
        %s298 = smul.addr %s297, 8
        %s299 = smul.addr %s298, 8
        %s300 = scalar_lea.vmem %s0, %s299
        %p301 = pneg %p42
        %p302 = pneg %p39
        %p303 = pneg %p63
        %p304 = pneg %p60
        %p305 = pneg %p84
        %p306 = pneg %p81
        %p307 = pneg %p105
        %p308 = pneg %p102
        %p309 = pneg %p126
        %p310 = pneg %p123
        %p311 = pneg %p147
        %p312 = pneg %p144
        %p313 = pneg %p168
        %p314 = pneg %p165
        %p315 = pneg %p194
        %p316 = pneg %p191
        %p317 = scmp.lt.s32.totalorder %s21, 1
        %s318 = scalar_select %p317, %s21, 1
        %s319 = smul.addr %s318, 2
        %s320 = smul.addr %s319, 8
        %s321 = scalar_lea.vmem %s7, %s320
        %p322 = scmp.lt.s32.totalorder %s21, 1
        %s323 = scalar_select %p322, %s21, 1
        %s324 = smul.addr %s323, 8
        %s325 = smul.addr %s324, 8
        %s326 = scalar_lea.vmem %s0, %s325
        %p327 = scmp.lt.s32.totalorder %s21, 1
        %s328 = scalar_select %p327, %s21, 1
        %s329 = smul.addr %s328, 2
        %s330 = smul.addr %s329, 8
        %s331 = scalar_lea.vmem %s7, %s330
        %333 = vst [vmem:[#allocation2] sm:$0x3] 0.0
        %334 = vst [vmem:[#allocation2 + $0x8] sm:$0x3] 0.0
        %335 = vst [vmem:[#allocation2 + $0x10] sm:$0x3] 0.0
        %336 = vst [vmem:[#allocation2 + $0x18] sm:$0x3] 0.0
        %337 = vst [vmem:[#allocation2 + $0x20] sm:$0x3] 0.0
        %338 = vst [vmem:[#allocation2 + $0x50] sm:$0xc] 0.0
        %339 = vst [vmem:[#allocation2 + $0x58] sm:$0xc] 0.0
        %340 = vst [vmem:[#allocation2 + $0x60] sm:$0xc] 0.0
        %341 = vst [vmem:[#allocation2 + $0x68] sm:$0xc] 0.0
        %342 = vst [vmem:[#allocation2 + $0x70] sm:$0xc] 0.0
        %vm343 = vcmask 523266
        %344 = vst.msk [vmem:[#allocation2] sm:$0xfc] %vm343, 0.0
        %vm345 = vcmask 523264
        %346 = vst.msk [vmem:[#allocation2 + $0x28] sm:$0xff] %vm345, 0.0
        %vm347 = vcmask 517120
        %348 = vst.msk [vmem:[#allocation2 + $0x50] sm:$0x3] %vm347, 0.0
        %vm349 = vcmask 1048066
        %350 = vst.msk [vmem:[#allocation2 + $0x20] sm:$0xfc] %vm349, 0.0
        %vm351 = vcmask 1048064
        %352 = vst.msk [vmem:[#allocation2 + $0x48] sm:$0xff] %vm351, 0.0
        %vm353 = vcmask 1041920
        %354 = vst.msk [vmem:[#allocation2 + $0x70] sm:$0x3] %vm353, 0.0
        %v355 = vld [vmem:[%s326] sm:$0xff]
        %v356 = vld [vmem:[%s326 + $0x8] sm:$0xff]
        %v357 = vld [vmem:[%s326 + $0x10] sm:$0xff]
        %v358 = vld [vmem:[%s326 + $0x18] sm:$0xff]
        %v359 = vld [vmem:[%s326 + $0x20] sm:$0xff]
        %v360 = vld [vmem:[%s326 + $0x28] sm:$0xff]
        %v361 = vld [vmem:[%s326 + $0x30] sm:$0xff]
        %v362 = vld [vmem:[%s326 + $0x38] sm:$0xff]
        %vm371 = vcmask 1041408
        %v372 = vrot.slane %v355, 6
        %v373 = vrot.slane %v356, 6
        %v374 = vrot.slane %v357, 6
        %v375 = vrot.slane %v358, 6
        %v376 = vrot.slane %v359, 6
        %v377 = vsel %vm371, %v372, %v376
        %v378 = vrot.slane %v360, 6
        %v379 = vsel %vm371, %v373, %v378
        %v380 = vrot.slane %v361, 6
        %v381 = vsel %vm371, %v374, %v380
        %v382 = vrot.slane %v362, 6
        %v383 = vsel %vm371, %v375, %v382
        %384 = vrot.lane.b32.xlu0 %v372, 64
        %v385 = vpop.permute.xlu0 %384
        %386 = vrot.lane.b32.xlu0 %v373, 64
        %v387 = vpop.permute.xlu0 %386
        %388 = vrot.lane.b32.xlu0 %v374, 64
        %v389 = vpop.permute.xlu0 %388
        %390 = vrot.lane.b32.xlu0 %v375, 64
        %v391 = vpop.permute.xlu0 %390
        %392 = vrot.lane.b32.xlu0 %v377, 64
        %v393 = vpop.permute.xlu0 %392
        %394 = vrot.lane.b32.xlu0 %v379, 64
        %v395 = vpop.permute.xlu0 %394
        %396 = vrot.lane.b32.xlu0 %v381, 64
        %v397 = vpop.permute.xlu0 %396
        %398 = vrot.lane.b32.xlu0 %v383, 64
        %v399 = vpop.permute.xlu0 %398
        %400 = vrot.lane.b32.xlu0 %v376, 64
        %v401 = vpop.permute.xlu0 %400
        %402 = vrot.lane.b32.xlu0 %v378, 64
        %v403 = vpop.permute.xlu0 %402
        %404 = vrot.lane.b32.xlu0 %v380, 64
        %v405 = vpop.permute.xlu0 %404
        %406 = vrot.lane.b32.xlu0 %v382, 64
        %v407 = vpop.permute.xlu0 %406
        %v408 = vsel %vm345, %v385, %v387
        %v409 = vsel %vm345, %v387, %v389
        %v410 = vsel %vm345, %v389, %v391
        %v411 = vsel %vm345, %v393, %v395
        %v412 = vsel %vm345, %v395, %v397
        %v413 = vsel %vm345, %v397, %v399
        %v414 = vsel %vm345, %v401, %v403
        %v415 = vsel %vm345, %v403, %v405
        %v416 = vsel %vm345, %v405, %v407
        %432 = vst.msk [vmem:[#allocation2] sm:$0xfc] %vm349, %v385
        %433 = vst [vmem:[#allocation2 + $0x8] sm:$0xfc] %v408
        %434 = vst [vmem:[#allocation2 + $0x10] sm:$0xfc] %v409
        %435 = vst [vmem:[#allocation2 + $0x18] sm:$0xfc] %v410
        %436 = vst.msk [vmem:[#allocation2 + $0x20] sm:$0xfc] %vm343, %v391
        %437 = vst.msk [vmem:[#allocation2 + $0x28] sm:$0xff] %vm351, %v393
        %438 = vst [vmem:[#allocation2 + $0x30] sm:$0xff] %v411
        %439 = vst [vmem:[#allocation2 + $0x38] sm:$0xff] %v412
        %440 = vst [vmem:[#allocation2 + $0x40] sm:$0xff] %v413
        %441 = vst.msk [vmem:[#allocation2 + $0x48] sm:$0xff] %vm345, %v399
        %442 = vst.msk [vmem:[#allocation2 + $0x50] sm:$0x3] %vm353, %v401
        %443 = vst [vmem:[#allocation2 + $0x58] sm:$0x3] %v414
        %444 = vst [vmem:[#allocation2 + $0x60] sm:$0x3] %v415
        %445 = vst [vmem:[#allocation2 + $0x68] sm:$0x3] %v416
        %446 = vst.msk [vmem:[#allocation2 + $0x70] sm:$0x3] %vm347, %v407
        %v447 = vld [vmem:[#allocation2] sm:$0xff]
        %v448 = vld [vmem:[#allocation2 + $0x8] sm:$0xff]
        %v449 = vld [vmem:[#allocation2 + $0x10] sm:$0xff]
        %v450 = vld [vmem:[#allocation2 + $0x18] sm:$0xff]
        %v451 = vld [vmem:[#allocation2 + $0x20] sm:$0xff]
        %v452 = vld [vmem:[#allocation2 + $0x28] sm:$0xff]
        %v453 = vld [vmem:[#allocation2 + $0x30] sm:$0xff]
        %v454 = vld [vmem:[#allocation2 + $0x38] sm:$0xff]
        %v455 = vld [vmem:[#allocation2 + $0x40] sm:$0xff]
        %v456 = vld [vmem:[#allocation2 + $0x48] sm:$0xff]
        %v457 = vld [vmem:[#allocation2 + $0x50] sm:$0xf]
        %v458 = vld [vmem:[#allocation2 + $0x58] sm:$0xf]
        %v459 = vld [vmem:[#allocation2 + $0x60] sm:$0xf]
        %v460 = vld [vmem:[#allocation2 + $0x68] sm:$0xf]
        %v461 = vld [vmem:[#allocation2 + $0x70] sm:$0xf]
        %v462 = vld [vmem:[%s1] ss:$8 sm:$0xf]
        %v464 = vlaneseq
        %v465 = vshrl.u32 %v464, 7
        %v466 = vsub.s32 0, %v465
        %v467 = vrot.slane %v462, %v466
        %v468 = vlaneseq
        %v469 = vshrl.u32 %v468, 7
        %v470 = vsub.s32 1, %v469
        %v471 = vrot.slane %v462, %v470
        %v472 = vlaneseq
        %v473 = vshrl.u32 %v472, 7
        %v474 = vsub.s32 2, %v473
        %v475 = vrot.slane %v462, %v474
        %v476 = vlaneseq
        %v477 = vshrl.u32 %v476, 7
        %v478 = vsub.s32 3, %v477
        %v479 = vrot.slane %v462, %v478
        %v484 = vmul.f32 %v447, %v467
        %v485 = vmul.f32 %v448, %v471
        %v486 = vmul.f32 %v449, %v475
        %v487 = vmul.f32 %v450, %v479
        %v488 = vmul.f32 %v452, %v467
        %v489 = vmul.f32 %v453, %v471
        %v490 = vmul.f32 %v454, %v475
        %v491 = vmul.f32 %v455, %v479
        %v492 = vadd.f32 %v484, 0.0
        %v493 = vadd.f32 %v485, 0.0
        %v494 = vadd.f32 %v486, 0.0
        %v495 = vadd.f32 %v487, 0.0
        %v496 = vadd.f32 %v488, 0.0
        %v497 = vadd.f32 %v489, 0.0
        %v498 = vadd.f32 %v490, 0.0
        %v499 = vadd.f32 %v491, 0.0
        %s500 = scalar_lea.vmem %s1, 128
        %v501 = vld [vmem:[%s500] ss:$8 sm:$0xf]
        %v503 = vlaneseq
        %v504 = vshrl.u32 %v503, 7
        %v505 = vsub.s32 0, %v504
        %v506 = vrot.slane %v501, %v505
        %v507 = vlaneseq
        %v508 = vshrl.u32 %v507, 7
        %v509 = vsub.s32 1, %v508
        %v510 = vrot.slane %v501, %v509
        %v511 = vlaneseq
        %v512 = vshrl.u32 %v511, 7
        %v513 = vsub.s32 2, %v512
        %v514 = vrot.slane %v501, %v513
        %v515 = vlaneseq
        %v516 = vshrl.u32 %v515, 7
        %v517 = vsub.s32 3, %v516
        %v518 = vrot.slane %v501, %v517
        %v523 = vmul.f32 %v447, %v506
        %v524 = vmul.f32 %v448, %v510
        %v525 = vmul.f32 %v449, %v514
        %v526 = vmul.f32 %v450, %v518
        %v527 = vmul.f32 %v452, %v506
        %v528 = vmul.f32 %v453, %v510
        %v529 = vmul.f32 %v454, %v514
        %v530 = vmul.f32 %v455, %v518
        %v531 = vadd.f32 %v523, 0.0
        %v532 = vadd.f32 %v524, 0.0
        %v533 = vadd.f32 %v525, 0.0
        %v534 = vadd.f32 %v526, 0.0
        %v535 = vadd.f32 %v527, 0.0
        %v536 = vadd.f32 %v528, 0.0
        %v537 = vadd.f32 %v529, 0.0
        %v538 = vadd.f32 %v530, 0.0
        %s539 = scalar_lea.vmem %s1, 5
        %v540 = vld [vmem:[%s539] ss:$8 sm:$0xf]
        %v542 = vlaneseq
        %v543 = vshrl.u32 %v542, 7
        %v544 = vsub.s32 0, %v543
        %v545 = vrot.slane %v540, %v544
        %v546 = vlaneseq
        %v547 = vshrl.u32 %v546, 7
        %v548 = vsub.s32 1, %v547
        %v549 = vrot.slane %v540, %v548
        %v550 = vlaneseq
        %v551 = vshrl.u32 %v550, 7
        %v552 = vsub.s32 2, %v551
        %v553 = vrot.slane %v540, %v552
        %v554 = vlaneseq
        %v555 = vshrl.u32 %v554, 7
        %v556 = vsub.s32 3, %v555
        %v557 = vrot.slane %v540, %v556
        %v562 = vmul.f32 %v447, %v545
        %v563 = vmul.f32 %v448, %v549
        %v564 = vmul.f32 %v449, %v553
        %v565 = vmul.f32 %v450, %v557
        %v566 = vmul.f32 %v452, %v545
        %v567 = vmul.f32 %v453, %v549
        %v568 = vmul.f32 %v454, %v553
        %v569 = vmul.f32 %v455, %v557
        %v570 = vmul.f32 %v457, %v545
        %v571 = vmul.f32 %v458, %v549
        %v572 = vmul.f32 %v459, %v553
        %v573 = vmul.f32 %v460, %v557
        %vm586 = vcmask 1046528
        %v587 = vrot.slane %v562, 1
        %v588 = vrot.slane %v566, 1
        %v589 = vsel %vm586, %v587, %v588
        %v590 = vrot.slane %v563, 1
        %v591 = vrot.slane %v567, 1
        %v592 = vsel %vm586, %v590, %v591
        %v593 = vrot.slane %v564, 1
        %v594 = vrot.slane %v568, 1
        %v595 = vsel %vm586, %v593, %v594
        %v596 = vrot.slane %v565, 1
        %v597 = vrot.slane %v569, 1
        %v598 = vsel %vm586, %v596, %v597
        %v599 = vrot.slane %v570, 1
        %v600 = vsel %vm586, %v588, %v599
        %v601 = vrot.slane %v571, 1
        %v602 = vsel %vm586, %v591, %v601
        %v603 = vrot.slane %v572, 1
        %v604 = vsel %vm586, %v594, %v603
        %v605 = vrot.slane %v573, 1
        %v606 = vsel %vm586, %v597, %v605
        %v615 = vadd.f32 %v492, %v589
        %v616 = vadd.f32 %v493, %v592
        %v617 = vadd.f32 %v494, %v595
        %v618 = vadd.f32 %v495, %v598
        %v619 = vadd.f32 %v496, %v600
        %v620 = vadd.f32 %v497, %v602
        %v621 = vadd.f32 %v498, %v604
        %v622 = vadd.f32 %v499, %v606
        %s623 = scalar_lea.vmem %s500, 5
        %v624 = vld [vmem:[%s623] ss:$8 sm:$0xf]
        %v626 = vlaneseq
        %v627 = vshrl.u32 %v626, 7
        %v628 = vsub.s32 0, %v627
        %v629 = vrot.slane %v624, %v628
        %v630 = vlaneseq
        %v631 = vshrl.u32 %v630, 7
        %v632 = vsub.s32 1, %v631
        %v633 = vrot.slane %v624, %v632
        %v634 = vlaneseq
        %v635 = vshrl.u32 %v634, 7
        %v636 = vsub.s32 2, %v635
        %v637 = vrot.slane %v624, %v636
        %v638 = vlaneseq
        %v639 = vshrl.u32 %v638, 7
        %v640 = vsub.s32 3, %v639
        %v641 = vrot.slane %v624, %v640
        %v646 = vmul.f32 %v447, %v629
        %v647 = vmul.f32 %v448, %v633
        %v648 = vmul.f32 %v449, %v637
        %v649 = vmul.f32 %v450, %v641
        %v650 = vmul.f32 %v452, %v629
        %v651 = vmul.f32 %v453, %v633
        %v652 = vmul.f32 %v454, %v637
        %v653 = vmul.f32 %v455, %v641
        %v654 = vmul.f32 %v457, %v629
        %v655 = vmul.f32 %v458, %v633
        %v656 = vmul.f32 %v459, %v637
        %v657 = vmul.f32 %v460, %v641
        %v670 = vrot.slane %v646, 1
        %v671 = vrot.slane %v650, 1
        %v672 = vsel %vm586, %v670, %v671
        %v673 = vrot.slane %v647, 1
        %v674 = vrot.slane %v651, 1
        %v675 = vsel %vm586, %v673, %v674
        %v676 = vrot.slane %v648, 1
        %v677 = vrot.slane %v652, 1
        %v678 = vsel %vm586, %v676, %v677
        %v679 = vrot.slane %v649, 1
        %v680 = vrot.slane %v653, 1
        %v681 = vsel %vm586, %v679, %v680
        %v682 = vrot.slane %v654, 1
        %v683 = vsel %vm586, %v671, %v682
        %v684 = vrot.slane %v655, 1
        %v685 = vsel %vm586, %v674, %v684
        %v686 = vrot.slane %v656, 1
        %v687 = vsel %vm586, %v677, %v686
        %v688 = vrot.slane %v657, 1
        %v689 = vsel %vm586, %v680, %v688
        %v698 = vadd.f32 %v531, %v672
        %v699 = vadd.f32 %v532, %v675
        %v700 = vadd.f32 %v533, %v678
        %v701 = vadd.f32 %v534, %v681
        %v702 = vadd.f32 %v535, %v683
        %v703 = vadd.f32 %v536, %v685
        %v704 = vadd.f32 %v537, %v687
        %v705 = vadd.f32 %v538, %v689
        %s706 = scalar_lea.vmem %s1, 34
        %v707 = vld [vmem:[%s706] ss:$8 sm:$0xf]
        %v709 = vlaneseq
        %v710 = vshrl.u32 %v709, 7
        %v711 = vsub.s32 0, %v710
        %v712 = vrot.slane %v707, %v711
        %v713 = vlaneseq
        %v714 = vshrl.u32 %v713, 7
        %v715 = vsub.s32 1, %v714
        %v716 = vrot.slane %v707, %v715
        %v717 = vlaneseq
        %v718 = vshrl.u32 %v717, 7
        %v719 = vsub.s32 2, %v718
        %v720 = vrot.slane %v707, %v719
        %v721 = vlaneseq
        %v722 = vshrl.u32 %v721, 7
        %v723 = vsub.s32 3, %v722
        %v724 = vrot.slane %v707, %v723
        %v729 = vmul.f32 %v447, %v712
        %v730 = vmul.f32 %v448, %v716
        %v731 = vmul.f32 %v449, %v720
        %v732 = vmul.f32 %v450, %v724
        %v733 = vmul.f32 %v452, %v712
        %v734 = vmul.f32 %v453, %v716
        %v735 = vmul.f32 %v454, %v720
        %v736 = vmul.f32 %v455, %v724
        %v737 = vmul.f32 %v457, %v712
        %v738 = vmul.f32 %v458, %v716
        %v739 = vmul.f32 %v459, %v720
        %v740 = vmul.f32 %v460, %v724
        %vm753 = vcmask 1045504
        %v754 = vrot.slane %v729, 2
        %v755 = vrot.slane %v733, 2
        %v756 = vsel %vm753, %v754, %v755
        %v757 = vrot.slane %v730, 2
        %v758 = vrot.slane %v734, 2
        %v759 = vsel %vm753, %v757, %v758
        %v760 = vrot.slane %v731, 2
        %v761 = vrot.slane %v735, 2
        %v762 = vsel %vm753, %v760, %v761
        %v763 = vrot.slane %v732, 2
        %v764 = vrot.slane %v736, 2
        %v765 = vsel %vm753, %v763, %v764
        %v766 = vrot.slane %v737, 2
        %v767 = vsel %vm753, %v755, %v766
        %v768 = vrot.slane %v738, 2
        %v769 = vsel %vm753, %v758, %v768
        %v770 = vrot.slane %v739, 2
        %v771 = vsel %vm753, %v761, %v770
        %v772 = vrot.slane %v740, 2
        %v773 = vsel %vm753, %v764, %v772
        %v782 = vadd.f32 %v615, %v756
        %v783 = vadd.f32 %v616, %v759
        %v784 = vadd.f32 %v617, %v762
        %v785 = vadd.f32 %v618, %v765
        %v786 = vadd.f32 %v619, %v767
        %v787 = vadd.f32 %v620, %v769
        %v788 = vadd.f32 %v621, %v771
        %v789 = vadd.f32 %v622, %v773
        %s790 = scalar_lea.vmem %s500, 34
        %v791 = vld [vmem:[%s790] ss:$8 sm:$0xf]
        %v793 = vlaneseq
        %v794 = vshrl.u32 %v793, 7
        %v795 = vsub.s32 0, %v794
        %v796 = vrot.slane %v791, %v795
        %v797 = vlaneseq
        %v798 = vshrl.u32 %v797, 7
        %v799 = vsub.s32 1, %v798
        %v800 = vrot.slane %v791, %v799
        %v801 = vlaneseq
        %v802 = vshrl.u32 %v801, 7
        %v803 = vsub.s32 2, %v802
        %v804 = vrot.slane %v791, %v803
        %v805 = vlaneseq
        %v806 = vshrl.u32 %v805, 7
        %v807 = vsub.s32 3, %v806
        %v808 = vrot.slane %v791, %v807
        %v813 = vmul.f32 %v447, %v796
        %v814 = vmul.f32 %v448, %v800
        %v815 = vmul.f32 %v449, %v804
        %v816 = vmul.f32 %v450, %v808
        %v817 = vmul.f32 %v452, %v796
        %v818 = vmul.f32 %v453, %v800
        %v819 = vmul.f32 %v454, %v804
        %v820 = vmul.f32 %v455, %v808
        %v821 = vmul.f32 %v457, %v796
        %v822 = vmul.f32 %v458, %v800
        %v823 = vmul.f32 %v459, %v804
        %v824 = vmul.f32 %v460, %v808
        %v837 = vrot.slane %v813, 2
        %v838 = vrot.slane %v817, 2
        %v839 = vsel %vm753, %v837, %v838
        %v840 = vrot.slane %v814, 2
        %v841 = vrot.slane %v818, 2
        %v842 = vsel %vm753, %v840, %v841
        %v843 = vrot.slane %v815, 2
        %v844 = vrot.slane %v819, 2
        %v845 = vsel %vm753, %v843, %v844
        %v846 = vrot.slane %v816, 2
        %v847 = vrot.slane %v820, 2
        %v848 = vsel %vm753, %v846, %v847
        %v849 = vrot.slane %v821, 2
        %v850 = vsel %vm753, %v838, %v849
        %v851 = vrot.slane %v822, 2
        %v852 = vsel %vm753, %v841, %v851
        %v853 = vrot.slane %v823, 2
        %v854 = vsel %vm753, %v844, %v853
        %v855 = vrot.slane %v824, 2
        %v856 = vsel %vm753, %v847, %v855
        %v865 = vadd.f32 %v698, %v839
        %v866 = vadd.f32 %v699, %v842
        %v867 = vadd.f32 %v700, %v845
        %v868 = vadd.f32 %v701, %v848
        %v869 = vadd.f32 %v702, %v850
        %v870 = vadd.f32 %v703, %v852
        %v871 = vadd.f32 %v704, %v854
        %v872 = vadd.f32 %v705, %v856
        %s873 = scalar_lea.vmem %s1, 39
        %v874 = vld [vmem:[%s873] ss:$8 sm:$0xf]
        %v876 = vlaneseq
        %v877 = vshrl.u32 %v876, 7
        %v878 = vsub.s32 0, %v877
        %v879 = vrot.slane %v874, %v878
        %v880 = vlaneseq
        %v881 = vshrl.u32 %v880, 7
        %v882 = vsub.s32 1, %v881
        %v883 = vrot.slane %v874, %v882
        %v884 = vlaneseq
        %v885 = vshrl.u32 %v884, 7
        %v886 = vsub.s32 2, %v885
        %v887 = vrot.slane %v874, %v886
        %v888 = vlaneseq
        %v889 = vshrl.u32 %v888, 7
        %v890 = vsub.s32 3, %v889
        %v891 = vrot.slane %v874, %v890
        %v896 = vmul.f32 %v447, %v879
        %v897 = vmul.f32 %v448, %v883
        %v898 = vmul.f32 %v449, %v887
        %v899 = vmul.f32 %v450, %v891
        %v900 = vmul.f32 %v452, %v879
        %v901 = vmul.f32 %v453, %v883
        %v902 = vmul.f32 %v454, %v887
        %v903 = vmul.f32 %v455, %v891
        %v904 = vmul.f32 %v457, %v879
        %v905 = vmul.f32 %v458, %v883
        %v906 = vmul.f32 %v459, %v887
        %v907 = vmul.f32 %v460, %v891
        %vm920 = vcmask 1044480
        %v921 = vrot.slane %v896, 3
        %v922 = vrot.slane %v900, 3
        %v923 = vsel %vm920, %v921, %v922
        %v924 = vrot.slane %v897, 3
        %v925 = vrot.slane %v901, 3
        %v926 = vsel %vm920, %v924, %v925
        %v927 = vrot.slane %v898, 3
        %v928 = vrot.slane %v902, 3
        %v929 = vsel %vm920, %v927, %v928
        %v930 = vrot.slane %v899, 3
        %v931 = vrot.slane %v903, 3
        %v932 = vsel %vm920, %v930, %v931
        %v933 = vrot.slane %v904, 3
        %v934 = vsel %vm920, %v922, %v933
        %v935 = vrot.slane %v905, 3
        %v936 = vsel %vm920, %v925, %v935
        %v937 = vrot.slane %v906, 3
        %v938 = vsel %vm920, %v928, %v937
        %v939 = vrot.slane %v907, 3
        %v940 = vsel %vm920, %v931, %v939
        %v949 = vadd.f32 %v782, %v923
        %v950 = vadd.f32 %v783, %v926
        %v951 = vadd.f32 %v784, %v929
        %v952 = vadd.f32 %v785, %v932
        %v953 = vadd.f32 %v786, %v934
        %v954 = vadd.f32 %v787, %v936
        %v955 = vadd.f32 %v788, %v938
        %v956 = vadd.f32 %v789, %v940
        %s957 = scalar_lea.vmem %s500, 39
        %v958 = vld [vmem:[%s957] ss:$8 sm:$0xf]
        %v960 = vlaneseq
        %v961 = vshrl.u32 %v960, 7
        %v962 = vsub.s32 0, %v961
        %v963 = vrot.slane %v958, %v962
        %v964 = vlaneseq
        %v965 = vshrl.u32 %v964, 7
        %v966 = vsub.s32 1, %v965
        %v967 = vrot.slane %v958, %v966
        %v968 = vlaneseq
        %v969 = vshrl.u32 %v968, 7
        %v970 = vsub.s32 2, %v969
        %v971 = vrot.slane %v958, %v970
        %v972 = vlaneseq
        %v973 = vshrl.u32 %v972, 7
        %v974 = vsub.s32 3, %v973
        %v975 = vrot.slane %v958, %v974
        %v980 = vmul.f32 %v447, %v963
        %v981 = vmul.f32 %v448, %v967
        %v982 = vmul.f32 %v449, %v971
        %v983 = vmul.f32 %v450, %v975
        %v984 = vmul.f32 %v452, %v963
        %v985 = vmul.f32 %v453, %v967
        %v986 = vmul.f32 %v454, %v971
        %v987 = vmul.f32 %v455, %v975
        %v988 = vmul.f32 %v457, %v963
        %v989 = vmul.f32 %v458, %v967
        %v990 = vmul.f32 %v459, %v971
        %v991 = vmul.f32 %v460, %v975
        %v1004 = vrot.slane %v980, 3
        %v1005 = vrot.slane %v984, 3
        %v1006 = vsel %vm920, %v1004, %v1005
        %v1007 = vrot.slane %v981, 3
        %v1008 = vrot.slane %v985, 3
        %v1009 = vsel %vm920, %v1007, %v1008
        %v1010 = vrot.slane %v982, 3
        %v1011 = vrot.slane %v986, 3
        %v1012 = vsel %vm920, %v1010, %v1011
        %v1013 = vrot.slane %v983, 3
        %v1014 = vrot.slane %v987, 3
        %v1015 = vsel %vm920, %v1013, %v1014
        %v1016 = vrot.slane %v988, 3
        %v1017 = vsel %vm920, %v1005, %v1016
        %v1018 = vrot.slane %v989, 3
        %v1019 = vsel %vm920, %v1008, %v1018
        %v1020 = vrot.slane %v990, 3
        %v1021 = vsel %vm920, %v1011, %v1020
        %v1022 = vrot.slane %v991, 3
        %v1023 = vsel %vm920, %v1014, %v1022
        %v1032 = vadd.f32 %v865, %v1006
        %v1033 = vadd.f32 %v866, %v1009
        %v1034 = vadd.f32 %v867, %v1012
        %v1035 = vadd.f32 %v868, %v1015
        %v1036 = vadd.f32 %v869, %v1017
        %v1037 = vadd.f32 %v870, %v1019
        %v1038 = vadd.f32 %v871, %v1021
        %v1039 = vadd.f32 %v872, %v1023
        %s1040 = scalar_lea.vmem %s1, 68
        %v1041 = vld [vmem:[%s1040] ss:$8 sm:$0xf]
        %v1043 = vlaneseq
        %v1044 = vshrl.u32 %v1043, 7
        %v1045 = vsub.s32 0, %v1044
        %v1046 = vrot.slane %v1041, %v1045
        %v1047 = vlaneseq
        %v1048 = vshrl.u32 %v1047, 7
        %v1049 = vsub.s32 1, %v1048
        %v1050 = vrot.slane %v1041, %v1049
        %v1051 = vlaneseq
        %v1052 = vshrl.u32 %v1051, 7
        %v1053 = vsub.s32 2, %v1052
        %v1054 = vrot.slane %v1041, %v1053
        %v1055 = vlaneseq
        %v1056 = vshrl.u32 %v1055, 7
        %v1057 = vsub.s32 3, %v1056
        %v1058 = vrot.slane %v1041, %v1057
        %v1063 = vmul.f32 %v447, %v1046
        %v1064 = vmul.f32 %v448, %v1050
        %v1065 = vmul.f32 %v449, %v1054
        %v1066 = vmul.f32 %v450, %v1058
        %v1067 = vmul.f32 %v452, %v1046
        %v1068 = vmul.f32 %v453, %v1050
        %v1069 = vmul.f32 %v454, %v1054
        %v1070 = vmul.f32 %v455, %v1058
        %v1071 = vmul.f32 %v457, %v1046
        %v1072 = vmul.f32 %v458, %v1050
        %v1073 = vmul.f32 %v459, %v1054
        %v1074 = vmul.f32 %v460, %v1058
        %vm1087 = vcmask 1043456
        %v1088 = vrot.slane %v1063, 4
        %v1089 = vrot.slane %v1067, 4
        %v1090 = vsel %vm1087, %v1088, %v1089
        %v1091 = vrot.slane %v1064, 4
        %v1092 = vrot.slane %v1068, 4
        %v1093 = vsel %vm1087, %v1091, %v1092
        %v1094 = vrot.slane %v1065, 4
        %v1095 = vrot.slane %v1069, 4
        %v1096 = vsel %vm1087, %v1094, %v1095
        %v1097 = vrot.slane %v1066, 4
        %v1098 = vrot.slane %v1070, 4
        %v1099 = vsel %vm1087, %v1097, %v1098
        %v1100 = vrot.slane %v1071, 4
        %v1101 = vsel %vm1087, %v1089, %v1100
        %v1102 = vrot.slane %v1072, 4
        %v1103 = vsel %vm1087, %v1092, %v1102
        %v1104 = vrot.slane %v1073, 4
        %v1105 = vsel %vm1087, %v1095, %v1104
        %v1106 = vrot.slane %v1074, 4
        %v1107 = vsel %vm1087, %v1098, %v1106
        %v1116 = vadd.f32 %v949, %v1090
        %v1117 = vadd.f32 %v950, %v1093
        %v1118 = vadd.f32 %v951, %v1096
        %v1119 = vadd.f32 %v952, %v1099
        %v1120 = vadd.f32 %v953, %v1101
        %v1121 = vadd.f32 %v954, %v1103
        %v1122 = vadd.f32 %v955, %v1105
        %v1123 = vadd.f32 %v956, %v1107
        %s1124 = scalar_lea.vmem %s500, 68
        %v1125 = vld [vmem:[%s1124] ss:$8 sm:$0xf]
        %v1127 = vlaneseq
        %v1128 = vshrl.u32 %v1127, 7
        %v1129 = vsub.s32 0, %v1128
        %v1130 = vrot.slane %v1125, %v1129
        %v1131 = vlaneseq
        %v1132 = vshrl.u32 %v1131, 7
        %v1133 = vsub.s32 1, %v1132
        %v1134 = vrot.slane %v1125, %v1133
        %v1135 = vlaneseq
        %v1136 = vshrl.u32 %v1135, 7
        %v1137 = vsub.s32 2, %v1136
        %v1138 = vrot.slane %v1125, %v1137
        %v1139 = vlaneseq
        %v1140 = vshrl.u32 %v1139, 7
        %v1141 = vsub.s32 3, %v1140
        %v1142 = vrot.slane %v1125, %v1141
        %v1147 = vmul.f32 %v447, %v1130
        %v1148 = vmul.f32 %v448, %v1134
        %v1149 = vmul.f32 %v449, %v1138
        %v1150 = vmul.f32 %v450, %v1142
        %v1151 = vmul.f32 %v452, %v1130
        %v1152 = vmul.f32 %v453, %v1134
        %v1153 = vmul.f32 %v454, %v1138
        %v1154 = vmul.f32 %v455, %v1142
        %v1155 = vmul.f32 %v457, %v1130
        %v1156 = vmul.f32 %v458, %v1134
        %v1157 = vmul.f32 %v459, %v1138
        %v1158 = vmul.f32 %v460, %v1142
        %v1171 = vrot.slane %v1147, 4
        %v1172 = vrot.slane %v1151, 4
        %v1173 = vsel %vm1087, %v1171, %v1172
        %v1174 = vrot.slane %v1148, 4
        %v1175 = vrot.slane %v1152, 4
        %v1176 = vsel %vm1087, %v1174, %v1175
        %v1177 = vrot.slane %v1149, 4
        %v1178 = vrot.slane %v1153, 4
        %v1179 = vsel %vm1087, %v1177, %v1178
        %v1180 = vrot.slane %v1150, 4
        %v1181 = vrot.slane %v1154, 4
        %v1182 = vsel %vm1087, %v1180, %v1181
        %v1183 = vrot.slane %v1155, 4
        %v1184 = vsel %vm1087, %v1172, %v1183
        %v1185 = vrot.slane %v1156, 4
        %v1186 = vsel %vm1087, %v1175, %v1185
        %v1187 = vrot.slane %v1157, 4
        %v1188 = vsel %vm1087, %v1178, %v1187
        %v1189 = vrot.slane %v1158, 4
        %v1190 = vsel %vm1087, %v1181, %v1189
        %v1199 = vadd.f32 %v1032, %v1173
        %v1200 = vadd.f32 %v1033, %v1176
        %v1201 = vadd.f32 %v1034, %v1179
        %v1202 = vadd.f32 %v1035, %v1182
        %v1203 = vadd.f32 %v1036, %v1184
        %v1204 = vadd.f32 %v1037, %v1186
        %v1205 = vadd.f32 %v1038, %v1188
        %v1206 = vadd.f32 %v1039, %v1190
        %s1207 = scalar_lea.vmem %s1, 1
        %v1208 = vld [vmem:[%s1207] ss:$8 sm:$0xf]
        %v1210 = vlaneseq
        %v1211 = vshrl.u32 %v1210, 7
        %v1212 = vsub.s32 0, %v1211
        %v1213 = vrot.slane %v1208, %v1212
        %v1214 = vlaneseq
        %v1215 = vshrl.u32 %v1214, 7
        %v1216 = vsub.s32 1, %v1215
        %v1217 = vrot.slane %v1208, %v1216
        %v1218 = vlaneseq
        %v1219 = vshrl.u32 %v1218, 7
        %v1220 = vsub.s32 2, %v1219
        %v1221 = vrot.slane %v1208, %v1220
        %v1222 = vlaneseq
        %v1223 = vshrl.u32 %v1222, 7
        %v1224 = vsub.s32 3, %v1223
        %v1225 = vrot.slane %v1208, %v1224
        %1226 = vrot.lane.b32.xlu0 %v1213, 32
        %v1227 = vpop.permute.xlu0 %1226
        %1228 = vrot.lane.b32.xlu0 %v1217, 32
        %v1229 = vpop.permute.xlu0 %1228
        %1230 = vrot.lane.b32.xlu0 %v1221, 32
        %v1231 = vpop.permute.xlu0 %1230
        %1232 = vrot.lane.b32.xlu0 %v1225, 32
        %v1233 = vpop.permute.xlu0 %1232
        %vm1234 = vcmask 261120
        %v1235 = vsel %vm1234, %v1227, %v1229
        %v1236 = vsel %vm1234, %v1229, %v1231
        %v1237 = vsel %vm1234, %v1231, %v1233
        %v1243 = vmul.f32 %v447, %v1227
        %v1244 = vmul.f32 %v448, %v1235
        %v1245 = vmul.f32 %v449, %v1236
        %v1246 = vmul.f32 %v450, %v1237
        %v1247 = vmul.f32 %v451, %v1233
        %v1248 = vmul.f32 %v452, %v1227
        %v1249 = vmul.f32 %v453, %v1235
        %v1250 = vmul.f32 %v454, %v1236
        %v1251 = vmul.f32 %v455, %v1237
        %v1252 = vmul.f32 %v456, %v1233
        %1263 = vrot.lane.b32.xlu0 %v1243, 96
        %v1264 = vpop.permute.xlu0 %1263
        %1265 = vrot.lane.b32.xlu0 %v1244, 96
        %v1266 = vpop.permute.xlu0 %1265
        %1267 = vrot.lane.b32.xlu0 %v1245, 96
        %v1268 = vpop.permute.xlu0 %1267
        %1269 = vrot.lane.b32.xlu0 %v1246, 96
        %v1270 = vpop.permute.xlu0 %1269
        %1271 = vrot.lane.b32.xlu0 %v1247, 96
        %v1272 = vpop.permute.xlu0 %1271
        %1273 = vrot.lane.b32.xlu0 %v1248, 96
        %v1274 = vpop.permute.xlu0 %1273
        %1275 = vrot.lane.b32.xlu0 %v1249, 96
        %v1276 = vpop.permute.xlu0 %1275
        %1277 = vrot.lane.b32.xlu0 %v1250, 96
        %v1278 = vpop.permute.xlu0 %1277
        %1279 = vrot.lane.b32.xlu0 %v1251, 96
        %v1280 = vpop.permute.xlu0 %1279
        %1281 = vrot.lane.b32.xlu0 %v1252, 96
        %v1282 = vpop.permute.xlu0 %1281
        %vm1283 = vcmask 785408
        %v1284 = vsel %vm1283, %v1264, %v1266
        %v1285 = vsel %vm1283, %v1266, %v1268
        %v1286 = vsel %vm1283, %v1268, %v1270
        %v1287 = vsel %vm1283, %v1270, %v1272
        %v1288 = vsel %vm1283, %v1274, %v1276
        %v1289 = vsel %vm1283, %v1276, %v1278
        %v1290 = vsel %vm1283, %v1278, %v1280
        %v1291 = vsel %vm1283, %v1280, %v1282
        %v1300 = vadd.f32 %v1116, %v1284
        %v1301 = vadd.f32 %v1117, %v1285
        %v1302 = vadd.f32 %v1118, %v1286
        %v1303 = vadd.f32 %v1119, %v1287
        %v1304 = vadd.f32 %v1120, %v1288
        %v1305 = vadd.f32 %v1121, %v1289
        %v1306 = vadd.f32 %v1122, %v1290
        %v1307 = vadd.f32 %v1123, %v1291
        %s1308 = scalar_lea.vmem %s500, 1
        %v1309 = vld [vmem:[%s1308] ss:$8 sm:$0xf]
        %v1311 = vlaneseq
        %v1312 = vshrl.u32 %v1311, 7
        %v1313 = vsub.s32 0, %v1312
        %v1314 = vrot.slane %v1309, %v1313
        %v1315 = vlaneseq
        %v1316 = vshrl.u32 %v1315, 7
        %v1317 = vsub.s32 1, %v1316
        %v1318 = vrot.slane %v1309, %v1317
        %v1319 = vlaneseq
        %v1320 = vshrl.u32 %v1319, 7
        %v1321 = vsub.s32 2, %v1320
        %v1322 = vrot.slane %v1309, %v1321
        %v1323 = vlaneseq
        %v1324 = vshrl.u32 %v1323, 7
        %v1325 = vsub.s32 3, %v1324
        %v1326 = vrot.slane %v1309, %v1325
        %1327 = vrot.lane.b32.xlu0 %v1314, 32
        %v1328 = vpop.permute.xlu0 %1327
        %1329 = vrot.lane.b32.xlu0 %v1318, 32
        %v1330 = vpop.permute.xlu0 %1329
        %1331 = vrot.lane.b32.xlu0 %v1322, 32
        %v1332 = vpop.permute.xlu0 %1331
        %1333 = vrot.lane.b32.xlu0 %v1326, 32
        %v1334 = vpop.permute.xlu0 %1333
        %v1335 = vsel %vm1234, %v1328, %v1330
        %v1336 = vsel %vm1234, %v1330, %v1332
        %v1337 = vsel %vm1234, %v1332, %v1334
        %v1343 = vmul.f32 %v447, %v1328
        %v1344 = vmul.f32 %v448, %v1335
        %v1345 = vmul.f32 %v449, %v1336
        %v1346 = vmul.f32 %v450, %v1337
        %v1347 = vmul.f32 %v451, %v1334
        %v1348 = vmul.f32 %v452, %v1328
        %v1349 = vmul.f32 %v453, %v1335
        %v1350 = vmul.f32 %v454, %v1336
        %v1351 = vmul.f32 %v455, %v1337
        %v1352 = vmul.f32 %v456, %v1334
        %1363 = vrot.lane.b32.xlu0 %v1343, 96
        %v1364 = vpop.permute.xlu0 %1363
        %1365 = vrot.lane.b32.xlu0 %v1344, 96
        %v1366 = vpop.permute.xlu0 %1365
        %1367 = vrot.lane.b32.xlu0 %v1345, 96
        %v1368 = vpop.permute.xlu0 %1367
        %1369 = vrot.lane.b32.xlu0 %v1346, 96
        %v1370 = vpop.permute.xlu0 %1369
        %1371 = vrot.lane.b32.xlu0 %v1347, 96
        %v1372 = vpop.permute.xlu0 %1371
        %1373 = vrot.lane.b32.xlu0 %v1348, 96
        %v1374 = vpop.permute.xlu0 %1373
        %1375 = vrot.lane.b32.xlu0 %v1349, 96
        %v1376 = vpop.permute.xlu0 %1375
        %1377 = vrot.lane.b32.xlu0 %v1350, 96
        %v1378 = vpop.permute.xlu0 %1377
        %1379 = vrot.lane.b32.xlu0 %v1351, 96
        %v1380 = vpop.permute.xlu0 %1379
        %1381 = vrot.lane.b32.xlu0 %v1352, 96
        %v1382 = vpop.permute.xlu0 %1381
        %v1383 = vsel %vm1283, %v1364, %v1366
        %v1384 = vsel %vm1283, %v1366, %v1368
        %v1385 = vsel %vm1283, %v1368, %v1370
        %v1386 = vsel %vm1283, %v1370, %v1372
        %v1387 = vsel %vm1283, %v1374, %v1376
        %v1388 = vsel %vm1283, %v1376, %v1378
        %v1389 = vsel %vm1283, %v1378, %v1380
        %v1390 = vsel %vm1283, %v1380, %v1382
        %v1399 = vadd.f32 %v1199, %v1383
        %v1400 = vadd.f32 %v1200, %v1384
        %v1401 = vadd.f32 %v1201, %v1385
        %v1402 = vadd.f32 %v1202, %v1386
        %v1403 = vadd.f32 %v1203, %v1387
        %v1404 = vadd.f32 %v1204, %v1388
        %v1405 = vadd.f32 %v1205, %v1389
        %v1406 = vadd.f32 %v1206, %v1390
        %s1407 = scalar_lea.vmem %s1, 6
        %v1408 = vld [vmem:[%s1407] ss:$8 sm:$0xf]
        %v1410 = vlaneseq
        %v1411 = vshrl.u32 %v1410, 7
        %v1412 = vsub.s32 0, %v1411
        %v1413 = vrot.slane %v1408, %v1412
        %v1414 = vlaneseq
        %v1415 = vshrl.u32 %v1414, 7
        %v1416 = vsub.s32 1, %v1415
        %v1417 = vrot.slane %v1408, %v1416
        %v1418 = vlaneseq
        %v1419 = vshrl.u32 %v1418, 7
        %v1420 = vsub.s32 2, %v1419
        %v1421 = vrot.slane %v1408, %v1420
        %v1422 = vlaneseq
        %v1423 = vshrl.u32 %v1422, 7
        %v1424 = vsub.s32 3, %v1423
        %v1425 = vrot.slane %v1408, %v1424
        %1426 = vrot.lane.b32.xlu0 %v1413, 32
        %v1427 = vpop.permute.xlu0 %1426
        %1428 = vrot.lane.b32.xlu0 %v1417, 32
        %v1429 = vpop.permute.xlu0 %1428
        %1430 = vrot.lane.b32.xlu0 %v1421, 32
        %v1431 = vpop.permute.xlu0 %1430
        %1432 = vrot.lane.b32.xlu0 %v1425, 32
        %v1433 = vpop.permute.xlu0 %1432
        %v1434 = vsel %vm1234, %v1427, %v1429
        %v1435 = vsel %vm1234, %v1429, %v1431
        %v1436 = vsel %vm1234, %v1431, %v1433
        %v1442 = vmul.f32 %v447, %v1427
        %v1443 = vmul.f32 %v448, %v1434
        %v1444 = vmul.f32 %v449, %v1435
        %v1445 = vmul.f32 %v450, %v1436
        %v1446 = vmul.f32 %v451, %v1433
        %v1447 = vmul.f32 %v452, %v1427
        %v1448 = vmul.f32 %v453, %v1434
        %v1449 = vmul.f32 %v454, %v1435
        %v1450 = vmul.f32 %v455, %v1436
        %v1451 = vmul.f32 %v456, %v1433
        %v1452 = vmul.f32 %v457, %v1427
        %v1453 = vmul.f32 %v458, %v1434
        %v1454 = vmul.f32 %v459, %v1435
        %v1455 = vmul.f32 %v460, %v1436
        %v1456 = vmul.f32 %v461, %v1433
        %v1472 = vrot.slane %v1442, 1
        %v1473 = vrot.slane %v1447, 1
        %v1474 = vsel %vm586, %v1472, %v1473
        %v1475 = vrot.slane %v1443, 1
        %v1476 = vrot.slane %v1448, 1
        %v1477 = vsel %vm586, %v1475, %v1476
        %v1478 = vrot.slane %v1444, 1
        %v1479 = vrot.slane %v1449, 1
        %v1480 = vsel %vm586, %v1478, %v1479
        %v1481 = vrot.slane %v1445, 1
        %v1482 = vrot.slane %v1450, 1
        %v1483 = vsel %vm586, %v1481, %v1482
        %v1484 = vrot.slane %v1446, 1
        %v1485 = vrot.slane %v1451, 1
        %v1486 = vsel %vm586, %v1484, %v1485
        %v1487 = vrot.slane %v1452, 1
        %v1488 = vsel %vm586, %v1473, %v1487
        %v1489 = vrot.slane %v1453, 1
        %v1490 = vsel %vm586, %v1476, %v1489
        %v1491 = vrot.slane %v1454, 1
        %v1492 = vsel %vm586, %v1479, %v1491
        %v1493 = vrot.slane %v1455, 1
        %v1494 = vsel %vm586, %v1482, %v1493
        %v1495 = vrot.slane %v1456, 1
        %v1496 = vsel %vm586, %v1485, %v1495
        %1497 = vrot.lane.b32.xlu0 %v1474, 96
        %v1498 = vpop.permute.xlu0 %1497
        %1499 = vrot.lane.b32.xlu0 %v1477, 96
        %v1500 = vpop.permute.xlu0 %1499
        %1501 = vrot.lane.b32.xlu0 %v1480, 96
        %v1502 = vpop.permute.xlu0 %1501
        %1503 = vrot.lane.b32.xlu0 %v1483, 96
        %v1504 = vpop.permute.xlu0 %1503
        %1505 = vrot.lane.b32.xlu0 %v1486, 96
        %v1506 = vpop.permute.xlu0 %1505
        %1507 = vrot.lane.b32.xlu0 %v1488, 96
        %v1508 = vpop.permute.xlu0 %1507
        %1509 = vrot.lane.b32.xlu0 %v1490, 96
        %v1510 = vpop.permute.xlu0 %1509
        %1511 = vrot.lane.b32.xlu0 %v1492, 96
        %v1512 = vpop.permute.xlu0 %1511
        %1513 = vrot.lane.b32.xlu0 %v1494, 96
        %v1514 = vpop.permute.xlu0 %1513
        %1515 = vrot.lane.b32.xlu0 %v1496, 96
        %v1516 = vpop.permute.xlu0 %1515
        %v1517 = vsel %vm1283, %v1498, %v1500
        %v1518 = vsel %vm1283, %v1500, %v1502
        %v1519 = vsel %vm1283, %v1502, %v1504
        %v1520 = vsel %vm1283, %v1504, %v1506
        %v1521 = vsel %vm1283, %v1508, %v1510
        %v1522 = vsel %vm1283, %v1510, %v1512
        %v1523 = vsel %vm1283, %v1512, %v1514
        %v1524 = vsel %vm1283, %v1514, %v1516
        %v1533 = vadd.f32 %v1300, %v1517
        %v1534 = vadd.f32 %v1301, %v1518
        %v1535 = vadd.f32 %v1302, %v1519
        %v1536 = vadd.f32 %v1303, %v1520
        %v1537 = vadd.f32 %v1304, %v1521
        %v1538 = vadd.f32 %v1305, %v1522
        %v1539 = vadd.f32 %v1306, %v1523
        %v1540 = vadd.f32 %v1307, %v1524
        %s1541 = scalar_lea.vmem %s500, 6
        %v1542 = vld [vmem:[%s1541] ss:$8 sm:$0xf]
        %v1544 = vlaneseq
        %v1545 = vshrl.u32 %v1544, 7
        %v1546 = vsub.s32 0, %v1545
        %v1547 = vrot.slane %v1542, %v1546
        %v1548 = vlaneseq
        %v1549 = vshrl.u32 %v1548, 7
        %v1550 = vsub.s32 1, %v1549
        %v1551 = vrot.slane %v1542, %v1550
        %v1552 = vlaneseq
        %v1553 = vshrl.u32 %v1552, 7
        %v1554 = vsub.s32 2, %v1553
        %v1555 = vrot.slane %v1542, %v1554
        %v1556 = vlaneseq
        %v1557 = vshrl.u32 %v1556, 7
        %v1558 = vsub.s32 3, %v1557
        %v1559 = vrot.slane %v1542, %v1558
        %1560 = vrot.lane.b32.xlu0 %v1547, 32
        %v1561 = vpop.permute.xlu0 %1560
        %1562 = vrot.lane.b32.xlu0 %v1551, 32
        %v1563 = vpop.permute.xlu0 %1562
        %1564 = vrot.lane.b32.xlu0 %v1555, 32
        %v1565 = vpop.permute.xlu0 %1564
        %1566 = vrot.lane.b32.xlu0 %v1559, 32
        %v1567 = vpop.permute.xlu0 %1566
        %v1568 = vsel %vm1234, %v1561, %v1563
        %v1569 = vsel %vm1234, %v1563, %v1565
        %v1570 = vsel %vm1234, %v1565, %v1567
        %v1576 = vmul.f32 %v447, %v1561
        %v1577 = vmul.f32 %v448, %v1568
        %v1578 = vmul.f32 %v449, %v1569
        %v1579 = vmul.f32 %v450, %v1570
        %v1580 = vmul.f32 %v451, %v1567
        %v1581 = vmul.f32 %v452, %v1561
        %v1582 = vmul.f32 %v453, %v1568
        %v1583 = vmul.f32 %v454, %v1569
        %v1584 = vmul.f32 %v455, %v1570
        %v1585 = vmul.f32 %v456, %v1567
        %v1586 = vmul.f32 %v457, %v1561
        %v1587 = vmul.f32 %v458, %v1568
        %v1588 = vmul.f32 %v459, %v1569
        %v1589 = vmul.f32 %v460, %v1570
        %v1590 = vmul.f32 %v461, %v1567
        %v1606 = vrot.slane %v1576, 1
        %v1607 = vrot.slane %v1581, 1
        %v1608 = vsel %vm586, %v1606, %v1607
        %v1609 = vrot.slane %v1577, 1
        %v1610 = vrot.slane %v1582, 1
        %v1611 = vsel %vm586, %v1609, %v1610
        %v1612 = vrot.slane %v1578, 1
        %v1613 = vrot.slane %v1583, 1
        %v1614 = vsel %vm586, %v1612, %v1613
        %v1615 = vrot.slane %v1579, 1
        %v1616 = vrot.slane %v1584, 1
        %v1617 = vsel %vm586, %v1615, %v1616
        %v1618 = vrot.slane %v1580, 1
        %v1619 = vrot.slane %v1585, 1
        %v1620 = vsel %vm586, %v1618, %v1619
        %v1621 = vrot.slane %v1586, 1
        %v1622 = vsel %vm586, %v1607, %v1621
        %v1623 = vrot.slane %v1587, 1
        %v1624 = vsel %vm586, %v1610, %v1623
        %v1625 = vrot.slane %v1588, 1
        %v1626 = vsel %vm586, %v1613, %v1625
        %v1627 = vrot.slane %v1589, 1
        %v1628 = vsel %vm586, %v1616, %v1627
        %v1629 = vrot.slane %v1590, 1
        %v1630 = vsel %vm586, %v1619, %v1629
        %1631 = vrot.lane.b32.xlu0 %v1608, 96
        %v1632 = vpop.permute.xlu0 %1631
        %1633 = vrot.lane.b32.xlu0 %v1611, 96
        %v1634 = vpop.permute.xlu0 %1633
        %1635 = vrot.lane.b32.xlu0 %v1614, 96
        %v1636 = vpop.permute.xlu0 %1635
        %1637 = vrot.lane.b32.xlu0 %v1617, 96
        %v1638 = vpop.permute.xlu0 %1637
        %1639 = vrot.lane.b32.xlu0 %v1620, 96
        %v1640 = vpop.permute.xlu0 %1639
        %1641 = vrot.lane.b32.xlu0 %v1622, 96
        %v1642 = vpop.permute.xlu0 %1641
        %1643 = vrot.lane.b32.xlu0 %v1624, 96
        %v1644 = vpop.permute.xlu0 %1643
        %1645 = vrot.lane.b32.xlu0 %v1626, 96
        %v1646 = vpop.permute.xlu0 %1645
        %1647 = vrot.lane.b32.xlu0 %v1628, 96
        %v1648 = vpop.permute.xlu0 %1647
        %1649 = vrot.lane.b32.xlu0 %v1630, 96
        %v1650 = vpop.permute.xlu0 %1649
        %v1651 = vsel %vm1283, %v1632, %v1634
        %v1652 = vsel %vm1283, %v1634, %v1636
        %v1653 = vsel %vm1283, %v1636, %v1638
        %v1654 = vsel %vm1283, %v1638, %v1640
        %v1655 = vsel %vm1283, %v1642, %v1644
        %v1656 = vsel %vm1283, %v1644, %v1646
        %v1657 = vsel %vm1283, %v1646, %v1648
        %v1658 = vsel %vm1283, %v1648, %v1650
        %v1667 = vadd.f32 %v1399, %v1651
        %v1668 = vadd.f32 %v1400, %v1652
        %v1669 = vadd.f32 %v1401, %v1653
        %v1670 = vadd.f32 %v1402, %v1654
        %v1671 = vadd.f32 %v1403, %v1655
        %v1672 = vadd.f32 %v1404, %v1656
        %v1673 = vadd.f32 %v1405, %v1657
        %v1674 = vadd.f32 %v1406, %v1658
        %s1675 = scalar_lea.vmem %s1, 35
        %v1676 = vld [vmem:[%s1675] ss:$8 sm:$0xf]
        %v1678 = vlaneseq
        %v1679 = vshrl.u32 %v1678, 7
        %v1680 = vsub.s32 0, %v1679
        %v1681 = vrot.slane %v1676, %v1680
        %v1682 = vlaneseq
        %v1683 = vshrl.u32 %v1682, 7
        %v1684 = vsub.s32 1, %v1683
        %v1685 = vrot.slane %v1676, %v1684
        %v1686 = vlaneseq
        %v1687 = vshrl.u32 %v1686, 7
        %v1688 = vsub.s32 2, %v1687
        %v1689 = vrot.slane %v1676, %v1688
        %v1690 = vlaneseq
        %v1691 = vshrl.u32 %v1690, 7
        %v1692 = vsub.s32 3, %v1691
        %v1693 = vrot.slane %v1676, %v1692
        %1694 = vrot.lane.b32.xlu0 %v1681, 32
        %v1695 = vpop.permute.xlu0 %1694
        %1696 = vrot.lane.b32.xlu0 %v1685, 32
        %v1697 = vpop.permute.xlu0 %1696
        %1698 = vrot.lane.b32.xlu0 %v1689, 32
        %v1699 = vpop.permute.xlu0 %1698
        %1700 = vrot.lane.b32.xlu0 %v1693, 32
        %v1701 = vpop.permute.xlu0 %1700
        %v1702 = vsel %vm1234, %v1695, %v1697
        %v1703 = vsel %vm1234, %v1697, %v1699
        %v1704 = vsel %vm1234, %v1699, %v1701
        %v1710 = vmul.f32 %v447, %v1695
        %v1711 = vmul.f32 %v448, %v1702
        %v1712 = vmul.f32 %v449, %v1703
        %v1713 = vmul.f32 %v450, %v1704
        %v1714 = vmul.f32 %v451, %v1701
        %v1715 = vmul.f32 %v452, %v1695
        %v1716 = vmul.f32 %v453, %v1702
        %v1717 = vmul.f32 %v454, %v1703
        %v1718 = vmul.f32 %v455, %v1704
        %v1719 = vmul.f32 %v456, %v1701
        %v1720 = vmul.f32 %v457, %v1695
        %v1721 = vmul.f32 %v458, %v1702
        %v1722 = vmul.f32 %v459, %v1703
        %v1723 = vmul.f32 %v460, %v1704
        %v1724 = vmul.f32 %v461, %v1701
        %v1740 = vrot.slane %v1710, 2
        %v1741 = vrot.slane %v1715, 2
        %v1742 = vsel %vm753, %v1740, %v1741
        %v1743 = vrot.slane %v1711, 2
        %v1744 = vrot.slane %v1716, 2
        %v1745 = vsel %vm753, %v1743, %v1744
        %v1746 = vrot.slane %v1712, 2
        %v1747 = vrot.slane %v1717, 2
        %v1748 = vsel %vm753, %v1746, %v1747
        %v1749 = vrot.slane %v1713, 2
        %v1750 = vrot.slane %v1718, 2
        %v1751 = vsel %vm753, %v1749, %v1750
        %v1752 = vrot.slane %v1714, 2
        %v1753 = vrot.slane %v1719, 2
        %v1754 = vsel %vm753, %v1752, %v1753
        %v1755 = vrot.slane %v1720, 2
        %v1756 = vsel %vm753, %v1741, %v1755
        %v1757 = vrot.slane %v1721, 2
        %v1758 = vsel %vm753, %v1744, %v1757
        %v1759 = vrot.slane %v1722, 2
        %v1760 = vsel %vm753, %v1747, %v1759
        %v1761 = vrot.slane %v1723, 2
        %v1762 = vsel %vm753, %v1750, %v1761
        %v1763 = vrot.slane %v1724, 2
        %v1764 = vsel %vm753, %v1753, %v1763
        %1765 = vrot.lane.b32.xlu0 %v1742, 96
        %v1766 = vpop.permute.xlu0 %1765
        %1767 = vrot.lane.b32.xlu0 %v1745, 96
        %v1768 = vpop.permute.xlu0 %1767
        %1769 = vrot.lane.b32.xlu0 %v1748, 96
        %v1770 = vpop.permute.xlu0 %1769
        %1771 = vrot.lane.b32.xlu0 %v1751, 96
        %v1772 = vpop.permute.xlu0 %1771
        %1773 = vrot.lane.b32.xlu0 %v1754, 96
        %v1774 = vpop.permute.xlu0 %1773
        %1775 = vrot.lane.b32.xlu0 %v1756, 96
        %v1776 = vpop.permute.xlu0 %1775
        %1777 = vrot.lane.b32.xlu0 %v1758, 96
        %v1778 = vpop.permute.xlu0 %1777
        %1779 = vrot.lane.b32.xlu0 %v1760, 96
        %v1780 = vpop.permute.xlu0 %1779
        %1781 = vrot.lane.b32.xlu0 %v1762, 96
        %v1782 = vpop.permute.xlu0 %1781
        %1783 = vrot.lane.b32.xlu0 %v1764, 96
        %v1784 = vpop.permute.xlu0 %1783
        %v1785 = vsel %vm1283, %v1766, %v1768
        %v1786 = vsel %vm1283, %v1768, %v1770
        %v1787 = vsel %vm1283, %v1770, %v1772
        %v1788 = vsel %vm1283, %v1772, %v1774
        %v1789 = vsel %vm1283, %v1776, %v1778
        %v1790 = vsel %vm1283, %v1778, %v1780
        %v1791 = vsel %vm1283, %v1780, %v1782
        %v1792 = vsel %vm1283, %v1782, %v1784
        %v1801 = vadd.f32 %v1533, %v1785
        %v1802 = vadd.f32 %v1534, %v1786
        %v1803 = vadd.f32 %v1535, %v1787
        %v1804 = vadd.f32 %v1536, %v1788
        %v1805 = vadd.f32 %v1537, %v1789
        %v1806 = vadd.f32 %v1538, %v1790
        %v1807 = vadd.f32 %v1539, %v1791
        %v1808 = vadd.f32 %v1540, %v1792
        %s1809 = scalar_lea.vmem %s500, 35
        %v1810 = vld [vmem:[%s1809] ss:$8 sm:$0xf]
        %v1812 = vlaneseq
        %v1813 = vshrl.u32 %v1812, 7
        %v1814 = vsub.s32 0, %v1813
        %v1815 = vrot.slane %v1810, %v1814
        %v1816 = vlaneseq
        %v1817 = vshrl.u32 %v1816, 7
        %v1818 = vsub.s32 1, %v1817
        %v1819 = vrot.slane %v1810, %v1818
        %v1820 = vlaneseq
        %v1821 = vshrl.u32 %v1820, 7
        %v1822 = vsub.s32 2, %v1821
        %v1823 = vrot.slane %v1810, %v1822
        %v1824 = vlaneseq
        %v1825 = vshrl.u32 %v1824, 7
        %v1826 = vsub.s32 3, %v1825
        %v1827 = vrot.slane %v1810, %v1826
        %1828 = vrot.lane.b32.xlu0 %v1815, 32
        %v1829 = vpop.permute.xlu0 %1828
        %1830 = vrot.lane.b32.xlu0 %v1819, 32
        %v1831 = vpop.permute.xlu0 %1830
        %1832 = vrot.lane.b32.xlu0 %v1823, 32
        %v1833 = vpop.permute.xlu0 %1832
        %1834 = vrot.lane.b32.xlu0 %v1827, 32
        %v1835 = vpop.permute.xlu0 %1834
        %v1836 = vsel %vm1234, %v1829, %v1831
        %v1837 = vsel %vm1234, %v1831, %v1833
        %v1838 = vsel %vm1234, %v1833, %v1835
        %v1844 = vmul.f32 %v447, %v1829
        %v1845 = vmul.f32 %v448, %v1836
        %v1846 = vmul.f32 %v449, %v1837
        %v1847 = vmul.f32 %v450, %v1838
        %v1848 = vmul.f32 %v451, %v1835
        %v1849 = vmul.f32 %v452, %v1829
        %v1850 = vmul.f32 %v453, %v1836
        %v1851 = vmul.f32 %v454, %v1837
        %v1852 = vmul.f32 %v455, %v1838
        %v1853 = vmul.f32 %v456, %v1835
        %v1854 = vmul.f32 %v457, %v1829
        %v1855 = vmul.f32 %v458, %v1836
        %v1856 = vmul.f32 %v459, %v1837
        %v1857 = vmul.f32 %v460, %v1838
        %v1858 = vmul.f32 %v461, %v1835
        %v1874 = vrot.slane %v1844, 2
        %v1875 = vrot.slane %v1849, 2
        %v1876 = vsel %vm753, %v1874, %v1875
        %v1877 = vrot.slane %v1845, 2
        %v1878 = vrot.slane %v1850, 2
        %v1879 = vsel %vm753, %v1877, %v1878
        %v1880 = vrot.slane %v1846, 2
        %v1881 = vrot.slane %v1851, 2
        %v1882 = vsel %vm753, %v1880, %v1881
        %v1883 = vrot.slane %v1847, 2
        %v1884 = vrot.slane %v1852, 2
        %v1885 = vsel %vm753, %v1883, %v1884
        %v1886 = vrot.slane %v1848, 2
        %v1887 = vrot.slane %v1853, 2
        %v1888 = vsel %vm753, %v1886, %v1887
        %v1889 = vrot.slane %v1854, 2
        %v1890 = vsel %vm753, %v1875, %v1889
        %v1891 = vrot.slane %v1855, 2
        %v1892 = vsel %vm753, %v1878, %v1891
        %v1893 = vrot.slane %v1856, 2
        %v1894 = vsel %vm753, %v1881, %v1893
        %v1895 = vrot.slane %v1857, 2
        %v1896 = vsel %vm753, %v1884, %v1895
        %v1897 = vrot.slane %v1858, 2
        %v1898 = vsel %vm753, %v1887, %v1897
        %1899 = vrot.lane.b32.xlu0 %v1876, 96
        %v1900 = vpop.permute.xlu0 %1899
        %1901 = vrot.lane.b32.xlu0 %v1879, 96
        %v1902 = vpop.permute.xlu0 %1901
        %1903 = vrot.lane.b32.xlu0 %v1882, 96
        %v1904 = vpop.permute.xlu0 %1903
        %1905 = vrot.lane.b32.xlu0 %v1885, 96
        %v1906 = vpop.permute.xlu0 %1905
        %1907 = vrot.lane.b32.xlu0 %v1888, 96
        %v1908 = vpop.permute.xlu0 %1907
        %1909 = vrot.lane.b32.xlu0 %v1890, 96
        %v1910 = vpop.permute.xlu0 %1909
        %1911 = vrot.lane.b32.xlu0 %v1892, 96
        %v1912 = vpop.permute.xlu0 %1911
        %1913 = vrot.lane.b32.xlu0 %v1894, 96
        %v1914 = vpop.permute.xlu0 %1913
        %1915 = vrot.lane.b32.xlu0 %v1896, 96
        %v1916 = vpop.permute.xlu0 %1915
        %1917 = vrot.lane.b32.xlu0 %v1898, 96
        %v1918 = vpop.permute.xlu0 %1917
        %v1919 = vsel %vm1283, %v1900, %v1902
        %v1920 = vsel %vm1283, %v1902, %v1904
        %v1921 = vsel %vm1283, %v1904, %v1906
        %v1922 = vsel %vm1283, %v1906, %v1908
        %v1923 = vsel %vm1283, %v1910, %v1912
        %v1924 = vsel %vm1283, %v1912, %v1914
        %v1925 = vsel %vm1283, %v1914, %v1916
        %v1926 = vsel %vm1283, %v1916, %v1918
        %v1935 = vadd.f32 %v1667, %v1919
        %v1936 = vadd.f32 %v1668, %v1920
        %v1937 = vadd.f32 %v1669, %v1921
        %v1938 = vadd.f32 %v1670, %v1922
        %v1939 = vadd.f32 %v1671, %v1923
        %v1940 = vadd.f32 %v1672, %v1924
        %v1941 = vadd.f32 %v1673, %v1925
        %v1942 = vadd.f32 %v1674, %v1926
        %s1943 = scalar_lea.vmem %s1, 64
        %v1944 = vld [vmem:[%s1943] ss:$8 sm:$0xf]
        %v1946 = vlaneseq
        %v1947 = vshrl.u32 %v1946, 7
        %v1948 = vsub.s32 0, %v1947
        %v1949 = vrot.slane %v1944, %v1948
        %v1950 = vlaneseq
        %v1951 = vshrl.u32 %v1950, 7
        %v1952 = vsub.s32 1, %v1951
        %v1953 = vrot.slane %v1944, %v1952
        %v1954 = vlaneseq
        %v1955 = vshrl.u32 %v1954, 7
        %v1956 = vsub.s32 2, %v1955
        %v1957 = vrot.slane %v1944, %v1956
        %v1958 = vlaneseq
        %v1959 = vshrl.u32 %v1958, 7
        %v1960 = vsub.s32 3, %v1959
        %v1961 = vrot.slane %v1944, %v1960
        %1962 = vrot.lane.b32.xlu0 %v1949, 32
        %v1963 = vpop.permute.xlu0 %1962
        %1964 = vrot.lane.b32.xlu0 %v1953, 32
        %v1965 = vpop.permute.xlu0 %1964
        %1966 = vrot.lane.b32.xlu0 %v1957, 32
        %v1967 = vpop.permute.xlu0 %1966
        %1968 = vrot.lane.b32.xlu0 %v1961, 32
        %v1969 = vpop.permute.xlu0 %1968
        %v1970 = vsel %vm1234, %v1963, %v1965
        %v1971 = vsel %vm1234, %v1965, %v1967
        %v1972 = vsel %vm1234, %v1967, %v1969
        %v1978 = vmul.f32 %v447, %v1963
        %v1979 = vmul.f32 %v448, %v1970
        %v1980 = vmul.f32 %v449, %v1971
        %v1981 = vmul.f32 %v450, %v1972
        %v1982 = vmul.f32 %v451, %v1969
        %v1983 = vmul.f32 %v452, %v1963
        %v1984 = vmul.f32 %v453, %v1970
        %v1985 = vmul.f32 %v454, %v1971
        %v1986 = vmul.f32 %v455, %v1972
        %v1987 = vmul.f32 %v456, %v1969
        %v1988 = vmul.f32 %v457, %v1963
        %v1989 = vmul.f32 %v458, %v1970
        %v1990 = vmul.f32 %v459, %v1971
        %v1991 = vmul.f32 %v460, %v1972
        %v1992 = vmul.f32 %v461, %v1969
        %v2008 = vrot.slane %v1978, 3
        %v2009 = vrot.slane %v1983, 3
        %v2010 = vsel %vm920, %v2008, %v2009
        %v2011 = vrot.slane %v1979, 3
        %v2012 = vrot.slane %v1984, 3
        %v2013 = vsel %vm920, %v2011, %v2012
        %v2014 = vrot.slane %v1980, 3
        %v2015 = vrot.slane %v1985, 3
        %v2016 = vsel %vm920, %v2014, %v2015
        %v2017 = vrot.slane %v1981, 3
        %v2018 = vrot.slane %v1986, 3
        %v2019 = vsel %vm920, %v2017, %v2018
        %v2020 = vrot.slane %v1982, 3
        %v2021 = vrot.slane %v1987, 3
        %v2022 = vsel %vm920, %v2020, %v2021
        %v2023 = vrot.slane %v1988, 3
        %v2024 = vsel %vm920, %v2009, %v2023
        %v2025 = vrot.slane %v1989, 3
        %v2026 = vsel %vm920, %v2012, %v2025
        %v2027 = vrot.slane %v1990, 3
        %v2028 = vsel %vm920, %v2015, %v2027
        %v2029 = vrot.slane %v1991, 3
        %v2030 = vsel %vm920, %v2018, %v2029
        %v2031 = vrot.slane %v1992, 3
        %v2032 = vsel %vm920, %v2021, %v2031
        %2033 = vrot.lane.b32.xlu0 %v2010, 96
        %v2034 = vpop.permute.xlu0 %2033
        %2035 = vrot.lane.b32.xlu0 %v2013, 96
        %v2036 = vpop.permute.xlu0 %2035
        %2037 = vrot.lane.b32.xlu0 %v2016, 96
        %v2038 = vpop.permute.xlu0 %2037
        %2039 = vrot.lane.b32.xlu0 %v2019, 96
        %v2040 = vpop.permute.xlu0 %2039
        %2041 = vrot.lane.b32.xlu0 %v2022, 96
        %v2042 = vpop.permute.xlu0 %2041
        %2043 = vrot.lane.b32.xlu0 %v2024, 96
        %v2044 = vpop.permute.xlu0 %2043
        %2045 = vrot.lane.b32.xlu0 %v2026, 96
        %v2046 = vpop.permute.xlu0 %2045
        %2047 = vrot.lane.b32.xlu0 %v2028, 96
        %v2048 = vpop.permute.xlu0 %2047
        %2049 = vrot.lane.b32.xlu0 %v2030, 96
        %v2050 = vpop.permute.xlu0 %2049
        %2051 = vrot.lane.b32.xlu0 %v2032, 96
        %v2052 = vpop.permute.xlu0 %2051
        %v2053 = vsel %vm1283, %v2034, %v2036
        %v2054 = vsel %vm1283, %v2036, %v2038
        %v2055 = vsel %vm1283, %v2038, %v2040
        %v2056 = vsel %vm1283, %v2040, %v2042
        %v2057 = vsel %vm1283, %v2044, %v2046
        %v2058 = vsel %vm1283, %v2046, %v2048
        %v2059 = vsel %vm1283, %v2048, %v2050
        %v2060 = vsel %vm1283, %v2050, %v2052
        %v2069 = vadd.f32 %v1801, %v2053
        %v2070 = vadd.f32 %v1802, %v2054
        %v2071 = vadd.f32 %v1803, %v2055
        %v2072 = vadd.f32 %v1804, %v2056
        %v2073 = vadd.f32 %v1805, %v2057
        %v2074 = vadd.f32 %v1806, %v2058
        %v2075 = vadd.f32 %v1807, %v2059
        %v2076 = vadd.f32 %v1808, %v2060
        %s2077 = scalar_lea.vmem %s500, 64
        %v2078 = vld [vmem:[%s2077] ss:$8 sm:$0xf]
        %v2080 = vlaneseq
        %v2081 = vshrl.u32 %v2080, 7
        %v2082 = vsub.s32 0, %v2081
        %v2083 = vrot.slane %v2078, %v2082
        %v2084 = vlaneseq
        %v2085 = vshrl.u32 %v2084, 7
        %v2086 = vsub.s32 1, %v2085
        %v2087 = vrot.slane %v2078, %v2086
        %v2088 = vlaneseq
        %v2089 = vshrl.u32 %v2088, 7
        %v2090 = vsub.s32 2, %v2089
        %v2091 = vrot.slane %v2078, %v2090
        %v2092 = vlaneseq
        %v2093 = vshrl.u32 %v2092, 7
        %v2094 = vsub.s32 3, %v2093
        %v2095 = vrot.slane %v2078, %v2094
        %2096 = vrot.lane.b32.xlu0 %v2083, 32
        %v2097 = vpop.permute.xlu0 %2096
        %2098 = vrot.lane.b32.xlu0 %v2087, 32
        %v2099 = vpop.permute.xlu0 %2098
        %2100 = vrot.lane.b32.xlu0 %v2091, 32
        %v2101 = vpop.permute.xlu0 %2100
        %2102 = vrot.lane.b32.xlu0 %v2095, 32
        %v2103 = vpop.permute.xlu0 %2102
        %v2104 = vsel %vm1234, %v2097, %v2099
        %v2105 = vsel %vm1234, %v2099, %v2101
        %v2106 = vsel %vm1234, %v2101, %v2103
        %v2112 = vmul.f32 %v447, %v2097
        %v2113 = vmul.f32 %v448, %v2104
        %v2114 = vmul.f32 %v449, %v2105
        %v2115 = vmul.f32 %v450, %v2106
        %v2116 = vmul.f32 %v451, %v2103
        %v2117 = vmul.f32 %v452, %v2097
        %v2118 = vmul.f32 %v453, %v2104
        %v2119 = vmul.f32 %v454, %v2105
        %v2120 = vmul.f32 %v455, %v2106
        %v2121 = vmul.f32 %v456, %v2103
        %v2122 = vmul.f32 %v457, %v2097
        %v2123 = vmul.f32 %v458, %v2104
        %v2124 = vmul.f32 %v459, %v2105
        %v2125 = vmul.f32 %v460, %v2106
        %v2126 = vmul.f32 %v461, %v2103
        %v2142 = vrot.slane %v2112, 3
        %v2143 = vrot.slane %v2117, 3
        %v2144 = vsel %vm920, %v2142, %v2143
        %v2145 = vrot.slane %v2113, 3
        %v2146 = vrot.slane %v2118, 3
        %v2147 = vsel %vm920, %v2145, %v2146
        %v2148 = vrot.slane %v2114, 3
        %v2149 = vrot.slane %v2119, 3
        %v2150 = vsel %vm920, %v2148, %v2149
        %v2151 = vrot.slane %v2115, 3
        %v2152 = vrot.slane %v2120, 3
        %v2153 = vsel %vm920, %v2151, %v2152
        %v2154 = vrot.slane %v2116, 3
        %v2155 = vrot.slane %v2121, 3
        %v2156 = vsel %vm920, %v2154, %v2155
        %v2157 = vrot.slane %v2122, 3
        %v2158 = vsel %vm920, %v2143, %v2157
        %v2159 = vrot.slane %v2123, 3
        %v2160 = vsel %vm920, %v2146, %v2159
        %v2161 = vrot.slane %v2124, 3
        %v2162 = vsel %vm920, %v2149, %v2161
        %v2163 = vrot.slane %v2125, 3
        %v2164 = vsel %vm920, %v2152, %v2163
        %v2165 = vrot.slane %v2126, 3
        %v2166 = vsel %vm920, %v2155, %v2165
        %2167 = vrot.lane.b32.xlu0 %v2144, 96
        %v2168 = vpop.permute.xlu0 %2167
        %2169 = vrot.lane.b32.xlu0 %v2147, 96
        %v2170 = vpop.permute.xlu0 %2169
        %2171 = vrot.lane.b32.xlu0 %v2150, 96
        %v2172 = vpop.permute.xlu0 %2171
        %2173 = vrot.lane.b32.xlu0 %v2153, 96
        %v2174 = vpop.permute.xlu0 %2173
        %2175 = vrot.lane.b32.xlu0 %v2156, 96
        %v2176 = vpop.permute.xlu0 %2175
        %2177 = vrot.lane.b32.xlu0 %v2158, 96
        %v2178 = vpop.permute.xlu0 %2177
        %2179 = vrot.lane.b32.xlu0 %v2160, 96
        %v2180 = vpop.permute.xlu0 %2179
        %2181 = vrot.lane.b32.xlu0 %v2162, 96
        %v2182 = vpop.permute.xlu0 %2181
        %2183 = vrot.lane.b32.xlu0 %v2164, 96
        %v2184 = vpop.permute.xlu0 %2183
        %2185 = vrot.lane.b32.xlu0 %v2166, 96
        %v2186 = vpop.permute.xlu0 %2185
        %v2187 = vsel %vm1283, %v2168, %v2170
        %v2188 = vsel %vm1283, %v2170, %v2172
        %v2189 = vsel %vm1283, %v2172, %v2174
        %v2190 = vsel %vm1283, %v2174, %v2176
        %v2191 = vsel %vm1283, %v2178, %v2180
        %v2192 = vsel %vm1283, %v2180, %v2182
        %v2193 = vsel %vm1283, %v2182, %v2184
        %v2194 = vsel %vm1283, %v2184, %v2186
        %v2203 = vadd.f32 %v1935, %v2187
        %v2204 = vadd.f32 %v1936, %v2188
        %v2205 = vadd.f32 %v1937, %v2189
        %v2206 = vadd.f32 %v1938, %v2190
        %v2207 = vadd.f32 %v1939, %v2191
        %v2208 = vadd.f32 %v1940, %v2192
        %v2209 = vadd.f32 %v1941, %v2193
        %v2210 = vadd.f32 %v1942, %v2194
        %s2211 = scalar_lea.vmem %s1, 69
        %v2212 = vld [vmem:[%s2211] ss:$8 sm:$0xf]
        %v2214 = vlaneseq
        %v2215 = vshrl.u32 %v2214, 7
        %v2216 = vsub.s32 0, %v2215
        %v2217 = vrot.slane %v2212, %v2216
        %v2218 = vlaneseq
        %v2219 = vshrl.u32 %v2218, 7
        %v2220 = vsub.s32 1, %v2219
        %v2221 = vrot.slane %v2212, %v2220
        %v2222 = vlaneseq
        %v2223 = vshrl.u32 %v2222, 7
        %v2224 = vsub.s32 2, %v2223
        %v2225 = vrot.slane %v2212, %v2224
        %v2226 = vlaneseq
        %v2227 = vshrl.u32 %v2226, 7
        %v2228 = vsub.s32 3, %v2227
        %v2229 = vrot.slane %v2212, %v2228
        %2230 = vrot.lane.b32.xlu0 %v2217, 32
        %v2231 = vpop.permute.xlu0 %2230
        %2232 = vrot.lane.b32.xlu0 %v2221, 32
        %v2233 = vpop.permute.xlu0 %2232
        %2234 = vrot.lane.b32.xlu0 %v2225, 32
        %v2235 = vpop.permute.xlu0 %2234
        %2236 = vrot.lane.b32.xlu0 %v2229, 32
        %v2237 = vpop.permute.xlu0 %2236
        %v2238 = vsel %vm1234, %v2231, %v2233
        %v2239 = vsel %vm1234, %v2233, %v2235
        %v2240 = vsel %vm1234, %v2235, %v2237
        %v2246 = vmul.f32 %v447, %v2231
        %v2247 = vmul.f32 %v448, %v2238
        %v2248 = vmul.f32 %v449, %v2239
        %v2249 = vmul.f32 %v450, %v2240
        %v2250 = vmul.f32 %v451, %v2237
        %v2251 = vmul.f32 %v452, %v2231
        %v2252 = vmul.f32 %v453, %v2238
        %v2253 = vmul.f32 %v454, %v2239
        %v2254 = vmul.f32 %v455, %v2240
        %v2255 = vmul.f32 %v456, %v2237
        %v2256 = vmul.f32 %v457, %v2231
        %v2257 = vmul.f32 %v458, %v2238
        %v2258 = vmul.f32 %v459, %v2239
        %v2259 = vmul.f32 %v460, %v2240
        %v2260 = vmul.f32 %v461, %v2237
        %v2276 = vrot.slane %v2246, 4
        %v2277 = vrot.slane %v2251, 4
        %v2278 = vsel %vm1087, %v2276, %v2277
        %v2279 = vrot.slane %v2247, 4
        %v2280 = vrot.slane %v2252, 4
        %v2281 = vsel %vm1087, %v2279, %v2280
        %v2282 = vrot.slane %v2248, 4
        %v2283 = vrot.slane %v2253, 4
        %v2284 = vsel %vm1087, %v2282, %v2283
        %v2285 = vrot.slane %v2249, 4
        %v2286 = vrot.slane %v2254, 4
        %v2287 = vsel %vm1087, %v2285, %v2286
        %v2288 = vrot.slane %v2250, 4
        %v2289 = vrot.slane %v2255, 4
        %v2290 = vsel %vm1087, %v2288, %v2289
        %v2291 = vrot.slane %v2256, 4
        %v2292 = vsel %vm1087, %v2277, %v2291
        %v2293 = vrot.slane %v2257, 4
        %v2294 = vsel %vm1087, %v2280, %v2293
        %v2295 = vrot.slane %v2258, 4
        %v2296 = vsel %vm1087, %v2283, %v2295
        %v2297 = vrot.slane %v2259, 4
        %v2298 = vsel %vm1087, %v2286, %v2297
        %v2299 = vrot.slane %v2260, 4
        %v2300 = vsel %vm1087, %v2289, %v2299
        %2301 = vrot.lane.b32.xlu0 %v2278, 96
        %v2302 = vpop.permute.xlu0 %2301
        %2303 = vrot.lane.b32.xlu0 %v2281, 96
        %v2304 = vpop.permute.xlu0 %2303
        %2305 = vrot.lane.b32.xlu0 %v2284, 96
        %v2306 = vpop.permute.xlu0 %2305
        %2307 = vrot.lane.b32.xlu0 %v2287, 96
        %v2308 = vpop.permute.xlu0 %2307
        %2309 = vrot.lane.b32.xlu0 %v2290, 96
        %v2310 = vpop.permute.xlu0 %2309
        %2311 = vrot.lane.b32.xlu0 %v2292, 96
        %v2312 = vpop.permute.xlu0 %2311
        %2313 = vrot.lane.b32.xlu0 %v2294, 96
        %v2314 = vpop.permute.xlu0 %2313
        %2315 = vrot.lane.b32.xlu0 %v2296, 96
        %v2316 = vpop.permute.xlu0 %2315
        %2317 = vrot.lane.b32.xlu0 %v2298, 96
        %v2318 = vpop.permute.xlu0 %2317
        %2319 = vrot.lane.b32.xlu0 %v2300, 96
        %v2320 = vpop.permute.xlu0 %2319
        %v2321 = vsel %vm1283, %v2302, %v2304
        %v2322 = vsel %vm1283, %v2304, %v2306
        %v2323 = vsel %vm1283, %v2306, %v2308
        %v2324 = vsel %vm1283, %v2308, %v2310
        %v2325 = vsel %vm1283, %v2312, %v2314
        %v2326 = vsel %vm1283, %v2314, %v2316
        %v2327 = vsel %vm1283, %v2316, %v2318
        %v2328 = vsel %vm1283, %v2318, %v2320
        %v2337 = vadd.f32 %v2069, %v2321
        %v2338 = vadd.f32 %v2070, %v2322
        %v2339 = vadd.f32 %v2071, %v2323
        %v2340 = vadd.f32 %v2072, %v2324
        %v2341 = vadd.f32 %v2073, %v2325
        %v2342 = vadd.f32 %v2074, %v2326
        %v2343 = vadd.f32 %v2075, %v2327
        %v2344 = vadd.f32 %v2076, %v2328
        %s2345 = scalar_lea.vmem %s500, 69
        %v2346 = vld [vmem:[%s2345] ss:$8 sm:$0xf]
        %v2348 = vlaneseq
        %v2349 = vshrl.u32 %v2348, 7
        %v2350 = vsub.s32 0, %v2349
        %v2351 = vrot.slane %v2346, %v2350
        %v2352 = vlaneseq
        %v2353 = vshrl.u32 %v2352, 7
        %v2354 = vsub.s32 1, %v2353
        %v2355 = vrot.slane %v2346, %v2354
        %v2356 = vlaneseq
        %v2357 = vshrl.u32 %v2356, 7
        %v2358 = vsub.s32 2, %v2357
        %v2359 = vrot.slane %v2346, %v2358
        %v2360 = vlaneseq
        %v2361 = vshrl.u32 %v2360, 7
        %v2362 = vsub.s32 3, %v2361
        %v2363 = vrot.slane %v2346, %v2362
        %2364 = vrot.lane.b32.xlu0 %v2351, 32
        %v2365 = vpop.permute.xlu0 %2364
        %2366 = vrot.lane.b32.xlu0 %v2355, 32
        %v2367 = vpop.permute.xlu0 %2366
        %2368 = vrot.lane.b32.xlu0 %v2359, 32
        %v2369 = vpop.permute.xlu0 %2368
        %2370 = vrot.lane.b32.xlu0 %v2363, 32
        %v2371 = vpop.permute.xlu0 %2370
        %v2372 = vsel %vm1234, %v2365, %v2367
        %v2373 = vsel %vm1234, %v2367, %v2369
        %v2374 = vsel %vm1234, %v2369, %v2371
        %v2380 = vmul.f32 %v447, %v2365
        %v2381 = vmul.f32 %v448, %v2372
        %v2382 = vmul.f32 %v449, %v2373
        %v2383 = vmul.f32 %v450, %v2374
        %v2384 = vmul.f32 %v451, %v2371
        %v2385 = vmul.f32 %v452, %v2365
        %v2386 = vmul.f32 %v453, %v2372
        %v2387 = vmul.f32 %v454, %v2373
        %v2388 = vmul.f32 %v455, %v2374
        %v2389 = vmul.f32 %v456, %v2371
        %v2390 = vmul.f32 %v457, %v2365
        %v2391 = vmul.f32 %v458, %v2372
        %v2392 = vmul.f32 %v459, %v2373
        %v2393 = vmul.f32 %v460, %v2374
        %v2394 = vmul.f32 %v461, %v2371
        %v2410 = vrot.slane %v2380, 4
        %v2411 = vrot.slane %v2385, 4
        %v2412 = vsel %vm1087, %v2410, %v2411
        %v2413 = vrot.slane %v2381, 4
        %v2414 = vrot.slane %v2386, 4
        %v2415 = vsel %vm1087, %v2413, %v2414
        %v2416 = vrot.slane %v2382, 4
        %v2417 = vrot.slane %v2387, 4
        %v2418 = vsel %vm1087, %v2416, %v2417
        %v2419 = vrot.slane %v2383, 4
        %v2420 = vrot.slane %v2388, 4
        %v2421 = vsel %vm1087, %v2419, %v2420
        %v2422 = vrot.slane %v2384, 4
        %v2423 = vrot.slane %v2389, 4
        %v2424 = vsel %vm1087, %v2422, %v2423
        %v2425 = vrot.slane %v2390, 4
        %v2426 = vsel %vm1087, %v2411, %v2425
        %v2427 = vrot.slane %v2391, 4
        %v2428 = vsel %vm1087, %v2414, %v2427
        %v2429 = vrot.slane %v2392, 4
        %v2430 = vsel %vm1087, %v2417, %v2429
        %v2431 = vrot.slane %v2393, 4
        %v2432 = vsel %vm1087, %v2420, %v2431
        %v2433 = vrot.slane %v2394, 4
        %v2434 = vsel %vm1087, %v2423, %v2433
        %2435 = vrot.lane.b32.xlu0 %v2412, 96
        %v2436 = vpop.permute.xlu0 %2435
        %2437 = vrot.lane.b32.xlu0 %v2415, 96
        %v2438 = vpop.permute.xlu0 %2437
        %2439 = vrot.lane.b32.xlu0 %v2418, 96
        %v2440 = vpop.permute.xlu0 %2439
        %2441 = vrot.lane.b32.xlu0 %v2421, 96
        %v2442 = vpop.permute.xlu0 %2441
        %2443 = vrot.lane.b32.xlu0 %v2424, 96
        %v2444 = vpop.permute.xlu0 %2443
        %2445 = vrot.lane.b32.xlu0 %v2426, 96
        %v2446 = vpop.permute.xlu0 %2445
        %2447 = vrot.lane.b32.xlu0 %v2428, 96
        %v2448 = vpop.permute.xlu0 %2447
        %2449 = vrot.lane.b32.xlu0 %v2430, 96
        %v2450 = vpop.permute.xlu0 %2449
        %2451 = vrot.lane.b32.xlu0 %v2432, 96
        %v2452 = vpop.permute.xlu0 %2451
        %2453 = vrot.lane.b32.xlu0 %v2434, 96
        %v2454 = vpop.permute.xlu0 %2453
        %v2455 = vsel %vm1283, %v2436, %v2438
        %v2456 = vsel %vm1283, %v2438, %v2440
        %v2457 = vsel %vm1283, %v2440, %v2442
        %v2458 = vsel %vm1283, %v2442, %v2444
        %v2459 = vsel %vm1283, %v2446, %v2448
        %v2460 = vsel %vm1283, %v2448, %v2450
        %v2461 = vsel %vm1283, %v2450, %v2452
        %v2462 = vsel %vm1283, %v2452, %v2454
        %v2471 = vadd.f32 %v2203, %v2455
        %v2472 = vadd.f32 %v2204, %v2456
        %v2473 = vadd.f32 %v2205, %v2457
        %v2474 = vadd.f32 %v2206, %v2458
        %v2475 = vadd.f32 %v2207, %v2459
        %v2476 = vadd.f32 %v2208, %v2460
        %v2477 = vadd.f32 %v2209, %v2461
        %v2478 = vadd.f32 %v2210, %v2462
        %s2479 = scalar_lea.vmem %s1, 2
        %v2480 = vld [vmem:[%s2479] ss:$8 sm:$0xf]
        %v2482 = vlaneseq
        %v2483 = vshrl.u32 %v2482, 7
        %v2484 = vsub.s32 0, %v2483
        %v2485 = vrot.slane %v2480, %v2484
        %v2486 = vlaneseq
        %v2487 = vshrl.u32 %v2486, 7
        %v2488 = vsub.s32 1, %v2487
        %v2489 = vrot.slane %v2480, %v2488
        %v2490 = vlaneseq
        %v2491 = vshrl.u32 %v2490, 7
        %v2492 = vsub.s32 2, %v2491
        %v2493 = vrot.slane %v2480, %v2492
        %v2494 = vlaneseq
        %v2495 = vshrl.u32 %v2494, 7
        %v2496 = vsub.s32 3, %v2495
        %v2497 = vrot.slane %v2480, %v2496
        %2498 = vrot.lane.b32.xlu0 %v2485, 64
        %v2499 = vpop.permute.xlu0 %2498
        %2500 = vrot.lane.b32.xlu0 %v2489, 64
        %v2501 = vpop.permute.xlu0 %2500
        %2502 = vrot.lane.b32.xlu0 %v2493, 64
        %v2503 = vpop.permute.xlu0 %2502
        %2504 = vrot.lane.b32.xlu0 %v2497, 64
        %v2505 = vpop.permute.xlu0 %2504
        %v2506 = vsel %vm345, %v2499, %v2501
        %v2507 = vsel %vm345, %v2501, %v2503
        %v2508 = vsel %vm345, %v2503, %v2505
        %v2514 = vmul.f32 %v447, %v2499
        %v2515 = vmul.f32 %v448, %v2506
        %v2516 = vmul.f32 %v449, %v2507
        %v2517 = vmul.f32 %v450, %v2508
        %v2518 = vmul.f32 %v451, %v2505
        %v2519 = vmul.f32 %v452, %v2499
        %v2520 = vmul.f32 %v453, %v2506
        %v2521 = vmul.f32 %v454, %v2507
        %v2522 = vmul.f32 %v455, %v2508
        %v2523 = vmul.f32 %v456, %v2505
        %2534 = vrot.lane.b32.xlu0 %v2514, 64
        %v2535 = vpop.permute.xlu0 %2534
        %2536 = vrot.lane.b32.xlu0 %v2515, 64
        %v2537 = vpop.permute.xlu0 %2536
        %2538 = vrot.lane.b32.xlu0 %v2516, 64
        %v2539 = vpop.permute.xlu0 %2538
        %2540 = vrot.lane.b32.xlu0 %v2517, 64
        %v2541 = vpop.permute.xlu0 %2540
        %2542 = vrot.lane.b32.xlu0 %v2518, 64
        %v2543 = vpop.permute.xlu0 %2542
        %2544 = vrot.lane.b32.xlu0 %v2519, 64
        %v2545 = vpop.permute.xlu0 %2544
        %2546 = vrot.lane.b32.xlu0 %v2520, 64
        %v2547 = vpop.permute.xlu0 %2546
        %2548 = vrot.lane.b32.xlu0 %v2521, 64
        %v2549 = vpop.permute.xlu0 %2548
        %2550 = vrot.lane.b32.xlu0 %v2522, 64
        %v2551 = vpop.permute.xlu0 %2550
        %2552 = vrot.lane.b32.xlu0 %v2523, 64
        %v2553 = vpop.permute.xlu0 %2552
        %v2554 = vsel %vm345, %v2535, %v2537
        %v2555 = vsel %vm345, %v2537, %v2539
        %v2556 = vsel %vm345, %v2539, %v2541
        %v2557 = vsel %vm345, %v2541, %v2543
        %v2558 = vsel %vm345, %v2545, %v2547
        %v2559 = vsel %vm345, %v2547, %v2549
        %v2560 = vsel %vm345, %v2549, %v2551
        %v2561 = vsel %vm345, %v2551, %v2553
        %v2570 = vadd.f32 %v2337, %v2554
        %v2571 = vadd.f32 %v2338, %v2555
        %v2572 = vadd.f32 %v2339, %v2556
        %v2573 = vadd.f32 %v2340, %v2557
        %v2574 = vadd.f32 %v2341, %v2558
        %v2575 = vadd.f32 %v2342, %v2559
        %v2576 = vadd.f32 %v2343, %v2560
        %v2577 = vadd.f32 %v2344, %v2561
        %s2578 = scalar_lea.vmem %s500, 2
        %v2579 = vld [vmem:[%s2578] ss:$8 sm:$0xf]
        %v2581 = vlaneseq
        %v2582 = vshrl.u32 %v2581, 7
        %v2583 = vsub.s32 0, %v2582
        %v2584 = vrot.slane %v2579, %v2583
        %v2585 = vlaneseq
        %v2586 = vshrl.u32 %v2585, 7
        %v2587 = vsub.s32 1, %v2586
        %v2588 = vrot.slane %v2579, %v2587
        %v2589 = vlaneseq
        %v2590 = vshrl.u32 %v2589, 7
        %v2591 = vsub.s32 2, %v2590
        %v2592 = vrot.slane %v2579, %v2591
        %v2593 = vlaneseq
        %v2594 = vshrl.u32 %v2593, 7
        %v2595 = vsub.s32 3, %v2594
        %v2596 = vrot.slane %v2579, %v2595
        %2597 = vrot.lane.b32.xlu0 %v2584, 64
        %v2598 = vpop.permute.xlu0 %2597
        %2599 = vrot.lane.b32.xlu0 %v2588, 64
        %v2600 = vpop.permute.xlu0 %2599
        %2601 = vrot.lane.b32.xlu0 %v2592, 64
        %v2602 = vpop.permute.xlu0 %2601
        %2603 = vrot.lane.b32.xlu0 %v2596, 64
        %v2604 = vpop.permute.xlu0 %2603
        %v2605 = vsel %vm345, %v2598, %v2600
        %v2606 = vsel %vm345, %v2600, %v2602
        %v2607 = vsel %vm345, %v2602, %v2604
        %v2613 = vmul.f32 %v447, %v2598
        %v2614 = vmul.f32 %v448, %v2605
        %v2615 = vmul.f32 %v449, %v2606
        %v2616 = vmul.f32 %v450, %v2607
        %v2617 = vmul.f32 %v451, %v2604
        %v2618 = vmul.f32 %v452, %v2598
        %v2619 = vmul.f32 %v453, %v2605
        %v2620 = vmul.f32 %v454, %v2606
        %v2621 = vmul.f32 %v455, %v2607
        %v2622 = vmul.f32 %v456, %v2604
        %2633 = vrot.lane.b32.xlu0 %v2613, 64
        %v2634 = vpop.permute.xlu0 %2633
        %2635 = vrot.lane.b32.xlu0 %v2614, 64
        %v2636 = vpop.permute.xlu0 %2635
        %2637 = vrot.lane.b32.xlu0 %v2615, 64
        %v2638 = vpop.permute.xlu0 %2637
        %2639 = vrot.lane.b32.xlu0 %v2616, 64
        %v2640 = vpop.permute.xlu0 %2639
        %2641 = vrot.lane.b32.xlu0 %v2617, 64
        %v2642 = vpop.permute.xlu0 %2641
        %2643 = vrot.lane.b32.xlu0 %v2618, 64
        %v2644 = vpop.permute.xlu0 %2643
        %2645 = vrot.lane.b32.xlu0 %v2619, 64
        %v2646 = vpop.permute.xlu0 %2645
        %2647 = vrot.lane.b32.xlu0 %v2620, 64
        %v2648 = vpop.permute.xlu0 %2647
        %2649 = vrot.lane.b32.xlu0 %v2621, 64
        %v2650 = vpop.permute.xlu0 %2649
        %2651 = vrot.lane.b32.xlu0 %v2622, 64
        %v2652 = vpop.permute.xlu0 %2651
        %v2653 = vsel %vm345, %v2634, %v2636
        %v2654 = vsel %vm345, %v2636, %v2638
        %v2655 = vsel %vm345, %v2638, %v2640
        %v2656 = vsel %vm345, %v2640, %v2642
        %v2657 = vsel %vm345, %v2644, %v2646
        %v2658 = vsel %vm345, %v2646, %v2648
        %v2659 = vsel %vm345, %v2648, %v2650
        %v2660 = vsel %vm345, %v2650, %v2652
        %v2669 = vadd.f32 %v2471, %v2653
        %v2670 = vadd.f32 %v2472, %v2654
        %v2671 = vadd.f32 %v2473, %v2655
        %v2672 = vadd.f32 %v2474, %v2656
        %v2673 = vadd.f32 %v2475, %v2657
        %v2674 = vadd.f32 %v2476, %v2658
        %v2675 = vadd.f32 %v2477, %v2659
        %v2676 = vadd.f32 %v2478, %v2660
        %s2677 = scalar_lea.vmem %s1, 7
        %v2678 = vld [vmem:[%s2677] ss:$8 sm:$0xf]
        %v2680 = vlaneseq
        %v2681 = vshrl.u32 %v2680, 7
        %v2682 = vsub.s32 0, %v2681
        %v2683 = vrot.slane %v2678, %v2682
        %v2684 = vlaneseq
        %v2685 = vshrl.u32 %v2684, 7
        %v2686 = vsub.s32 1, %v2685
        %v2687 = vrot.slane %v2678, %v2686
        %v2688 = vlaneseq
        %v2689 = vshrl.u32 %v2688, 7
        %v2690 = vsub.s32 2, %v2689
        %v2691 = vrot.slane %v2678, %v2690
        %v2692 = vlaneseq
        %v2693 = vshrl.u32 %v2692, 7
        %v2694 = vsub.s32 3, %v2693
        %v2695 = vrot.slane %v2678, %v2694
        %2696 = vrot.lane.b32.xlu0 %v2683, 64
        %v2697 = vpop.permute.xlu0 %2696
        %2698 = vrot.lane.b32.xlu0 %v2687, 64
        %v2699 = vpop.permute.xlu0 %2698
        %2700 = vrot.lane.b32.xlu0 %v2691, 64
        %v2701 = vpop.permute.xlu0 %2700
        %2702 = vrot.lane.b32.xlu0 %v2695, 64
        %v2703 = vpop.permute.xlu0 %2702
        %v2704 = vsel %vm345, %v2697, %v2699
        %v2705 = vsel %vm345, %v2699, %v2701
        %v2706 = vsel %vm345, %v2701, %v2703
        %v2712 = vmul.f32 %v447, %v2697
        %v2713 = vmul.f32 %v448, %v2704
        %v2714 = vmul.f32 %v449, %v2705
        %v2715 = vmul.f32 %v450, %v2706
        %v2716 = vmul.f32 %v451, %v2703
        %v2717 = vmul.f32 %v452, %v2697
        %v2718 = vmul.f32 %v453, %v2704
        %v2719 = vmul.f32 %v454, %v2705
        %v2720 = vmul.f32 %v455, %v2706
        %v2721 = vmul.f32 %v456, %v2703
        %v2722 = vmul.f32 %v457, %v2697
        %v2723 = vmul.f32 %v458, %v2704
        %v2724 = vmul.f32 %v459, %v2705
        %v2725 = vmul.f32 %v460, %v2706
        %v2726 = vmul.f32 %v461, %v2703
        %v2742 = vrot.slane %v2712, 1
        %v2743 = vrot.slane %v2717, 1
        %v2744 = vsel %vm586, %v2742, %v2743
        %v2745 = vrot.slane %v2713, 1
        %v2746 = vrot.slane %v2718, 1
        %v2747 = vsel %vm586, %v2745, %v2746
        %v2748 = vrot.slane %v2714, 1
        %v2749 = vrot.slane %v2719, 1
        %v2750 = vsel %vm586, %v2748, %v2749
        %v2751 = vrot.slane %v2715, 1
        %v2752 = vrot.slane %v2720, 1
        %v2753 = vsel %vm586, %v2751, %v2752
        %v2754 = vrot.slane %v2716, 1
        %v2755 = vrot.slane %v2721, 1
        %v2756 = vsel %vm586, %v2754, %v2755
        %v2757 = vrot.slane %v2722, 1
        %v2758 = vsel %vm586, %v2743, %v2757
        %v2759 = vrot.slane %v2723, 1
        %v2760 = vsel %vm586, %v2746, %v2759
        %v2761 = vrot.slane %v2724, 1
        %v2762 = vsel %vm586, %v2749, %v2761
        %v2763 = vrot.slane %v2725, 1
        %v2764 = vsel %vm586, %v2752, %v2763
        %v2765 = vrot.slane %v2726, 1
        %v2766 = vsel %vm586, %v2755, %v2765
        %2767 = vrot.lane.b32.xlu0 %v2744, 64
        %v2768 = vpop.permute.xlu0 %2767
        %2769 = vrot.lane.b32.xlu0 %v2747, 64
        %v2770 = vpop.permute.xlu0 %2769
        %2771 = vrot.lane.b32.xlu0 %v2750, 64
        %v2772 = vpop.permute.xlu0 %2771
        %2773 = vrot.lane.b32.xlu0 %v2753, 64
        %v2774 = vpop.permute.xlu0 %2773
        %2775 = vrot.lane.b32.xlu0 %v2756, 64
        %v2776 = vpop.permute.xlu0 %2775
        %2777 = vrot.lane.b32.xlu0 %v2758, 64
        %v2778 = vpop.permute.xlu0 %2777
        %2779 = vrot.lane.b32.xlu0 %v2760, 64
        %v2780 = vpop.permute.xlu0 %2779
        %2781 = vrot.lane.b32.xlu0 %v2762, 64
        %v2782 = vpop.permute.xlu0 %2781
        %2783 = vrot.lane.b32.xlu0 %v2764, 64
        %v2784 = vpop.permute.xlu0 %2783
        %2785 = vrot.lane.b32.xlu0 %v2766, 64
        %v2786 = vpop.permute.xlu0 %2785
        %v2787 = vsel %vm345, %v2768, %v2770
        %v2788 = vsel %vm345, %v2770, %v2772
        %v2789 = vsel %vm345, %v2772, %v2774
        %v2790 = vsel %vm345, %v2774, %v2776
        %v2791 = vsel %vm345, %v2778, %v2780
        %v2792 = vsel %vm345, %v2780, %v2782
        %v2793 = vsel %vm345, %v2782, %v2784
        %v2794 = vsel %vm345, %v2784, %v2786
        %v2803 = vadd.f32 %v2570, %v2787
        %v2804 = vadd.f32 %v2571, %v2788
        %v2805 = vadd.f32 %v2572, %v2789
        %v2806 = vadd.f32 %v2573, %v2790
        %v2807 = vadd.f32 %v2574, %v2791
        %v2808 = vadd.f32 %v2575, %v2792
        %v2809 = vadd.f32 %v2576, %v2793
        %v2810 = vadd.f32 %v2577, %v2794
        %s2811 = scalar_lea.vmem %s500, 7
        %v2812 = vld [vmem:[%s2811] ss:$8 sm:$0xf]
        %v2814 = vlaneseq
        %v2815 = vshrl.u32 %v2814, 7
        %v2816 = vsub.s32 0, %v2815
        %v2817 = vrot.slane %v2812, %v2816
        %v2818 = vlaneseq
        %v2819 = vshrl.u32 %v2818, 7
        %v2820 = vsub.s32 1, %v2819
        %v2821 = vrot.slane %v2812, %v2820
        %v2822 = vlaneseq
        %v2823 = vshrl.u32 %v2822, 7
        %v2824 = vsub.s32 2, %v2823
        %v2825 = vrot.slane %v2812, %v2824
        %v2826 = vlaneseq
        %v2827 = vshrl.u32 %v2826, 7
        %v2828 = vsub.s32 3, %v2827
        %v2829 = vrot.slane %v2812, %v2828
        %2830 = vrot.lane.b32.xlu0 %v2817, 64
        %v2831 = vpop.permute.xlu0 %2830
        %2832 = vrot.lane.b32.xlu0 %v2821, 64
        %v2833 = vpop.permute.xlu0 %2832
        %2834 = vrot.lane.b32.xlu0 %v2825, 64
        %v2835 = vpop.permute.xlu0 %2834
        %2836 = vrot.lane.b32.xlu0 %v2829, 64
        %v2837 = vpop.permute.xlu0 %2836
        %v2838 = vsel %vm345, %v2831, %v2833
        %v2839 = vsel %vm345, %v2833, %v2835
        %v2840 = vsel %vm345, %v2835, %v2837
        %v2846 = vmul.f32 %v447, %v2831
        %v2847 = vmul.f32 %v448, %v2838
        %v2848 = vmul.f32 %v449, %v2839
        %v2849 = vmul.f32 %v450, %v2840
        %v2850 = vmul.f32 %v451, %v2837
        %v2851 = vmul.f32 %v452, %v2831
        %v2852 = vmul.f32 %v453, %v2838
        %v2853 = vmul.f32 %v454, %v2839
        %v2854 = vmul.f32 %v455, %v2840
        %v2855 = vmul.f32 %v456, %v2837
        %v2856 = vmul.f32 %v457, %v2831
        %v2857 = vmul.f32 %v458, %v2838
        %v2858 = vmul.f32 %v459, %v2839
        %v2859 = vmul.f32 %v460, %v2840
        %v2860 = vmul.f32 %v461, %v2837
        %v2876 = vrot.slane %v2846, 1
        %v2877 = vrot.slane %v2851, 1
        %v2878 = vsel %vm586, %v2876, %v2877
        %v2879 = vrot.slane %v2847, 1
        %v2880 = vrot.slane %v2852, 1
        %v2881 = vsel %vm586, %v2879, %v2880
        %v2882 = vrot.slane %v2848, 1
        %v2883 = vrot.slane %v2853, 1
        %v2884 = vsel %vm586, %v2882, %v2883
        %v2885 = vrot.slane %v2849, 1
        %v2886 = vrot.slane %v2854, 1
        %v2887 = vsel %vm586, %v2885, %v2886
        %v2888 = vrot.slane %v2850, 1
        %v2889 = vrot.slane %v2855, 1
        %v2890 = vsel %vm586, %v2888, %v2889
        %v2891 = vrot.slane %v2856, 1
        %v2892 = vsel %vm586, %v2877, %v2891
        %v2893 = vrot.slane %v2857, 1
        %v2894 = vsel %vm586, %v2880, %v2893
        %v2895 = vrot.slane %v2858, 1
        %v2896 = vsel %vm586, %v2883, %v2895
        %v2897 = vrot.slane %v2859, 1
        %v2898 = vsel %vm586, %v2886, %v2897
        %v2899 = vrot.slane %v2860, 1
        %v2900 = vsel %vm586, %v2889, %v2899
        %2901 = vrot.lane.b32.xlu0 %v2878, 64
        %v2902 = vpop.permute.xlu0 %2901
        %2903 = vrot.lane.b32.xlu0 %v2881, 64
        %v2904 = vpop.permute.xlu0 %2903
        %2905 = vrot.lane.b32.xlu0 %v2884, 64
        %v2906 = vpop.permute.xlu0 %2905
        %2907 = vrot.lane.b32.xlu0 %v2887, 64
        %v2908 = vpop.permute.xlu0 %2907
        %2909 = vrot.lane.b32.xlu0 %v2890, 64
        %v2910 = vpop.permute.xlu0 %2909
        %2911 = vrot.lane.b32.xlu0 %v2892, 64
        %v2912 = vpop.permute.xlu0 %2911
        %2913 = vrot.lane.b32.xlu0 %v2894, 64
        %v2914 = vpop.permute.xlu0 %2913
        %2915 = vrot.lane.b32.xlu0 %v2896, 64
        %v2916 = vpop.permute.xlu0 %2915
        %2917 = vrot.lane.b32.xlu0 %v2898, 64
        %v2918 = vpop.permute.xlu0 %2917
        %2919 = vrot.lane.b32.xlu0 %v2900, 64
        %v2920 = vpop.permute.xlu0 %2919
        %v2921 = vsel %vm345, %v2902, %v2904
        %v2922 = vsel %vm345, %v2904, %v2906
        %v2923 = vsel %vm345, %v2906, %v2908
        %v2924 = vsel %vm345, %v2908, %v2910
        %v2925 = vsel %vm345, %v2912, %v2914
        %v2926 = vsel %vm345, %v2914, %v2916
        %v2927 = vsel %vm345, %v2916, %v2918
        %v2928 = vsel %vm345, %v2918, %v2920
        %v2937 = vadd.f32 %v2669, %v2921
        %v2938 = vadd.f32 %v2670, %v2922
        %v2939 = vadd.f32 %v2671, %v2923
        %v2940 = vadd.f32 %v2672, %v2924
        %v2941 = vadd.f32 %v2673, %v2925
        %v2942 = vadd.f32 %v2674, %v2926
        %v2943 = vadd.f32 %v2675, %v2927
        %v2944 = vadd.f32 %v2676, %v2928
        %s2945 = scalar_lea.vmem %s1, 36
        %v2946 = vld [vmem:[%s2945] ss:$8 sm:$0xf]
        %v2948 = vlaneseq
        %v2949 = vshrl.u32 %v2948, 7
        %v2950 = vsub.s32 0, %v2949
        %v2951 = vrot.slane %v2946, %v2950
        %v2952 = vlaneseq
        %v2953 = vshrl.u32 %v2952, 7
        %v2954 = vsub.s32 1, %v2953
        %v2955 = vrot.slane %v2946, %v2954
        %v2956 = vlaneseq
        %v2957 = vshrl.u32 %v2956, 7
        %v2958 = vsub.s32 2, %v2957
        %v2959 = vrot.slane %v2946, %v2958
        %v2960 = vlaneseq
        %v2961 = vshrl.u32 %v2960, 7
        %v2962 = vsub.s32 3, %v2961
        %v2963 = vrot.slane %v2946, %v2962
        %2964 = vrot.lane.b32.xlu0 %v2951, 64
        %v2965 = vpop.permute.xlu0 %2964
        %2966 = vrot.lane.b32.xlu0 %v2955, 64
        %v2967 = vpop.permute.xlu0 %2966
        %2968 = vrot.lane.b32.xlu0 %v2959, 64
        %v2969 = vpop.permute.xlu0 %2968
        %2970 = vrot.lane.b32.xlu0 %v2963, 64
        %v2971 = vpop.permute.xlu0 %2970
        %v2972 = vsel %vm345, %v2965, %v2967
        %v2973 = vsel %vm345, %v2967, %v2969
        %v2974 = vsel %vm345, %v2969, %v2971
        %v2980 = vmul.f32 %v447, %v2965
        %v2981 = vmul.f32 %v448, %v2972
        %v2982 = vmul.f32 %v449, %v2973
        %v2983 = vmul.f32 %v450, %v2974
        %v2984 = vmul.f32 %v451, %v2971
        %v2985 = vmul.f32 %v452, %v2965
        %v2986 = vmul.f32 %v453, %v2972
        %v2987 = vmul.f32 %v454, %v2973
        %v2988 = vmul.f32 %v455, %v2974
        %v2989 = vmul.f32 %v456, %v2971
        %v2990 = vmul.f32 %v457, %v2965
        %v2991 = vmul.f32 %v458, %v2972
        %v2992 = vmul.f32 %v459, %v2973
        %v2993 = vmul.f32 %v460, %v2974
        %v2994 = vmul.f32 %v461, %v2971
        %v3010 = vrot.slane %v2980, 2
        %v3011 = vrot.slane %v2985, 2
        %v3012 = vsel %vm753, %v3010, %v3011
        %v3013 = vrot.slane %v2981, 2
        %v3014 = vrot.slane %v2986, 2
        %v3015 = vsel %vm753, %v3013, %v3014
        %v3016 = vrot.slane %v2982, 2
        %v3017 = vrot.slane %v2987, 2
        %v3018 = vsel %vm753, %v3016, %v3017
        %v3019 = vrot.slane %v2983, 2
        %v3020 = vrot.slane %v2988, 2
        %v3021 = vsel %vm753, %v3019, %v3020
        %v3022 = vrot.slane %v2984, 2
        %v3023 = vrot.slane %v2989, 2
        %v3024 = vsel %vm753, %v3022, %v3023
        %v3025 = vrot.slane %v2990, 2
        %v3026 = vsel %vm753, %v3011, %v3025
        %v3027 = vrot.slane %v2991, 2
        %v3028 = vsel %vm753, %v3014, %v3027
        %v3029 = vrot.slane %v2992, 2
        %v3030 = vsel %vm753, %v3017, %v3029
        %v3031 = vrot.slane %v2993, 2
        %v3032 = vsel %vm753, %v3020, %v3031
        %v3033 = vrot.slane %v2994, 2
        %v3034 = vsel %vm753, %v3023, %v3033
        %3035 = vrot.lane.b32.xlu0 %v3012, 64
        %v3036 = vpop.permute.xlu0 %3035
        %3037 = vrot.lane.b32.xlu0 %v3015, 64
        %v3038 = vpop.permute.xlu0 %3037
        %3039 = vrot.lane.b32.xlu0 %v3018, 64
        %v3040 = vpop.permute.xlu0 %3039
        %3041 = vrot.lane.b32.xlu0 %v3021, 64
        %v3042 = vpop.permute.xlu0 %3041
        %3043 = vrot.lane.b32.xlu0 %v3024, 64
        %v3044 = vpop.permute.xlu0 %3043
        %3045 = vrot.lane.b32.xlu0 %v3026, 64
        %v3046 = vpop.permute.xlu0 %3045
        %3047 = vrot.lane.b32.xlu0 %v3028, 64
        %v3048 = vpop.permute.xlu0 %3047
        %3049 = vrot.lane.b32.xlu0 %v3030, 64
        %v3050 = vpop.permute.xlu0 %3049
        %3051 = vrot.lane.b32.xlu0 %v3032, 64
        %v3052 = vpop.permute.xlu0 %3051
        %3053 = vrot.lane.b32.xlu0 %v3034, 64
        %v3054 = vpop.permute.xlu0 %3053
        %v3055 = vsel %vm345, %v3036, %v3038
        %v3056 = vsel %vm345, %v3038, %v3040
        %v3057 = vsel %vm345, %v3040, %v3042
        %v3058 = vsel %vm345, %v3042, %v3044
        %v3059 = vsel %vm345, %v3046, %v3048
        %v3060 = vsel %vm345, %v3048, %v3050
        %v3061 = vsel %vm345, %v3050, %v3052
        %v3062 = vsel %vm345, %v3052, %v3054
        %v3071 = vadd.f32 %v2803, %v3055
        %v3072 = vadd.f32 %v2804, %v3056
        %v3073 = vadd.f32 %v2805, %v3057
        %v3074 = vadd.f32 %v2806, %v3058
        %v3075 = vadd.f32 %v2807, %v3059
        %v3076 = vadd.f32 %v2808, %v3060
        %v3077 = vadd.f32 %v2809, %v3061
        %v3078 = vadd.f32 %v2810, %v3062
        %s3079 = scalar_lea.vmem %s500, 36
        %v3080 = vld [vmem:[%s3079] ss:$8 sm:$0xf]
        %v3082 = vlaneseq
        %v3083 = vshrl.u32 %v3082, 7
        %v3084 = vsub.s32 0, %v3083
        %v3085 = vrot.slane %v3080, %v3084
        %v3086 = vlaneseq
        %v3087 = vshrl.u32 %v3086, 7
        %v3088 = vsub.s32 1, %v3087
        %v3089 = vrot.slane %v3080, %v3088
        %v3090 = vlaneseq
        %v3091 = vshrl.u32 %v3090, 7
        %v3092 = vsub.s32 2, %v3091
        %v3093 = vrot.slane %v3080, %v3092
        %v3094 = vlaneseq
        %v3095 = vshrl.u32 %v3094, 7
        %v3096 = vsub.s32 3, %v3095
        %v3097 = vrot.slane %v3080, %v3096
        %3098 = vrot.lane.b32.xlu0 %v3085, 64
        %v3099 = vpop.permute.xlu0 %3098
        %3100 = vrot.lane.b32.xlu0 %v3089, 64
        %v3101 = vpop.permute.xlu0 %3100
        %3102 = vrot.lane.b32.xlu0 %v3093, 64
        %v3103 = vpop.permute.xlu0 %3102
        %3104 = vrot.lane.b32.xlu0 %v3097, 64
        %v3105 = vpop.permute.xlu0 %3104
        %v3106 = vsel %vm345, %v3099, %v3101
        %v3107 = vsel %vm345, %v3101, %v3103
        %v3108 = vsel %vm345, %v3103, %v3105
        %v3114 = vmul.f32 %v447, %v3099
        %v3115 = vmul.f32 %v448, %v3106
        %v3116 = vmul.f32 %v449, %v3107
        %v3117 = vmul.f32 %v450, %v3108
        %v3118 = vmul.f32 %v451, %v3105
        %v3119 = vmul.f32 %v452, %v3099
        %v3120 = vmul.f32 %v453, %v3106
        %v3121 = vmul.f32 %v454, %v3107
        %v3122 = vmul.f32 %v455, %v3108
        %v3123 = vmul.f32 %v456, %v3105
        %v3124 = vmul.f32 %v457, %v3099
        %v3125 = vmul.f32 %v458, %v3106
        %v3126 = vmul.f32 %v459, %v3107
        %v3127 = vmul.f32 %v460, %v3108
        %v3128 = vmul.f32 %v461, %v3105
        %v3144 = vrot.slane %v3114, 2
        %v3145 = vrot.slane %v3119, 2
        %v3146 = vsel %vm753, %v3144, %v3145
        %v3147 = vrot.slane %v3115, 2
        %v3148 = vrot.slane %v3120, 2
        %v3149 = vsel %vm753, %v3147, %v3148
        %v3150 = vrot.slane %v3116, 2
        %v3151 = vrot.slane %v3121, 2
        %v3152 = vsel %vm753, %v3150, %v3151
        %v3153 = vrot.slane %v3117, 2
        %v3154 = vrot.slane %v3122, 2
        %v3155 = vsel %vm753, %v3153, %v3154
        %v3156 = vrot.slane %v3118, 2
        %v3157 = vrot.slane %v3123, 2
        %v3158 = vsel %vm753, %v3156, %v3157
        %v3159 = vrot.slane %v3124, 2
        %v3160 = vsel %vm753, %v3145, %v3159
        %v3161 = vrot.slane %v3125, 2
        %v3162 = vsel %vm753, %v3148, %v3161
        %v3163 = vrot.slane %v3126, 2
        %v3164 = vsel %vm753, %v3151, %v3163
        %v3165 = vrot.slane %v3127, 2
        %v3166 = vsel %vm753, %v3154, %v3165
        %v3167 = vrot.slane %v3128, 2
        %v3168 = vsel %vm753, %v3157, %v3167
        %3169 = vrot.lane.b32.xlu0 %v3146, 64
        %v3170 = vpop.permute.xlu0 %3169
        %3171 = vrot.lane.b32.xlu0 %v3149, 64
        %v3172 = vpop.permute.xlu0 %3171
        %3173 = vrot.lane.b32.xlu0 %v3152, 64
        %v3174 = vpop.permute.xlu0 %3173
        %3175 = vrot.lane.b32.xlu0 %v3155, 64
        %v3176 = vpop.permute.xlu0 %3175
        %3177 = vrot.lane.b32.xlu0 %v3158, 64
        %v3178 = vpop.permute.xlu0 %3177
        %3179 = vrot.lane.b32.xlu0 %v3160, 64
        %v3180 = vpop.permute.xlu0 %3179
        %3181 = vrot.lane.b32.xlu0 %v3162, 64
        %v3182 = vpop.permute.xlu0 %3181
        %3183 = vrot.lane.b32.xlu0 %v3164, 64
        %v3184 = vpop.permute.xlu0 %3183
        %3185 = vrot.lane.b32.xlu0 %v3166, 64
        %v3186 = vpop.permute.xlu0 %3185
        %3187 = vrot.lane.b32.xlu0 %v3168, 64
        %v3188 = vpop.permute.xlu0 %3187
        %v3189 = vsel %vm345, %v3170, %v3172
        %v3190 = vsel %vm345, %v3172, %v3174
        %v3191 = vsel %vm345, %v3174, %v3176
        %v3192 = vsel %vm345, %v3176, %v3178
        %v3193 = vsel %vm345, %v3180, %v3182
        %v3194 = vsel %vm345, %v3182, %v3184
        %v3195 = vsel %vm345, %v3184, %v3186
        %v3196 = vsel %vm345, %v3186, %v3188
        %v3205 = vadd.f32 %v2937, %v3189
        %v3206 = vadd.f32 %v2938, %v3190
        %v3207 = vadd.f32 %v2939, %v3191
        %v3208 = vadd.f32 %v2940, %v3192
        %v3209 = vadd.f32 %v2941, %v3193
        %v3210 = vadd.f32 %v2942, %v3194
        %v3211 = vadd.f32 %v2943, %v3195
        %v3212 = vadd.f32 %v2944, %v3196
        %s3213 = scalar_lea.vmem %s1, 65
        %v3214 = vld [vmem:[%s3213] ss:$8 sm:$0xf]
        %v3216 = vlaneseq
        %v3217 = vshrl.u32 %v3216, 7
        %v3218 = vsub.s32 0, %v3217
        %v3219 = vrot.slane %v3214, %v3218
        %v3220 = vlaneseq
        %v3221 = vshrl.u32 %v3220, 7
        %v3222 = vsub.s32 1, %v3221
        %v3223 = vrot.slane %v3214, %v3222
        %v3224 = vlaneseq
        %v3225 = vshrl.u32 %v3224, 7
        %v3226 = vsub.s32 2, %v3225
        %v3227 = vrot.slane %v3214, %v3226
        %v3228 = vlaneseq
        %v3229 = vshrl.u32 %v3228, 7
        %v3230 = vsub.s32 3, %v3229
        %v3231 = vrot.slane %v3214, %v3230
        %3232 = vrot.lane.b32.xlu0 %v3219, 64
        %v3233 = vpop.permute.xlu0 %3232
        %3234 = vrot.lane.b32.xlu0 %v3223, 64
        %v3235 = vpop.permute.xlu0 %3234
        %3236 = vrot.lane.b32.xlu0 %v3227, 64
        %v3237 = vpop.permute.xlu0 %3236
        %3238 = vrot.lane.b32.xlu0 %v3231, 64
        %v3239 = vpop.permute.xlu0 %3238
        %v3240 = vsel %vm345, %v3233, %v3235
        %v3241 = vsel %vm345, %v3235, %v3237
        %v3242 = vsel %vm345, %v3237, %v3239
        %v3248 = vmul.f32 %v447, %v3233
        %v3249 = vmul.f32 %v448, %v3240
        %v3250 = vmul.f32 %v449, %v3241
        %v3251 = vmul.f32 %v450, %v3242
        %v3252 = vmul.f32 %v451, %v3239
        %v3253 = vmul.f32 %v452, %v3233
        %v3254 = vmul.f32 %v453, %v3240
        %v3255 = vmul.f32 %v454, %v3241
        %v3256 = vmul.f32 %v455, %v3242
        %v3257 = vmul.f32 %v456, %v3239
        %v3258 = vmul.f32 %v457, %v3233
        %v3259 = vmul.f32 %v458, %v3240
        %v3260 = vmul.f32 %v459, %v3241
        %v3261 = vmul.f32 %v460, %v3242
        %v3262 = vmul.f32 %v461, %v3239
        %v3278 = vrot.slane %v3248, 3
        %v3279 = vrot.slane %v3253, 3
        %v3280 = vsel %vm920, %v3278, %v3279
        %v3281 = vrot.slane %v3249, 3
        %v3282 = vrot.slane %v3254, 3
        %v3283 = vsel %vm920, %v3281, %v3282
        %v3284 = vrot.slane %v3250, 3
        %v3285 = vrot.slane %v3255, 3
        %v3286 = vsel %vm920, %v3284, %v3285
        %v3287 = vrot.slane %v3251, 3
        %v3288 = vrot.slane %v3256, 3
        %v3289 = vsel %vm920, %v3287, %v3288
        %v3290 = vrot.slane %v3252, 3
        %v3291 = vrot.slane %v3257, 3
        %v3292 = vsel %vm920, %v3290, %v3291
        %v3293 = vrot.slane %v3258, 3
        %v3294 = vsel %vm920, %v3279, %v3293
        %v3295 = vrot.slane %v3259, 3
        %v3296 = vsel %vm920, %v3282, %v3295
        %v3297 = vrot.slane %v3260, 3
        %v3298 = vsel %vm920, %v3285, %v3297
        %v3299 = vrot.slane %v3261, 3
        %v3300 = vsel %vm920, %v3288, %v3299
        %v3301 = vrot.slane %v3262, 3
        %v3302 = vsel %vm920, %v3291, %v3301
        %3303 = vrot.lane.b32.xlu0 %v3280, 64
        %v3304 = vpop.permute.xlu0 %3303
        %3305 = vrot.lane.b32.xlu0 %v3283, 64
        %v3306 = vpop.permute.xlu0 %3305
        %3307 = vrot.lane.b32.xlu0 %v3286, 64
        %v3308 = vpop.permute.xlu0 %3307
        %3309 = vrot.lane.b32.xlu0 %v3289, 64
        %v3310 = vpop.permute.xlu0 %3309
        %3311 = vrot.lane.b32.xlu0 %v3292, 64
        %v3312 = vpop.permute.xlu0 %3311
        %3313 = vrot.lane.b32.xlu0 %v3294, 64
        %v3314 = vpop.permute.xlu0 %3313
        %3315 = vrot.lane.b32.xlu0 %v3296, 64
        %v3316 = vpop.permute.xlu0 %3315
        %3317 = vrot.lane.b32.xlu0 %v3298, 64
        %v3318 = vpop.permute.xlu0 %3317
        %3319 = vrot.lane.b32.xlu0 %v3300, 64
        %v3320 = vpop.permute.xlu0 %3319
        %3321 = vrot.lane.b32.xlu0 %v3302, 64
        %v3322 = vpop.permute.xlu0 %3321
        %v3323 = vsel %vm345, %v3304, %v3306
        %v3324 = vsel %vm345, %v3306, %v3308
        %v3325 = vsel %vm345, %v3308, %v3310
        %v3326 = vsel %vm345, %v3310, %v3312
        %v3327 = vsel %vm345, %v3314, %v3316
        %v3328 = vsel %vm345, %v3316, %v3318
        %v3329 = vsel %vm345, %v3318, %v3320
        %v3330 = vsel %vm345, %v3320, %v3322
        %v3339 = vadd.f32 %v3071, %v3323
        %v3340 = vadd.f32 %v3072, %v3324
        %v3341 = vadd.f32 %v3073, %v3325
        %v3342 = vadd.f32 %v3074, %v3326
        %v3343 = vadd.f32 %v3075, %v3327
        %v3344 = vadd.f32 %v3076, %v3328
        %v3345 = vadd.f32 %v3077, %v3329
        %v3346 = vadd.f32 %v3078, %v3330
        %s3347 = scalar_lea.vmem %s500, 65
        %v3348 = vld [vmem:[%s3347] ss:$8 sm:$0xf]
        %v3350 = vlaneseq
        %v3351 = vshrl.u32 %v3350, 7
        %v3352 = vsub.s32 0, %v3351
        %v3353 = vrot.slane %v3348, %v3352
        %v3354 = vlaneseq
        %v3355 = vshrl.u32 %v3354, 7
        %v3356 = vsub.s32 1, %v3355
        %v3357 = vrot.slane %v3348, %v3356
        %v3358 = vlaneseq
        %v3359 = vshrl.u32 %v3358, 7
        %v3360 = vsub.s32 2, %v3359
        %v3361 = vrot.slane %v3348, %v3360
        %v3362 = vlaneseq
        %v3363 = vshrl.u32 %v3362, 7
        %v3364 = vsub.s32 3, %v3363
        %v3365 = vrot.slane %v3348, %v3364
        %3366 = vrot.lane.b32.xlu0 %v3353, 64
        %v3367 = vpop.permute.xlu0 %3366
        %3368 = vrot.lane.b32.xlu0 %v3357, 64
        %v3369 = vpop.permute.xlu0 %3368
        %3370 = vrot.lane.b32.xlu0 %v3361, 64
        %v3371 = vpop.permute.xlu0 %3370
        %3372 = vrot.lane.b32.xlu0 %v3365, 64
        %v3373 = vpop.permute.xlu0 %3372
        %v3374 = vsel %vm345, %v3367, %v3369
        %v3375 = vsel %vm345, %v3369, %v3371
        %v3376 = vsel %vm345, %v3371, %v3373
        %v3382 = vmul.f32 %v447, %v3367
        %v3383 = vmul.f32 %v448, %v3374
        %v3384 = vmul.f32 %v449, %v3375
        %v3385 = vmul.f32 %v450, %v3376
        %v3386 = vmul.f32 %v451, %v3373
        %v3387 = vmul.f32 %v452, %v3367
        %v3388 = vmul.f32 %v453, %v3374
        %v3389 = vmul.f32 %v454, %v3375
        %v3390 = vmul.f32 %v455, %v3376
        %v3391 = vmul.f32 %v456, %v3373
        %v3392 = vmul.f32 %v457, %v3367
        %v3393 = vmul.f32 %v458, %v3374
        %v3394 = vmul.f32 %v459, %v3375
        %v3395 = vmul.f32 %v460, %v3376
        %v3396 = vmul.f32 %v461, %v3373
        %v3412 = vrot.slane %v3382, 3
        %v3413 = vrot.slane %v3387, 3
        %v3414 = vsel %vm920, %v3412, %v3413
        %v3415 = vrot.slane %v3383, 3
        %v3416 = vrot.slane %v3388, 3
        %v3417 = vsel %vm920, %v3415, %v3416
        %v3418 = vrot.slane %v3384, 3
        %v3419 = vrot.slane %v3389, 3
        %v3420 = vsel %vm920, %v3418, %v3419
        %v3421 = vrot.slane %v3385, 3
        %v3422 = vrot.slane %v3390, 3
        %v3423 = vsel %vm920, %v3421, %v3422
        %v3424 = vrot.slane %v3386, 3
        %v3425 = vrot.slane %v3391, 3
        %v3426 = vsel %vm920, %v3424, %v3425
        %v3427 = vrot.slane %v3392, 3
        %v3428 = vsel %vm920, %v3413, %v3427
        %v3429 = vrot.slane %v3393, 3
        %v3430 = vsel %vm920, %v3416, %v3429
        %v3431 = vrot.slane %v3394, 3
        %v3432 = vsel %vm920, %v3419, %v3431
        %v3433 = vrot.slane %v3395, 3
        %v3434 = vsel %vm920, %v3422, %v3433
        %v3435 = vrot.slane %v3396, 3
        %v3436 = vsel %vm920, %v3425, %v3435
        %3437 = vrot.lane.b32.xlu0 %v3414, 64
        %v3438 = vpop.permute.xlu0 %3437
        %3439 = vrot.lane.b32.xlu0 %v3417, 64
        %v3440 = vpop.permute.xlu0 %3439
        %3441 = vrot.lane.b32.xlu0 %v3420, 64
        %v3442 = vpop.permute.xlu0 %3441
        %3443 = vrot.lane.b32.xlu0 %v3423, 64
        %v3444 = vpop.permute.xlu0 %3443
        %3445 = vrot.lane.b32.xlu0 %v3426, 64
        %v3446 = vpop.permute.xlu0 %3445
        %3447 = vrot.lane.b32.xlu0 %v3428, 64
        %v3448 = vpop.permute.xlu0 %3447
        %3449 = vrot.lane.b32.xlu0 %v3430, 64
        %v3450 = vpop.permute.xlu0 %3449
        %3451 = vrot.lane.b32.xlu0 %v3432, 64
        %v3452 = vpop.permute.xlu0 %3451
        %3453 = vrot.lane.b32.xlu0 %v3434, 64
        %v3454 = vpop.permute.xlu0 %3453
        %3455 = vrot.lane.b32.xlu0 %v3436, 64
        %v3456 = vpop.permute.xlu0 %3455
        %v3457 = vsel %vm345, %v3438, %v3440
        %v3458 = vsel %vm345, %v3440, %v3442
        %v3459 = vsel %vm345, %v3442, %v3444
        %v3460 = vsel %vm345, %v3444, %v3446
        %v3461 = vsel %vm345, %v3448, %v3450
        %v3462 = vsel %vm345, %v3450, %v3452
        %v3463 = vsel %vm345, %v3452, %v3454
        %v3464 = vsel %vm345, %v3454, %v3456
        %v3473 = vadd.f32 %v3205, %v3457
        %v3474 = vadd.f32 %v3206, %v3458
        %v3475 = vadd.f32 %v3207, %v3459
        %v3476 = vadd.f32 %v3208, %v3460
        %v3477 = vadd.f32 %v3209, %v3461
        %v3478 = vadd.f32 %v3210, %v3462
        %v3479 = vadd.f32 %v3211, %v3463
        %v3480 = vadd.f32 %v3212, %v3464
        %s3481 = scalar_lea.vmem %s1, 70
        %v3482 = vld [vmem:[%s3481] ss:$8 sm:$0xf]
        %v3484 = vlaneseq
        %v3485 = vshrl.u32 %v3484, 7
        %v3486 = vsub.s32 0, %v3485
        %v3487 = vrot.slane %v3482, %v3486
        %v3488 = vlaneseq
        %v3489 = vshrl.u32 %v3488, 7
        %v3490 = vsub.s32 1, %v3489
        %v3491 = vrot.slane %v3482, %v3490
        %v3492 = vlaneseq
        %v3493 = vshrl.u32 %v3492, 7
        %v3494 = vsub.s32 2, %v3493
        %v3495 = vrot.slane %v3482, %v3494
        %v3496 = vlaneseq
        %v3497 = vshrl.u32 %v3496, 7
        %v3498 = vsub.s32 3, %v3497
        %v3499 = vrot.slane %v3482, %v3498
        %3500 = vrot.lane.b32.xlu0 %v3487, 64
        %v3501 = vpop.permute.xlu0 %3500
        %3502 = vrot.lane.b32.xlu0 %v3491, 64
        %v3503 = vpop.permute.xlu0 %3502
        %3504 = vrot.lane.b32.xlu0 %v3495, 64
        %v3505 = vpop.permute.xlu0 %3504
        %3506 = vrot.lane.b32.xlu0 %v3499, 64
        %v3507 = vpop.permute.xlu0 %3506
        %v3508 = vsel %vm345, %v3501, %v3503
        %v3509 = vsel %vm345, %v3503, %v3505
        %v3510 = vsel %vm345, %v3505, %v3507
        %v3516 = vmul.f32 %v447, %v3501
        %v3517 = vmul.f32 %v448, %v3508
        %v3518 = vmul.f32 %v449, %v3509
        %v3519 = vmul.f32 %v450, %v3510
        %v3520 = vmul.f32 %v451, %v3507
        %v3521 = vmul.f32 %v452, %v3501
        %v3522 = vmul.f32 %v453, %v3508
        %v3523 = vmul.f32 %v454, %v3509
        %v3524 = vmul.f32 %v455, %v3510
        %v3525 = vmul.f32 %v456, %v3507
        %v3526 = vmul.f32 %v457, %v3501
        %v3527 = vmul.f32 %v458, %v3508
        %v3528 = vmul.f32 %v459, %v3509
        %v3529 = vmul.f32 %v460, %v3510
        %v3530 = vmul.f32 %v461, %v3507
        %v3546 = vrot.slane %v3516, 4
        %v3547 = vrot.slane %v3521, 4
        %v3548 = vsel %vm1087, %v3546, %v3547
        %v3549 = vrot.slane %v3517, 4
        %v3550 = vrot.slane %v3522, 4
        %v3551 = vsel %vm1087, %v3549, %v3550
        %v3552 = vrot.slane %v3518, 4
        %v3553 = vrot.slane %v3523, 4
        %v3554 = vsel %vm1087, %v3552, %v3553
        %v3555 = vrot.slane %v3519, 4
        %v3556 = vrot.slane %v3524, 4
        %v3557 = vsel %vm1087, %v3555, %v3556
        %v3558 = vrot.slane %v3520, 4
        %v3559 = vrot.slane %v3525, 4
        %v3560 = vsel %vm1087, %v3558, %v3559
        %v3561 = vrot.slane %v3526, 4
        %v3562 = vsel %vm1087, %v3547, %v3561
        %v3563 = vrot.slane %v3527, 4
        %v3564 = vsel %vm1087, %v3550, %v3563
        %v3565 = vrot.slane %v3528, 4
        %v3566 = vsel %vm1087, %v3553, %v3565
        %v3567 = vrot.slane %v3529, 4
        %v3568 = vsel %vm1087, %v3556, %v3567
        %v3569 = vrot.slane %v3530, 4
        %v3570 = vsel %vm1087, %v3559, %v3569
        %3571 = vrot.lane.b32.xlu0 %v3548, 64
        %v3572 = vpop.permute.xlu0 %3571
        %3573 = vrot.lane.b32.xlu0 %v3551, 64
        %v3574 = vpop.permute.xlu0 %3573
        %3575 = vrot.lane.b32.xlu0 %v3554, 64
        %v3576 = vpop.permute.xlu0 %3575
        %3577 = vrot.lane.b32.xlu0 %v3557, 64
        %v3578 = vpop.permute.xlu0 %3577
        %3579 = vrot.lane.b32.xlu0 %v3560, 64
        %v3580 = vpop.permute.xlu0 %3579
        %3581 = vrot.lane.b32.xlu0 %v3562, 64
        %v3582 = vpop.permute.xlu0 %3581
        %3583 = vrot.lane.b32.xlu0 %v3564, 64
        %v3584 = vpop.permute.xlu0 %3583
        %3585 = vrot.lane.b32.xlu0 %v3566, 64
        %v3586 = vpop.permute.xlu0 %3585
        %3587 = vrot.lane.b32.xlu0 %v3568, 64
        %v3588 = vpop.permute.xlu0 %3587
        %3589 = vrot.lane.b32.xlu0 %v3570, 64
        %v3590 = vpop.permute.xlu0 %3589
        %v3591 = vsel %vm345, %v3572, %v3574
        %v3592 = vsel %vm345, %v3574, %v3576
        %v3593 = vsel %vm345, %v3576, %v3578
        %v3594 = vsel %vm345, %v3578, %v3580
        %v3595 = vsel %vm345, %v3582, %v3584
        %v3596 = vsel %vm345, %v3584, %v3586
        %v3597 = vsel %vm345, %v3586, %v3588
        %v3598 = vsel %vm345, %v3588, %v3590
        %v3607 = vadd.f32 %v3339, %v3591
        %v3608 = vadd.f32 %v3340, %v3592
        %v3609 = vadd.f32 %v3341, %v3593
        %v3610 = vadd.f32 %v3342, %v3594
        %v3611 = vadd.f32 %v3343, %v3595
        %v3612 = vadd.f32 %v3344, %v3596
        %v3613 = vadd.f32 %v3345, %v3597
        %v3614 = vadd.f32 %v3346, %v3598
        %s3615 = scalar_lea.vmem %s500, 70
        %v3616 = vld [vmem:[%s3615] ss:$8 sm:$0xf]
        %v3618 = vlaneseq
        %v3619 = vshrl.u32 %v3618, 7
        %v3620 = vsub.s32 0, %v3619
        %v3621 = vrot.slane %v3616, %v3620
        %v3622 = vlaneseq
        %v3623 = vshrl.u32 %v3622, 7
        %v3624 = vsub.s32 1, %v3623
        %v3625 = vrot.slane %v3616, %v3624
        %v3626 = vlaneseq
        %v3627 = vshrl.u32 %v3626, 7
        %v3628 = vsub.s32 2, %v3627
        %v3629 = vrot.slane %v3616, %v3628
        %v3630 = vlaneseq
        %v3631 = vshrl.u32 %v3630, 7
        %v3632 = vsub.s32 3, %v3631
        %v3633 = vrot.slane %v3616, %v3632
        %3634 = vrot.lane.b32.xlu0 %v3621, 64
        %v3635 = vpop.permute.xlu0 %3634
        %3636 = vrot.lane.b32.xlu0 %v3625, 64
        %v3637 = vpop.permute.xlu0 %3636
        %3638 = vrot.lane.b32.xlu0 %v3629, 64
        %v3639 = vpop.permute.xlu0 %3638
        %3640 = vrot.lane.b32.xlu0 %v3633, 64
        %v3641 = vpop.permute.xlu0 %3640
        %v3642 = vsel %vm345, %v3635, %v3637
        %v3643 = vsel %vm345, %v3637, %v3639
        %v3644 = vsel %vm345, %v3639, %v3641
        %v3650 = vmul.f32 %v447, %v3635
        %v3651 = vmul.f32 %v448, %v3642
        %v3652 = vmul.f32 %v449, %v3643
        %v3653 = vmul.f32 %v450, %v3644
        %v3654 = vmul.f32 %v451, %v3641
        %v3655 = vmul.f32 %v452, %v3635
        %v3656 = vmul.f32 %v453, %v3642
        %v3657 = vmul.f32 %v454, %v3643
        %v3658 = vmul.f32 %v455, %v3644
        %v3659 = vmul.f32 %v456, %v3641
        %v3660 = vmul.f32 %v457, %v3635
        %v3661 = vmul.f32 %v458, %v3642
        %v3662 = vmul.f32 %v459, %v3643
        %v3663 = vmul.f32 %v460, %v3644
        %v3664 = vmul.f32 %v461, %v3641
        %v3680 = vrot.slane %v3650, 4
        %v3681 = vrot.slane %v3655, 4
        %v3682 = vsel %vm1087, %v3680, %v3681
        %v3683 = vrot.slane %v3651, 4
        %v3684 = vrot.slane %v3656, 4
        %v3685 = vsel %vm1087, %v3683, %v3684
        %v3686 = vrot.slane %v3652, 4
        %v3687 = vrot.slane %v3657, 4
        %v3688 = vsel %vm1087, %v3686, %v3687
        %v3689 = vrot.slane %v3653, 4
        %v3690 = vrot.slane %v3658, 4
        %v3691 = vsel %vm1087, %v3689, %v3690
        %v3692 = vrot.slane %v3654, 4
        %v3693 = vrot.slane %v3659, 4
        %v3694 = vsel %vm1087, %v3692, %v3693
        %v3695 = vrot.slane %v3660, 4
        %v3696 = vsel %vm1087, %v3681, %v3695
        %v3697 = vrot.slane %v3661, 4
        %v3698 = vsel %vm1087, %v3684, %v3697
        %v3699 = vrot.slane %v3662, 4
        %v3700 = vsel %vm1087, %v3687, %v3699
        %v3701 = vrot.slane %v3663, 4
        %v3702 = vsel %vm1087, %v3690, %v3701
        %v3703 = vrot.slane %v3664, 4
        %v3704 = vsel %vm1087, %v3693, %v3703
        %3705 = vrot.lane.b32.xlu0 %v3682, 64
        %v3706 = vpop.permute.xlu0 %3705
        %3707 = vrot.lane.b32.xlu0 %v3685, 64
        %v3708 = vpop.permute.xlu0 %3707
        %3709 = vrot.lane.b32.xlu0 %v3688, 64
        %v3710 = vpop.permute.xlu0 %3709
        %3711 = vrot.lane.b32.xlu0 %v3691, 64
        %v3712 = vpop.permute.xlu0 %3711
        %3713 = vrot.lane.b32.xlu0 %v3694, 64
        %v3714 = vpop.permute.xlu0 %3713
        %3715 = vrot.lane.b32.xlu0 %v3696, 64
        %v3716 = vpop.permute.xlu0 %3715
        %3717 = vrot.lane.b32.xlu0 %v3698, 64
        %v3718 = vpop.permute.xlu0 %3717
        %3719 = vrot.lane.b32.xlu0 %v3700, 64
        %v3720 = vpop.permute.xlu0 %3719
        %3721 = vrot.lane.b32.xlu0 %v3702, 64
        %v3722 = vpop.permute.xlu0 %3721
        %3723 = vrot.lane.b32.xlu0 %v3704, 64
        %v3724 = vpop.permute.xlu0 %3723
        %v3725 = vsel %vm345, %v3706, %v3708
        %v3726 = vsel %vm345, %v3708, %v3710
        %v3727 = vsel %vm345, %v3710, %v3712
        %v3728 = vsel %vm345, %v3712, %v3714
        %v3729 = vsel %vm345, %v3716, %v3718
        %v3730 = vsel %vm345, %v3718, %v3720
        %v3731 = vsel %vm345, %v3720, %v3722
        %v3732 = vsel %vm345, %v3722, %v3724
        %v3741 = vadd.f32 %v3473, %v3725
        %v3742 = vadd.f32 %v3474, %v3726
        %v3743 = vadd.f32 %v3475, %v3727
        %v3744 = vadd.f32 %v3476, %v3728
        %v3745 = vadd.f32 %v3477, %v3729
        %v3746 = vadd.f32 %v3478, %v3730
        %v3747 = vadd.f32 %v3479, %v3731
        %v3748 = vadd.f32 %v3480, %v3732
        %s3749 = scalar_lea.vmem %s1, 3
        %v3750 = vld [vmem:[%s3749] ss:$8 sm:$0xf]
        %v3752 = vlaneseq
        %v3753 = vshrl.u32 %v3752, 7
        %v3754 = vsub.s32 0, %v3753
        %v3755 = vrot.slane %v3750, %v3754
        %v3756 = vlaneseq
        %v3757 = vshrl.u32 %v3756, 7
        %v3758 = vsub.s32 1, %v3757
        %v3759 = vrot.slane %v3750, %v3758
        %v3760 = vlaneseq
        %v3761 = vshrl.u32 %v3760, 7
        %v3762 = vsub.s32 2, %v3761
        %v3763 = vrot.slane %v3750, %v3762
        %v3764 = vlaneseq
        %v3765 = vshrl.u32 %v3764, 7
        %v3766 = vsub.s32 3, %v3765
        %v3767 = vrot.slane %v3750, %v3766
        %3768 = vrot.lane.b32.xlu0 %v3755, 96
        %v3769 = vpop.permute.xlu0 %3768
        %3770 = vrot.lane.b32.xlu0 %v3759, 96
        %v3771 = vpop.permute.xlu0 %3770
        %3772 = vrot.lane.b32.xlu0 %v3763, 96
        %v3773 = vpop.permute.xlu0 %3772
        %3774 = vrot.lane.b32.xlu0 %v3767, 96
        %v3775 = vpop.permute.xlu0 %3774
        %v3776 = vsel %vm1283, %v3769, %v3771
        %v3777 = vsel %vm1283, %v3771, %v3773
        %v3778 = vsel %vm1283, %v3773, %v3775
        %v3784 = vmul.f32 %v447, %v3769
        %v3785 = vmul.f32 %v448, %v3776
        %v3786 = vmul.f32 %v449, %v3777
        %v3787 = vmul.f32 %v450, %v3778
        %v3788 = vmul.f32 %v451, %v3775
        %v3789 = vmul.f32 %v452, %v3769
        %v3790 = vmul.f32 %v453, %v3776
        %v3791 = vmul.f32 %v454, %v3777
        %v3792 = vmul.f32 %v455, %v3778
        %v3793 = vmul.f32 %v456, %v3775
        %3804 = vrot.lane.b32.xlu0 %v3784, 32
        %v3805 = vpop.permute.xlu0 %3804
        %3806 = vrot.lane.b32.xlu0 %v3785, 32
        %v3807 = vpop.permute.xlu0 %3806
        %3808 = vrot.lane.b32.xlu0 %v3786, 32
        %v3809 = vpop.permute.xlu0 %3808
        %3810 = vrot.lane.b32.xlu0 %v3787, 32
        %v3811 = vpop.permute.xlu0 %3810
        %3812 = vrot.lane.b32.xlu0 %v3788, 32
        %v3813 = vpop.permute.xlu0 %3812
        %3814 = vrot.lane.b32.xlu0 %v3789, 32
        %v3815 = vpop.permute.xlu0 %3814
        %3816 = vrot.lane.b32.xlu0 %v3790, 32
        %v3817 = vpop.permute.xlu0 %3816
        %3818 = vrot.lane.b32.xlu0 %v3791, 32
        %v3819 = vpop.permute.xlu0 %3818
        %3820 = vrot.lane.b32.xlu0 %v3792, 32
        %v3821 = vpop.permute.xlu0 %3820
        %3822 = vrot.lane.b32.xlu0 %v3793, 32
        %v3823 = vpop.permute.xlu0 %3822
        %v3824 = vsel %vm1234, %v3805, %v3807
        %v3825 = vsel %vm1234, %v3807, %v3809
        %v3826 = vsel %vm1234, %v3809, %v3811
        %v3827 = vsel %vm1234, %v3811, %v3813
        %v3828 = vsel %vm1234, %v3815, %v3817
        %v3829 = vsel %vm1234, %v3817, %v3819
        %v3830 = vsel %vm1234, %v3819, %v3821
        %v3831 = vsel %vm1234, %v3821, %v3823
        %v3840 = vadd.f32 %v3607, %v3824
        %v3841 = vadd.f32 %v3608, %v3825
        %v3842 = vadd.f32 %v3609, %v3826
        %v3843 = vadd.f32 %v3610, %v3827
        %v3844 = vadd.f32 %v3611, %v3828
        %v3845 = vadd.f32 %v3612, %v3829
        %v3846 = vadd.f32 %v3613, %v3830
        %v3847 = vadd.f32 %v3614, %v3831
        %s3848 = scalar_lea.vmem %s500, 3
        %v3849 = vld [vmem:[%s3848] ss:$8 sm:$0xf]
        %v3851 = vlaneseq
        %v3852 = vshrl.u32 %v3851, 7
        %v3853 = vsub.s32 0, %v3852
        %v3854 = vrot.slane %v3849, %v3853
        %v3855 = vlaneseq
        %v3856 = vshrl.u32 %v3855, 7
        %v3857 = vsub.s32 1, %v3856
        %v3858 = vrot.slane %v3849, %v3857
        %v3859 = vlaneseq
        %v3860 = vshrl.u32 %v3859, 7
        %v3861 = vsub.s32 2, %v3860
        %v3862 = vrot.slane %v3849, %v3861
        %v3863 = vlaneseq
        %v3864 = vshrl.u32 %v3863, 7
        %v3865 = vsub.s32 3, %v3864
        %v3866 = vrot.slane %v3849, %v3865
        %3867 = vrot.lane.b32.xlu0 %v3854, 96
        %v3868 = vpop.permute.xlu0 %3867
        %3869 = vrot.lane.b32.xlu0 %v3858, 96
        %v3870 = vpop.permute.xlu0 %3869
        %3871 = vrot.lane.b32.xlu0 %v3862, 96
        %v3872 = vpop.permute.xlu0 %3871
        %3873 = vrot.lane.b32.xlu0 %v3866, 96
        %v3874 = vpop.permute.xlu0 %3873
        %v3875 = vsel %vm1283, %v3868, %v3870
        %v3876 = vsel %vm1283, %v3870, %v3872
        %v3877 = vsel %vm1283, %v3872, %v3874
        %v3883 = vmul.f32 %v447, %v3868
        %v3884 = vmul.f32 %v448, %v3875
        %v3885 = vmul.f32 %v449, %v3876
        %v3886 = vmul.f32 %v450, %v3877
        %v3887 = vmul.f32 %v451, %v3874
        %v3888 = vmul.f32 %v452, %v3868
        %v3889 = vmul.f32 %v453, %v3875
        %v3890 = vmul.f32 %v454, %v3876
        %v3891 = vmul.f32 %v455, %v3877
        %v3892 = vmul.f32 %v456, %v3874
        %3903 = vrot.lane.b32.xlu0 %v3883, 32
        %v3904 = vpop.permute.xlu0 %3903
        %3905 = vrot.lane.b32.xlu0 %v3884, 32
        %v3906 = vpop.permute.xlu0 %3905
        %3907 = vrot.lane.b32.xlu0 %v3885, 32
        %v3908 = vpop.permute.xlu0 %3907
        %3909 = vrot.lane.b32.xlu0 %v3886, 32
        %v3910 = vpop.permute.xlu0 %3909
        %3911 = vrot.lane.b32.xlu0 %v3887, 32
        %v3912 = vpop.permute.xlu0 %3911
        %3913 = vrot.lane.b32.xlu0 %v3888, 32
        %v3914 = vpop.permute.xlu0 %3913
        %3915 = vrot.lane.b32.xlu0 %v3889, 32
        %v3916 = vpop.permute.xlu0 %3915
        %3917 = vrot.lane.b32.xlu0 %v3890, 32
        %v3918 = vpop.permute.xlu0 %3917
        %3919 = vrot.lane.b32.xlu0 %v3891, 32
        %v3920 = vpop.permute.xlu0 %3919
        %3921 = vrot.lane.b32.xlu0 %v3892, 32
        %v3922 = vpop.permute.xlu0 %3921
        %v3923 = vsel %vm1234, %v3904, %v3906
        %v3924 = vsel %vm1234, %v3906, %v3908
        %v3925 = vsel %vm1234, %v3908, %v3910
        %v3926 = vsel %vm1234, %v3910, %v3912
        %v3927 = vsel %vm1234, %v3914, %v3916
        %v3928 = vsel %vm1234, %v3916, %v3918
        %v3929 = vsel %vm1234, %v3918, %v3920
        %v3930 = vsel %vm1234, %v3920, %v3922
        %v3939 = vadd.f32 %v3741, %v3923
        %v3940 = vadd.f32 %v3742, %v3924
        %v3941 = vadd.f32 %v3743, %v3925
        %v3942 = vadd.f32 %v3744, %v3926
        %v3943 = vadd.f32 %v3745, %v3927
        %v3944 = vadd.f32 %v3746, %v3928
        %v3945 = vadd.f32 %v3747, %v3929
        %v3946 = vadd.f32 %v3748, %v3930
        %s3947 = scalar_lea.vmem %s1, 32
        %v3948 = vld [vmem:[%s3947] ss:$8 sm:$0xf]
        %v3950 = vlaneseq
        %v3951 = vshrl.u32 %v3950, 7
        %v3952 = vsub.s32 0, %v3951
        %v3953 = vrot.slane %v3948, %v3952
        %v3954 = vlaneseq
        %v3955 = vshrl.u32 %v3954, 7
        %v3956 = vsub.s32 1, %v3955
        %v3957 = vrot.slane %v3948, %v3956
        %v3958 = vlaneseq
        %v3959 = vshrl.u32 %v3958, 7
        %v3960 = vsub.s32 2, %v3959
        %v3961 = vrot.slane %v3948, %v3960
        %v3962 = vlaneseq
        %v3963 = vshrl.u32 %v3962, 7
        %v3964 = vsub.s32 3, %v3963
        %v3965 = vrot.slane %v3948, %v3964
        %3966 = vrot.lane.b32.xlu0 %v3953, 96
        %v3967 = vpop.permute.xlu0 %3966
        %3968 = vrot.lane.b32.xlu0 %v3957, 96
        %v3969 = vpop.permute.xlu0 %3968
        %3970 = vrot.lane.b32.xlu0 %v3961, 96
        %v3971 = vpop.permute.xlu0 %3970
        %3972 = vrot.lane.b32.xlu0 %v3965, 96
        %v3973 = vpop.permute.xlu0 %3972
        %v3974 = vsel %vm1283, %v3967, %v3969
        %v3975 = vsel %vm1283, %v3969, %v3971
        %v3976 = vsel %vm1283, %v3971, %v3973
        %v3982 = vmul.f32 %v447, %v3967
        %v3983 = vmul.f32 %v448, %v3974
        %v3984 = vmul.f32 %v449, %v3975
        %v3985 = vmul.f32 %v450, %v3976
        %v3986 = vmul.f32 %v451, %v3973
        %v3987 = vmul.f32 %v452, %v3967
        %v3988 = vmul.f32 %v453, %v3974
        %v3989 = vmul.f32 %v454, %v3975
        %v3990 = vmul.f32 %v455, %v3976
        %v3991 = vmul.f32 %v456, %v3973
        %v3992 = vmul.f32 %v457, %v3967
        %v3993 = vmul.f32 %v458, %v3974
        %v3994 = vmul.f32 %v459, %v3975
        %v3995 = vmul.f32 %v460, %v3976
        %v3996 = vmul.f32 %v461, %v3973
        %v4012 = vrot.slane %v3982, 1
        %v4013 = vrot.slane %v3987, 1
        %v4014 = vsel %vm586, %v4012, %v4013
        %v4015 = vrot.slane %v3983, 1
        %v4016 = vrot.slane %v3988, 1
        %v4017 = vsel %vm586, %v4015, %v4016
        %v4018 = vrot.slane %v3984, 1
        %v4019 = vrot.slane %v3989, 1
        %v4020 = vsel %vm586, %v4018, %v4019
        %v4021 = vrot.slane %v3985, 1
        %v4022 = vrot.slane %v3990, 1
        %v4023 = vsel %vm586, %v4021, %v4022
        %v4024 = vrot.slane %v3986, 1
        %v4025 = vrot.slane %v3991, 1
        %v4026 = vsel %vm586, %v4024, %v4025
        %v4027 = vrot.slane %v3992, 1
        %v4028 = vsel %vm586, %v4013, %v4027
        %v4029 = vrot.slane %v3993, 1
        %v4030 = vsel %vm586, %v4016, %v4029
        %v4031 = vrot.slane %v3994, 1
        %v4032 = vsel %vm586, %v4019, %v4031
        %v4033 = vrot.slane %v3995, 1
        %v4034 = vsel %vm586, %v4022, %v4033
        %v4035 = vrot.slane %v3996, 1
        %v4036 = vsel %vm586, %v4025, %v4035
        %4037 = vrot.lane.b32.xlu0 %v4014, 32
        %v4038 = vpop.permute.xlu0 %4037
        %4039 = vrot.lane.b32.xlu0 %v4017, 32
        %v4040 = vpop.permute.xlu0 %4039
        %4041 = vrot.lane.b32.xlu0 %v4020, 32
        %v4042 = vpop.permute.xlu0 %4041
        %4043 = vrot.lane.b32.xlu0 %v4023, 32
        %v4044 = vpop.permute.xlu0 %4043
        %4045 = vrot.lane.b32.xlu0 %v4026, 32
        %v4046 = vpop.permute.xlu0 %4045
        %4047 = vrot.lane.b32.xlu0 %v4028, 32
        %v4048 = vpop.permute.xlu0 %4047
        %4049 = vrot.lane.b32.xlu0 %v4030, 32
        %v4050 = vpop.permute.xlu0 %4049
        %4051 = vrot.lane.b32.xlu0 %v4032, 32
        %v4052 = vpop.permute.xlu0 %4051
        %4053 = vrot.lane.b32.xlu0 %v4034, 32
        %v4054 = vpop.permute.xlu0 %4053
        %4055 = vrot.lane.b32.xlu0 %v4036, 32
        %v4056 = vpop.permute.xlu0 %4055
        %v4057 = vsel %vm1234, %v4038, %v4040
        %v4058 = vsel %vm1234, %v4040, %v4042
        %v4059 = vsel %vm1234, %v4042, %v4044
        %v4060 = vsel %vm1234, %v4044, %v4046
        %v4061 = vsel %vm1234, %v4048, %v4050
        %v4062 = vsel %vm1234, %v4050, %v4052
        %v4063 = vsel %vm1234, %v4052, %v4054
        %v4064 = vsel %vm1234, %v4054, %v4056
        %v4073 = vadd.f32 %v3840, %v4057
        %v4074 = vadd.f32 %v3841, %v4058
        %v4075 = vadd.f32 %v3842, %v4059
        %v4076 = vadd.f32 %v3843, %v4060
        %v4077 = vadd.f32 %v3844, %v4061
        %v4078 = vadd.f32 %v3845, %v4062
        %v4079 = vadd.f32 %v3846, %v4063
        %v4080 = vadd.f32 %v3847, %v4064
        %s4081 = scalar_lea.vmem %s500, 32
        %v4082 = vld [vmem:[%s4081] ss:$8 sm:$0xf]
        %v4084 = vlaneseq
        %v4085 = vshrl.u32 %v4084, 7
        %v4086 = vsub.s32 0, %v4085
        %v4087 = vrot.slane %v4082, %v4086
        %v4088 = vlaneseq
        %v4089 = vshrl.u32 %v4088, 7
        %v4090 = vsub.s32 1, %v4089
        %v4091 = vrot.slane %v4082, %v4090
        %v4092 = vlaneseq
        %v4093 = vshrl.u32 %v4092, 7
        %v4094 = vsub.s32 2, %v4093
        %v4095 = vrot.slane %v4082, %v4094
        %v4096 = vlaneseq
        %v4097 = vshrl.u32 %v4096, 7
        %v4098 = vsub.s32 3, %v4097
        %v4099 = vrot.slane %v4082, %v4098
        %4100 = vrot.lane.b32.xlu0 %v4087, 96
        %v4101 = vpop.permute.xlu0 %4100
        %4102 = vrot.lane.b32.xlu0 %v4091, 96
        %v4103 = vpop.permute.xlu0 %4102
        %4104 = vrot.lane.b32.xlu0 %v4095, 96
        %v4105 = vpop.permute.xlu0 %4104
        %4106 = vrot.lane.b32.xlu0 %v4099, 96
        %v4107 = vpop.permute.xlu0 %4106
        %v4108 = vsel %vm1283, %v4101, %v4103
        %v4109 = vsel %vm1283, %v4103, %v4105
        %v4110 = vsel %vm1283, %v4105, %v4107
        %v4116 = vmul.f32 %v447, %v4101
        %v4117 = vmul.f32 %v448, %v4108
        %v4118 = vmul.f32 %v449, %v4109
        %v4119 = vmul.f32 %v450, %v4110
        %v4120 = vmul.f32 %v451, %v4107
        %v4121 = vmul.f32 %v452, %v4101
        %v4122 = vmul.f32 %v453, %v4108
        %v4123 = vmul.f32 %v454, %v4109
        %v4124 = vmul.f32 %v455, %v4110
        %v4125 = vmul.f32 %v456, %v4107
        %v4126 = vmul.f32 %v457, %v4101
        %v4127 = vmul.f32 %v458, %v4108
        %v4128 = vmul.f32 %v459, %v4109
        %v4129 = vmul.f32 %v460, %v4110
        %v4130 = vmul.f32 %v461, %v4107
        %v4146 = vrot.slane %v4116, 1
        %v4147 = vrot.slane %v4121, 1
        %v4148 = vsel %vm586, %v4146, %v4147
        %v4149 = vrot.slane %v4117, 1
        %v4150 = vrot.slane %v4122, 1
        %v4151 = vsel %vm586, %v4149, %v4150
        %v4152 = vrot.slane %v4118, 1
        %v4153 = vrot.slane %v4123, 1
        %v4154 = vsel %vm586, %v4152, %v4153
        %v4155 = vrot.slane %v4119, 1
        %v4156 = vrot.slane %v4124, 1
        %v4157 = vsel %vm586, %v4155, %v4156
        %v4158 = vrot.slane %v4120, 1
        %v4159 = vrot.slane %v4125, 1
        %v4160 = vsel %vm586, %v4158, %v4159
        %v4161 = vrot.slane %v4126, 1
        %v4162 = vsel %vm586, %v4147, %v4161
        %v4163 = vrot.slane %v4127, 1
        %v4164 = vsel %vm586, %v4150, %v4163
        %v4165 = vrot.slane %v4128, 1
        %v4166 = vsel %vm586, %v4153, %v4165
        %v4167 = vrot.slane %v4129, 1
        %v4168 = vsel %vm586, %v4156, %v4167
        %v4169 = vrot.slane %v4130, 1
        %v4170 = vsel %vm586, %v4159, %v4169
        %4171 = vrot.lane.b32.xlu0 %v4148, 32
        %v4172 = vpop.permute.xlu0 %4171
        %4173 = vrot.lane.b32.xlu0 %v4151, 32
        %v4174 = vpop.permute.xlu0 %4173
        %4175 = vrot.lane.b32.xlu0 %v4154, 32
        %v4176 = vpop.permute.xlu0 %4175
        %4177 = vrot.lane.b32.xlu0 %v4157, 32
        %v4178 = vpop.permute.xlu0 %4177
        %4179 = vrot.lane.b32.xlu0 %v4160, 32
        %v4180 = vpop.permute.xlu0 %4179
        %4181 = vrot.lane.b32.xlu0 %v4162, 32
        %v4182 = vpop.permute.xlu0 %4181
        %4183 = vrot.lane.b32.xlu0 %v4164, 32
        %v4184 = vpop.permute.xlu0 %4183
        %4185 = vrot.lane.b32.xlu0 %v4166, 32
        %v4186 = vpop.permute.xlu0 %4185
        %4187 = vrot.lane.b32.xlu0 %v4168, 32
        %v4188 = vpop.permute.xlu0 %4187
        %4189 = vrot.lane.b32.xlu0 %v4170, 32
        %v4190 = vpop.permute.xlu0 %4189
        %v4191 = vsel %vm1234, %v4172, %v4174
        %v4192 = vsel %vm1234, %v4174, %v4176
        %v4193 = vsel %vm1234, %v4176, %v4178
        %v4194 = vsel %vm1234, %v4178, %v4180
        %v4195 = vsel %vm1234, %v4182, %v4184
        %v4196 = vsel %vm1234, %v4184, %v4186
        %v4197 = vsel %vm1234, %v4186, %v4188
        %v4198 = vsel %vm1234, %v4188, %v4190
        %v4207 = vadd.f32 %v3939, %v4191
        %v4208 = vadd.f32 %v3940, %v4192
        %v4209 = vadd.f32 %v3941, %v4193
        %v4210 = vadd.f32 %v3942, %v4194
        %v4211 = vadd.f32 %v3943, %v4195
        %v4212 = vadd.f32 %v3944, %v4196
        %v4213 = vadd.f32 %v3945, %v4197
        %v4214 = vadd.f32 %v3946, %v4198
        %s4215 = scalar_lea.vmem %s1, 37
        %v4216 = vld [vmem:[%s4215] ss:$8 sm:$0xf]
        %v4218 = vlaneseq
        %v4219 = vshrl.u32 %v4218, 7
        %v4220 = vsub.s32 0, %v4219
        %v4221 = vrot.slane %v4216, %v4220
        %v4222 = vlaneseq
        %v4223 = vshrl.u32 %v4222, 7
        %v4224 = vsub.s32 1, %v4223
        %v4225 = vrot.slane %v4216, %v4224
        %v4226 = vlaneseq
        %v4227 = vshrl.u32 %v4226, 7
        %v4228 = vsub.s32 2, %v4227
        %v4229 = vrot.slane %v4216, %v4228
        %v4230 = vlaneseq
        %v4231 = vshrl.u32 %v4230, 7
        %v4232 = vsub.s32 3, %v4231
        %v4233 = vrot.slane %v4216, %v4232
        %4234 = vrot.lane.b32.xlu0 %v4221, 96
        %v4235 = vpop.permute.xlu0 %4234
        %4236 = vrot.lane.b32.xlu0 %v4225, 96
        %v4237 = vpop.permute.xlu0 %4236
        %4238 = vrot.lane.b32.xlu0 %v4229, 96
        %v4239 = vpop.permute.xlu0 %4238
        %4240 = vrot.lane.b32.xlu0 %v4233, 96
        %v4241 = vpop.permute.xlu0 %4240
        %v4242 = vsel %vm1283, %v4235, %v4237
        %v4243 = vsel %vm1283, %v4237, %v4239
        %v4244 = vsel %vm1283, %v4239, %v4241
        %v4250 = vmul.f32 %v447, %v4235
        %v4251 = vmul.f32 %v448, %v4242
        %v4252 = vmul.f32 %v449, %v4243
        %v4253 = vmul.f32 %v450, %v4244
        %v4254 = vmul.f32 %v451, %v4241
        %v4255 = vmul.f32 %v452, %v4235
        %v4256 = vmul.f32 %v453, %v4242
        %v4257 = vmul.f32 %v454, %v4243
        %v4258 = vmul.f32 %v455, %v4244
        %v4259 = vmul.f32 %v456, %v4241
        %v4260 = vmul.f32 %v457, %v4235
        %v4261 = vmul.f32 %v458, %v4242
        %v4262 = vmul.f32 %v459, %v4243
        %v4263 = vmul.f32 %v460, %v4244
        %v4264 = vmul.f32 %v461, %v4241
        %v4280 = vrot.slane %v4250, 2
        %v4281 = vrot.slane %v4255, 2
        %v4282 = vsel %vm753, %v4280, %v4281
        %v4283 = vrot.slane %v4251, 2
        %v4284 = vrot.slane %v4256, 2
        %v4285 = vsel %vm753, %v4283, %v4284
        %v4286 = vrot.slane %v4252, 2
        %v4287 = vrot.slane %v4257, 2
        %v4288 = vsel %vm753, %v4286, %v4287
        %v4289 = vrot.slane %v4253, 2
        %v4290 = vrot.slane %v4258, 2
        %v4291 = vsel %vm753, %v4289, %v4290
        %v4292 = vrot.slane %v4254, 2
        %v4293 = vrot.slane %v4259, 2
        %v4294 = vsel %vm753, %v4292, %v4293
        %v4295 = vrot.slane %v4260, 2
        %v4296 = vsel %vm753, %v4281, %v4295
        %v4297 = vrot.slane %v4261, 2
        %v4298 = vsel %vm753, %v4284, %v4297
        %v4299 = vrot.slane %v4262, 2
        %v4300 = vsel %vm753, %v4287, %v4299
        %v4301 = vrot.slane %v4263, 2
        %v4302 = vsel %vm753, %v4290, %v4301
        %v4303 = vrot.slane %v4264, 2
        %v4304 = vsel %vm753, %v4293, %v4303
        %4305 = vrot.lane.b32.xlu0 %v4282, 32
        %v4306 = vpop.permute.xlu0 %4305
        %4307 = vrot.lane.b32.xlu0 %v4285, 32
        %v4308 = vpop.permute.xlu0 %4307
        %4309 = vrot.lane.b32.xlu0 %v4288, 32
        %v4310 = vpop.permute.xlu0 %4309
        %4311 = vrot.lane.b32.xlu0 %v4291, 32
        %v4312 = vpop.permute.xlu0 %4311
        %4313 = vrot.lane.b32.xlu0 %v4294, 32
        %v4314 = vpop.permute.xlu0 %4313
        %4315 = vrot.lane.b32.xlu0 %v4296, 32
        %v4316 = vpop.permute.xlu0 %4315
        %4317 = vrot.lane.b32.xlu0 %v4298, 32
        %v4318 = vpop.permute.xlu0 %4317
        %4319 = vrot.lane.b32.xlu0 %v4300, 32
        %v4320 = vpop.permute.xlu0 %4319
        %4321 = vrot.lane.b32.xlu0 %v4302, 32
        %v4322 = vpop.permute.xlu0 %4321
        %4323 = vrot.lane.b32.xlu0 %v4304, 32
        %v4324 = vpop.permute.xlu0 %4323
        %v4325 = vsel %vm1234, %v4306, %v4308
        %v4326 = vsel %vm1234, %v4308, %v4310
        %v4327 = vsel %vm1234, %v4310, %v4312
        %v4328 = vsel %vm1234, %v4312, %v4314
        %v4329 = vsel %vm1234, %v4316, %v4318
        %v4330 = vsel %vm1234, %v4318, %v4320
        %v4331 = vsel %vm1234, %v4320, %v4322
        %v4332 = vsel %vm1234, %v4322, %v4324
        %v4341 = vadd.f32 %v4073, %v4325
        %v4342 = vadd.f32 %v4074, %v4326
        %v4343 = vadd.f32 %v4075, %v4327
        %v4344 = vadd.f32 %v4076, %v4328
        %v4345 = vadd.f32 %v4077, %v4329
        %v4346 = vadd.f32 %v4078, %v4330
        %v4347 = vadd.f32 %v4079, %v4331
        %v4348 = vadd.f32 %v4080, %v4332
        %s4349 = scalar_lea.vmem %s500, 37
        %v4350 = vld [vmem:[%s4349] ss:$8 sm:$0xf]
        %v4352 = vlaneseq
        %v4353 = vshrl.u32 %v4352, 7
        %v4354 = vsub.s32 0, %v4353
        %v4355 = vrot.slane %v4350, %v4354
        %v4356 = vlaneseq
        %v4357 = vshrl.u32 %v4356, 7
        %v4358 = vsub.s32 1, %v4357
        %v4359 = vrot.slane %v4350, %v4358
        %v4360 = vlaneseq
        %v4361 = vshrl.u32 %v4360, 7
        %v4362 = vsub.s32 2, %v4361
        %v4363 = vrot.slane %v4350, %v4362
        %v4364 = vlaneseq
        %v4365 = vshrl.u32 %v4364, 7
        %v4366 = vsub.s32 3, %v4365
        %v4367 = vrot.slane %v4350, %v4366
        %4368 = vrot.lane.b32.xlu0 %v4355, 96
        %v4369 = vpop.permute.xlu0 %4368
        %4370 = vrot.lane.b32.xlu0 %v4359, 96
        %v4371 = vpop.permute.xlu0 %4370
        %4372 = vrot.lane.b32.xlu0 %v4363, 96
        %v4373 = vpop.permute.xlu0 %4372
        %4374 = vrot.lane.b32.xlu0 %v4367, 96
        %v4375 = vpop.permute.xlu0 %4374
        %v4376 = vsel %vm1283, %v4369, %v4371
        %v4377 = vsel %vm1283, %v4371, %v4373
        %v4378 = vsel %vm1283, %v4373, %v4375
        %v4384 = vmul.f32 %v447, %v4369
        %v4385 = vmul.f32 %v448, %v4376
        %v4386 = vmul.f32 %v449, %v4377
        %v4387 = vmul.f32 %v450, %v4378
        %v4388 = vmul.f32 %v451, %v4375
        %v4389 = vmul.f32 %v452, %v4369
        %v4390 = vmul.f32 %v453, %v4376
        %v4391 = vmul.f32 %v454, %v4377
        %v4392 = vmul.f32 %v455, %v4378
        %v4393 = vmul.f32 %v456, %v4375
        %v4394 = vmul.f32 %v457, %v4369
        %v4395 = vmul.f32 %v458, %v4376
        %v4396 = vmul.f32 %v459, %v4377
        %v4397 = vmul.f32 %v460, %v4378
        %v4398 = vmul.f32 %v461, %v4375
        %v4414 = vrot.slane %v4384, 2
        %v4415 = vrot.slane %v4389, 2
        %v4416 = vsel %vm753, %v4414, %v4415
        %v4417 = vrot.slane %v4385, 2
        %v4418 = vrot.slane %v4390, 2
        %v4419 = vsel %vm753, %v4417, %v4418
        %v4420 = vrot.slane %v4386, 2
        %v4421 = vrot.slane %v4391, 2
        %v4422 = vsel %vm753, %v4420, %v4421
        %v4423 = vrot.slane %v4387, 2
        %v4424 = vrot.slane %v4392, 2
        %v4425 = vsel %vm753, %v4423, %v4424
        %v4426 = vrot.slane %v4388, 2
        %v4427 = vrot.slane %v4393, 2
        %v4428 = vsel %vm753, %v4426, %v4427
        %v4429 = vrot.slane %v4394, 2
        %v4430 = vsel %vm753, %v4415, %v4429
        %v4431 = vrot.slane %v4395, 2
        %v4432 = vsel %vm753, %v4418, %v4431
        %v4433 = vrot.slane %v4396, 2
        %v4434 = vsel %vm753, %v4421, %v4433
        %v4435 = vrot.slane %v4397, 2
        %v4436 = vsel %vm753, %v4424, %v4435
        %v4437 = vrot.slane %v4398, 2
        %v4438 = vsel %vm753, %v4427, %v4437
        %4439 = vrot.lane.b32.xlu0 %v4416, 32
        %v4440 = vpop.permute.xlu0 %4439
        %4441 = vrot.lane.b32.xlu0 %v4419, 32
        %v4442 = vpop.permute.xlu0 %4441
        %4443 = vrot.lane.b32.xlu0 %v4422, 32
        %v4444 = vpop.permute.xlu0 %4443
        %4445 = vrot.lane.b32.xlu0 %v4425, 32
        %v4446 = vpop.permute.xlu0 %4445
        %4447 = vrot.lane.b32.xlu0 %v4428, 32
        %v4448 = vpop.permute.xlu0 %4447
        %4449 = vrot.lane.b32.xlu0 %v4430, 32
        %v4450 = vpop.permute.xlu0 %4449
        %4451 = vrot.lane.b32.xlu0 %v4432, 32
        %v4452 = vpop.permute.xlu0 %4451
        %4453 = vrot.lane.b32.xlu0 %v4434, 32
        %v4454 = vpop.permute.xlu0 %4453
        %4455 = vrot.lane.b32.xlu0 %v4436, 32
        %v4456 = vpop.permute.xlu0 %4455
        %4457 = vrot.lane.b32.xlu0 %v4438, 32
        %v4458 = vpop.permute.xlu0 %4457
        %v4459 = vsel %vm1234, %v4440, %v4442
        %v4460 = vsel %vm1234, %v4442, %v4444
        %v4461 = vsel %vm1234, %v4444, %v4446
        %v4462 = vsel %vm1234, %v4446, %v4448
        %v4463 = vsel %vm1234, %v4450, %v4452
        %v4464 = vsel %vm1234, %v4452, %v4454
        %v4465 = vsel %vm1234, %v4454, %v4456
        %v4466 = vsel %vm1234, %v4456, %v4458
        %v4475 = vadd.f32 %v4207, %v4459
        %v4476 = vadd.f32 %v4208, %v4460
        %v4477 = vadd.f32 %v4209, %v4461
        %v4478 = vadd.f32 %v4210, %v4462
        %v4479 = vadd.f32 %v4211, %v4463
        %v4480 = vadd.f32 %v4212, %v4464
        %v4481 = vadd.f32 %v4213, %v4465
        %v4482 = vadd.f32 %v4214, %v4466
        %s4483 = scalar_lea.vmem %s1, 66
        %v4484 = vld [vmem:[%s4483] ss:$8 sm:$0xf]
        %v4486 = vlaneseq
        %v4487 = vshrl.u32 %v4486, 7
        %v4488 = vsub.s32 0, %v4487
        %v4489 = vrot.slane %v4484, %v4488
        %v4490 = vlaneseq
        %v4491 = vshrl.u32 %v4490, 7
        %v4492 = vsub.s32 1, %v4491
        %v4493 = vrot.slane %v4484, %v4492
        %v4494 = vlaneseq
        %v4495 = vshrl.u32 %v4494, 7
        %v4496 = vsub.s32 2, %v4495
        %v4497 = vrot.slane %v4484, %v4496
        %v4498 = vlaneseq
        %v4499 = vshrl.u32 %v4498, 7
        %v4500 = vsub.s32 3, %v4499
        %v4501 = vrot.slane %v4484, %v4500
        %4502 = vrot.lane.b32.xlu0 %v4489, 96
        %v4503 = vpop.permute.xlu0 %4502
        %4504 = vrot.lane.b32.xlu0 %v4493, 96
        %v4505 = vpop.permute.xlu0 %4504
        %4506 = vrot.lane.b32.xlu0 %v4497, 96
        %v4507 = vpop.permute.xlu0 %4506
        %4508 = vrot.lane.b32.xlu0 %v4501, 96
        %v4509 = vpop.permute.xlu0 %4508
        %v4510 = vsel %vm1283, %v4503, %v4505
        %v4511 = vsel %vm1283, %v4505, %v4507
        %v4512 = vsel %vm1283, %v4507, %v4509
        %v4518 = vmul.f32 %v447, %v4503
        %v4519 = vmul.f32 %v448, %v4510
        %v4520 = vmul.f32 %v449, %v4511
        %v4521 = vmul.f32 %v450, %v4512
        %v4522 = vmul.f32 %v451, %v4509
        %v4523 = vmul.f32 %v452, %v4503
        %v4524 = vmul.f32 %v453, %v4510
        %v4525 = vmul.f32 %v454, %v4511
        %v4526 = vmul.f32 %v455, %v4512
        %v4527 = vmul.f32 %v456, %v4509
        %v4528 = vmul.f32 %v457, %v4503
        %v4529 = vmul.f32 %v458, %v4510
        %v4530 = vmul.f32 %v459, %v4511
        %v4531 = vmul.f32 %v460, %v4512
        %v4532 = vmul.f32 %v461, %v4509
        %v4548 = vrot.slane %v4518, 3
        %v4549 = vrot.slane %v4523, 3
        %v4550 = vsel %vm920, %v4548, %v4549
        %v4551 = vrot.slane %v4519, 3
        %v4552 = vrot.slane %v4524, 3
        %v4553 = vsel %vm920, %v4551, %v4552
        %v4554 = vrot.slane %v4520, 3
        %v4555 = vrot.slane %v4525, 3
        %v4556 = vsel %vm920, %v4554, %v4555
        %v4557 = vrot.slane %v4521, 3
        %v4558 = vrot.slane %v4526, 3
        %v4559 = vsel %vm920, %v4557, %v4558
        %v4560 = vrot.slane %v4522, 3
        %v4561 = vrot.slane %v4527, 3
        %v4562 = vsel %vm920, %v4560, %v4561
        %v4563 = vrot.slane %v4528, 3
        %v4564 = vsel %vm920, %v4549, %v4563
        %v4565 = vrot.slane %v4529, 3
        %v4566 = vsel %vm920, %v4552, %v4565
        %v4567 = vrot.slane %v4530, 3
        %v4568 = vsel %vm920, %v4555, %v4567
        %v4569 = vrot.slane %v4531, 3
        %v4570 = vsel %vm920, %v4558, %v4569
        %v4571 = vrot.slane %v4532, 3
        %v4572 = vsel %vm920, %v4561, %v4571
        %4573 = vrot.lane.b32.xlu0 %v4550, 32
        %v4574 = vpop.permute.xlu0 %4573
        %4575 = vrot.lane.b32.xlu0 %v4553, 32
        %v4576 = vpop.permute.xlu0 %4575
        %4577 = vrot.lane.b32.xlu0 %v4556, 32
        %v4578 = vpop.permute.xlu0 %4577
        %4579 = vrot.lane.b32.xlu0 %v4559, 32
        %v4580 = vpop.permute.xlu0 %4579
        %4581 = vrot.lane.b32.xlu0 %v4562, 32
        %v4582 = vpop.permute.xlu0 %4581
        %4583 = vrot.lane.b32.xlu0 %v4564, 32
        %v4584 = vpop.permute.xlu0 %4583
        %4585 = vrot.lane.b32.xlu0 %v4566, 32
        %v4586 = vpop.permute.xlu0 %4585
        %4587 = vrot.lane.b32.xlu0 %v4568, 32
        %v4588 = vpop.permute.xlu0 %4587
        %4589 = vrot.lane.b32.xlu0 %v4570, 32
        %v4590 = vpop.permute.xlu0 %4589
        %4591 = vrot.lane.b32.xlu0 %v4572, 32
        %v4592 = vpop.permute.xlu0 %4591
        %v4593 = vsel %vm1234, %v4574, %v4576
        %v4594 = vsel %vm1234, %v4576, %v4578
        %v4595 = vsel %vm1234, %v4578, %v4580
        %v4596 = vsel %vm1234, %v4580, %v4582
        %v4597 = vsel %vm1234, %v4584, %v4586
        %v4598 = vsel %vm1234, %v4586, %v4588
        %v4599 = vsel %vm1234, %v4588, %v4590
        %v4600 = vsel %vm1234, %v4590, %v4592
        %v4609 = vadd.f32 %v4341, %v4593
        %v4610 = vadd.f32 %v4342, %v4594
        %v4611 = vadd.f32 %v4343, %v4595
        %v4612 = vadd.f32 %v4344, %v4596
        %v4613 = vadd.f32 %v4345, %v4597
        %v4614 = vadd.f32 %v4346, %v4598
        %v4615 = vadd.f32 %v4347, %v4599
        %v4616 = vadd.f32 %v4348, %v4600
        %s4617 = scalar_lea.vmem %s500, 66
        %v4618 = vld [vmem:[%s4617] ss:$8 sm:$0xf]
        %v4620 = vlaneseq
        %v4621 = vshrl.u32 %v4620, 7
        %v4622 = vsub.s32 0, %v4621
        %v4623 = vrot.slane %v4618, %v4622
        %v4624 = vlaneseq
        %v4625 = vshrl.u32 %v4624, 7
        %v4626 = vsub.s32 1, %v4625
        %v4627 = vrot.slane %v4618, %v4626
        %v4628 = vlaneseq
        %v4629 = vshrl.u32 %v4628, 7
        %v4630 = vsub.s32 2, %v4629
        %v4631 = vrot.slane %v4618, %v4630
        %v4632 = vlaneseq
        %v4633 = vshrl.u32 %v4632, 7
        %v4634 = vsub.s32 3, %v4633
        %v4635 = vrot.slane %v4618, %v4634
        %4636 = vrot.lane.b32.xlu0 %v4623, 96
        %v4637 = vpop.permute.xlu0 %4636
        %4638 = vrot.lane.b32.xlu0 %v4627, 96
        %v4639 = vpop.permute.xlu0 %4638
        %4640 = vrot.lane.b32.xlu0 %v4631, 96
        %v4641 = vpop.permute.xlu0 %4640
        %4642 = vrot.lane.b32.xlu0 %v4635, 96
        %v4643 = vpop.permute.xlu0 %4642
        %v4644 = vsel %vm1283, %v4637, %v4639
        %v4645 = vsel %vm1283, %v4639, %v4641
        %v4646 = vsel %vm1283, %v4641, %v4643
        %v4652 = vmul.f32 %v447, %v4637
        %v4653 = vmul.f32 %v448, %v4644
        %v4654 = vmul.f32 %v449, %v4645
        %v4655 = vmul.f32 %v450, %v4646
        %v4656 = vmul.f32 %v451, %v4643
        %v4657 = vmul.f32 %v452, %v4637
        %v4658 = vmul.f32 %v453, %v4644
        %v4659 = vmul.f32 %v454, %v4645
        %v4660 = vmul.f32 %v455, %v4646
        %v4661 = vmul.f32 %v456, %v4643
        %v4662 = vmul.f32 %v457, %v4637
        %v4663 = vmul.f32 %v458, %v4644
        %v4664 = vmul.f32 %v459, %v4645
        %v4665 = vmul.f32 %v460, %v4646
        %v4666 = vmul.f32 %v461, %v4643
        %v4682 = vrot.slane %v4652, 3
        %v4683 = vrot.slane %v4657, 3
        %v4684 = vsel %vm920, %v4682, %v4683
        %v4685 = vrot.slane %v4653, 3
        %v4686 = vrot.slane %v4658, 3
        %v4687 = vsel %vm920, %v4685, %v4686
        %v4688 = vrot.slane %v4654, 3
        %v4689 = vrot.slane %v4659, 3
        %v4690 = vsel %vm920, %v4688, %v4689
        %v4691 = vrot.slane %v4655, 3
        %v4692 = vrot.slane %v4660, 3
        %v4693 = vsel %vm920, %v4691, %v4692
        %v4694 = vrot.slane %v4656, 3
        %v4695 = vrot.slane %v4661, 3
        %v4696 = vsel %vm920, %v4694, %v4695
        %v4697 = vrot.slane %v4662, 3
        %v4698 = vsel %vm920, %v4683, %v4697
        %v4699 = vrot.slane %v4663, 3
        %v4700 = vsel %vm920, %v4686, %v4699
        %v4701 = vrot.slane %v4664, 3
        %v4702 = vsel %vm920, %v4689, %v4701
        %v4703 = vrot.slane %v4665, 3
        %v4704 = vsel %vm920, %v4692, %v4703
        %v4705 = vrot.slane %v4666, 3
        %v4706 = vsel %vm920, %v4695, %v4705
        %4707 = vrot.lane.b32.xlu0 %v4684, 32
        %v4708 = vpop.permute.xlu0 %4707
        %4709 = vrot.lane.b32.xlu0 %v4687, 32
        %v4710 = vpop.permute.xlu0 %4709
        %4711 = vrot.lane.b32.xlu0 %v4690, 32
        %v4712 = vpop.permute.xlu0 %4711
        %4713 = vrot.lane.b32.xlu0 %v4693, 32
        %v4714 = vpop.permute.xlu0 %4713
        %4715 = vrot.lane.b32.xlu0 %v4696, 32
        %v4716 = vpop.permute.xlu0 %4715
        %4717 = vrot.lane.b32.xlu0 %v4698, 32
        %v4718 = vpop.permute.xlu0 %4717
        %4719 = vrot.lane.b32.xlu0 %v4700, 32
        %v4720 = vpop.permute.xlu0 %4719
        %4721 = vrot.lane.b32.xlu0 %v4702, 32
        %v4722 = vpop.permute.xlu0 %4721
        %4723 = vrot.lane.b32.xlu0 %v4704, 32
        %v4724 = vpop.permute.xlu0 %4723
        %4725 = vrot.lane.b32.xlu0 %v4706, 32
        %v4726 = vpop.permute.xlu0 %4725
        %v4727 = vsel %vm1234, %v4708, %v4710
        %v4728 = vsel %vm1234, %v4710, %v4712
        %v4729 = vsel %vm1234, %v4712, %v4714
        %v4730 = vsel %vm1234, %v4714, %v4716
        %v4731 = vsel %vm1234, %v4718, %v4720
        %v4732 = vsel %vm1234, %v4720, %v4722
        %v4733 = vsel %vm1234, %v4722, %v4724
        %v4734 = vsel %vm1234, %v4724, %v4726
        %v4743 = vadd.f32 %v4475, %v4727
        %v4744 = vadd.f32 %v4476, %v4728
        %v4745 = vadd.f32 %v4477, %v4729
        %v4746 = vadd.f32 %v4478, %v4730
        %v4747 = vadd.f32 %v4479, %v4731
        %v4748 = vadd.f32 %v4480, %v4732
        %v4749 = vadd.f32 %v4481, %v4733
        %v4750 = vadd.f32 %v4482, %v4734
        %s4751 = scalar_lea.vmem %s1, 71
        %v4752 = vld [vmem:[%s4751] ss:$8 sm:$0xf]
        %v4754 = vlaneseq
        %v4755 = vshrl.u32 %v4754, 7
        %v4756 = vsub.s32 0, %v4755
        %v4757 = vrot.slane %v4752, %v4756
        %v4758 = vlaneseq
        %v4759 = vshrl.u32 %v4758, 7
        %v4760 = vsub.s32 1, %v4759
        %v4761 = vrot.slane %v4752, %v4760
        %v4762 = vlaneseq
        %v4763 = vshrl.u32 %v4762, 7
        %v4764 = vsub.s32 2, %v4763
        %v4765 = vrot.slane %v4752, %v4764
        %v4766 = vlaneseq
        %v4767 = vshrl.u32 %v4766, 7
        %v4768 = vsub.s32 3, %v4767
        %v4769 = vrot.slane %v4752, %v4768
        %4770 = vrot.lane.b32.xlu0 %v4757, 96
        %v4771 = vpop.permute.xlu0 %4770
        %4772 = vrot.lane.b32.xlu0 %v4761, 96
        %v4773 = vpop.permute.xlu0 %4772
        %4774 = vrot.lane.b32.xlu0 %v4765, 96
        %v4775 = vpop.permute.xlu0 %4774
        %4776 = vrot.lane.b32.xlu0 %v4769, 96
        %v4777 = vpop.permute.xlu0 %4776
        %v4778 = vsel %vm1283, %v4771, %v4773
        %v4779 = vsel %vm1283, %v4773, %v4775
        %v4780 = vsel %vm1283, %v4775, %v4777
        %v4786 = vmul.f32 %v447, %v4771
        %v4787 = vmul.f32 %v448, %v4778
        %v4788 = vmul.f32 %v449, %v4779
        %v4789 = vmul.f32 %v450, %v4780
        %v4790 = vmul.f32 %v451, %v4777
        %v4791 = vmul.f32 %v452, %v4771
        %v4792 = vmul.f32 %v453, %v4778
        %v4793 = vmul.f32 %v454, %v4779
        %v4794 = vmul.f32 %v455, %v4780
        %v4795 = vmul.f32 %v456, %v4777
        %v4796 = vmul.f32 %v457, %v4771
        %v4797 = vmul.f32 %v458, %v4778
        %v4798 = vmul.f32 %v459, %v4779
        %v4799 = vmul.f32 %v460, %v4780
        %v4800 = vmul.f32 %v461, %v4777
        %v4816 = vrot.slane %v4786, 4
        %v4817 = vrot.slane %v4791, 4
        %v4818 = vsel %vm1087, %v4816, %v4817
        %v4819 = vrot.slane %v4787, 4
        %v4820 = vrot.slane %v4792, 4
        %v4821 = vsel %vm1087, %v4819, %v4820
        %v4822 = vrot.slane %v4788, 4
        %v4823 = vrot.slane %v4793, 4
        %v4824 = vsel %vm1087, %v4822, %v4823
        %v4825 = vrot.slane %v4789, 4
        %v4826 = vrot.slane %v4794, 4
        %v4827 = vsel %vm1087, %v4825, %v4826
        %v4828 = vrot.slane %v4790, 4
        %v4829 = vrot.slane %v4795, 4
        %v4830 = vsel %vm1087, %v4828, %v4829
        %v4831 = vrot.slane %v4796, 4
        %v4832 = vsel %vm1087, %v4817, %v4831
        %v4833 = vrot.slane %v4797, 4
        %v4834 = vsel %vm1087, %v4820, %v4833
        %v4835 = vrot.slane %v4798, 4
        %v4836 = vsel %vm1087, %v4823, %v4835
        %v4837 = vrot.slane %v4799, 4
        %v4838 = vsel %vm1087, %v4826, %v4837
        %v4839 = vrot.slane %v4800, 4
        %v4840 = vsel %vm1087, %v4829, %v4839
        %4841 = vrot.lane.b32.xlu0 %v4818, 32
        %v4842 = vpop.permute.xlu0 %4841
        %4843 = vrot.lane.b32.xlu0 %v4821, 32
        %v4844 = vpop.permute.xlu0 %4843
        %4845 = vrot.lane.b32.xlu0 %v4824, 32
        %v4846 = vpop.permute.xlu0 %4845
        %4847 = vrot.lane.b32.xlu0 %v4827, 32
        %v4848 = vpop.permute.xlu0 %4847
        %4849 = vrot.lane.b32.xlu0 %v4830, 32
        %v4850 = vpop.permute.xlu0 %4849
        %4851 = vrot.lane.b32.xlu0 %v4832, 32
        %v4852 = vpop.permute.xlu0 %4851
        %4853 = vrot.lane.b32.xlu0 %v4834, 32
        %v4854 = vpop.permute.xlu0 %4853
        %4855 = vrot.lane.b32.xlu0 %v4836, 32
        %v4856 = vpop.permute.xlu0 %4855
        %4857 = vrot.lane.b32.xlu0 %v4838, 32
        %v4858 = vpop.permute.xlu0 %4857
        %4859 = vrot.lane.b32.xlu0 %v4840, 32
        %v4860 = vpop.permute.xlu0 %4859
        %v4861 = vsel %vm1234, %v4842, %v4844
        %v4862 = vsel %vm1234, %v4844, %v4846
        %v4863 = vsel %vm1234, %v4846, %v4848
        %v4864 = vsel %vm1234, %v4848, %v4850
        %v4865 = vsel %vm1234, %v4852, %v4854
        %v4866 = vsel %vm1234, %v4854, %v4856
        %v4867 = vsel %vm1234, %v4856, %v4858
        %v4868 = vsel %vm1234, %v4858, %v4860
        %v4877 = vadd.f32 %v4609, %v4861
        %v4878 = vadd.f32 %v4610, %v4862
        %v4879 = vadd.f32 %v4611, %v4863
        %v4880 = vadd.f32 %v4612, %v4864
        %v4881 = vadd.f32 %v4613, %v4865
        %v4882 = vadd.f32 %v4614, %v4866
        %v4883 = vadd.f32 %v4615, %v4867
        %v4884 = vadd.f32 %v4616, %v4868
        %s4885 = scalar_lea.vmem %s500, 71
        %v4886 = vld [vmem:[%s4885] ss:$8 sm:$0xf]
        %v4888 = vlaneseq
        %v4889 = vshrl.u32 %v4888, 7
        %v4890 = vsub.s32 0, %v4889
        %v4891 = vrot.slane %v4886, %v4890
        %v4892 = vlaneseq
        %v4893 = vshrl.u32 %v4892, 7
        %v4894 = vsub.s32 1, %v4893
        %v4895 = vrot.slane %v4886, %v4894
        %v4896 = vlaneseq
        %v4897 = vshrl.u32 %v4896, 7
        %v4898 = vsub.s32 2, %v4897
        %v4899 = vrot.slane %v4886, %v4898
        %v4900 = vlaneseq
        %v4901 = vshrl.u32 %v4900, 7
        %v4902 = vsub.s32 3, %v4901
        %v4903 = vrot.slane %v4886, %v4902
        %4904 = vrot.lane.b32.xlu0 %v4891, 96
        %v4905 = vpop.permute.xlu0 %4904
        %4906 = vrot.lane.b32.xlu0 %v4895, 96
        %v4907 = vpop.permute.xlu0 %4906
        %4908 = vrot.lane.b32.xlu0 %v4899, 96
        %v4909 = vpop.permute.xlu0 %4908
        %4910 = vrot.lane.b32.xlu0 %v4903, 96
        %v4911 = vpop.permute.xlu0 %4910
        %v4912 = vsel %vm1283, %v4905, %v4907
        %v4913 = vsel %vm1283, %v4907, %v4909
        %v4914 = vsel %vm1283, %v4909, %v4911
        %v4920 = vmul.f32 %v447, %v4905
        %v4921 = vmul.f32 %v448, %v4912
        %v4922 = vmul.f32 %v449, %v4913
        %v4923 = vmul.f32 %v450, %v4914
        %v4924 = vmul.f32 %v451, %v4911
        %v4925 = vmul.f32 %v452, %v4905
        %v4926 = vmul.f32 %v453, %v4912
        %v4927 = vmul.f32 %v454, %v4913
        %v4928 = vmul.f32 %v455, %v4914
        %v4929 = vmul.f32 %v456, %v4911
        %v4930 = vmul.f32 %v457, %v4905
        %v4931 = vmul.f32 %v458, %v4912
        %v4932 = vmul.f32 %v459, %v4913
        %v4933 = vmul.f32 %v460, %v4914
        %v4934 = vmul.f32 %v461, %v4911
        %v4950 = vrot.slane %v4920, 4
        %v4951 = vrot.slane %v4925, 4
        %v4952 = vsel %vm1087, %v4950, %v4951
        %v4953 = vrot.slane %v4921, 4
        %v4954 = vrot.slane %v4926, 4
        %v4955 = vsel %vm1087, %v4953, %v4954
        %v4956 = vrot.slane %v4922, 4
        %v4957 = vrot.slane %v4927, 4
        %v4958 = vsel %vm1087, %v4956, %v4957
        %v4959 = vrot.slane %v4923, 4
        %v4960 = vrot.slane %v4928, 4
        %v4961 = vsel %vm1087, %v4959, %v4960
        %v4962 = vrot.slane %v4924, 4
        %v4963 = vrot.slane %v4929, 4
        %v4964 = vsel %vm1087, %v4962, %v4963
        %v4965 = vrot.slane %v4930, 4
        %v4966 = vsel %vm1087, %v4951, %v4965
        %v4967 = vrot.slane %v4931, 4
        %v4968 = vsel %vm1087, %v4954, %v4967
        %v4969 = vrot.slane %v4932, 4
        %v4970 = vsel %vm1087, %v4957, %v4969
        %v4971 = vrot.slane %v4933, 4
        %v4972 = vsel %vm1087, %v4960, %v4971
        %v4973 = vrot.slane %v4934, 4
        %v4974 = vsel %vm1087, %v4963, %v4973
        %4975 = vrot.lane.b32.xlu0 %v4952, 32
        %v4976 = vpop.permute.xlu0 %4975
        %4977 = vrot.lane.b32.xlu0 %v4955, 32
        %v4978 = vpop.permute.xlu0 %4977
        %4979 = vrot.lane.b32.xlu0 %v4958, 32
        %v4980 = vpop.permute.xlu0 %4979
        %4981 = vrot.lane.b32.xlu0 %v4961, 32
        %v4982 = vpop.permute.xlu0 %4981
        %4983 = vrot.lane.b32.xlu0 %v4964, 32
        %v4984 = vpop.permute.xlu0 %4983
        %4985 = vrot.lane.b32.xlu0 %v4966, 32
        %v4986 = vpop.permute.xlu0 %4985
        %4987 = vrot.lane.b32.xlu0 %v4968, 32
        %v4988 = vpop.permute.xlu0 %4987
        %4989 = vrot.lane.b32.xlu0 %v4970, 32
        %v4990 = vpop.permute.xlu0 %4989
        %4991 = vrot.lane.b32.xlu0 %v4972, 32
        %v4992 = vpop.permute.xlu0 %4991
        %4993 = vrot.lane.b32.xlu0 %v4974, 32
        %v4994 = vpop.permute.xlu0 %4993
        %v4995 = vsel %vm1234, %v4976, %v4978
        %v4996 = vsel %vm1234, %v4978, %v4980
        %v4997 = vsel %vm1234, %v4980, %v4982
        %v4998 = vsel %vm1234, %v4982, %v4984
        %v4999 = vsel %vm1234, %v4986, %v4988
        %v5000 = vsel %vm1234, %v4988, %v4990
        %v5001 = vsel %vm1234, %v4990, %v4992
        %v5002 = vsel %vm1234, %v4992, %v4994
        %v5011 = vadd.f32 %v4743, %v4995
        %v5012 = vadd.f32 %v4744, %v4996
        %v5013 = vadd.f32 %v4745, %v4997
        %v5014 = vadd.f32 %v4746, %v4998
        %v5015 = vadd.f32 %v4747, %v4999
        %v5016 = vadd.f32 %v4748, %v5000
        %v5017 = vadd.f32 %v4749, %v5001
        %v5018 = vadd.f32 %v4750, %v5002
        %s5019 = scalar_lea.vmem %s1, 4
        %v5020 = vld [vmem:[%s5019] ss:$8 sm:$0xf]
        %v5022 = vlaneseq
        %v5023 = vshrl.u32 %v5022, 7
        %v5024 = vsub.s32 0, %v5023
        %v5025 = vrot.slane %v5020, %v5024
        %v5026 = vlaneseq
        %v5027 = vshrl.u32 %v5026, 7
        %v5028 = vsub.s32 1, %v5027
        %v5029 = vrot.slane %v5020, %v5028
        %v5030 = vlaneseq
        %v5031 = vshrl.u32 %v5030, 7
        %v5032 = vsub.s32 2, %v5031
        %v5033 = vrot.slane %v5020, %v5032
        %v5034 = vlaneseq
        %v5035 = vshrl.u32 %v5034, 7
        %v5036 = vsub.s32 3, %v5035
        %v5037 = vrot.slane %v5020, %v5036
        %v5042 = vmul.f32 %v448, %v5025
        %v5043 = vmul.f32 %v449, %v5029
        %v5044 = vmul.f32 %v450, %v5033
        %v5045 = vmul.f32 %v451, %v5037
        %v5046 = vmul.f32 %v453, %v5025
        %v5047 = vmul.f32 %v454, %v5029
        %v5048 = vmul.f32 %v455, %v5033
        %v5049 = vmul.f32 %v456, %v5037
        %v5050 = vadd.f32 %v4877, %v5042
        %v5051 = vadd.f32 %v4878, %v5043
        %v5052 = vadd.f32 %v4879, %v5044
        %v5053 = vadd.f32 %v4880, %v5045
        %v5054 = vadd.f32 %v4881, %v5046
        %v5055 = vadd.f32 %v4882, %v5047
        %v5056 = vadd.f32 %v4883, %v5048
        %v5057 = vadd.f32 %v4884, %v5049
        %s5058 = scalar_lea.vmem %s500, 4
        %v5059 = vld [vmem:[%s5058] ss:$8 sm:$0xf]
        %v5061 = vlaneseq
        %v5062 = vshrl.u32 %v5061, 7
        %v5063 = vsub.s32 0, %v5062
        %v5064 = vrot.slane %v5059, %v5063
        %v5065 = vlaneseq
        %v5066 = vshrl.u32 %v5065, 7
        %v5067 = vsub.s32 1, %v5066
        %v5068 = vrot.slane %v5059, %v5067
        %v5069 = vlaneseq
        %v5070 = vshrl.u32 %v5069, 7
        %v5071 = vsub.s32 2, %v5070
        %v5072 = vrot.slane %v5059, %v5071
        %v5073 = vlaneseq
        %v5074 = vshrl.u32 %v5073, 7
        %v5075 = vsub.s32 3, %v5074
        %v5076 = vrot.slane %v5059, %v5075
        %v5081 = vmul.f32 %v448, %v5064
        %v5082 = vmul.f32 %v449, %v5068
        %v5083 = vmul.f32 %v450, %v5072
        %v5084 = vmul.f32 %v451, %v5076
        %v5085 = vmul.f32 %v453, %v5064
        %v5086 = vmul.f32 %v454, %v5068
        %v5087 = vmul.f32 %v455, %v5072
        %v5088 = vmul.f32 %v456, %v5076
        %v5089 = vadd.f32 %v5011, %v5081
        %v5090 = vadd.f32 %v5012, %v5082
        %v5091 = vadd.f32 %v5013, %v5083
        %v5092 = vadd.f32 %v5014, %v5084
        %v5093 = vadd.f32 %v5015, %v5085
        %v5094 = vadd.f32 %v5016, %v5086
        %v5095 = vadd.f32 %v5017, %v5087
        %v5096 = vadd.f32 %v5018, %v5088
        %s5097 = scalar_lea.vmem %s1, 33
        %v5098 = vld [vmem:[%s5097] ss:$8 sm:$0xf]
        %v5100 = vlaneseq
        %v5101 = vshrl.u32 %v5100, 7
        %v5102 = vsub.s32 0, %v5101
        %v5103 = vrot.slane %v5098, %v5102
        %v5104 = vlaneseq
        %v5105 = vshrl.u32 %v5104, 7
        %v5106 = vsub.s32 1, %v5105
        %v5107 = vrot.slane %v5098, %v5106
        %v5108 = vlaneseq
        %v5109 = vshrl.u32 %v5108, 7
        %v5110 = vsub.s32 2, %v5109
        %v5111 = vrot.slane %v5098, %v5110
        %v5112 = vlaneseq
        %v5113 = vshrl.u32 %v5112, 7
        %v5114 = vsub.s32 3, %v5113
        %v5115 = vrot.slane %v5098, %v5114
        %v5120 = vmul.f32 %v448, %v5103
        %v5121 = vmul.f32 %v449, %v5107
        %v5122 = vmul.f32 %v450, %v5111
        %v5123 = vmul.f32 %v451, %v5115
        %v5124 = vmul.f32 %v453, %v5103
        %v5125 = vmul.f32 %v454, %v5107
        %v5126 = vmul.f32 %v455, %v5111
        %v5127 = vmul.f32 %v456, %v5115
        %v5128 = vmul.f32 %v458, %v5103
        %v5129 = vmul.f32 %v459, %v5107
        %v5130 = vmul.f32 %v460, %v5111
        %v5131 = vmul.f32 %v461, %v5115
        %v5144 = vrot.slane %v5120, 1
        %v5145 = vrot.slane %v5124, 1
        %v5146 = vsel %vm586, %v5144, %v5145
        %v5147 = vrot.slane %v5121, 1
        %v5148 = vrot.slane %v5125, 1
        %v5149 = vsel %vm586, %v5147, %v5148
        %v5150 = vrot.slane %v5122, 1
        %v5151 = vrot.slane %v5126, 1
        %v5152 = vsel %vm586, %v5150, %v5151
        %v5153 = vrot.slane %v5123, 1
        %v5154 = vrot.slane %v5127, 1
        %v5155 = vsel %vm586, %v5153, %v5154
        %v5156 = vrot.slane %v5128, 1
        %v5157 = vsel %vm586, %v5145, %v5156
        %v5158 = vrot.slane %v5129, 1
        %v5159 = vsel %vm586, %v5148, %v5158
        %v5160 = vrot.slane %v5130, 1
        %v5161 = vsel %vm586, %v5151, %v5160
        %v5162 = vrot.slane %v5131, 1
        %v5163 = vsel %vm586, %v5154, %v5162
        %v5172 = vadd.f32 %v5050, %v5146
        %v5173 = vadd.f32 %v5051, %v5149
        %v5174 = vadd.f32 %v5052, %v5152
        %v5175 = vadd.f32 %v5053, %v5155
        %v5176 = vadd.f32 %v5054, %v5157
        %v5177 = vadd.f32 %v5055, %v5159
        %v5178 = vadd.f32 %v5056, %v5161
        %v5179 = vadd.f32 %v5057, %v5163
        %s5180 = scalar_lea.vmem %s500, 33
        %v5181 = vld [vmem:[%s5180] ss:$8 sm:$0xf]
        %v5183 = vlaneseq
        %v5184 = vshrl.u32 %v5183, 7
        %v5185 = vsub.s32 0, %v5184
        %v5186 = vrot.slane %v5181, %v5185
        %v5187 = vlaneseq
        %v5188 = vshrl.u32 %v5187, 7
        %v5189 = vsub.s32 1, %v5188
        %v5190 = vrot.slane %v5181, %v5189
        %v5191 = vlaneseq
        %v5192 = vshrl.u32 %v5191, 7
        %v5193 = vsub.s32 2, %v5192
        %v5194 = vrot.slane %v5181, %v5193
        %v5195 = vlaneseq
        %v5196 = vshrl.u32 %v5195, 7
        %v5197 = vsub.s32 3, %v5196
        %v5198 = vrot.slane %v5181, %v5197
        %v5203 = vmul.f32 %v448, %v5186
        %v5204 = vmul.f32 %v449, %v5190
        %v5205 = vmul.f32 %v450, %v5194
        %v5206 = vmul.f32 %v451, %v5198
        %v5207 = vmul.f32 %v453, %v5186
        %v5208 = vmul.f32 %v454, %v5190
        %v5209 = vmul.f32 %v455, %v5194
        %v5210 = vmul.f32 %v456, %v5198
        %v5211 = vmul.f32 %v458, %v5186
        %v5212 = vmul.f32 %v459, %v5190
        %v5213 = vmul.f32 %v460, %v5194
        %v5214 = vmul.f32 %v461, %v5198
        %v5227 = vrot.slane %v5203, 1
        %v5228 = vrot.slane %v5207, 1
        %v5229 = vsel %vm586, %v5227, %v5228
        %v5230 = vrot.slane %v5204, 1
        %v5231 = vrot.slane %v5208, 1
        %v5232 = vsel %vm586, %v5230, %v5231
        %v5233 = vrot.slane %v5205, 1
        %v5234 = vrot.slane %v5209, 1
        %v5235 = vsel %vm586, %v5233, %v5234
        %v5236 = vrot.slane %v5206, 1
        %v5237 = vrot.slane %v5210, 1
        %v5238 = vsel %vm586, %v5236, %v5237
        %v5239 = vrot.slane %v5211, 1
        %v5240 = vsel %vm586, %v5228, %v5239
        %v5241 = vrot.slane %v5212, 1
        %v5242 = vsel %vm586, %v5231, %v5241
        %v5243 = vrot.slane %v5213, 1
        %v5244 = vsel %vm586, %v5234, %v5243
        %v5245 = vrot.slane %v5214, 1
        %v5246 = vsel %vm586, %v5237, %v5245
        %v5255 = vadd.f32 %v5089, %v5229
        %v5256 = vadd.f32 %v5090, %v5232
        %v5257 = vadd.f32 %v5091, %v5235
        %v5258 = vadd.f32 %v5092, %v5238
        %v5259 = vadd.f32 %v5093, %v5240
        %v5260 = vadd.f32 %v5094, %v5242
        %v5261 = vadd.f32 %v5095, %v5244
        %v5262 = vadd.f32 %v5096, %v5246
        %s5263 = scalar_lea.vmem %s1, 38
        %v5264 = vld [vmem:[%s5263] ss:$8 sm:$0xf]
        %v5266 = vlaneseq
        %v5267 = vshrl.u32 %v5266, 7
        %v5268 = vsub.s32 0, %v5267
        %v5269 = vrot.slane %v5264, %v5268
        %v5270 = vlaneseq
        %v5271 = vshrl.u32 %v5270, 7
        %v5272 = vsub.s32 1, %v5271
        %v5273 = vrot.slane %v5264, %v5272
        %v5274 = vlaneseq
        %v5275 = vshrl.u32 %v5274, 7
        %v5276 = vsub.s32 2, %v5275
        %v5277 = vrot.slane %v5264, %v5276
        %v5278 = vlaneseq
        %v5279 = vshrl.u32 %v5278, 7
        %v5280 = vsub.s32 3, %v5279
        %v5281 = vrot.slane %v5264, %v5280
        %v5286 = vmul.f32 %v448, %v5269
        %v5287 = vmul.f32 %v449, %v5273
        %v5288 = vmul.f32 %v450, %v5277
        %v5289 = vmul.f32 %v451, %v5281
        %v5290 = vmul.f32 %v453, %v5269
        %v5291 = vmul.f32 %v454, %v5273
        %v5292 = vmul.f32 %v455, %v5277
        %v5293 = vmul.f32 %v456, %v5281
        %v5294 = vmul.f32 %v458, %v5269
        %v5295 = vmul.f32 %v459, %v5273
        %v5296 = vmul.f32 %v460, %v5277
        %v5297 = vmul.f32 %v461, %v5281
        %v5310 = vrot.slane %v5286, 2
        %v5311 = vrot.slane %v5290, 2
        %v5312 = vsel %vm753, %v5310, %v5311
        %v5313 = vrot.slane %v5287, 2
        %v5314 = vrot.slane %v5291, 2
        %v5315 = vsel %vm753, %v5313, %v5314
        %v5316 = vrot.slane %v5288, 2
        %v5317 = vrot.slane %v5292, 2
        %v5318 = vsel %vm753, %v5316, %v5317
        %v5319 = vrot.slane %v5289, 2
        %v5320 = vrot.slane %v5293, 2
        %v5321 = vsel %vm753, %v5319, %v5320
        %v5322 = vrot.slane %v5294, 2
        %v5323 = vsel %vm753, %v5311, %v5322
        %v5324 = vrot.slane %v5295, 2
        %v5325 = vsel %vm753, %v5314, %v5324
        %v5326 = vrot.slane %v5296, 2
        %v5327 = vsel %vm753, %v5317, %v5326
        %v5328 = vrot.slane %v5297, 2
        %v5329 = vsel %vm753, %v5320, %v5328
        %v5338 = vadd.f32 %v5172, %v5312
        %v5339 = vadd.f32 %v5173, %v5315
        %v5340 = vadd.f32 %v5174, %v5318
        %v5341 = vadd.f32 %v5175, %v5321
        %v5342 = vadd.f32 %v5176, %v5323
        %v5343 = vadd.f32 %v5177, %v5325
        %v5344 = vadd.f32 %v5178, %v5327
        %v5345 = vadd.f32 %v5179, %v5329
        %s5346 = scalar_lea.vmem %s500, 38
        %v5347 = vld [vmem:[%s5346] ss:$8 sm:$0xf]
        %v5349 = vlaneseq
        %v5350 = vshrl.u32 %v5349, 7
        %v5351 = vsub.s32 0, %v5350
        %v5352 = vrot.slane %v5347, %v5351
        %v5353 = vlaneseq
        %v5354 = vshrl.u32 %v5353, 7
        %v5355 = vsub.s32 1, %v5354
        %v5356 = vrot.slane %v5347, %v5355
        %v5357 = vlaneseq
        %v5358 = vshrl.u32 %v5357, 7
        %v5359 = vsub.s32 2, %v5358
        %v5360 = vrot.slane %v5347, %v5359
        %v5361 = vlaneseq
        %v5362 = vshrl.u32 %v5361, 7
        %v5363 = vsub.s32 3, %v5362
        %v5364 = vrot.slane %v5347, %v5363
        %v5369 = vmul.f32 %v448, %v5352
        %v5370 = vmul.f32 %v449, %v5356
        %v5371 = vmul.f32 %v450, %v5360
        %v5372 = vmul.f32 %v451, %v5364
        %v5373 = vmul.f32 %v453, %v5352
        %v5374 = vmul.f32 %v454, %v5356
        %v5375 = vmul.f32 %v455, %v5360
        %v5376 = vmul.f32 %v456, %v5364
        %v5377 = vmul.f32 %v458, %v5352
        %v5378 = vmul.f32 %v459, %v5356
        %v5379 = vmul.f32 %v460, %v5360
        %v5380 = vmul.f32 %v461, %v5364
        %v5393 = vrot.slane %v5369, 2
        %v5394 = vrot.slane %v5373, 2
        %v5395 = vsel %vm753, %v5393, %v5394
        %v5396 = vrot.slane %v5370, 2
        %v5397 = vrot.slane %v5374, 2
        %v5398 = vsel %vm753, %v5396, %v5397
        %v5399 = vrot.slane %v5371, 2
        %v5400 = vrot.slane %v5375, 2
        %v5401 = vsel %vm753, %v5399, %v5400
        %v5402 = vrot.slane %v5372, 2
        %v5403 = vrot.slane %v5376, 2
        %v5404 = vsel %vm753, %v5402, %v5403
        %v5405 = vrot.slane %v5377, 2
        %v5406 = vsel %vm753, %v5394, %v5405
        %v5407 = vrot.slane %v5378, 2
        %v5408 = vsel %vm753, %v5397, %v5407
        %v5409 = vrot.slane %v5379, 2
        %v5410 = vsel %vm753, %v5400, %v5409
        %v5411 = vrot.slane %v5380, 2
        %v5412 = vsel %vm753, %v5403, %v5411
        %v5421 = vadd.f32 %v5255, %v5395
        %v5422 = vadd.f32 %v5256, %v5398
        %v5423 = vadd.f32 %v5257, %v5401
        %v5424 = vadd.f32 %v5258, %v5404
        %v5425 = vadd.f32 %v5259, %v5406
        %v5426 = vadd.f32 %v5260, %v5408
        %v5427 = vadd.f32 %v5261, %v5410
        %v5428 = vadd.f32 %v5262, %v5412
        %s5429 = scalar_lea.vmem %s1, 67
        %v5430 = vld [vmem:[%s5429] ss:$8 sm:$0xf]
        %v5432 = vlaneseq
        %v5433 = vshrl.u32 %v5432, 7
        %v5434 = vsub.s32 0, %v5433
        %v5435 = vrot.slane %v5430, %v5434
        %v5436 = vlaneseq
        %v5437 = vshrl.u32 %v5436, 7
        %v5438 = vsub.s32 1, %v5437
        %v5439 = vrot.slane %v5430, %v5438
        %v5440 = vlaneseq
        %v5441 = vshrl.u32 %v5440, 7
        %v5442 = vsub.s32 2, %v5441
        %v5443 = vrot.slane %v5430, %v5442
        %v5444 = vlaneseq
        %v5445 = vshrl.u32 %v5444, 7
        %v5446 = vsub.s32 3, %v5445
        %v5447 = vrot.slane %v5430, %v5446
        %v5452 = vmul.f32 %v448, %v5435
        %v5453 = vmul.f32 %v449, %v5439
        %v5454 = vmul.f32 %v450, %v5443
        %v5455 = vmul.f32 %v451, %v5447
        %v5456 = vmul.f32 %v453, %v5435
        %v5457 = vmul.f32 %v454, %v5439
        %v5458 = vmul.f32 %v455, %v5443
        %v5459 = vmul.f32 %v456, %v5447
        %v5460 = vmul.f32 %v458, %v5435
        %v5461 = vmul.f32 %v459, %v5439
        %v5462 = vmul.f32 %v460, %v5443
        %v5463 = vmul.f32 %v461, %v5447
        %v5476 = vrot.slane %v5452, 3
        %v5477 = vrot.slane %v5456, 3
        %v5478 = vsel %vm920, %v5476, %v5477
        %v5479 = vrot.slane %v5453, 3
        %v5480 = vrot.slane %v5457, 3
        %v5481 = vsel %vm920, %v5479, %v5480
        %v5482 = vrot.slane %v5454, 3
        %v5483 = vrot.slane %v5458, 3
        %v5484 = vsel %vm920, %v5482, %v5483
        %v5485 = vrot.slane %v5455, 3
        %v5486 = vrot.slane %v5459, 3
        %v5487 = vsel %vm920, %v5485, %v5486
        %v5488 = vrot.slane %v5460, 3
        %v5489 = vsel %vm920, %v5477, %v5488
        %v5490 = vrot.slane %v5461, 3
        %v5491 = vsel %vm920, %v5480, %v5490
        %v5492 = vrot.slane %v5462, 3
        %v5493 = vsel %vm920, %v5483, %v5492
        %v5494 = vrot.slane %v5463, 3
        %v5495 = vsel %vm920, %v5486, %v5494
        %v5504 = vadd.f32 %v5338, %v5478
        %v5505 = vadd.f32 %v5339, %v5481
        %v5506 = vadd.f32 %v5340, %v5484
        %v5507 = vadd.f32 %v5341, %v5487
        %v5508 = vadd.f32 %v5342, %v5489
        %v5509 = vadd.f32 %v5343, %v5491
        %v5510 = vadd.f32 %v5344, %v5493
        %v5511 = vadd.f32 %v5345, %v5495
        %s5512 = scalar_lea.vmem %s500, 67
        %v5513 = vld [vmem:[%s5512] ss:$8 sm:$0xf]
        %v5515 = vlaneseq
        %v5516 = vshrl.u32 %v5515, 7
        %v5517 = vsub.s32 0, %v5516
        %v5518 = vrot.slane %v5513, %v5517
        %v5519 = vlaneseq
        %v5520 = vshrl.u32 %v5519, 7
        %v5521 = vsub.s32 1, %v5520
        %v5522 = vrot.slane %v5513, %v5521
        %v5523 = vlaneseq
        %v5524 = vshrl.u32 %v5523, 7
        %v5525 = vsub.s32 2, %v5524
        %v5526 = vrot.slane %v5513, %v5525
        %v5527 = vlaneseq
        %v5528 = vshrl.u32 %v5527, 7
        %v5529 = vsub.s32 3, %v5528
        %v5530 = vrot.slane %v5513, %v5529
        %v5535 = vmul.f32 %v448, %v5518
        %v5536 = vmul.f32 %v449, %v5522
        %v5537 = vmul.f32 %v450, %v5526
        %v5538 = vmul.f32 %v451, %v5530
        %v5539 = vmul.f32 %v453, %v5518
        %v5540 = vmul.f32 %v454, %v5522
        %v5541 = vmul.f32 %v455, %v5526
        %v5542 = vmul.f32 %v456, %v5530
        %v5543 = vmul.f32 %v458, %v5518
        %v5544 = vmul.f32 %v459, %v5522
        %v5545 = vmul.f32 %v460, %v5526
        %v5546 = vmul.f32 %v461, %v5530
        %v5559 = vrot.slane %v5535, 3
        %v5560 = vrot.slane %v5539, 3
        %v5561 = vsel %vm920, %v5559, %v5560
        %v5562 = vrot.slane %v5536, 3
        %v5563 = vrot.slane %v5540, 3
        %v5564 = vsel %vm920, %v5562, %v5563
        %v5565 = vrot.slane %v5537, 3
        %v5566 = vrot.slane %v5541, 3
        %v5567 = vsel %vm920, %v5565, %v5566
        %v5568 = vrot.slane %v5538, 3
        %v5569 = vrot.slane %v5542, 3
        %v5570 = vsel %vm920, %v5568, %v5569
        %v5571 = vrot.slane %v5543, 3
        %v5572 = vsel %vm920, %v5560, %v5571
        %v5573 = vrot.slane %v5544, 3
        %v5574 = vsel %vm920, %v5563, %v5573
        %v5575 = vrot.slane %v5545, 3
        %v5576 = vsel %vm920, %v5566, %v5575
        %v5577 = vrot.slane %v5546, 3
        %v5578 = vsel %vm920, %v5569, %v5577
        %v5587 = vadd.f32 %v5421, %v5561
        %v5588 = vadd.f32 %v5422, %v5564
        %v5589 = vadd.f32 %v5423, %v5567
        %v5590 = vadd.f32 %v5424, %v5570
        %v5591 = vadd.f32 %v5425, %v5572
        %v5592 = vadd.f32 %v5426, %v5574
        %v5593 = vadd.f32 %v5427, %v5576
        %v5594 = vadd.f32 %v5428, %v5578
        %s5595 = scalar_lea.vmem %s1, 96
        %v5596 = vld [vmem:[%s5595] ss:$8 sm:$0xf]
        %v5598 = vlaneseq
        %v5599 = vshrl.u32 %v5598, 7
        %v5600 = vsub.s32 0, %v5599
        %v5601 = vrot.slane %v5596, %v5600
        %v5602 = vlaneseq
        %v5603 = vshrl.u32 %v5602, 7
        %v5604 = vsub.s32 1, %v5603
        %v5605 = vrot.slane %v5596, %v5604
        %v5606 = vlaneseq
        %v5607 = vshrl.u32 %v5606, 7
        %v5608 = vsub.s32 2, %v5607
        %v5609 = vrot.slane %v5596, %v5608
        %v5610 = vlaneseq
        %v5611 = vshrl.u32 %v5610, 7
        %v5612 = vsub.s32 3, %v5611
        %v5613 = vrot.slane %v5596, %v5612
        %v5618 = vmul.f32 %v448, %v5601
        %v5619 = vmul.f32 %v449, %v5605
        %v5620 = vmul.f32 %v450, %v5609
        %v5621 = vmul.f32 %v451, %v5613
        %v5622 = vmul.f32 %v453, %v5601
        %v5623 = vmul.f32 %v454, %v5605
        %v5624 = vmul.f32 %v455, %v5609
        %v5625 = vmul.f32 %v456, %v5613
        %v5626 = vmul.f32 %v458, %v5601
        %v5627 = vmul.f32 %v459, %v5605
        %v5628 = vmul.f32 %v460, %v5609
        %v5629 = vmul.f32 %v461, %v5613
        %v5642 = vrot.slane %v5618, 4
        %v5643 = vrot.slane %v5622, 4
        %v5644 = vsel %vm1087, %v5642, %v5643
        %v5645 = vrot.slane %v5619, 4
        %v5646 = vrot.slane %v5623, 4
        %v5647 = vsel %vm1087, %v5645, %v5646
        %v5648 = vrot.slane %v5620, 4
        %v5649 = vrot.slane %v5624, 4
        %v5650 = vsel %vm1087, %v5648, %v5649
        %v5651 = vrot.slane %v5621, 4
        %v5652 = vrot.slane %v5625, 4
        %v5653 = vsel %vm1087, %v5651, %v5652
        %v5654 = vrot.slane %v5626, 4
        %v5655 = vsel %vm1087, %v5643, %v5654
        %v5656 = vrot.slane %v5627, 4
        %v5657 = vsel %vm1087, %v5646, %v5656
        %v5658 = vrot.slane %v5628, 4
        %v5659 = vsel %vm1087, %v5649, %v5658
        %v5660 = vrot.slane %v5629, 4
        %v5661 = vsel %vm1087, %v5652, %v5660
        %v5670 = vadd.f32 %v5504, %v5644
        %v5671 = vadd.f32 %v5505, %v5647
        %v5672 = vadd.f32 %v5506, %v5650
        %v5673 = vadd.f32 %v5507, %v5653
        %v5674 = vadd.f32 %v5508, %v5655
        %v5675 = vadd.f32 %v5509, %v5657
        %v5676 = vadd.f32 %v5510, %v5659
        %v5677 = vadd.f32 %v5511, %v5661
        %s5678 = scalar_lea.vmem %s500, 96
        %v5679 = vld [vmem:[%s5678] ss:$8 sm:$0xf]
        %v5681 = vlaneseq
        %v5682 = vshrl.u32 %v5681, 7
        %v5683 = vsub.s32 0, %v5682
        %v5684 = vrot.slane %v5679, %v5683
        %v5685 = vlaneseq
        %v5686 = vshrl.u32 %v5685, 7
        %v5687 = vsub.s32 1, %v5686
        %v5688 = vrot.slane %v5679, %v5687
        %v5689 = vlaneseq
        %v5690 = vshrl.u32 %v5689, 7
        %v5691 = vsub.s32 2, %v5690
        %v5692 = vrot.slane %v5679, %v5691
        %v5693 = vlaneseq
        %v5694 = vshrl.u32 %v5693, 7
        %v5695 = vsub.s32 3, %v5694
        %v5696 = vrot.slane %v5679, %v5695
        %v5701 = vmul.f32 %v448, %v5684
        %v5702 = vmul.f32 %v449, %v5688
        %v5703 = vmul.f32 %v450, %v5692
        %v5704 = vmul.f32 %v451, %v5696
        %v5705 = vmul.f32 %v453, %v5684
        %v5706 = vmul.f32 %v454, %v5688
        %v5707 = vmul.f32 %v455, %v5692
        %v5708 = vmul.f32 %v456, %v5696
        %v5709 = vmul.f32 %v458, %v5684
        %v5710 = vmul.f32 %v459, %v5688
        %v5711 = vmul.f32 %v460, %v5692
        %v5712 = vmul.f32 %v461, %v5696
        %v5725 = vrot.slane %v5701, 4
        %v5726 = vrot.slane %v5705, 4
        %v5727 = vsel %vm1087, %v5725, %v5726
        %v5728 = vrot.slane %v5702, 4
        %v5729 = vrot.slane %v5706, 4
        %v5730 = vsel %vm1087, %v5728, %v5729
        %v5731 = vrot.slane %v5703, 4
        %v5732 = vrot.slane %v5707, 4
        %v5733 = vsel %vm1087, %v5731, %v5732
        %v5734 = vrot.slane %v5704, 4
        %v5735 = vrot.slane %v5708, 4
        %v5736 = vsel %vm1087, %v5734, %v5735
        %v5737 = vrot.slane %v5709, 4
        %v5738 = vsel %vm1087, %v5726, %v5737
        %v5739 = vrot.slane %v5710, 4
        %v5740 = vsel %vm1087, %v5729, %v5739
        %v5741 = vrot.slane %v5711, 4
        %v5742 = vsel %vm1087, %v5732, %v5741
        %v5743 = vrot.slane %v5712, 4
        %v5744 = vsel %vm1087, %v5735, %v5743
        %v5753 = vadd.f32 %v5587, %v5727
        %v5754 = vadd.f32 %v5588, %v5730
        %v5755 = vadd.f32 %v5589, %v5733
        %v5756 = vadd.f32 %v5590, %v5736
        %v5757 = vadd.f32 %v5591, %v5738
        %v5758 = vadd.f32 %v5592, %v5740
        %v5759 = vadd.f32 %v5593, %v5742
        %v5760 = vadd.f32 %v5594, %v5744
        %v5761 = vld [vmem:[#allocation3] ss:$2 sm:$0xf]
        %v5763 = vlaneseq
        %v5764 = vshrl.u32 %v5763, 7
        %v5765 = vsub.s32 0, %v5764
        %v5766 = vrot.slane %v5761, %v5765
        %v5767 = vlaneseq
        %v5768 = vshrl.u32 %v5767, 7
        %v5769 = vsub.s32 1, %v5768
        %v5770 = vrot.slane %v5761, %v5769
        %v5771 = vlaneseq
        %v5772 = vshrl.u32 %v5771, 7
        %v5773 = vsub.s32 2, %v5772
        %v5774 = vrot.slane %v5761, %v5773
        %v5775 = vlaneseq
        %v5776 = vshrl.u32 %v5775, 7
        %v5777 = vsub.s32 3, %v5776
        %v5778 = vrot.slane %v5761, %v5777
        %v5783 = vadd.f32 %v5670, %v5766
        %v5784 = vadd.f32 %v5671, %v5770
        %v5785 = vadd.f32 %v5672, %v5774
        %v5786 = vadd.f32 %v5673, %v5778
        %v5787 = vadd.f32 %v5674, %v5766
        %v5788 = vadd.f32 %v5675, %v5770
        %v5789 = vadd.f32 %v5676, %v5774
        %v5790 = vadd.f32 %v5677, %v5778
        %v5791 = vmax.f32 %v5783, 0.0
        %v5792 = vmax.f32 %v5784, 0.0
        %v5793 = vmax.f32 %v5785, 0.0
        %v5794 = vmax.f32 %v5786, 0.0
        %v5795 = vmax.f32 %v5787, 0.0
        %v5796 = vmax.f32 %v5788, 0.0
        %v5797 = vmax.f32 %v5789, 0.0
        %v5798 = vmax.f32 %v5790, 0.0
        %s5799 = scalar_lea.vmem [#allocation3], 1
        %v5800 = vld [vmem:[%s5799] ss:$2 sm:$0xf]
        %v5802 = vlaneseq
        %v5803 = vshrl.u32 %v5802, 7
        %v5804 = vsub.s32 0, %v5803
        %v5805 = vrot.slane %v5800, %v5804
        %v5806 = vlaneseq
        %v5807 = vshrl.u32 %v5806, 7
        %v5808 = vsub.s32 1, %v5807
        %v5809 = vrot.slane %v5800, %v5808
        %v5810 = vlaneseq
        %v5811 = vshrl.u32 %v5810, 7
        %v5812 = vsub.s32 2, %v5811
        %v5813 = vrot.slane %v5800, %v5812
        %v5814 = vlaneseq
        %v5815 = vshrl.u32 %v5814, 7
        %v5816 = vsub.s32 3, %v5815
        %v5817 = vrot.slane %v5800, %v5816
        %v5822 = vadd.f32 %v5753, %v5805
        %v5823 = vadd.f32 %v5754, %v5809
        %v5824 = vadd.f32 %v5755, %v5813
        %v5825 = vadd.f32 %v5756, %v5817
        %v5826 = vadd.f32 %v5757, %v5805
        %v5827 = vadd.f32 %v5758, %v5809
        %v5828 = vadd.f32 %v5759, %v5813
        %v5829 = vadd.f32 %v5760, %v5817
        %v5830 = vmax.f32 %v5822, 0.0
        %v5831 = vmax.f32 %v5823, 0.0
        %v5832 = vmax.f32 %v5824, 0.0
        %v5833 = vmax.f32 %v5825, 0.0
        %v5834 = vmax.f32 %v5826, 0.0
        %v5835 = vmax.f32 %v5827, 0.0
        %v5836 = vmax.f32 %v5828, 0.0
        %v5837 = vmax.f32 %v5829, 0.0
        %v5838 = vpack.c.bf16 %v5795, %v5791
        %v5839 = vpack.c.bf16 %v5796, %v5792
        %v5840 = vpack.c.bf16 %v5797, %v5793
        %v5841 = vpack.c.bf16 %v5798, %v5794
        %v5842 = vpack.c.bf16 %v5834, %v5830
        %v5843 = vpack.c.bf16 %v5835, %v5831
        %v5844 = vpack.c.bf16 %v5836, %v5832
        %v5845 = vpack.c.bf16 %v5837, %v5833
        %v5846 = vld [vmem:[#allocation5] sm:$0xff]
        %v5847 = vld [vmem:[#allocation5 + $0x8] sm:$0xff]
        %v5848 = vld [vmem:[#allocation5 + $0x10] sm:$0xff]
        %v5849 = vld [vmem:[#allocation5 + $0x18] sm:$0xff]
        %v5850 = vld [vmem:[#allocation5 + $0x20] sm:$0xff]
        %v5851 = vld [vmem:[#allocation5 + $0x28] sm:$0xff]
        %v5852 = vld [vmem:[#allocation5 + $0x30] sm:$0xff]
        %v5853 = vld [vmem:[#allocation5 + $0x38] sm:$0xff]
        %v5854 = vld [vmem:[#allocation5 + $0x40] sm:$0xff]
        %v5855 = vld [vmem:[#allocation5 + $0x48] sm:$0xff]
        %v5856 = vld [vmem:[#allocation5 + $0x50] sm:$0xff]
        %v5857 = vld [vmem:[#allocation5 + $0x58] sm:$0xff]
        %v5858 = vld [vmem:[#allocation5 + $0x60] sm:$0xff]
        %v5859 = vld [vmem:[#allocation5 + $0x68] sm:$0xff]
        %v5860 = vld [vmem:[#allocation5 + $0x70] sm:$0xff]
        %v5861 = vld [vmem:[#allocation5 + $0x78] sm:$0xff]
        %v5862 = vld [vmem:[#allocation5 + $0x80] sm:$0xff]
        %v5863 = vld [vmem:[#allocation5 + $0x88] sm:$0xff]
        %v5864 = vld [vmem:[#allocation5 + $0x90] sm:$0xff]
        %v5865 = vld [vmem:[#allocation5 + $0x98] sm:$0xff]
        %v5866 = vld [vmem:[#allocation5 + $0xa0] sm:$0xff]
        %v5867 = vld [vmem:[#allocation5 + $0xa8] sm:$0xff]
        %v5868 = vld [vmem:[#allocation5 + $0xb0] sm:$0xff]
        %v5869 = vld [vmem:[#allocation5 + $0xb8] sm:$0xff]
        %v5870 = vld [vmem:[#allocation5 + $0xc0] sm:$0xff]
        %v5871 = vld [vmem:[#allocation5 + $0xc8] sm:$0xff]
        %v5872 = vld [vmem:[#allocation5 + $0xd0] sm:$0xff]
        %v5873 = vld [vmem:[#allocation5 + $0xd8] sm:$0xff]
        %v5874 = vld [vmem:[#allocation5 + $0xe0] sm:$0xff]
        %v5875 = vld [vmem:[#allocation5 + $0xe8] sm:$0xff]
        %v5876 = vld [vmem:[#allocation5 + $0xf0] sm:$0xff]
        %v5877 = vld [vmem:[#allocation5 + $0xf8] sm:$0xff]
        %v5878 = vld [vmem:[#allocation5 + $0x100] sm:$0xff]
        %v5879 = vld [vmem:[#allocation5 + $0x108] sm:$0xff]
        %v5880 = vld [vmem:[#allocation5 + $0x110] sm:$0xff]
        %v5881 = vld [vmem:[#allocation5 + $0x118] sm:$0xff]
        %v5882 = vld [vmem:[#allocation5 + $0x120] sm:$0xff]
        %v5883 = vld [vmem:[#allocation5 + $0x128] sm:$0xff]
        %v5884 = vld [vmem:[#allocation5 + $0x130] sm:$0xff]
        %v5885 = vld [vmem:[#allocation5 + $0x138] sm:$0xff]
        %v5886 = vld [vmem:[#allocation5 + $0x140] sm:$0xff]
        %v5887 = vld [vmem:[#allocation5 + $0x148] sm:$0xff]
        %v5888 = vld [vmem:[#allocation5 + $0x150] sm:$0xff]
        %v5889 = vld [vmem:[#allocation5 + $0x158] sm:$0xff]
        %v5890 = vld [vmem:[#allocation5 + $0x160] sm:$0xff]
        %v5891 = vld [vmem:[#allocation5 + $0x168] sm:$0xff]
        %v5892 = vld [vmem:[#allocation5 + $0x170] sm:$0xff]
        %v5893 = vld [vmem:[#allocation5 + $0x178] sm:$0xff]
        %v5894 = vld [vmem:[#allocation5 + $0x180] sm:$0xff]
        %v5895 = vld [vmem:[#allocation5 + $0x188] sm:$0xff]
        %v5896 = vld [vmem:[#allocation5 + $0x190] sm:$0xff]
        %v5897 = vld [vmem:[#allocation5 + $0x198] sm:$0xff]
        %v5898 = vld [vmem:[#allocation5 + $0x1a0] sm:$0xff]
        %v5899 = vld [vmem:[#allocation5 + $0x1a8] sm:$0xff]
        %v5900 = vld [vmem:[#allocation5 + $0x1b0] sm:$0xff]
        %v5901 = vld [vmem:[#allocation5 + $0x1b8] sm:$0xff]
        %v5902 = vld [vmem:[#allocation5 + $0x1c0] sm:$0xff]
        %v5903 = vld [vmem:[#allocation5 + $0x1c8] sm:$0xff]
        %v5904 = vld [vmem:[#allocation5 + $0x1d0] sm:$0xff]
        %v5905 = vld [vmem:[#allocation5 + $0x1d8] sm:$0xff]
        %v5906 = vld [vmem:[#allocation5 + $0x1e0] sm:$0xff]
        %v5907 = vld [vmem:[#allocation5 + $0x1e8] sm:$0xff]
        %v5908 = vld [vmem:[#allocation5 + $0x1f0] sm:$0xff]
        %v5909 = vld [vmem:[#allocation5 + $0x1f8] sm:$0xff]
        %v5910 = vld [vmem:[#allocation5 + $0x200] sm:$0xff]
        %v5911 = vld [vmem:[#allocation5 + $0x208] sm:$0xff]
        %v5912 = vld [vmem:[#allocation5 + $0x210] sm:$0xff]
        %v5913 = vld [vmem:[#allocation5 + $0x218] sm:$0xff]
        %v5914 = vld [vmem:[#allocation5 + $0x220] sm:$0xff]
        %v5915 = vld [vmem:[#allocation5 + $0x228] sm:$0xff]
        %v5916 = vld [vmem:[#allocation5 + $0x230] sm:$0xff]
        %v5917 = vld [vmem:[#allocation5 + $0x238] sm:$0xff]
        %v5918 = vld [vmem:[#allocation5 + $0x240] sm:$0xff]
        %v5919 = vld [vmem:[#allocation5 + $0x248] sm:$0xff]
        %v5920 = vld [vmem:[#allocation5 + $0x250] sm:$0xff]
        %v5921 = vld [vmem:[#allocation5 + $0x258] sm:$0xff]
        %v5922 = vld [vmem:[#allocation5 + $0x260] sm:$0xff]
        %v5923 = vld [vmem:[#allocation5 + $0x268] sm:$0xff]
        %v5924 = vld [vmem:[#allocation5 + $0x270] sm:$0xff]
        %v5925 = vld [vmem:[#allocation5 + $0x278] sm:$0xff]
        %v5926 = vld [vmem:[#allocation5 + $0x280] sm:$0xff]
        %v5927 = vld [vmem:[#allocation5 + $0x288] sm:$0xff]
        %v5928 = vld [vmem:[#allocation5 + $0x290] sm:$0xff]
        %v5929 = vld [vmem:[#allocation5 + $0x298] sm:$0xff]
        %v5930 = vld [vmem:[#allocation5 + $0x2a0] sm:$0xff]
        %v5931 = vld [vmem:[#allocation5 + $0x2a8] sm:$0xff]
        %v5932 = vld [vmem:[#allocation5 + $0x2b0] sm:$0xff]
        %v5933 = vld [vmem:[#allocation5 + $0x2b8] sm:$0xff]
        %v5934 = vld [vmem:[#allocation5 + $0x2c0] sm:$0xff]
        %v5935 = vld [vmem:[#allocation5 + $0x2c8] sm:$0xff]
        %v5936 = vld [vmem:[#allocation5 + $0x2d0] sm:$0xff]
        %v5937 = vld [vmem:[#allocation5 + $0x2d8] sm:$0xff]
        %v5938 = vld [vmem:[#allocation5 + $0x2e0] sm:$0xff]
        %v5939 = vld [vmem:[#allocation5 + $0x2e8] sm:$0xff]
        %v5940 = vld [vmem:[#allocation5 + $0x2f0] sm:$0xff]
        %v5941 = vld [vmem:[#allocation5 + $0x2f8] sm:$0xff]
        %v5942 = vld [vmem:[#allocation5 + $0x300] sm:$0xff]
        %v5943 = vld [vmem:[#allocation5 + $0x308] sm:$0xff]
        %v5944 = vld [vmem:[#allocation5 + $0x310] sm:$0xff]
        %v5945 = vld [vmem:[#allocation5 + $0x318] sm:$0xff]
        %v5946 = vld [vmem:[#allocation5 + $0x320] sm:$0xff]
        %v5947 = vld [vmem:[#allocation5 + $0x328] sm:$0xff]
        %v5948 = vld [vmem:[#allocation5 + $0x330] sm:$0xff]
        %v5949 = vld [vmem:[#allocation5 + $0x338] sm:$0xff]
        %v5950 = vld [vmem:[#allocation5 + $0x340] sm:$0xff]
        %v5951 = vld [vmem:[#allocation5 + $0x348] sm:$0xff]
        %v5952 = vld [vmem:[#allocation5 + $0x350] sm:$0xff]
        %v5953 = vld [vmem:[#allocation5 + $0x358] sm:$0xff]
        %v5954 = vld [vmem:[#allocation5 + $0x360] sm:$0xff]
        %v5955 = vld [vmem:[#allocation5 + $0x368] sm:$0xff]
        %v5956 = vld [vmem:[#allocation5 + $0x370] sm:$0xff]
        %v5957 = vld [vmem:[#allocation5 + $0x378] sm:$0xff]
        %v5958 = vld [vmem:[#allocation5 + $0x380] sm:$0xff]
        %v5959 = vld [vmem:[#allocation5 + $0x388] sm:$0xff]
        %v5960 = vld [vmem:[#allocation5 + $0x390] sm:$0xff]
        %v5961 = vld [vmem:[#allocation5 + $0x398] sm:$0xff]
        %v5962 = vld [vmem:[#allocation5 + $0x3a0] sm:$0xff]
        %v5963 = vld [vmem:[#allocation5 + $0x3a8] sm:$0xff]
        %v5964 = vld [vmem:[#allocation5 + $0x3b0] sm:$0xff]
        %v5965 = vld [vmem:[#allocation5 + $0x3b8] sm:$0xff]
        %v5966 = vld [vmem:[#allocation5 + $0x3c0] sm:$0xff]
        %v5967 = vld [vmem:[#allocation5 + $0x3c8] sm:$0xff]
        %v5968 = vld [vmem:[#allocation5 + $0x3d0] sm:$0xff]
        %v5969 = vld [vmem:[#allocation5 + $0x3d8] sm:$0xff]
        %v5970 = vld [vmem:[#allocation5 + $0x3e0] sm:$0xff]
        %v5971 = vld [vmem:[#allocation5 + $0x3e8] sm:$0xff]
        %v5972 = vld [vmem:[#allocation5 + $0x3f0] sm:$0xff]
        %v5973 = vld [vmem:[#allocation5 + $0x3f8] sm:$0xff]
        %v5974 = vld [vmem:[#allocation5 + $0x400] sm:$0xff]
        %v5975 = vld [vmem:[#allocation5 + $0x408] sm:$0xff]
        %v5976 = vld [vmem:[#allocation5 + $0x410] sm:$0xff]
        %v5977 = vld [vmem:[#allocation5 + $0x418] sm:$0xff]
        %v5978 = vld [vmem:[#allocation5 + $0x420] sm:$0xff]
        %v5979 = vld [vmem:[#allocation5 + $0x428] sm:$0xff]
        %v5980 = vld [vmem:[#allocation5 + $0x430] sm:$0xff]
        %v5981 = vld [vmem:[#allocation5 + $0x438] sm:$0xff]
        %v5982 = vld [vmem:[#allocation5 + $0x440] sm:$0xff]
        %v5983 = vld [vmem:[#allocation5 + $0x448] sm:$0xff]
        %v5984 = vld [vmem:[#allocation5 + $0x450] sm:$0xff]
        %v5985 = vld [vmem:[#allocation5 + $0x458] sm:$0xff]
        %v5986 = vld [vmem:[#allocation5 + $0x460] sm:$0xff]
        %v5987 = vld [vmem:[#allocation5 + $0x468] sm:$0xff]
        %v5988 = vld [vmem:[#allocation5 + $0x470] sm:$0xff]
        %v5989 = vld [vmem:[#allocation5 + $0x478] sm:$0xff]
        %v5990 = vld [vmem:[#allocation5 + $0x480] sm:$0xff]
        %v5991 = vld [vmem:[#allocation5 + $0x488] sm:$0xff]
        %v5992 = vld [vmem:[#allocation5 + $0x490] sm:$0xff]
        %v5993 = vld [vmem:[#allocation5 + $0x498] sm:$0xff]
        %v5994 = vld [vmem:[#allocation5 + $0x4a0] sm:$0xff]
        %v5995 = vld [vmem:[#allocation5 + $0x4a8] sm:$0xff]
        %v5996 = vld [vmem:[#allocation5 + $0x4b0] sm:$0xff]
        %v5997 = vld [vmem:[#allocation5 + $0x4b8] sm:$0xff]
        %v5998 = vld [vmem:[#allocation5 + $0x4c0] sm:$0xff]
        %v5999 = vld [vmem:[#allocation5 + $0x4c8] sm:$0xff]
        %v6000 = vld [vmem:[#allocation5 + $0x4d0] sm:$0xff]
        %v6001 = vld [vmem:[#allocation5 + $0x4d8] sm:$0xff]
        %v6002 = vld [vmem:[#allocation5 + $0x4e0] sm:$0xff]
        %v6003 = vld [vmem:[#allocation5 + $0x4e8] sm:$0xff]
        %v6004 = vld [vmem:[#allocation5 + $0x4f0] sm:$0xff]
        %v6005 = vld [vmem:[#allocation5 + $0x4f8] sm:$0xff]
        %v6006 = vld [vmem:[#allocation5 + $0x500] sm:$0xff]
        %v6007 = vld [vmem:[#allocation5 + $0x508] sm:$0xff]
        %v6008 = vld [vmem:[#allocation5 + $0x510] sm:$0xff]
        %v6009 = vld [vmem:[#allocation5 + $0x518] sm:$0xff]
        %v6010 = vld [vmem:[#allocation5 + $0x520] sm:$0xff]
        %v6011 = vld [vmem:[#allocation5 + $0x528] sm:$0xff]
        %v6012 = vld [vmem:[#allocation5 + $0x530] sm:$0xff]
        %v6013 = vld [vmem:[#allocation5 + $0x538] sm:$0xff]
        %v6014 = vld [vmem:[#allocation5 + $0x540] sm:$0xff]
        %v6015 = vld [vmem:[#allocation5 + $0x548] sm:$0xff]
        %v6016 = vld [vmem:[#allocation5 + $0x550] sm:$0xff]
        %v6017 = vld [vmem:[#allocation5 + $0x558] sm:$0xff]
        %v6018 = vld [vmem:[#allocation5 + $0x560] sm:$0xff]
        %v6019 = vld [vmem:[#allocation5 + $0x568] sm:$0xff]
        %v6020 = vld [vmem:[#allocation5 + $0x570] sm:$0xff]
        %v6021 = vld [vmem:[#allocation5 + $0x578] sm:$0xff]
        %v6022 = vld [vmem:[#allocation5 + $0x580] sm:$0xff]
        %v6023 = vld [vmem:[#allocation5 + $0x588] sm:$0xff]
        %v6024 = vld [vmem:[#allocation5 + $0x590] sm:$0xff]
        %v6025 = vld [vmem:[#allocation5 + $0x598] sm:$0xff]
        %v6026 = vld [vmem:[#allocation5 + $0x5a0] sm:$0xff]
        %v6027 = vld [vmem:[#allocation5 + $0x5a8] sm:$0xff]
        %v6028 = vld [vmem:[#allocation5 + $0x5b0] sm:$0xff]
        %v6029 = vld [vmem:[#allocation5 + $0x5b8] sm:$0xff]
        %v6030 = vld [vmem:[#allocation5 + $0x5c0] sm:$0xff]
        %v6031 = vld [vmem:[#allocation5 + $0x5c8] sm:$0xff]
        %v6032 = vld [vmem:[#allocation5 + $0x5d0] sm:$0xff]
        %v6033 = vld [vmem:[#allocation5 + $0x5d8] sm:$0xff]
        %v6034 = vld [vmem:[#allocation5 + $0x5e0] sm:$0xff]
        %v6035 = vld [vmem:[#allocation5 + $0x5e8] sm:$0xff]
        %v6036 = vld [vmem:[#allocation5 + $0x5f0] sm:$0xff]
        %v6037 = vld [vmem:[#allocation5 + $0x5f8] sm:$0xff]
        %v6038 = vld [vmem:[#allocation5 + $0x600] sm:$0xff]
        %v6039 = vld [vmem:[#allocation5 + $0x608] sm:$0xff]
        %v6040 = vld [vmem:[#allocation5 + $0x610] sm:$0xff]
        %v6041 = vld [vmem:[#allocation5 + $0x618] sm:$0xff]
        %v6042 = vld [vmem:[#allocation5 + $0x620] sm:$0xff]
        %v6043 = vld [vmem:[#allocation5 + $0x628] sm:$0xff]
        %v6044 = vld [vmem:[#allocation5 + $0x630] sm:$0xff]
        %v6045 = vld [vmem:[#allocation5 + $0x638] sm:$0xff]
        %v6046 = vld [vmem:[#allocation5 + $0x640] sm:$0xff]
        %v6047 = vld [vmem:[#allocation5 + $0x648] sm:$0xff]
        %v6048 = vld [vmem:[#allocation5 + $0x650] sm:$0xff]
        %v6049 = vld [vmem:[#allocation5 + $0x658] sm:$0xff]
        %v6050 = vld [vmem:[#allocation5 + $0x660] sm:$0xff]
        %v6051 = vld [vmem:[#allocation5 + $0x668] sm:$0xff]
        %v6052 = vld [vmem:[#allocation5 + $0x670] sm:$0xff]
        %v6053 = vld [vmem:[#allocation5 + $0x678] sm:$0xff]
        %v6054 = vld [vmem:[#allocation5 + $0x680] sm:$0xff]
        %v6055 = vld [vmem:[#allocation5 + $0x688] sm:$0xff]
        %v6056 = vld [vmem:[#allocation5 + $0x690] sm:$0xff]
        %v6057 = vld [vmem:[#allocation5 + $0x698] sm:$0xff]
        %v6058 = vld [vmem:[#allocation5 + $0x6a0] sm:$0xff]
        %v6059 = vld [vmem:[#allocation5 + $0x6a8] sm:$0xff]
        %v6060 = vld [vmem:[#allocation5 + $0x6b0] sm:$0xff]
        %v6061 = vld [vmem:[#allocation5 + $0x6b8] sm:$0xff]
        %v6062 = vld [vmem:[#allocation5 + $0x6c0] sm:$0xff]
        %v6063 = vld [vmem:[#allocation5 + $0x6c8] sm:$0xff]
        %v6064 = vld [vmem:[#allocation5 + $0x6d0] sm:$0xff]
        %v6065 = vld [vmem:[#allocation5 + $0x6d8] sm:$0xff]
        %v6066 = vld [vmem:[#allocation5 + $0x6e0] sm:$0xff]
        %v6067 = vld [vmem:[#allocation5 + $0x6e8] sm:$0xff]
        %v6068 = vld [vmem:[#allocation5 + $0x6f0] sm:$0xff]
        %v6069 = vld [vmem:[#allocation5 + $0x6f8] sm:$0xff]
        %v6070 = vld [vmem:[#allocation5 + $0x700] sm:$0xff]
        %v6071 = vld [vmem:[#allocation5 + $0x708] sm:$0xff]
        %v6072 = vld [vmem:[#allocation5 + $0x710] sm:$0xff]
        %v6073 = vld [vmem:[#allocation5 + $0x718] sm:$0xff]
        %v6074 = vld [vmem:[#allocation5 + $0x720] sm:$0xff]
        %v6075 = vld [vmem:[#allocation5 + $0x728] sm:$0xff]
        %v6076 = vld [vmem:[#allocation5 + $0x730] sm:$0xff]
        %v6077 = vld [vmem:[#allocation5 + $0x738] sm:$0xff]
        %v6078 = vld [vmem:[#allocation5 + $0x740] sm:$0xff]
        %v6079 = vld [vmem:[#allocation5 + $0x748] sm:$0xff]
        %v6080 = vld [vmem:[#allocation5 + $0x750] sm:$0xff]
        %v6081 = vld [vmem:[#allocation5 + $0x758] sm:$0xff]
        %v6082 = vld [vmem:[#allocation5 + $0x760] sm:$0xff]
        %v6083 = vld [vmem:[#allocation5 + $0x768] sm:$0xff]
        %v6084 = vld [vmem:[#allocation5 + $0x770] sm:$0xff]
        %v6085 = vld [vmem:[#allocation5 + $0x778] sm:$0xff]
        %v6086 = vld [vmem:[#allocation5 + $0x780] sm:$0xff]
        %v6087 = vld [vmem:[#allocation5 + $0x788] sm:$0xff]
        %v6088 = vld [vmem:[#allocation5 + $0x790] sm:$0xff]
        %v6089 = vld [vmem:[#allocation5 + $0x798] sm:$0xff]
        %v6090 = vld [vmem:[#allocation5 + $0x7a0] sm:$0xff]
        %v6091 = vld [vmem:[#allocation5 + $0x7a8] sm:$0xff]
        %v6092 = vld [vmem:[#allocation5 + $0x7b0] sm:$0xff]
        %v6093 = vld [vmem:[#allocation5 + $0x7b8] sm:$0xff]
        %v6094 = vld [vmem:[#allocation5 + $0x7c0] sm:$0xff]
        %v6095 = vld [vmem:[#allocation5 + $0x7c8] sm:$0xff]
        %v6096 = vld [vmem:[#allocation5 + $0x7d0] sm:$0xff]
        %v6097 = vld [vmem:[#allocation5 + $0x7d8] sm:$0xff]
        %v6098 = vld [vmem:[#allocation5 + $0x7e0] sm:$0xff]
        %v6099 = vld [vmem:[#allocation5 + $0x7e8] sm:$0xff]
        %v6100 = vld [vmem:[#allocation5 + $0x7f0] sm:$0xff]
        %v6101 = vld [vmem:[#allocation5 + $0x7f8] sm:$0xff]
        %v6102 = vld [vmem:[#allocation5 + $0x800] sm:$0xff]
        %v6103 = vld [vmem:[#allocation5 + $0x808] sm:$0xff]
        %v6104 = vld [vmem:[#allocation5 + $0x810] sm:$0xff]
        %v6105 = vld [vmem:[#allocation5 + $0x818] sm:$0xff]
        %v6106 = vld [vmem:[#allocation5 + $0x820] sm:$0xff]
        %v6107 = vld [vmem:[#allocation5 + $0x828] sm:$0xff]
        %v6108 = vld [vmem:[#allocation5 + $0x830] sm:$0xff]
        %v6109 = vld [vmem:[#allocation5 + $0x838] sm:$0xff]
        %v6110 = vld [vmem:[#allocation5 + $0x840] sm:$0xff]
        %v6111 = vld [vmem:[#allocation5 + $0x848] sm:$0xff]
        %v6112 = vld [vmem:[#allocation5 + $0x850] sm:$0xff]
        %v6113 = vld [vmem:[#allocation5 + $0x858] sm:$0xff]
        %v6114 = vld [vmem:[#allocation5 + $0x860] sm:$0xff]
        %v6115 = vld [vmem:[#allocation5 + $0x868] sm:$0xff]
        %v6116 = vld [vmem:[#allocation5 + $0x870] sm:$0xff]
        %v6117 = vld [vmem:[#allocation5 + $0x878] sm:$0xff]
        %v6118 = vld [vmem:[#allocation5 + $0x880] sm:$0xff]
        %v6119 = vld [vmem:[#allocation5 + $0x888] sm:$0xff]
        %v6120 = vld [vmem:[#allocation5 + $0x890] sm:$0xff]
        %v6121 = vld [vmem:[#allocation5 + $0x898] sm:$0xff]
        %v6122 = vld [vmem:[#allocation5 + $0x8a0] sm:$0xff]
        %v6123 = vld [vmem:[#allocation5 + $0x8a8] sm:$0xff]
        %v6124 = vld [vmem:[#allocation5 + $0x8b0] sm:$0xff]
        %v6125 = vld [vmem:[#allocation5 + $0x8b8] sm:$0xff]
        %v6126 = vld [vmem:[#allocation5 + $0x8c0] sm:$0xff]
        %v6127 = vld [vmem:[#allocation5 + $0x8c8] sm:$0xff]
        %v6128 = vld [vmem:[#allocation5 + $0x8d0] sm:$0xff]
        %v6129 = vld [vmem:[#allocation5 + $0x8d8] sm:$0xff]
        %v6130 = vld [vmem:[#allocation5 + $0x8e0] sm:$0xff]
        %v6131 = vld [vmem:[#allocation5 + $0x8e8] sm:$0xff]
        %v6132 = vld [vmem:[#allocation5 + $0x8f0] sm:$0xff]
        %v6133 = vld [vmem:[#allocation5 + $0x8f8] sm:$0xff]
        %v6134 = vld [vmem:[#allocation5 + $0x900] sm:$0xff]
        %v6135 = vld [vmem:[#allocation5 + $0x908] sm:$0xff]
        %v6136 = vld [vmem:[#allocation5 + $0x910] sm:$0xff]
        %v6137 = vld [vmem:[#allocation5 + $0x918] sm:$0xff]
        %v6138 = vld [vmem:[#allocation5 + $0x920] sm:$0xff]
        %v6139 = vld [vmem:[#allocation5 + $0x928] sm:$0xff]
        %v6140 = vld [vmem:[#allocation5 + $0x930] sm:$0xff]
        %v6141 = vld [vmem:[#allocation5 + $0x938] sm:$0xff]
        %v6142 = vld [vmem:[#allocation5 + $0x940] sm:$0xff]
        %v6143 = vld [vmem:[#allocation5 + $0x948] sm:$0xff]
        %v6144 = vld [vmem:[#allocation5 + $0x950] sm:$0xff]
        %v6145 = vld [vmem:[#allocation5 + $0x958] sm:$0xff]
        %v6146 = vld [vmem:[#allocation5 + $0x960] sm:$0xff]
        %v6147 = vld [vmem:[#allocation5 + $0x968] sm:$0xff]
        %v6148 = vld [vmem:[#allocation5 + $0x970] sm:$0xff]
        %v6149 = vld [vmem:[#allocation5 + $0x978] sm:$0xff]
        %v6150 = vld [vmem:[#allocation5 + $0x980] sm:$0xff]
        %v6151 = vld [vmem:[#allocation5 + $0x988] sm:$0xff]
        %v6152 = vld [vmem:[#allocation5 + $0x990] sm:$0xff]
        %v6153 = vld [vmem:[#allocation5 + $0x998] sm:$0xff]
        %v6154 = vld [vmem:[#allocation5 + $0x9a0] sm:$0xff]
        %v6155 = vld [vmem:[#allocation5 + $0x9a8] sm:$0xff]
        %v6156 = vld [vmem:[#allocation5 + $0x9b0] sm:$0xff]
        %v6157 = vld [vmem:[#allocation5 + $0x9b8] sm:$0xff]
        %v6158 = vld [vmem:[#allocation5 + $0x9c0] sm:$0xff]
        %v6159 = vld [vmem:[#allocation5 + $0x9c8] sm:$0xff]
        %v6160 = vld [vmem:[#allocation5 + $0x9d0] sm:$0xff]
        %v6161 = vld [vmem:[#allocation5 + $0x9d8] sm:$0xff]
        %v6162 = vld [vmem:[#allocation5 + $0x9e0] sm:$0xff]
        %v6163 = vld [vmem:[#allocation5 + $0x9e8] sm:$0xff]
        %v6164 = vld [vmem:[#allocation5 + $0x9f0] sm:$0xff]
        %v6165 = vld [vmem:[#allocation5 + $0x9f8] sm:$0xff]
        %v6166 = vld [vmem:[#allocation5 + $0xa00] sm:$0xff]
        %v6167 = vld [vmem:[#allocation5 + $0xa08] sm:$0xff]
        %v6168 = vld [vmem:[#allocation5 + $0xa10] sm:$0xff]
        %v6169 = vld [vmem:[#allocation5 + $0xa18] sm:$0xff]
        %v6170 = vld [vmem:[#allocation5 + $0xa20] sm:$0xff]
        %v6171 = vld [vmem:[#allocation5 + $0xa28] sm:$0xff]
        %v6172 = vld [vmem:[#allocation5 + $0xa30] sm:$0xff]
        %v6173 = vld [vmem:[#allocation5 + $0xa38] sm:$0xff]
        %v6174 = vld [vmem:[#allocation5 + $0xa40] sm:$0xff]
        %v6175 = vld [vmem:[#allocation5 + $0xa48] sm:$0xff]
        %v6176 = vld [vmem:[#allocation5 + $0xa50] sm:$0xff]
        %v6177 = vld [vmem:[#allocation5 + $0xa58] sm:$0xff]
        %v6178 = vld [vmem:[#allocation5 + $0xa60] sm:$0xff]
        %v6179 = vld [vmem:[#allocation5 + $0xa68] sm:$0xff]
        %v6180 = vld [vmem:[#allocation5 + $0xa70] sm:$0xff]
        %v6181 = vld [vmem:[#allocation5 + $0xa78] sm:$0xff]
        %v6182 = vld [vmem:[#allocation5 + $0xa80] sm:$0xff]
        %v6183 = vld [vmem:[#allocation5 + $0xa88] sm:$0xff]
        %v6184 = vld [vmem:[#allocation5 + $0xa90] sm:$0xff]
        %v6185 = vld [vmem:[#allocation5 + $0xa98] sm:$0xff]
        %v6186 = vld [vmem:[#allocation5 + $0xaa0] sm:$0xff]
        %v6187 = vld [vmem:[#allocation5 + $0xaa8] sm:$0xff]
        %v6188 = vld [vmem:[#allocation5 + $0xab0] sm:$0xff]
        %v6189 = vld [vmem:[#allocation5 + $0xab8] sm:$0xff]
        %v6190 = vld [vmem:[#allocation5 + $0xac0] sm:$0xff]
        %v6191 = vld [vmem:[#allocation5 + $0xac8] sm:$0xff]
        %v6192 = vld [vmem:[#allocation5 + $0xad0] sm:$0xff]
        %v6193 = vld [vmem:[#allocation5 + $0xad8] sm:$0xff]
        %v6194 = vld [vmem:[#allocation5 + $0xae0] sm:$0xff]
        %v6195 = vld [vmem:[#allocation5 + $0xae8] sm:$0xff]
        %v6196 = vld [vmem:[#allocation5 + $0xaf0] sm:$0xff]
        %v6197 = vld [vmem:[#allocation5 + $0xaf8] sm:$0xff]
        %v6198 = vld [vmem:[#allocation5 + $0xb00] sm:$0xff]
        %v6199 = vld [vmem:[#allocation5 + $0xb08] sm:$0xff]
        %v6200 = vld [vmem:[#allocation5 + $0xb10] sm:$0xff]
        %v6201 = vld [vmem:[#allocation5 + $0xb18] sm:$0xff]
        %v6202 = vld [vmem:[#allocation5 + $0xb20] sm:$0xff]
        %v6203 = vld [vmem:[#allocation5 + $0xb28] sm:$0xff]
        %v6204 = vld [vmem:[#allocation5 + $0xb30] sm:$0xff]
        %v6205 = vld [vmem:[#allocation5 + $0xb38] sm:$0xff]
        %v6206 = vld [vmem:[#allocation5 + $0xb40] sm:$0xff]
        %v6207 = vld [vmem:[#allocation5 + $0xb48] sm:$0xff]
        %v6208 = vld [vmem:[#allocation5 + $0xb50] sm:$0xff]
        %v6209 = vld [vmem:[#allocation5 + $0xb58] sm:$0xff]
        %v6210 = vld [vmem:[#allocation5 + $0xb60] sm:$0xff]
        %v6211 = vld [vmem:[#allocation5 + $0xb68] sm:$0xff]
        %v6212 = vld [vmem:[#allocation5 + $0xb70] sm:$0xff]
        %v6213 = vld [vmem:[#allocation5 + $0xb78] sm:$0xff]
        %v6214 = vld [vmem:[#allocation5 + $0xb80] sm:$0xff]
        %v6215 = vld [vmem:[#allocation5 + $0xb88] sm:$0xff]
        %v6216 = vld [vmem:[#allocation5 + $0xb90] sm:$0xff]
        %v6217 = vld [vmem:[#allocation5 + $0xb98] sm:$0xff]
        %v6218 = vld [vmem:[#allocation5 + $0xba0] sm:$0xff]
        %v6219 = vld [vmem:[#allocation5 + $0xba8] sm:$0xff]
        %v6220 = vld [vmem:[#allocation5 + $0xbb0] sm:$0xff]
        %v6221 = vld [vmem:[#allocation5 + $0xbb8] sm:$0xff]
        %v6222 = vld [vmem:[#allocation5 + $0xbc0] sm:$0xff]
        %v6223 = vld [vmem:[#allocation5 + $0xbc8] sm:$0xff]
        %v6224 = vld [vmem:[#allocation5 + $0xbd0] sm:$0xff]
        %v6225 = vld [vmem:[#allocation5 + $0xbd8] sm:$0xff]
        %v6226 = vld [vmem:[#allocation5 + $0xbe0] sm:$0xff]
        %v6227 = vld [vmem:[#allocation5 + $0xbe8] sm:$0xff]
        %v6228 = vld [vmem:[#allocation5 + $0xbf0] sm:$0xff]
        %v6229 = vld [vmem:[#allocation5 + $0xbf8] sm:$0xff]
        %v6230 = vld [vmem:[#allocation5 + $0xc00] sm:$0xff]
        %v6231 = vld [vmem:[#allocation5 + $0xc08] sm:$0xff]
        %v6232 = vld [vmem:[#allocation5 + $0xc10] sm:$0xff]
        %v6233 = vld [vmem:[#allocation5 + $0xc18] sm:$0xff]
        %v6234 = vld [vmem:[#allocation5 + $0xc20] sm:$0xff]
        %v6235 = vld [vmem:[#allocation5 + $0xc28] sm:$0xff]
        %v6236 = vld [vmem:[#allocation5 + $0xc30] sm:$0xff]
        %v6237 = vld [vmem:[#allocation5 + $0xc38] sm:$0xff]
        %v6238 = vld [vmem:[#allocation5 + $0xc40] sm:$0xff]
        %v6239 = vld [vmem:[#allocation5 + $0xc48] sm:$0xff]
        %v6240 = vld [vmem:[#allocation5 + $0xc50] sm:$0xff]
        %v6241 = vld [vmem:[#allocation5 + $0xc58] sm:$0xff]
        %v6242 = vld [vmem:[#allocation5 + $0xc60] sm:$0xff]
        %v6243 = vld [vmem:[#allocation5 + $0xc68] sm:$0xff]
        %v6244 = vld [vmem:[#allocation5 + $0xc70] sm:$0xff]
        %v6245 = vld [vmem:[#allocation5 + $0xc78] sm:$0xff]
        %v6246 = vld [vmem:[#allocation5 + $0xc80] sm:$0xff]
        %v6247 = vld [vmem:[#allocation5 + $0xc88] sm:$0xff]
        %v6248 = vld [vmem:[#allocation5 + $0xc90] sm:$0xff]
        %v6249 = vld [vmem:[#allocation5 + $0xc98] sm:$0xff]
        %v6250 = vld [vmem:[#allocation5 + $0xca0] sm:$0xff]
        %v6251 = vld [vmem:[#allocation5 + $0xca8] sm:$0xff]
        %v6252 = vld [vmem:[#allocation5 + $0xcb0] sm:$0xff]
        %v6253 = vld [vmem:[#allocation5 + $0xcb8] sm:$0xff]
        %v6254 = vld [vmem:[#allocation5 + $0xcc0] sm:$0xff]
        %v6255 = vld [vmem:[#allocation5 + $0xcc8] sm:$0xff]
        %v6256 = vld [vmem:[#allocation5 + $0xcd0] sm:$0xff]
        %v6257 = vld [vmem:[#allocation5 + $0xcd8] sm:$0xff]
        %v6258 = vld [vmem:[#allocation5 + $0xce0] sm:$0xff]
        %v6259 = vld [vmem:[#allocation5 + $0xce8] sm:$0xff]
        %v6260 = vld [vmem:[#allocation5 + $0xcf0] sm:$0xff]
        %v6261 = vld [vmem:[#allocation5 + $0xcf8] sm:$0xff]
        %v6262 = vld [vmem:[#allocation5 + $0xd00] sm:$0xff]
        %v6263 = vld [vmem:[#allocation5 + $0xd08] sm:$0xff]
        %v6264 = vld [vmem:[#allocation5 + $0xd10] sm:$0xff]
        %v6265 = vld [vmem:[#allocation5 + $0xd18] sm:$0xff]
        %v6266 = vld [vmem:[#allocation5 + $0xd20] sm:$0xff]
        %v6267 = vld [vmem:[#allocation5 + $0xd28] sm:$0xff]
        %v6268 = vld [vmem:[#allocation5 + $0xd30] sm:$0xff]
        %v6269 = vld [vmem:[#allocation5 + $0xd38] sm:$0xff]
        %v6270 = vld [vmem:[#allocation5 + $0xd40] sm:$0xff]
        %v6271 = vld [vmem:[#allocation5 + $0xd48] sm:$0xff]
        %v6272 = vld [vmem:[#allocation5 + $0xd50] sm:$0xff]
        %v6273 = vld [vmem:[#allocation5 + $0xd58] sm:$0xff]
        %v6274 = vld [vmem:[#allocation5 + $0xd60] sm:$0xff]
        %v6275 = vld [vmem:[#allocation5 + $0xd68] sm:$0xff]
        %v6276 = vld [vmem:[#allocation5 + $0xd70] sm:$0xff]
        %v6277 = vld [vmem:[#allocation5 + $0xd78] sm:$0xff]
        %v6278 = vld [vmem:[#allocation5 + $0xd80] sm:$0xff]
        %v6279 = vld [vmem:[#allocation5 + $0xd88] sm:$0xff]
        %v6280 = vld [vmem:[#allocation5 + $0xd90] sm:$0xff]
        %v6281 = vld [vmem:[#allocation5 + $0xd98] sm:$0xff]
        %v6282 = vld [vmem:[#allocation5 + $0xda0] sm:$0xff]
        %v6283 = vld [vmem:[#allocation5 + $0xda8] sm:$0xff]
        %v6284 = vld [vmem:[#allocation5 + $0xdb0] sm:$0xff]
        %v6285 = vld [vmem:[#allocation5 + $0xdb8] sm:$0xff]
        %v6286 = vld [vmem:[#allocation5 + $0xdc0] sm:$0xff]
        %v6287 = vld [vmem:[#allocation5 + $0xdc8] sm:$0xff]
        %v6288 = vld [vmem:[#allocation5 + $0xdd0] sm:$0xff]
        %v6289 = vld [vmem:[#allocation5 + $0xdd8] sm:$0xff]
        %v6290 = vld [vmem:[#allocation5 + $0xde0] sm:$0xff]
        %v6291 = vld [vmem:[#allocation5 + $0xde8] sm:$0xff]
        %v6292 = vld [vmem:[#allocation5 + $0xdf0] sm:$0xff]
        %v6293 = vld [vmem:[#allocation5 + $0xdf8] sm:$0xff]
        %v6294 = vld [vmem:[#allocation5 + $0xe00] sm:$0xff]
        %v6295 = vld [vmem:[#allocation5 + $0xe08] sm:$0xff]
        %v6296 = vld [vmem:[#allocation5 + $0xe10] sm:$0xff]
        %v6297 = vld [vmem:[#allocation5 + $0xe18] sm:$0xff]
        %v6298 = vld [vmem:[#allocation5 + $0xe20] sm:$0xff]
        %v6299 = vld [vmem:[#allocation5 + $0xe28] sm:$0xff]
        %v6300 = vld [vmem:[#allocation5 + $0xe30] sm:$0xff]
        %v6301 = vld [vmem:[#allocation5 + $0xe38] sm:$0xff]
        %v6302 = vld [vmem:[#allocation5 + $0xe40] sm:$0xff]
        %v6303 = vld [vmem:[#allocation5 + $0xe48] sm:$0xff]
        %v6304 = vld [vmem:[#allocation5 + $0xe50] sm:$0xff]
        %v6305 = vld [vmem:[#allocation5 + $0xe58] sm:$0xff]
        %v6306 = vld [vmem:[#allocation5 + $0xe60] sm:$0xff]
        %v6307 = vld [vmem:[#allocation5 + $0xe68] sm:$0xff]
        %v6308 = vld [vmem:[#allocation5 + $0xe70] sm:$0xff]
        %v6309 = vld [vmem:[#allocation5 + $0xe78] sm:$0xff]
        %v6310 = vld [vmem:[#allocation5 + $0xe80] sm:$0xff]
        %v6311 = vld [vmem:[#allocation5 + $0xe88] sm:$0xff]
        %v6312 = vld [vmem:[#allocation5 + $0xe90] sm:$0xff]
        %v6313 = vld [vmem:[#allocation5 + $0xe98] sm:$0xff]
        %v6314 = vld [vmem:[#allocation5 + $0xea0] sm:$0xff]
        %v6315 = vld [vmem:[#allocation5 + $0xea8] sm:$0xff]
        %v6316 = vld [vmem:[#allocation5 + $0xeb0] sm:$0xff]
        %v6317 = vld [vmem:[#allocation5 + $0xeb8] sm:$0xff]
        %v6318 = vld [vmem:[#allocation5 + $0xec0] sm:$0xff]
        %v6319 = vld [vmem:[#allocation5 + $0xec8] sm:$0xff]
        %v6320 = vld [vmem:[#allocation5 + $0xed0] sm:$0xff]
        %v6321 = vld [vmem:[#allocation5 + $0xed8] sm:$0xff]
        %v6322 = vld [vmem:[#allocation5 + $0xee0] sm:$0xff]
        %v6323 = vld [vmem:[#allocation5 + $0xee8] sm:$0xff]
        %v6324 = vld [vmem:[#allocation5 + $0xef0] sm:$0xff]
        %v6325 = vld [vmem:[#allocation5 + $0xef8] sm:$0xff]
        %v6326 = vld [vmem:[#allocation5 + $0xf00] sm:$0xff]
        %v6327 = vld [vmem:[#allocation5 + $0xf08] sm:$0xff]
        %v6328 = vld [vmem:[#allocation5 + $0xf10] sm:$0xff]
        %v6329 = vld [vmem:[#allocation5 + $0xf18] sm:$0xff]
        %v6330 = vld [vmem:[#allocation5 + $0xf20] sm:$0xff]
        %v6331 = vld [vmem:[#allocation5 + $0xf28] sm:$0xff]
        %v6332 = vld [vmem:[#allocation5 + $0xf30] sm:$0xff]
        %v6333 = vld [vmem:[#allocation5 + $0xf38] sm:$0xff]
        %v6334 = vld [vmem:[#allocation5 + $0xf40] sm:$0xff]
        %v6335 = vld [vmem:[#allocation5 + $0xf48] sm:$0xff]
        %v6336 = vld [vmem:[#allocation5 + $0xf50] sm:$0xff]
        %v6337 = vld [vmem:[#allocation5 + $0xf58] sm:$0xff]
        %v6338 = vld [vmem:[#allocation5 + $0xf60] sm:$0xff]
        %v6339 = vld [vmem:[#allocation5 + $0xf68] sm:$0xff]
        %v6340 = vld [vmem:[#allocation5 + $0xf70] sm:$0xff]
        %v6341 = vld [vmem:[#allocation5 + $0xf78] sm:$0xff]
        %v6342 = vld [vmem:[#allocation5 + $0xf80] sm:$0xff]
        %v6343 = vld [vmem:[#allocation5 + $0xf88] sm:$0xff]
        %v6344 = vld [vmem:[#allocation5 + $0xf90] sm:$0xff]
        %v6345 = vld [vmem:[#allocation5 + $0xf98] sm:$0xff]
        %v6346 = vld [vmem:[#allocation5 + $0xfa0] sm:$0xff]
        %v6347 = vld [vmem:[#allocation5 + $0xfa8] sm:$0xff]
        %v6348 = vld [vmem:[#allocation5 + $0xfb0] sm:$0xff]
        %v6349 = vld [vmem:[#allocation5 + $0xfb8] sm:$0xff]
        %v6350 = vld [vmem:[#allocation5 + $0xfc0] sm:$0xff]
        %v6351 = vld [vmem:[#allocation5 + $0xfc8] sm:$0xff]
        %v6352 = vld [vmem:[#allocation5 + $0xfd0] sm:$0xff]
        %v6353 = vld [vmem:[#allocation5 + $0xfd8] sm:$0xff]
        %v6354 = vld [vmem:[#allocation5 + $0xfe0] sm:$0xff]
        %v6355 = vld [vmem:[#allocation5 + $0xfe8] sm:$0xff]
        %v6356 = vld [vmem:[#allocation5 + $0xff0] sm:$0xff]
        %v6357 = vld [vmem:[#allocation5 + $0xff8] sm:$0xff]
        %v6358 = vld [vmem:[#allocation7] sm:$0xff]
        %v6360 = vlaneseq
        %v6361 = vshrl.u32 %v6360, 7
        %v6362 = vsub.s32 0, %v6361
        %v6363 = vrot.slane %v6358, %v6362
        %v6364 = vlaneseq
        %v6365 = vshrl.u32 %v6364, 7
        %v6366 = vsub.s32 1, %v6365
        %v6367 = vrot.slane %v6358, %v6366
        %v6368 = vlaneseq
        %v6369 = vshrl.u32 %v6368, 7
        %v6370 = vsub.s32 2, %v6369
        %v6371 = vrot.slane %v6358, %v6370
        %v6372 = vlaneseq
        %v6373 = vshrl.u32 %v6372, 7
        %v6374 = vsub.s32 3, %v6373
        %v6375 = vrot.slane %v6358, %v6374
        %v6376 = vlaneseq
        %v6377 = vshrl.u32 %v6376, 7
        %v6378 = vsub.s32 4, %v6377
        %v6379 = vrot.slane %v6358, %v6378
        %v6380 = vlaneseq
        %v6381 = vshrl.u32 %v6380, 7
        %v6382 = vsub.s32 5, %v6381
        %v6383 = vrot.slane %v6358, %v6382
        %v6384 = vlaneseq
        %v6385 = vshrl.u32 %v6384, 7
        %v6386 = vsub.s32 6, %v6385
        %v6387 = vrot.slane %v6358, %v6386
        %v6388 = vlaneseq
        %v6389 = vshrl.u32 %v6388, 7
        %v6390 = vsub.s32 7, %v6389
        %v6391 = vrot.slane %v6358, %v6390
        %v6912 = vunpack.c.l.b16 %v5846
        %v6913 = vunpack.c.h.b16 %v5846
        %v6914 = vunpack.c.l.b16 %v5847
        %v6915 = vunpack.c.h.b16 %v5847
        %v6916 = vunpack.c.l.b16 %v5848
        %v6917 = vunpack.c.h.b16 %v5848
        %v6918 = vunpack.c.l.b16 %v5849
        %v6919 = vunpack.c.h.b16 %v5849
        %v6920 = vunpack.c.l.b16 %v5850
        %v6921 = vunpack.c.h.b16 %v5850
        %v6922 = vunpack.c.l.b16 %v5851
        %v6923 = vunpack.c.h.b16 %v5851
        %v6924 = vunpack.c.l.b16 %v5852
        %v6925 = vunpack.c.h.b16 %v5852
        %v6926 = vunpack.c.l.b16 %v5853
        %v6927 = vunpack.c.h.b16 %v5853
        %v6928 = vunpack.c.l.b16 %v5854
        %v6929 = vunpack.c.h.b16 %v5854
        %v6930 = vunpack.c.l.b16 %v5855
        %v6931 = vunpack.c.h.b16 %v5855
        %v6932 = vunpack.c.l.b16 %v5856
        %v6933 = vunpack.c.h.b16 %v5856
        %v6934 = vunpack.c.l.b16 %v5857
        %v6935 = vunpack.c.h.b16 %v5857
        %v6936 = vunpack.c.l.b16 %v5858
        %v6937 = vunpack.c.h.b16 %v5858
        %v6938 = vunpack.c.l.b16 %v5859
        %v6939 = vunpack.c.h.b16 %v5859
        %v6940 = vunpack.c.l.b16 %v5860
        %v6941 = vunpack.c.h.b16 %v5860
        %v6942 = vunpack.c.l.b16 %v5861
        %v6943 = vunpack.c.h.b16 %v5861
        %v6944 = vunpack.c.l.b16 %v5862
        %v6945 = vunpack.c.h.b16 %v5862
        %v6946 = vunpack.c.l.b16 %v5863
        %v6947 = vunpack.c.h.b16 %v5863
        %v6948 = vunpack.c.l.b16 %v5864
        %v6949 = vunpack.c.h.b16 %v5864
        %v6950 = vunpack.c.l.b16 %v5865
        %v6951 = vunpack.c.h.b16 %v5865
        %v6952 = vunpack.c.l.b16 %v5866
        %v6953 = vunpack.c.h.b16 %v5866
        %v6954 = vunpack.c.l.b16 %v5867
        %v6955 = vunpack.c.h.b16 %v5867
        %v6956 = vunpack.c.l.b16 %v5868
        %v6957 = vunpack.c.h.b16 %v5868
        %v6958 = vunpack.c.l.b16 %v5869
        %v6959 = vunpack.c.h.b16 %v5869
        %v6960 = vunpack.c.l.b16 %v5870
        %v6961 = vunpack.c.h.b16 %v5870
        %v6962 = vunpack.c.l.b16 %v5871
        %v6963 = vunpack.c.h.b16 %v5871
        %v6964 = vunpack.c.l.b16 %v5872
        %v6965 = vunpack.c.h.b16 %v5872
        %v6966 = vunpack.c.l.b16 %v5873
        %v6967 = vunpack.c.h.b16 %v5873
        %v6968 = vunpack.c.l.b16 %v5874
        %v6969 = vunpack.c.h.b16 %v5874
        %v6970 = vunpack.c.l.b16 %v5875
        %v6971 = vunpack.c.h.b16 %v5875
        %v6972 = vunpack.c.l.b16 %v5876
        %v6973 = vunpack.c.h.b16 %v5876
        %v6974 = vunpack.c.l.b16 %v5877
        %v6975 = vunpack.c.h.b16 %v5877
        %v6976 = vunpack.c.l.b16 %v5878
        %v6977 = vunpack.c.h.b16 %v5878
        %v6978 = vunpack.c.l.b16 %v5879
        %v6979 = vunpack.c.h.b16 %v5879
        %v6980 = vunpack.c.l.b16 %v5880
        %v6981 = vunpack.c.h.b16 %v5880
        %v6982 = vunpack.c.l.b16 %v5881
        %v6983 = vunpack.c.h.b16 %v5881
        %v6984 = vunpack.c.l.b16 %v5882
        %v6985 = vunpack.c.h.b16 %v5882
        %v6986 = vunpack.c.l.b16 %v5883
        %v6987 = vunpack.c.h.b16 %v5883
        %v6988 = vunpack.c.l.b16 %v5884
        %v6989 = vunpack.c.h.b16 %v5884
        %v6990 = vunpack.c.l.b16 %v5885
        %v6991 = vunpack.c.h.b16 %v5885
        %v6992 = vunpack.c.l.b16 %v5886
        %v6993 = vunpack.c.h.b16 %v5886
        %v6994 = vunpack.c.l.b16 %v5887
        %v6995 = vunpack.c.h.b16 %v5887
        %v6996 = vunpack.c.l.b16 %v5888
        %v6997 = vunpack.c.h.b16 %v5888
        %v6998 = vunpack.c.l.b16 %v5889
        %v6999 = vunpack.c.h.b16 %v5889
        %v7000 = vunpack.c.l.b16 %v5890
        %v7001 = vunpack.c.h.b16 %v5890
        %v7002 = vunpack.c.l.b16 %v5891
        %v7003 = vunpack.c.h.b16 %v5891
        %v7004 = vunpack.c.l.b16 %v5892
        %v7005 = vunpack.c.h.b16 %v5892
        %v7006 = vunpack.c.l.b16 %v5893
        %v7007 = vunpack.c.h.b16 %v5893
        %v7008 = vunpack.c.l.b16 %v5894
        %v7009 = vunpack.c.h.b16 %v5894
        %v7010 = vunpack.c.l.b16 %v5895
        %v7011 = vunpack.c.h.b16 %v5895
        %v7012 = vunpack.c.l.b16 %v5896
        %v7013 = vunpack.c.h.b16 %v5896
        %v7014 = vunpack.c.l.b16 %v5897
        %v7015 = vunpack.c.h.b16 %v5897
        %v7016 = vunpack.c.l.b16 %v5898
        %v7017 = vunpack.c.h.b16 %v5898
        %v7018 = vunpack.c.l.b16 %v5899
        %v7019 = vunpack.c.h.b16 %v5899
        %v7020 = vunpack.c.l.b16 %v5900
        %v7021 = vunpack.c.h.b16 %v5900
        %v7022 = vunpack.c.l.b16 %v5901
        %v7023 = vunpack.c.h.b16 %v5901
        %v7024 = vunpack.c.l.b16 %v5902
        %v7025 = vunpack.c.h.b16 %v5902
        %v7026 = vunpack.c.l.b16 %v5903
        %v7027 = vunpack.c.h.b16 %v5903
        %v7028 = vunpack.c.l.b16 %v5904
        %v7029 = vunpack.c.h.b16 %v5904
        %v7030 = vunpack.c.l.b16 %v5905
        %v7031 = vunpack.c.h.b16 %v5905
        %v7032 = vunpack.c.l.b16 %v5906
        %v7033 = vunpack.c.h.b16 %v5906
        %v7034 = vunpack.c.l.b16 %v5907
        %v7035 = vunpack.c.h.b16 %v5907
        %v7036 = vunpack.c.l.b16 %v5908
        %v7037 = vunpack.c.h.b16 %v5908
        %v7038 = vunpack.c.l.b16 %v5909
        %v7039 = vunpack.c.h.b16 %v5909
        %v7040 = vunpack.c.l.b16 %v5910
        %v7041 = vunpack.c.h.b16 %v5910
        %v7042 = vunpack.c.l.b16 %v5911
        %v7043 = vunpack.c.h.b16 %v5911
        %v7044 = vunpack.c.l.b16 %v5912
        %v7045 = vunpack.c.h.b16 %v5912
        %v7046 = vunpack.c.l.b16 %v5913
        %v7047 = vunpack.c.h.b16 %v5913
        %v7048 = vunpack.c.l.b16 %v5914
        %v7049 = vunpack.c.h.b16 %v5914
        %v7050 = vunpack.c.l.b16 %v5915
        %v7051 = vunpack.c.h.b16 %v5915
        %v7052 = vunpack.c.l.b16 %v5916
        %v7053 = vunpack.c.h.b16 %v5916
        %v7054 = vunpack.c.l.b16 %v5917
        %v7055 = vunpack.c.h.b16 %v5917
        %v7056 = vunpack.c.l.b16 %v5918
        %v7057 = vunpack.c.h.b16 %v5918
        %v7058 = vunpack.c.l.b16 %v5919
        %v7059 = vunpack.c.h.b16 %v5919
        %v7060 = vunpack.c.l.b16 %v5920
        %v7061 = vunpack.c.h.b16 %v5920
        %v7062 = vunpack.c.l.b16 %v5921
        %v7063 = vunpack.c.h.b16 %v5921
        %v7064 = vunpack.c.l.b16 %v5922
        %v7065 = vunpack.c.h.b16 %v5922
        %v7066 = vunpack.c.l.b16 %v5923
        %v7067 = vunpack.c.h.b16 %v5923
        %v7068 = vunpack.c.l.b16 %v5924
        %v7069 = vunpack.c.h.b16 %v5924
        %v7070 = vunpack.c.l.b16 %v5925
        %v7071 = vunpack.c.h.b16 %v5925
        %v7072 = vunpack.c.l.b16 %v5926
        %v7073 = vunpack.c.h.b16 %v5926
        %v7074 = vunpack.c.l.b16 %v5927
        %v7075 = vunpack.c.h.b16 %v5927
        %v7076 = vunpack.c.l.b16 %v5928
        %v7077 = vunpack.c.h.b16 %v5928
        %v7078 = vunpack.c.l.b16 %v5929
        %v7079 = vunpack.c.h.b16 %v5929
        %v7080 = vunpack.c.l.b16 %v5930
        %v7081 = vunpack.c.h.b16 %v5930
        %v7082 = vunpack.c.l.b16 %v5931
        %v7083 = vunpack.c.h.b16 %v5931
        %v7084 = vunpack.c.l.b16 %v5932
        %v7085 = vunpack.c.h.b16 %v5932
        %v7086 = vunpack.c.l.b16 %v5933
        %v7087 = vunpack.c.h.b16 %v5933
        %v7088 = vunpack.c.l.b16 %v5934
        %v7089 = vunpack.c.h.b16 %v5934
        %v7090 = vunpack.c.l.b16 %v5935
        %v7091 = vunpack.c.h.b16 %v5935
        %v7092 = vunpack.c.l.b16 %v5936
        %v7093 = vunpack.c.h.b16 %v5936
        %v7094 = vunpack.c.l.b16 %v5937
        %v7095 = vunpack.c.h.b16 %v5937
        %v7096 = vunpack.c.l.b16 %v5938
        %v7097 = vunpack.c.h.b16 %v5938
        %v7098 = vunpack.c.l.b16 %v5939
        %v7099 = vunpack.c.h.b16 %v5939
        %v7100 = vunpack.c.l.b16 %v5940
        %v7101 = vunpack.c.h.b16 %v5940
        %v7102 = vunpack.c.l.b16 %v5941
        %v7103 = vunpack.c.h.b16 %v5941
        %v7104 = vunpack.c.l.b16 %v5942
        %v7105 = vunpack.c.h.b16 %v5942
        %v7106 = vunpack.c.l.b16 %v5943
        %v7107 = vunpack.c.h.b16 %v5943
        %v7108 = vunpack.c.l.b16 %v5944
        %v7109 = vunpack.c.h.b16 %v5944
        %v7110 = vunpack.c.l.b16 %v5945
        %v7111 = vunpack.c.h.b16 %v5945
        %v7112 = vunpack.c.l.b16 %v5946
        %v7113 = vunpack.c.h.b16 %v5946
        %v7114 = vunpack.c.l.b16 %v5947
        %v7115 = vunpack.c.h.b16 %v5947
        %v7116 = vunpack.c.l.b16 %v5948
        %v7117 = vunpack.c.h.b16 %v5948
        %v7118 = vunpack.c.l.b16 %v5949
        %v7119 = vunpack.c.h.b16 %v5949
        %v7120 = vunpack.c.l.b16 %v5950
        %v7121 = vunpack.c.h.b16 %v5950
        %v7122 = vunpack.c.l.b16 %v5951
        %v7123 = vunpack.c.h.b16 %v5951
        %v7124 = vunpack.c.l.b16 %v5952
        %v7125 = vunpack.c.h.b16 %v5952
        %v7126 = vunpack.c.l.b16 %v5953
        %v7127 = vunpack.c.h.b16 %v5953
        %v7128 = vunpack.c.l.b16 %v5954
        %v7129 = vunpack.c.h.b16 %v5954
        %v7130 = vunpack.c.l.b16 %v5955
        %v7131 = vunpack.c.h.b16 %v5955
        %v7132 = vunpack.c.l.b16 %v5956
        %v7133 = vunpack.c.h.b16 %v5956
        %v7134 = vunpack.c.l.b16 %v5957
        %v7135 = vunpack.c.h.b16 %v5957
        %v7136 = vunpack.c.l.b16 %v5958
        %v7137 = vunpack.c.h.b16 %v5958
        %v7138 = vunpack.c.l.b16 %v5959
        %v7139 = vunpack.c.h.b16 %v5959
        %v7140 = vunpack.c.l.b16 %v5960
        %v7141 = vunpack.c.h.b16 %v5960
        %v7142 = vunpack.c.l.b16 %v5961
        %v7143 = vunpack.c.h.b16 %v5961
        %v7144 = vunpack.c.l.b16 %v5962
        %v7145 = vunpack.c.h.b16 %v5962
        %v7146 = vunpack.c.l.b16 %v5963
        %v7147 = vunpack.c.h.b16 %v5963
        %v7148 = vunpack.c.l.b16 %v5964
        %v7149 = vunpack.c.h.b16 %v5964
        %v7150 = vunpack.c.l.b16 %v5965
        %v7151 = vunpack.c.h.b16 %v5965
        %v7152 = vunpack.c.l.b16 %v5966
        %v7153 = vunpack.c.h.b16 %v5966
        %v7154 = vunpack.c.l.b16 %v5967
        %v7155 = vunpack.c.h.b16 %v5967
        %v7156 = vunpack.c.l.b16 %v5968
        %v7157 = vunpack.c.h.b16 %v5968
        %v7158 = vunpack.c.l.b16 %v5969
        %v7159 = vunpack.c.h.b16 %v5969
        %v7160 = vunpack.c.l.b16 %v5970
        %v7161 = vunpack.c.h.b16 %v5970
        %v7162 = vunpack.c.l.b16 %v5971
        %v7163 = vunpack.c.h.b16 %v5971
        %v7164 = vunpack.c.l.b16 %v5972
        %v7165 = vunpack.c.h.b16 %v5972
        %v7166 = vunpack.c.l.b16 %v5973
        %v7167 = vunpack.c.h.b16 %v5973
        %v7168 = vunpack.c.l.b16 %v5974
        %v7169 = vunpack.c.h.b16 %v5974
        %v7170 = vunpack.c.l.b16 %v5975
        %v7171 = vunpack.c.h.b16 %v5975
        %v7172 = vunpack.c.l.b16 %v5976
        %v7173 = vunpack.c.h.b16 %v5976
        %v7174 = vunpack.c.l.b16 %v5977
        %v7175 = vunpack.c.h.b16 %v5977
        %v7176 = vunpack.c.l.b16 %v5978
        %v7177 = vunpack.c.h.b16 %v5978
        %v7178 = vunpack.c.l.b16 %v5979
        %v7179 = vunpack.c.h.b16 %v5979
        %v7180 = vunpack.c.l.b16 %v5980
        %v7181 = vunpack.c.h.b16 %v5980
        %v7182 = vunpack.c.l.b16 %v5981
        %v7183 = vunpack.c.h.b16 %v5981
        %v7184 = vunpack.c.l.b16 %v5982
        %v7185 = vunpack.c.h.b16 %v5982
        %v7186 = vunpack.c.l.b16 %v5983
        %v7187 = vunpack.c.h.b16 %v5983
        %v7188 = vunpack.c.l.b16 %v5984
        %v7189 = vunpack.c.h.b16 %v5984
        %v7190 = vunpack.c.l.b16 %v5985
        %v7191 = vunpack.c.h.b16 %v5985
        %v7192 = vunpack.c.l.b16 %v5986
        %v7193 = vunpack.c.h.b16 %v5986
        %v7194 = vunpack.c.l.b16 %v5987
        %v7195 = vunpack.c.h.b16 %v5987
        %v7196 = vunpack.c.l.b16 %v5988
        %v7197 = vunpack.c.h.b16 %v5988
        %v7198 = vunpack.c.l.b16 %v5989
        %v7199 = vunpack.c.h.b16 %v5989
        %v7200 = vunpack.c.l.b16 %v5990
        %v7201 = vunpack.c.h.b16 %v5990
        %v7202 = vunpack.c.l.b16 %v5991
        %v7203 = vunpack.c.h.b16 %v5991
        %v7204 = vunpack.c.l.b16 %v5992
        %v7205 = vunpack.c.h.b16 %v5992
        %v7206 = vunpack.c.l.b16 %v5993
        %v7207 = vunpack.c.h.b16 %v5993
        %v7208 = vunpack.c.l.b16 %v5994
        %v7209 = vunpack.c.h.b16 %v5994
        %v7210 = vunpack.c.l.b16 %v5995
        %v7211 = vunpack.c.h.b16 %v5995
        %v7212 = vunpack.c.l.b16 %v5996
        %v7213 = vunpack.c.h.b16 %v5996
        %v7214 = vunpack.c.l.b16 %v5997
        %v7215 = vunpack.c.h.b16 %v5997
        %v7216 = vunpack.c.l.b16 %v5998
        %v7217 = vunpack.c.h.b16 %v5998
        %v7218 = vunpack.c.l.b16 %v5999
        %v7219 = vunpack.c.h.b16 %v5999
        %v7220 = vunpack.c.l.b16 %v6000
        %v7221 = vunpack.c.h.b16 %v6000
        %v7222 = vunpack.c.l.b16 %v6001
        %v7223 = vunpack.c.h.b16 %v6001
        %v7224 = vunpack.c.l.b16 %v6002
        %v7225 = vunpack.c.h.b16 %v6002
        %v7226 = vunpack.c.l.b16 %v6003
        %v7227 = vunpack.c.h.b16 %v6003
        %v7228 = vunpack.c.l.b16 %v6004
        %v7229 = vunpack.c.h.b16 %v6004
        %v7230 = vunpack.c.l.b16 %v6005
        %v7231 = vunpack.c.h.b16 %v6005
        %v7232 = vunpack.c.l.b16 %v6006
        %v7233 = vunpack.c.h.b16 %v6006
        %v7234 = vunpack.c.l.b16 %v6007
        %v7235 = vunpack.c.h.b16 %v6007
        %v7236 = vunpack.c.l.b16 %v6008
        %v7237 = vunpack.c.h.b16 %v6008
        %v7238 = vunpack.c.l.b16 %v6009
        %v7239 = vunpack.c.h.b16 %v6009
        %v7240 = vunpack.c.l.b16 %v6010
        %v7241 = vunpack.c.h.b16 %v6010
        %v7242 = vunpack.c.l.b16 %v6011
        %v7243 = vunpack.c.h.b16 %v6011
        %v7244 = vunpack.c.l.b16 %v6012
        %v7245 = vunpack.c.h.b16 %v6012
        %v7246 = vunpack.c.l.b16 %v6013
        %v7247 = vunpack.c.h.b16 %v6013
        %v7248 = vunpack.c.l.b16 %v6014
        %v7249 = vunpack.c.h.b16 %v6014
        %v7250 = vunpack.c.l.b16 %v6015
        %v7251 = vunpack.c.h.b16 %v6015
        %v7252 = vunpack.c.l.b16 %v6016
        %v7253 = vunpack.c.h.b16 %v6016
        %v7254 = vunpack.c.l.b16 %v6017
        %v7255 = vunpack.c.h.b16 %v6017
        %v7256 = vunpack.c.l.b16 %v6018
        %v7257 = vunpack.c.h.b16 %v6018
        %v7258 = vunpack.c.l.b16 %v6019
        %v7259 = vunpack.c.h.b16 %v6019
        %v7260 = vunpack.c.l.b16 %v6020
        %v7261 = vunpack.c.h.b16 %v6020
        %v7262 = vunpack.c.l.b16 %v6021
        %v7263 = vunpack.c.h.b16 %v6021
        %v7264 = vunpack.c.l.b16 %v6022
        %v7265 = vunpack.c.h.b16 %v6022
        %v7266 = vunpack.c.l.b16 %v6023
        %v7267 = vunpack.c.h.b16 %v6023
        %v7268 = vunpack.c.l.b16 %v6024
        %v7269 = vunpack.c.h.b16 %v6024
        %v7270 = vunpack.c.l.b16 %v6025
        %v7271 = vunpack.c.h.b16 %v6025
        %v7272 = vunpack.c.l.b16 %v6026
        %v7273 = vunpack.c.h.b16 %v6026
        %v7274 = vunpack.c.l.b16 %v6027
        %v7275 = vunpack.c.h.b16 %v6027
        %v7276 = vunpack.c.l.b16 %v6028
        %v7277 = vunpack.c.h.b16 %v6028
        %v7278 = vunpack.c.l.b16 %v6029
        %v7279 = vunpack.c.h.b16 %v6029
        %v7280 = vunpack.c.l.b16 %v6030
        %v7281 = vunpack.c.h.b16 %v6030
        %v7282 = vunpack.c.l.b16 %v6031
        %v7283 = vunpack.c.h.b16 %v6031
        %v7284 = vunpack.c.l.b16 %v6032
        %v7285 = vunpack.c.h.b16 %v6032
        %v7286 = vunpack.c.l.b16 %v6033
        %v7287 = vunpack.c.h.b16 %v6033
        %v7288 = vunpack.c.l.b16 %v6034
        %v7289 = vunpack.c.h.b16 %v6034
        %v7290 = vunpack.c.l.b16 %v6035
        %v7291 = vunpack.c.h.b16 %v6035
        %v7292 = vunpack.c.l.b16 %v6036
        %v7293 = vunpack.c.h.b16 %v6036
        %v7294 = vunpack.c.l.b16 %v6037
        %v7295 = vunpack.c.h.b16 %v6037
        %v7296 = vunpack.c.l.b16 %v6038
        %v7297 = vunpack.c.h.b16 %v6038
        %v7298 = vunpack.c.l.b16 %v6039
        %v7299 = vunpack.c.h.b16 %v6039
        %v7300 = vunpack.c.l.b16 %v6040
        %v7301 = vunpack.c.h.b16 %v6040
        %v7302 = vunpack.c.l.b16 %v6041
        %v7303 = vunpack.c.h.b16 %v6041
        %v7304 = vunpack.c.l.b16 %v6042
        %v7305 = vunpack.c.h.b16 %v6042
        %v7306 = vunpack.c.l.b16 %v6043
        %v7307 = vunpack.c.h.b16 %v6043
        %v7308 = vunpack.c.l.b16 %v6044
        %v7309 = vunpack.c.h.b16 %v6044
        %v7310 = vunpack.c.l.b16 %v6045
        %v7311 = vunpack.c.h.b16 %v6045
        %v7312 = vunpack.c.l.b16 %v6046
        %v7313 = vunpack.c.h.b16 %v6046
        %v7314 = vunpack.c.l.b16 %v6047
        %v7315 = vunpack.c.h.b16 %v6047
        %v7316 = vunpack.c.l.b16 %v6048
        %v7317 = vunpack.c.h.b16 %v6048
        %v7318 = vunpack.c.l.b16 %v6049
        %v7319 = vunpack.c.h.b16 %v6049
        %v7320 = vunpack.c.l.b16 %v6050
        %v7321 = vunpack.c.h.b16 %v6050
        %v7322 = vunpack.c.l.b16 %v6051
        %v7323 = vunpack.c.h.b16 %v6051
        %v7324 = vunpack.c.l.b16 %v6052
        %v7325 = vunpack.c.h.b16 %v6052
        %v7326 = vunpack.c.l.b16 %v6053
        %v7327 = vunpack.c.h.b16 %v6053
        %v7328 = vunpack.c.l.b16 %v6054
        %v7329 = vunpack.c.h.b16 %v6054
        %v7330 = vunpack.c.l.b16 %v6055
        %v7331 = vunpack.c.h.b16 %v6055
        %v7332 = vunpack.c.l.b16 %v6056
        %v7333 = vunpack.c.h.b16 %v6056
        %v7334 = vunpack.c.l.b16 %v6057
        %v7335 = vunpack.c.h.b16 %v6057
        %v7336 = vunpack.c.l.b16 %v6058
        %v7337 = vunpack.c.h.b16 %v6058
        %v7338 = vunpack.c.l.b16 %v6059
        %v7339 = vunpack.c.h.b16 %v6059
        %v7340 = vunpack.c.l.b16 %v6060
        %v7341 = vunpack.c.h.b16 %v6060
        %v7342 = vunpack.c.l.b16 %v6061
        %v7343 = vunpack.c.h.b16 %v6061
        %v7344 = vunpack.c.l.b16 %v6062
        %v7345 = vunpack.c.h.b16 %v6062
        %v7346 = vunpack.c.l.b16 %v6063
        %v7347 = vunpack.c.h.b16 %v6063
        %v7348 = vunpack.c.l.b16 %v6064
        %v7349 = vunpack.c.h.b16 %v6064
        %v7350 = vunpack.c.l.b16 %v6065
        %v7351 = vunpack.c.h.b16 %v6065
        %v7352 = vunpack.c.l.b16 %v6066
        %v7353 = vunpack.c.h.b16 %v6066
        %v7354 = vunpack.c.l.b16 %v6067
        %v7355 = vunpack.c.h.b16 %v6067
        %v7356 = vunpack.c.l.b16 %v6068
        %v7357 = vunpack.c.h.b16 %v6068
        %v7358 = vunpack.c.l.b16 %v6069
        %v7359 = vunpack.c.h.b16 %v6069
        %v7360 = vunpack.c.l.b16 %v6070
        %v7361 = vunpack.c.h.b16 %v6070
        %v7362 = vunpack.c.l.b16 %v6071
        %v7363 = vunpack.c.h.b16 %v6071
        %v7364 = vunpack.c.l.b16 %v6072
        %v7365 = vunpack.c.h.b16 %v6072
        %v7366 = vunpack.c.l.b16 %v6073
        %v7367 = vunpack.c.h.b16 %v6073
        %v7368 = vunpack.c.l.b16 %v6074
        %v7369 = vunpack.c.h.b16 %v6074
        %v7370 = vunpack.c.l.b16 %v6075
        %v7371 = vunpack.c.h.b16 %v6075
        %v7372 = vunpack.c.l.b16 %v6076
        %v7373 = vunpack.c.h.b16 %v6076
        %v7374 = vunpack.c.l.b16 %v6077
        %v7375 = vunpack.c.h.b16 %v6077
        %v7376 = vunpack.c.l.b16 %v6078
        %v7377 = vunpack.c.h.b16 %v6078
        %v7378 = vunpack.c.l.b16 %v6079
        %v7379 = vunpack.c.h.b16 %v6079
        %v7380 = vunpack.c.l.b16 %v6080
        %v7381 = vunpack.c.h.b16 %v6080
        %v7382 = vunpack.c.l.b16 %v6081
        %v7383 = vunpack.c.h.b16 %v6081
        %v7384 = vunpack.c.l.b16 %v6082
        %v7385 = vunpack.c.h.b16 %v6082
        %v7386 = vunpack.c.l.b16 %v6083
        %v7387 = vunpack.c.h.b16 %v6083
        %v7388 = vunpack.c.l.b16 %v6084
        %v7389 = vunpack.c.h.b16 %v6084
        %v7390 = vunpack.c.l.b16 %v6085
        %v7391 = vunpack.c.h.b16 %v6085
        %v7392 = vunpack.c.l.b16 %v6086
        %v7393 = vunpack.c.h.b16 %v6086
        %v7394 = vunpack.c.l.b16 %v6087
        %v7395 = vunpack.c.h.b16 %v6087
        %v7396 = vunpack.c.l.b16 %v6088
        %v7397 = vunpack.c.h.b16 %v6088
        %v7398 = vunpack.c.l.b16 %v6089
        %v7399 = vunpack.c.h.b16 %v6089
        %v7400 = vunpack.c.l.b16 %v6090
        %v7401 = vunpack.c.h.b16 %v6090
        %v7402 = vunpack.c.l.b16 %v6091
        %v7403 = vunpack.c.h.b16 %v6091
        %v7404 = vunpack.c.l.b16 %v6092
        %v7405 = vunpack.c.h.b16 %v6092
        %v7406 = vunpack.c.l.b16 %v6093
        %v7407 = vunpack.c.h.b16 %v6093
        %v7408 = vunpack.c.l.b16 %v6094
        %v7409 = vunpack.c.h.b16 %v6094
        %v7410 = vunpack.c.l.b16 %v6095
        %v7411 = vunpack.c.h.b16 %v6095
        %v7412 = vunpack.c.l.b16 %v6096
        %v7413 = vunpack.c.h.b16 %v6096
        %v7414 = vunpack.c.l.b16 %v6097
        %v7415 = vunpack.c.h.b16 %v6097
        %v7416 = vunpack.c.l.b16 %v6098
        %v7417 = vunpack.c.h.b16 %v6098
        %v7418 = vunpack.c.l.b16 %v6099
        %v7419 = vunpack.c.h.b16 %v6099
        %v7420 = vunpack.c.l.b16 %v6100
        %v7421 = vunpack.c.h.b16 %v6100
        %v7422 = vunpack.c.l.b16 %v6101
        %v7423 = vunpack.c.h.b16 %v6101
        %v7424 = vunpack.c.l.b16 %v6102
        %v7425 = vunpack.c.h.b16 %v6102
        %v7426 = vunpack.c.l.b16 %v6103
        %v7427 = vunpack.c.h.b16 %v6103
        %v7428 = vunpack.c.l.b16 %v6104
        %v7429 = vunpack.c.h.b16 %v6104
        %v7430 = vunpack.c.l.b16 %v6105
        %v7431 = vunpack.c.h.b16 %v6105
        %v7432 = vunpack.c.l.b16 %v6106
        %v7433 = vunpack.c.h.b16 %v6106
        %v7434 = vunpack.c.l.b16 %v6107
        %v7435 = vunpack.c.h.b16 %v6107
        %v7436 = vunpack.c.l.b16 %v6108
        %v7437 = vunpack.c.h.b16 %v6108
        %v7438 = vunpack.c.l.b16 %v6109
        %v7439 = vunpack.c.h.b16 %v6109
        %v7440 = vunpack.c.l.b16 %v6110
        %v7441 = vunpack.c.h.b16 %v6110
        %v7442 = vunpack.c.l.b16 %v6111
        %v7443 = vunpack.c.h.b16 %v6111
        %v7444 = vunpack.c.l.b16 %v6112
        %v7445 = vunpack.c.h.b16 %v6112
        %v7446 = vunpack.c.l.b16 %v6113
        %v7447 = vunpack.c.h.b16 %v6113
        %v7448 = vunpack.c.l.b16 %v6114
        %v7449 = vunpack.c.h.b16 %v6114
        %v7450 = vunpack.c.l.b16 %v6115
        %v7451 = vunpack.c.h.b16 %v6115
        %v7452 = vunpack.c.l.b16 %v6116
        %v7453 = vunpack.c.h.b16 %v6116
        %v7454 = vunpack.c.l.b16 %v6117
        %v7455 = vunpack.c.h.b16 %v6117
        %v7456 = vunpack.c.l.b16 %v6118
        %v7457 = vunpack.c.h.b16 %v6118
        %v7458 = vunpack.c.l.b16 %v6119
        %v7459 = vunpack.c.h.b16 %v6119
        %v7460 = vunpack.c.l.b16 %v6120
        %v7461 = vunpack.c.h.b16 %v6120
        %v7462 = vunpack.c.l.b16 %v6121
        %v7463 = vunpack.c.h.b16 %v6121
        %v7464 = vunpack.c.l.b16 %v6122
        %v7465 = vunpack.c.h.b16 %v6122
        %v7466 = vunpack.c.l.b16 %v6123
        %v7467 = vunpack.c.h.b16 %v6123
        %v7468 = vunpack.c.l.b16 %v6124
        %v7469 = vunpack.c.h.b16 %v6124
        %v7470 = vunpack.c.l.b16 %v6125
        %v7471 = vunpack.c.h.b16 %v6125
        %v7472 = vunpack.c.l.b16 %v6126
        %v7473 = vunpack.c.h.b16 %v6126
        %v7474 = vunpack.c.l.b16 %v6127
        %v7475 = vunpack.c.h.b16 %v6127
        %v7476 = vunpack.c.l.b16 %v6128
        %v7477 = vunpack.c.h.b16 %v6128
        %v7478 = vunpack.c.l.b16 %v6129
        %v7479 = vunpack.c.h.b16 %v6129
        %v7480 = vunpack.c.l.b16 %v6130
        %v7481 = vunpack.c.h.b16 %v6130
        %v7482 = vunpack.c.l.b16 %v6131
        %v7483 = vunpack.c.h.b16 %v6131
        %v7484 = vunpack.c.l.b16 %v6132
        %v7485 = vunpack.c.h.b16 %v6132
        %v7486 = vunpack.c.l.b16 %v6133
        %v7487 = vunpack.c.h.b16 %v6133
        %v7488 = vunpack.c.l.b16 %v6134
        %v7489 = vunpack.c.h.b16 %v6134
        %v7490 = vunpack.c.l.b16 %v6135
        %v7491 = vunpack.c.h.b16 %v6135
        %v7492 = vunpack.c.l.b16 %v6136
        %v7493 = vunpack.c.h.b16 %v6136
        %v7494 = vunpack.c.l.b16 %v6137
        %v7495 = vunpack.c.h.b16 %v6137
        %v7496 = vunpack.c.l.b16 %v6138
        %v7497 = vunpack.c.h.b16 %v6138
        %v7498 = vunpack.c.l.b16 %v6139
        %v7499 = vunpack.c.h.b16 %v6139
        %v7500 = vunpack.c.l.b16 %v6140
        %v7501 = vunpack.c.h.b16 %v6140
        %v7502 = vunpack.c.l.b16 %v6141
        %v7503 = vunpack.c.h.b16 %v6141
        %v7504 = vunpack.c.l.b16 %v6142
        %v7505 = vunpack.c.h.b16 %v6142
        %v7506 = vunpack.c.l.b16 %v6143
        %v7507 = vunpack.c.h.b16 %v6143
        %v7508 = vunpack.c.l.b16 %v6144
        %v7509 = vunpack.c.h.b16 %v6144
        %v7510 = vunpack.c.l.b16 %v6145
        %v7511 = vunpack.c.h.b16 %v6145
        %v7512 = vunpack.c.l.b16 %v6146
        %v7513 = vunpack.c.h.b16 %v6146
        %v7514 = vunpack.c.l.b16 %v6147
        %v7515 = vunpack.c.h.b16 %v6147
        %v7516 = vunpack.c.l.b16 %v6148
        %v7517 = vunpack.c.h.b16 %v6148
        %v7518 = vunpack.c.l.b16 %v6149
        %v7519 = vunpack.c.h.b16 %v6149
        %v7520 = vunpack.c.l.b16 %v6150
        %v7521 = vunpack.c.h.b16 %v6150
        %v7522 = vunpack.c.l.b16 %v6151
        %v7523 = vunpack.c.h.b16 %v6151
        %v7524 = vunpack.c.l.b16 %v6152
        %v7525 = vunpack.c.h.b16 %v6152
        %v7526 = vunpack.c.l.b16 %v6153
        %v7527 = vunpack.c.h.b16 %v6153
        %v7528 = vunpack.c.l.b16 %v6154
        %v7529 = vunpack.c.h.b16 %v6154
        %v7530 = vunpack.c.l.b16 %v6155
        %v7531 = vunpack.c.h.b16 %v6155
        %v7532 = vunpack.c.l.b16 %v6156
        %v7533 = vunpack.c.h.b16 %v6156
        %v7534 = vunpack.c.l.b16 %v6157
        %v7535 = vunpack.c.h.b16 %v6157
        %v7536 = vunpack.c.l.b16 %v6158
        %v7537 = vunpack.c.h.b16 %v6158
        %v7538 = vunpack.c.l.b16 %v6159
        %v7539 = vunpack.c.h.b16 %v6159
        %v7540 = vunpack.c.l.b16 %v6160
        %v7541 = vunpack.c.h.b16 %v6160
        %v7542 = vunpack.c.l.b16 %v6161
        %v7543 = vunpack.c.h.b16 %v6161
        %v7544 = vunpack.c.l.b16 %v6162
        %v7545 = vunpack.c.h.b16 %v6162
        %v7546 = vunpack.c.l.b16 %v6163
        %v7547 = vunpack.c.h.b16 %v6163
        %v7548 = vunpack.c.l.b16 %v6164
        %v7549 = vunpack.c.h.b16 %v6164
        %v7550 = vunpack.c.l.b16 %v6165
        %v7551 = vunpack.c.h.b16 %v6165
        %v7552 = vunpack.c.l.b16 %v6166
        %v7553 = vunpack.c.h.b16 %v6166
        %v7554 = vunpack.c.l.b16 %v6167
        %v7555 = vunpack.c.h.b16 %v6167
        %v7556 = vunpack.c.l.b16 %v6168
        %v7557 = vunpack.c.h.b16 %v6168
        %v7558 = vunpack.c.l.b16 %v6169
        %v7559 = vunpack.c.h.b16 %v6169
        %v7560 = vunpack.c.l.b16 %v6170
        %v7561 = vunpack.c.h.b16 %v6170
        %v7562 = vunpack.c.l.b16 %v6171
        %v7563 = vunpack.c.h.b16 %v6171
        %v7564 = vunpack.c.l.b16 %v6172
        %v7565 = vunpack.c.h.b16 %v6172
        %v7566 = vunpack.c.l.b16 %v6173
        %v7567 = vunpack.c.h.b16 %v6173
        %v7568 = vunpack.c.l.b16 %v6174
        %v7569 = vunpack.c.h.b16 %v6174
        %v7570 = vunpack.c.l.b16 %v6175
        %v7571 = vunpack.c.h.b16 %v6175
        %v7572 = vunpack.c.l.b16 %v6176
        %v7573 = vunpack.c.h.b16 %v6176
        %v7574 = vunpack.c.l.b16 %v6177
        %v7575 = vunpack.c.h.b16 %v6177
        %v7576 = vunpack.c.l.b16 %v6178
        %v7577 = vunpack.c.h.b16 %v6178
        %v7578 = vunpack.c.l.b16 %v6179
        %v7579 = vunpack.c.h.b16 %v6179
        %v7580 = vunpack.c.l.b16 %v6180
        %v7581 = vunpack.c.h.b16 %v6180
        %v7582 = vunpack.c.l.b16 %v6181
        %v7583 = vunpack.c.h.b16 %v6181
        %v7584 = vunpack.c.l.b16 %v6182
        %v7585 = vunpack.c.h.b16 %v6182
        %v7586 = vunpack.c.l.b16 %v6183
        %v7587 = vunpack.c.h.b16 %v6183
        %v7588 = vunpack.c.l.b16 %v6184
        %v7589 = vunpack.c.h.b16 %v6184
        %v7590 = vunpack.c.l.b16 %v6185
        %v7591 = vunpack.c.h.b16 %v6185
        %v7592 = vunpack.c.l.b16 %v6186
        %v7593 = vunpack.c.h.b16 %v6186
        %v7594 = vunpack.c.l.b16 %v6187
        %v7595 = vunpack.c.h.b16 %v6187
        %v7596 = vunpack.c.l.b16 %v6188
        %v7597 = vunpack.c.h.b16 %v6188
        %v7598 = vunpack.c.l.b16 %v6189
        %v7599 = vunpack.c.h.b16 %v6189
        %v7600 = vunpack.c.l.b16 %v6190
        %v7601 = vunpack.c.h.b16 %v6190
        %v7602 = vunpack.c.l.b16 %v6191
        %v7603 = vunpack.c.h.b16 %v6191
        %v7604 = vunpack.c.l.b16 %v6192
        %v7605 = vunpack.c.h.b16 %v6192
        %v7606 = vunpack.c.l.b16 %v6193
        %v7607 = vunpack.c.h.b16 %v6193
        %v7608 = vunpack.c.l.b16 %v6194
        %v7609 = vunpack.c.h.b16 %v6194
        %v7610 = vunpack.c.l.b16 %v6195
        %v7611 = vunpack.c.h.b16 %v6195
        %v7612 = vunpack.c.l.b16 %v6196
        %v7613 = vunpack.c.h.b16 %v6196
        %v7614 = vunpack.c.l.b16 %v6197
        %v7615 = vunpack.c.h.b16 %v6197
        %v7616 = vunpack.c.l.b16 %v6198
        %v7617 = vunpack.c.h.b16 %v6198
        %v7618 = vunpack.c.l.b16 %v6199
        %v7619 = vunpack.c.h.b16 %v6199
        %v7620 = vunpack.c.l.b16 %v6200
        %v7621 = vunpack.c.h.b16 %v6200
        %v7622 = vunpack.c.l.b16 %v6201
        %v7623 = vunpack.c.h.b16 %v6201
        %v7624 = vunpack.c.l.b16 %v6202
        %v7625 = vunpack.c.h.b16 %v6202
        %v7626 = vunpack.c.l.b16 %v6203
        %v7627 = vunpack.c.h.b16 %v6203
        %v7628 = vunpack.c.l.b16 %v6204
        %v7629 = vunpack.c.h.b16 %v6204
        %v7630 = vunpack.c.l.b16 %v6205
        %v7631 = vunpack.c.h.b16 %v6205
        %v7632 = vunpack.c.l.b16 %v6206
        %v7633 = vunpack.c.h.b16 %v6206
        %v7634 = vunpack.c.l.b16 %v6207
        %v7635 = vunpack.c.h.b16 %v6207
        %v7636 = vunpack.c.l.b16 %v6208
        %v7637 = vunpack.c.h.b16 %v6208
        %v7638 = vunpack.c.l.b16 %v6209
        %v7639 = vunpack.c.h.b16 %v6209
        %v7640 = vunpack.c.l.b16 %v6210
        %v7641 = vunpack.c.h.b16 %v6210
        %v7642 = vunpack.c.l.b16 %v6211
        %v7643 = vunpack.c.h.b16 %v6211
        %v7644 = vunpack.c.l.b16 %v6212
        %v7645 = vunpack.c.h.b16 %v6212
        %v7646 = vunpack.c.l.b16 %v6213
        %v7647 = vunpack.c.h.b16 %v6213
        %v7648 = vunpack.c.l.b16 %v6214
        %v7649 = vunpack.c.h.b16 %v6214
        %v7650 = vunpack.c.l.b16 %v6215
        %v7651 = vunpack.c.h.b16 %v6215
        %v7652 = vunpack.c.l.b16 %v6216
        %v7653 = vunpack.c.h.b16 %v6216
        %v7654 = vunpack.c.l.b16 %v6217
        %v7655 = vunpack.c.h.b16 %v6217
        %v7656 = vunpack.c.l.b16 %v6218
        %v7657 = vunpack.c.h.b16 %v6218
        %v7658 = vunpack.c.l.b16 %v6219
        %v7659 = vunpack.c.h.b16 %v6219
        %v7660 = vunpack.c.l.b16 %v6220
        %v7661 = vunpack.c.h.b16 %v6220
        %v7662 = vunpack.c.l.b16 %v6221
        %v7663 = vunpack.c.h.b16 %v6221
        %v7664 = vunpack.c.l.b16 %v6222
        %v7665 = vunpack.c.h.b16 %v6222
        %v7666 = vunpack.c.l.b16 %v6223
        %v7667 = vunpack.c.h.b16 %v6223
        %v7668 = vunpack.c.l.b16 %v6224
        %v7669 = vunpack.c.h.b16 %v6224
        %v7670 = vunpack.c.l.b16 %v6225
        %v7671 = vunpack.c.h.b16 %v6225
        %v7672 = vunpack.c.l.b16 %v6226
        %v7673 = vunpack.c.h.b16 %v6226
        %v7674 = vunpack.c.l.b16 %v6227
        %v7675 = vunpack.c.h.b16 %v6227
        %v7676 = vunpack.c.l.b16 %v6228
        %v7677 = vunpack.c.h.b16 %v6228
        %v7678 = vunpack.c.l.b16 %v6229
        %v7679 = vunpack.c.h.b16 %v6229
        %v7680 = vunpack.c.l.b16 %v6230
        %v7681 = vunpack.c.h.b16 %v6230
        %v7682 = vunpack.c.l.b16 %v6231
        %v7683 = vunpack.c.h.b16 %v6231
        %v7684 = vunpack.c.l.b16 %v6232
        %v7685 = vunpack.c.h.b16 %v6232
        %v7686 = vunpack.c.l.b16 %v6233
        %v7687 = vunpack.c.h.b16 %v6233
        %v7688 = vunpack.c.l.b16 %v6234
        %v7689 = vunpack.c.h.b16 %v6234
        %v7690 = vunpack.c.l.b16 %v6235
        %v7691 = vunpack.c.h.b16 %v6235
        %v7692 = vunpack.c.l.b16 %v6236
        %v7693 = vunpack.c.h.b16 %v6236
        %v7694 = vunpack.c.l.b16 %v6237
        %v7695 = vunpack.c.h.b16 %v6237
        %v7696 = vunpack.c.l.b16 %v6238
        %v7697 = vunpack.c.h.b16 %v6238
        %v7698 = vunpack.c.l.b16 %v6239
        %v7699 = vunpack.c.h.b16 %v6239
        %v7700 = vunpack.c.l.b16 %v6240
        %v7701 = vunpack.c.h.b16 %v6240
        %v7702 = vunpack.c.l.b16 %v6241
        %v7703 = vunpack.c.h.b16 %v6241
        %v7704 = vunpack.c.l.b16 %v6242
        %v7705 = vunpack.c.h.b16 %v6242
        %v7706 = vunpack.c.l.b16 %v6243
        %v7707 = vunpack.c.h.b16 %v6243
        %v7708 = vunpack.c.l.b16 %v6244
        %v7709 = vunpack.c.h.b16 %v6244
        %v7710 = vunpack.c.l.b16 %v6245
        %v7711 = vunpack.c.h.b16 %v6245
        %v7712 = vunpack.c.l.b16 %v6246
        %v7713 = vunpack.c.h.b16 %v6246
        %v7714 = vunpack.c.l.b16 %v6247
        %v7715 = vunpack.c.h.b16 %v6247
        %v7716 = vunpack.c.l.b16 %v6248
        %v7717 = vunpack.c.h.b16 %v6248
        %v7718 = vunpack.c.l.b16 %v6249
        %v7719 = vunpack.c.h.b16 %v6249
        %v7720 = vunpack.c.l.b16 %v6250
        %v7721 = vunpack.c.h.b16 %v6250
        %v7722 = vunpack.c.l.b16 %v6251
        %v7723 = vunpack.c.h.b16 %v6251
        %v7724 = vunpack.c.l.b16 %v6252
        %v7725 = vunpack.c.h.b16 %v6252
        %v7726 = vunpack.c.l.b16 %v6253
        %v7727 = vunpack.c.h.b16 %v6253
        %v7728 = vunpack.c.l.b16 %v6254
        %v7729 = vunpack.c.h.b16 %v6254
        %v7730 = vunpack.c.l.b16 %v6255
        %v7731 = vunpack.c.h.b16 %v6255
        %v7732 = vunpack.c.l.b16 %v6256
        %v7733 = vunpack.c.h.b16 %v6256
        %v7734 = vunpack.c.l.b16 %v6257
        %v7735 = vunpack.c.h.b16 %v6257
        %v7736 = vunpack.c.l.b16 %v6258
        %v7737 = vunpack.c.h.b16 %v6258
        %v7738 = vunpack.c.l.b16 %v6259
        %v7739 = vunpack.c.h.b16 %v6259
        %v7740 = vunpack.c.l.b16 %v6260
        %v7741 = vunpack.c.h.b16 %v6260
        %v7742 = vunpack.c.l.b16 %v6261
        %v7743 = vunpack.c.h.b16 %v6261
        %v7744 = vunpack.c.l.b16 %v6262
        %v7745 = vunpack.c.h.b16 %v6262
        %v7746 = vunpack.c.l.b16 %v6263
        %v7747 = vunpack.c.h.b16 %v6263
        %v7748 = vunpack.c.l.b16 %v6264
        %v7749 = vunpack.c.h.b16 %v6264
        %v7750 = vunpack.c.l.b16 %v6265
        %v7751 = vunpack.c.h.b16 %v6265
        %v7752 = vunpack.c.l.b16 %v6266
        %v7753 = vunpack.c.h.b16 %v6266
        %v7754 = vunpack.c.l.b16 %v6267
        %v7755 = vunpack.c.h.b16 %v6267
        %v7756 = vunpack.c.l.b16 %v6268
        %v7757 = vunpack.c.h.b16 %v6268
        %v7758 = vunpack.c.l.b16 %v6269
        %v7759 = vunpack.c.h.b16 %v6269
        %v7760 = vunpack.c.l.b16 %v6270
        %v7761 = vunpack.c.h.b16 %v6270
        %v7762 = vunpack.c.l.b16 %v6271
        %v7763 = vunpack.c.h.b16 %v6271
        %v7764 = vunpack.c.l.b16 %v6272
        %v7765 = vunpack.c.h.b16 %v6272
        %v7766 = vunpack.c.l.b16 %v6273
        %v7767 = vunpack.c.h.b16 %v6273
        %v7768 = vunpack.c.l.b16 %v6274
        %v7769 = vunpack.c.h.b16 %v6274
        %v7770 = vunpack.c.l.b16 %v6275
        %v7771 = vunpack.c.h.b16 %v6275
        %v7772 = vunpack.c.l.b16 %v6276
        %v7773 = vunpack.c.h.b16 %v6276
        %v7774 = vunpack.c.l.b16 %v6277
        %v7775 = vunpack.c.h.b16 %v6277
        %v7776 = vunpack.c.l.b16 %v6278
        %v7777 = vunpack.c.h.b16 %v6278
        %v7778 = vunpack.c.l.b16 %v6279
        %v7779 = vunpack.c.h.b16 %v6279
        %v7780 = vunpack.c.l.b16 %v6280
        %v7781 = vunpack.c.h.b16 %v6280
        %v7782 = vunpack.c.l.b16 %v6281
        %v7783 = vunpack.c.h.b16 %v6281
        %v7784 = vunpack.c.l.b16 %v6282
        %v7785 = vunpack.c.h.b16 %v6282
        %v7786 = vunpack.c.l.b16 %v6283
        %v7787 = vunpack.c.h.b16 %v6283
        %v7788 = vunpack.c.l.b16 %v6284
        %v7789 = vunpack.c.h.b16 %v6284
        %v7790 = vunpack.c.l.b16 %v6285
        %v7791 = vunpack.c.h.b16 %v6285
        %v7792 = vunpack.c.l.b16 %v6286
        %v7793 = vunpack.c.h.b16 %v6286
        %v7794 = vunpack.c.l.b16 %v6287
        %v7795 = vunpack.c.h.b16 %v6287
        %v7796 = vunpack.c.l.b16 %v6288
        %v7797 = vunpack.c.h.b16 %v6288
        %v7798 = vunpack.c.l.b16 %v6289
        %v7799 = vunpack.c.h.b16 %v6289
        %v7800 = vunpack.c.l.b16 %v6290
        %v7801 = vunpack.c.h.b16 %v6290
        %v7802 = vunpack.c.l.b16 %v6291
        %v7803 = vunpack.c.h.b16 %v6291
        %v7804 = vunpack.c.l.b16 %v6292
        %v7805 = vunpack.c.h.b16 %v6292
        %v7806 = vunpack.c.l.b16 %v6293
        %v7807 = vunpack.c.h.b16 %v6293
        %v7808 = vunpack.c.l.b16 %v6294
        %v7809 = vunpack.c.h.b16 %v6294
        %v7810 = vunpack.c.l.b16 %v6295
        %v7811 = vunpack.c.h.b16 %v6295
        %v7812 = vunpack.c.l.b16 %v6296
        %v7813 = vunpack.c.h.b16 %v6296
        %v7814 = vunpack.c.l.b16 %v6297
        %v7815 = vunpack.c.h.b16 %v6297
        %v7816 = vunpack.c.l.b16 %v6298
        %v7817 = vunpack.c.h.b16 %v6298
        %v7818 = vunpack.c.l.b16 %v6299
        %v7819 = vunpack.c.h.b16 %v6299
        %v7820 = vunpack.c.l.b16 %v6300
        %v7821 = vunpack.c.h.b16 %v6300
        %v7822 = vunpack.c.l.b16 %v6301
        %v7823 = vunpack.c.h.b16 %v6301
        %v7824 = vunpack.c.l.b16 %v6302
        %v7825 = vunpack.c.h.b16 %v6302
        %v7826 = vunpack.c.l.b16 %v6303
        %v7827 = vunpack.c.h.b16 %v6303
        %v7828 = vunpack.c.l.b16 %v6304
        %v7829 = vunpack.c.h.b16 %v6304
        %v7830 = vunpack.c.l.b16 %v6305
        %v7831 = vunpack.c.h.b16 %v6305
        %v7832 = vunpack.c.l.b16 %v6306
        %v7833 = vunpack.c.h.b16 %v6306
        %v7834 = vunpack.c.l.b16 %v6307
        %v7835 = vunpack.c.h.b16 %v6307
        %v7836 = vunpack.c.l.b16 %v6308
        %v7837 = vunpack.c.h.b16 %v6308
        %v7838 = vunpack.c.l.b16 %v6309
        %v7839 = vunpack.c.h.b16 %v6309
        %v7840 = vunpack.c.l.b16 %v6310
        %v7841 = vunpack.c.h.b16 %v6310
        %v7842 = vunpack.c.l.b16 %v6311
        %v7843 = vunpack.c.h.b16 %v6311
        %v7844 = vunpack.c.l.b16 %v6312
        %v7845 = vunpack.c.h.b16 %v6312
        %v7846 = vunpack.c.l.b16 %v6313
        %v7847 = vunpack.c.h.b16 %v6313
        %v7848 = vunpack.c.l.b16 %v6314
        %v7849 = vunpack.c.h.b16 %v6314
        %v7850 = vunpack.c.l.b16 %v6315
        %v7851 = vunpack.c.h.b16 %v6315
        %v7852 = vunpack.c.l.b16 %v6316
        %v7853 = vunpack.c.h.b16 %v6316
        %v7854 = vunpack.c.l.b16 %v6317
        %v7855 = vunpack.c.h.b16 %v6317
        %v7856 = vunpack.c.l.b16 %v6318
        %v7857 = vunpack.c.h.b16 %v6318
        %v7858 = vunpack.c.l.b16 %v6319
        %v7859 = vunpack.c.h.b16 %v6319
        %v7860 = vunpack.c.l.b16 %v6320
        %v7861 = vunpack.c.h.b16 %v6320
        %v7862 = vunpack.c.l.b16 %v6321
        %v7863 = vunpack.c.h.b16 %v6321
        %v7864 = vunpack.c.l.b16 %v6322
        %v7865 = vunpack.c.h.b16 %v6322
        %v7866 = vunpack.c.l.b16 %v6323
        %v7867 = vunpack.c.h.b16 %v6323
        %v7868 = vunpack.c.l.b16 %v6324
        %v7869 = vunpack.c.h.b16 %v6324
        %v7870 = vunpack.c.l.b16 %v6325
        %v7871 = vunpack.c.h.b16 %v6325
        %v7872 = vunpack.c.l.b16 %v6326
        %v7873 = vunpack.c.h.b16 %v6326
        %v7874 = vunpack.c.l.b16 %v6327
        %v7875 = vunpack.c.h.b16 %v6327
        %v7876 = vunpack.c.l.b16 %v6328
        %v7877 = vunpack.c.h.b16 %v6328
        %v7878 = vunpack.c.l.b16 %v6329
        %v7879 = vunpack.c.h.b16 %v6329
        %v7880 = vunpack.c.l.b16 %v6330
        %v7881 = vunpack.c.h.b16 %v6330
        %v7882 = vunpack.c.l.b16 %v6331
        %v7883 = vunpack.c.h.b16 %v6331
        %v7884 = vunpack.c.l.b16 %v6332
        %v7885 = vunpack.c.h.b16 %v6332
        %v7886 = vunpack.c.l.b16 %v6333
        %v7887 = vunpack.c.h.b16 %v6333
        %v7888 = vunpack.c.l.b16 %v6334
        %v7889 = vunpack.c.h.b16 %v6334
        %v7890 = vunpack.c.l.b16 %v6335
        %v7891 = vunpack.c.h.b16 %v6335
        %v7892 = vunpack.c.l.b16 %v6336
        %v7893 = vunpack.c.h.b16 %v6336
        %v7894 = vunpack.c.l.b16 %v6337
        %v7895 = vunpack.c.h.b16 %v6337
        %v7896 = vunpack.c.l.b16 %v6338
        %v7897 = vunpack.c.h.b16 %v6338
        %v7898 = vunpack.c.l.b16 %v6339
        %v7899 = vunpack.c.h.b16 %v6339
        %v7900 = vunpack.c.l.b16 %v6340
        %v7901 = vunpack.c.h.b16 %v6340
        %v7902 = vunpack.c.l.b16 %v6341
        %v7903 = vunpack.c.h.b16 %v6341
        %v7904 = vunpack.c.l.b16 %v6342
        %v7905 = vunpack.c.h.b16 %v6342
        %v7906 = vunpack.c.l.b16 %v6343
        %v7907 = vunpack.c.h.b16 %v6343
        %v7908 = vunpack.c.l.b16 %v6344
        %v7909 = vunpack.c.h.b16 %v6344
        %v7910 = vunpack.c.l.b16 %v6345
        %v7911 = vunpack.c.h.b16 %v6345
        %v7912 = vunpack.c.l.b16 %v6346
        %v7913 = vunpack.c.h.b16 %v6346
        %v7914 = vunpack.c.l.b16 %v6347
        %v7915 = vunpack.c.h.b16 %v6347
        %v7916 = vunpack.c.l.b16 %v6348
        %v7917 = vunpack.c.h.b16 %v6348
        %v7918 = vunpack.c.l.b16 %v6349
        %v7919 = vunpack.c.h.b16 %v6349
        %v7920 = vunpack.c.l.b16 %v6350
        %v7921 = vunpack.c.h.b16 %v6350
        %v7922 = vunpack.c.l.b16 %v6351
        %v7923 = vunpack.c.h.b16 %v6351
        %v7924 = vunpack.c.l.b16 %v6352
        %v7925 = vunpack.c.h.b16 %v6352
        %v7926 = vunpack.c.l.b16 %v6353
        %v7927 = vunpack.c.h.b16 %v6353
        %v7928 = vunpack.c.l.b16 %v6354
        %v7929 = vunpack.c.h.b16 %v6354
        %v7930 = vunpack.c.l.b16 %v6355
        %v7931 = vunpack.c.h.b16 %v6355
        %v7932 = vunpack.c.l.b16 %v6356
        %v7933 = vunpack.c.h.b16 %v6356
        %v7934 = vunpack.c.l.b16 %v6357
        %v7935 = vunpack.c.h.b16 %v6357
        %v7936 = vpack.c.b16 %v6920, %v6912
        %v7937 = vpack.c.b16 %v6921, %v6913
        %v7938 = vpack.c.b16 %v6922, %v6914
        %v7939 = vpack.c.b16 %v6923, %v6915
        %v7940 = vpack.c.b16 %v6924, %v6916
        %v7941 = vpack.c.b16 %v6925, %v6917
        %v7942 = vpack.c.b16 %v6926, %v6918
        %v7943 = vpack.c.b16 %v6927, %v6919
        %v7944 = vpack.c.b16 %v6936, %v6928
        %v7945 = vpack.c.b16 %v6937, %v6929
        %v7946 = vpack.c.b16 %v6938, %v6930
        %v7947 = vpack.c.b16 %v6939, %v6931
        %v7948 = vpack.c.b16 %v6940, %v6932
        %v7949 = vpack.c.b16 %v6941, %v6933
        %v7950 = vpack.c.b16 %v6942, %v6934
        %v7951 = vpack.c.b16 %v6943, %v6935
        %v7952 = vpack.c.b16 %v6952, %v6944
        %v7953 = vpack.c.b16 %v6953, %v6945
        %v7954 = vpack.c.b16 %v6954, %v6946
        %v7955 = vpack.c.b16 %v6955, %v6947
        %v7956 = vpack.c.b16 %v6956, %v6948
        %v7957 = vpack.c.b16 %v6957, %v6949
        %v7958 = vpack.c.b16 %v6958, %v6950
        %v7959 = vpack.c.b16 %v6959, %v6951
        %v7960 = vpack.c.b16 %v6968, %v6960
        %v7961 = vpack.c.b16 %v6969, %v6961
        %v7962 = vpack.c.b16 %v6970, %v6962
        %v7963 = vpack.c.b16 %v6971, %v6963
        %v7964 = vpack.c.b16 %v6972, %v6964
        %v7965 = vpack.c.b16 %v6973, %v6965
        %v7966 = vpack.c.b16 %v6974, %v6966
        %v7967 = vpack.c.b16 %v6975, %v6967
        %v7968 = vpack.c.b16 %v6984, %v6976
        %v7969 = vpack.c.b16 %v6985, %v6977
        %v7970 = vpack.c.b16 %v6986, %v6978
        %v7971 = vpack.c.b16 %v6987, %v6979
        %v7972 = vpack.c.b16 %v6988, %v6980
        %v7973 = vpack.c.b16 %v6989, %v6981
        %v7974 = vpack.c.b16 %v6990, %v6982
        %v7975 = vpack.c.b16 %v6991, %v6983
        %v7976 = vpack.c.b16 %v7000, %v6992
        %v7977 = vpack.c.b16 %v7001, %v6993
        %v7978 = vpack.c.b16 %v7002, %v6994
        %v7979 = vpack.c.b16 %v7003, %v6995
        %v7980 = vpack.c.b16 %v7004, %v6996
        %v7981 = vpack.c.b16 %v7005, %v6997
        %v7982 = vpack.c.b16 %v7006, %v6998
        %v7983 = vpack.c.b16 %v7007, %v6999
        %v7984 = vpack.c.b16 %v7016, %v7008
        %v7985 = vpack.c.b16 %v7017, %v7009
        %v7986 = vpack.c.b16 %v7018, %v7010
        %v7987 = vpack.c.b16 %v7019, %v7011
        %v7988 = vpack.c.b16 %v7020, %v7012
        %v7989 = vpack.c.b16 %v7021, %v7013
        %v7990 = vpack.c.b16 %v7022, %v7014
        %v7991 = vpack.c.b16 %v7023, %v7015
        %v7992 = vpack.c.b16 %v7032, %v7024
        %v7993 = vpack.c.b16 %v7033, %v7025
        %v7994 = vpack.c.b16 %v7034, %v7026
        %v7995 = vpack.c.b16 %v7035, %v7027
        %v7996 = vpack.c.b16 %v7036, %v7028
        %v7997 = vpack.c.b16 %v7037, %v7029
        %v7998 = vpack.c.b16 %v7038, %v7030
        %v7999 = vpack.c.b16 %v7039, %v7031
        %v8000 = vpack.c.b16 %v7048, %v7040
        %v8001 = vpack.c.b16 %v7049, %v7041
        %v8002 = vpack.c.b16 %v7050, %v7042
        %v8003 = vpack.c.b16 %v7051, %v7043
        %v8004 = vpack.c.b16 %v7052, %v7044
        %v8005 = vpack.c.b16 %v7053, %v7045
        %v8006 = vpack.c.b16 %v7054, %v7046
        %v8007 = vpack.c.b16 %v7055, %v7047
        %v8008 = vpack.c.b16 %v7064, %v7056
        %v8009 = vpack.c.b16 %v7065, %v7057
        %v8010 = vpack.c.b16 %v7066, %v7058
        %v8011 = vpack.c.b16 %v7067, %v7059
        %v8012 = vpack.c.b16 %v7068, %v7060
        %v8013 = vpack.c.b16 %v7069, %v7061
        %v8014 = vpack.c.b16 %v7070, %v7062
        %v8015 = vpack.c.b16 %v7071, %v7063
        %v8016 = vpack.c.b16 %v7080, %v7072
        %v8017 = vpack.c.b16 %v7081, %v7073
        %v8018 = vpack.c.b16 %v7082, %v7074
        %v8019 = vpack.c.b16 %v7083, %v7075
        %v8020 = vpack.c.b16 %v7084, %v7076
        %v8021 = vpack.c.b16 %v7085, %v7077
        %v8022 = vpack.c.b16 %v7086, %v7078
        %v8023 = vpack.c.b16 %v7087, %v7079
        %v8024 = vpack.c.b16 %v7096, %v7088
        %v8025 = vpack.c.b16 %v7097, %v7089
        %v8026 = vpack.c.b16 %v7098, %v7090
        %v8027 = vpack.c.b16 %v7099, %v7091
        %v8028 = vpack.c.b16 %v7100, %v7092
        %v8029 = vpack.c.b16 %v7101, %v7093
        %v8030 = vpack.c.b16 %v7102, %v7094
        %v8031 = vpack.c.b16 %v7103, %v7095
        %v8032 = vpack.c.b16 %v7112, %v7104
        %v8033 = vpack.c.b16 %v7113, %v7105
        %v8034 = vpack.c.b16 %v7114, %v7106
        %v8035 = vpack.c.b16 %v7115, %v7107
        %v8036 = vpack.c.b16 %v7116, %v7108
        %v8037 = vpack.c.b16 %v7117, %v7109
        %v8038 = vpack.c.b16 %v7118, %v7110
        %v8039 = vpack.c.b16 %v7119, %v7111
        %v8040 = vpack.c.b16 %v7128, %v7120
        %v8041 = vpack.c.b16 %v7129, %v7121
        %v8042 = vpack.c.b16 %v7130, %v7122
        %v8043 = vpack.c.b16 %v7131, %v7123
        %v8044 = vpack.c.b16 %v7132, %v7124
        %v8045 = vpack.c.b16 %v7133, %v7125
        %v8046 = vpack.c.b16 %v7134, %v7126
        %v8047 = vpack.c.b16 %v7135, %v7127
        %v8048 = vpack.c.b16 %v7144, %v7136
        %v8049 = vpack.c.b16 %v7145, %v7137
        %v8050 = vpack.c.b16 %v7146, %v7138
        %v8051 = vpack.c.b16 %v7147, %v7139
        %v8052 = vpack.c.b16 %v7148, %v7140
        %v8053 = vpack.c.b16 %v7149, %v7141
        %v8054 = vpack.c.b16 %v7150, %v7142
        %v8055 = vpack.c.b16 %v7151, %v7143
        %v8056 = vpack.c.b16 %v7160, %v7152
        %v8057 = vpack.c.b16 %v7161, %v7153
        %v8058 = vpack.c.b16 %v7162, %v7154
        %v8059 = vpack.c.b16 %v7163, %v7155
        %v8060 = vpack.c.b16 %v7164, %v7156
        %v8061 = vpack.c.b16 %v7165, %v7157
        %v8062 = vpack.c.b16 %v7166, %v7158
        %v8063 = vpack.c.b16 %v7167, %v7159
        %v8064 = vpack.c.b16 %v7176, %v7168
        %v8065 = vpack.c.b16 %v7177, %v7169
        %v8066 = vpack.c.b16 %v7178, %v7170
        %v8067 = vpack.c.b16 %v7179, %v7171
        %v8068 = vpack.c.b16 %v7180, %v7172
        %v8069 = vpack.c.b16 %v7181, %v7173
        %v8070 = vpack.c.b16 %v7182, %v7174
        %v8071 = vpack.c.b16 %v7183, %v7175
        %v8072 = vpack.c.b16 %v7192, %v7184
        %v8073 = vpack.c.b16 %v7193, %v7185
        %v8074 = vpack.c.b16 %v7194, %v7186
        %v8075 = vpack.c.b16 %v7195, %v7187
        %v8076 = vpack.c.b16 %v7196, %v7188
        %v8077 = vpack.c.b16 %v7197, %v7189
        %v8078 = vpack.c.b16 %v7198, %v7190
        %v8079 = vpack.c.b16 %v7199, %v7191
        %v8080 = vpack.c.b16 %v7208, %v7200
        %v8081 = vpack.c.b16 %v7209, %v7201
        %v8082 = vpack.c.b16 %v7210, %v7202
        %v8083 = vpack.c.b16 %v7211, %v7203
        %v8084 = vpack.c.b16 %v7212, %v7204
        %v8085 = vpack.c.b16 %v7213, %v7205
        %v8086 = vpack.c.b16 %v7214, %v7206
        %v8087 = vpack.c.b16 %v7215, %v7207
        %v8088 = vpack.c.b16 %v7224, %v7216
        %v8089 = vpack.c.b16 %v7225, %v7217
        %v8090 = vpack.c.b16 %v7226, %v7218
        %v8091 = vpack.c.b16 %v7227, %v7219
        %v8092 = vpack.c.b16 %v7228, %v7220
        %v8093 = vpack.c.b16 %v7229, %v7221
        %v8094 = vpack.c.b16 %v7230, %v7222
        %v8095 = vpack.c.b16 %v7231, %v7223
        %v8096 = vpack.c.b16 %v7240, %v7232
        %v8097 = vpack.c.b16 %v7241, %v7233
        %v8098 = vpack.c.b16 %v7242, %v7234
        %v8099 = vpack.c.b16 %v7243, %v7235
        %v8100 = vpack.c.b16 %v7244, %v7236
        %v8101 = vpack.c.b16 %v7245, %v7237
        %v8102 = vpack.c.b16 %v7246, %v7238
        %v8103 = vpack.c.b16 %v7247, %v7239
        %v8104 = vpack.c.b16 %v7256, %v7248
        %v8105 = vpack.c.b16 %v7257, %v7249
        %v8106 = vpack.c.b16 %v7258, %v7250
        %v8107 = vpack.c.b16 %v7259, %v7251
        %v8108 = vpack.c.b16 %v7260, %v7252
        %v8109 = vpack.c.b16 %v7261, %v7253
        %v8110 = vpack.c.b16 %v7262, %v7254
        %v8111 = vpack.c.b16 %v7263, %v7255
        %v8112 = vpack.c.b16 %v7272, %v7264
        %v8113 = vpack.c.b16 %v7273, %v7265
        %v8114 = vpack.c.b16 %v7274, %v7266
        %v8115 = vpack.c.b16 %v7275, %v7267
        %v8116 = vpack.c.b16 %v7276, %v7268
        %v8117 = vpack.c.b16 %v7277, %v7269
        %v8118 = vpack.c.b16 %v7278, %v7270
        %v8119 = vpack.c.b16 %v7279, %v7271
        %v8120 = vpack.c.b16 %v7288, %v7280
        %v8121 = vpack.c.b16 %v7289, %v7281
        %v8122 = vpack.c.b16 %v7290, %v7282
        %v8123 = vpack.c.b16 %v7291, %v7283
        %v8124 = vpack.c.b16 %v7292, %v7284
        %v8125 = vpack.c.b16 %v7293, %v7285
        %v8126 = vpack.c.b16 %v7294, %v7286
        %v8127 = vpack.c.b16 %v7295, %v7287
        %v8128 = vpack.c.b16 %v7304, %v7296
        %v8129 = vpack.c.b16 %v7305, %v7297
        %v8130 = vpack.c.b16 %v7306, %v7298
        %v8131 = vpack.c.b16 %v7307, %v7299
        %v8132 = vpack.c.b16 %v7308, %v7300
        %v8133 = vpack.c.b16 %v7309, %v7301
        %v8134 = vpack.c.b16 %v7310, %v7302
        %v8135 = vpack.c.b16 %v7311, %v7303
        %v8136 = vpack.c.b16 %v7320, %v7312
        %v8137 = vpack.c.b16 %v7321, %v7313
        %v8138 = vpack.c.b16 %v7322, %v7314
        %v8139 = vpack.c.b16 %v7323, %v7315
        %v8140 = vpack.c.b16 %v7324, %v7316
        %v8141 = vpack.c.b16 %v7325, %v7317
        %v8142 = vpack.c.b16 %v7326, %v7318
        %v8143 = vpack.c.b16 %v7327, %v7319
        %v8144 = vpack.c.b16 %v7336, %v7328
        %v8145 = vpack.c.b16 %v7337, %v7329
        %v8146 = vpack.c.b16 %v7338, %v7330
        %v8147 = vpack.c.b16 %v7339, %v7331
        %v8148 = vpack.c.b16 %v7340, %v7332
        %v8149 = vpack.c.b16 %v7341, %v7333
        %v8150 = vpack.c.b16 %v7342, %v7334
        %v8151 = vpack.c.b16 %v7343, %v7335
        %v8152 = vpack.c.b16 %v7352, %v7344
        %v8153 = vpack.c.b16 %v7353, %v7345
        %v8154 = vpack.c.b16 %v7354, %v7346
        %v8155 = vpack.c.b16 %v7355, %v7347
        %v8156 = vpack.c.b16 %v7356, %v7348
        %v8157 = vpack.c.b16 %v7357, %v7349
        %v8158 = vpack.c.b16 %v7358, %v7350
        %v8159 = vpack.c.b16 %v7359, %v7351
        %v8160 = vpack.c.b16 %v7368, %v7360
        %v8161 = vpack.c.b16 %v7369, %v7361
        %v8162 = vpack.c.b16 %v7370, %v7362
        %v8163 = vpack.c.b16 %v7371, %v7363
        %v8164 = vpack.c.b16 %v7372, %v7364
        %v8165 = vpack.c.b16 %v7373, %v7365
        %v8166 = vpack.c.b16 %v7374, %v7366
        %v8167 = vpack.c.b16 %v7375, %v7367
        %v8168 = vpack.c.b16 %v7384, %v7376
        %v8169 = vpack.c.b16 %v7385, %v7377
        %v8170 = vpack.c.b16 %v7386, %v7378
        %v8171 = vpack.c.b16 %v7387, %v7379
        %v8172 = vpack.c.b16 %v7388, %v7380
        %v8173 = vpack.c.b16 %v7389, %v7381
        %v8174 = vpack.c.b16 %v7390, %v7382
        %v8175 = vpack.c.b16 %v7391, %v7383
        %v8176 = vpack.c.b16 %v7400, %v7392
        %v8177 = vpack.c.b16 %v7401, %v7393
        %v8178 = vpack.c.b16 %v7402, %v7394
        %v8179 = vpack.c.b16 %v7403, %v7395
        %v8180 = vpack.c.b16 %v7404, %v7396
        %v8181 = vpack.c.b16 %v7405, %v7397
        %v8182 = vpack.c.b16 %v7406, %v7398
        %v8183 = vpack.c.b16 %v7407, %v7399
        %v8184 = vpack.c.b16 %v7416, %v7408
        %v8185 = vpack.c.b16 %v7417, %v7409
        %v8186 = vpack.c.b16 %v7418, %v7410
        %v8187 = vpack.c.b16 %v7419, %v7411
        %v8188 = vpack.c.b16 %v7420, %v7412
        %v8189 = vpack.c.b16 %v7421, %v7413
        %v8190 = vpack.c.b16 %v7422, %v7414
        %v8191 = vpack.c.b16 %v7423, %v7415
        %v8192 = vpack.c.b16 %v7432, %v7424
        %v8193 = vpack.c.b16 %v7433, %v7425
        %v8194 = vpack.c.b16 %v7434, %v7426
        %v8195 = vpack.c.b16 %v7435, %v7427
        %v8196 = vpack.c.b16 %v7436, %v7428
        %v8197 = vpack.c.b16 %v7437, %v7429
        %v8198 = vpack.c.b16 %v7438, %v7430
        %v8199 = vpack.c.b16 %v7439, %v7431
        %v8200 = vpack.c.b16 %v7448, %v7440
        %v8201 = vpack.c.b16 %v7449, %v7441
        %v8202 = vpack.c.b16 %v7450, %v7442
        %v8203 = vpack.c.b16 %v7451, %v7443
        %v8204 = vpack.c.b16 %v7452, %v7444
        %v8205 = vpack.c.b16 %v7453, %v7445
        %v8206 = vpack.c.b16 %v7454, %v7446
        %v8207 = vpack.c.b16 %v7455, %v7447
        %v8208 = vpack.c.b16 %v7464, %v7456
        %v8209 = vpack.c.b16 %v7465, %v7457
        %v8210 = vpack.c.b16 %v7466, %v7458
        %v8211 = vpack.c.b16 %v7467, %v7459
        %v8212 = vpack.c.b16 %v7468, %v7460
        %v8213 = vpack.c.b16 %v7469, %v7461
        %v8214 = vpack.c.b16 %v7470, %v7462
        %v8215 = vpack.c.b16 %v7471, %v7463
        %v8216 = vpack.c.b16 %v7480, %v7472
        %v8217 = vpack.c.b16 %v7481, %v7473
        %v8218 = vpack.c.b16 %v7482, %v7474
        %v8219 = vpack.c.b16 %v7483, %v7475
        %v8220 = vpack.c.b16 %v7484, %v7476
        %v8221 = vpack.c.b16 %v7485, %v7477
        %v8222 = vpack.c.b16 %v7486, %v7478
        %v8223 = vpack.c.b16 %v7487, %v7479
        %v8224 = vpack.c.b16 %v7496, %v7488
        %v8225 = vpack.c.b16 %v7497, %v7489
        %v8226 = vpack.c.b16 %v7498, %v7490
        %v8227 = vpack.c.b16 %v7499, %v7491
        %v8228 = vpack.c.b16 %v7500, %v7492
        %v8229 = vpack.c.b16 %v7501, %v7493
        %v8230 = vpack.c.b16 %v7502, %v7494
        %v8231 = vpack.c.b16 %v7503, %v7495
        %v8232 = vpack.c.b16 %v7512, %v7504
        %v8233 = vpack.c.b16 %v7513, %v7505
        %v8234 = vpack.c.b16 %v7514, %v7506
        %v8235 = vpack.c.b16 %v7515, %v7507
        %v8236 = vpack.c.b16 %v7516, %v7508
        %v8237 = vpack.c.b16 %v7517, %v7509
        %v8238 = vpack.c.b16 %v7518, %v7510
        %v8239 = vpack.c.b16 %v7519, %v7511
        %v8240 = vpack.c.b16 %v7528, %v7520
        %v8241 = vpack.c.b16 %v7529, %v7521
        %v8242 = vpack.c.b16 %v7530, %v7522
        %v8243 = vpack.c.b16 %v7531, %v7523
        %v8244 = vpack.c.b16 %v7532, %v7524
        %v8245 = vpack.c.b16 %v7533, %v7525
        %v8246 = vpack.c.b16 %v7534, %v7526
        %v8247 = vpack.c.b16 %v7535, %v7527
        %v8248 = vpack.c.b16 %v7544, %v7536
        %v8249 = vpack.c.b16 %v7545, %v7537
        %v8250 = vpack.c.b16 %v7546, %v7538
        %v8251 = vpack.c.b16 %v7547, %v7539
        %v8252 = vpack.c.b16 %v7548, %v7540
        %v8253 = vpack.c.b16 %v7549, %v7541
        %v8254 = vpack.c.b16 %v7550, %v7542
        %v8255 = vpack.c.b16 %v7551, %v7543
        %v8256 = vpack.c.b16 %v7560, %v7552
        %v8257 = vpack.c.b16 %v7561, %v7553
        %v8258 = vpack.c.b16 %v7562, %v7554
        %v8259 = vpack.c.b16 %v7563, %v7555
        %v8260 = vpack.c.b16 %v7564, %v7556
        %v8261 = vpack.c.b16 %v7565, %v7557
        %v8262 = vpack.c.b16 %v7566, %v7558
        %v8263 = vpack.c.b16 %v7567, %v7559
        %v8264 = vpack.c.b16 %v7576, %v7568
        %v8265 = vpack.c.b16 %v7577, %v7569
        %v8266 = vpack.c.b16 %v7578, %v7570
        %v8267 = vpack.c.b16 %v7579, %v7571
        %v8268 = vpack.c.b16 %v7580, %v7572
        %v8269 = vpack.c.b16 %v7581, %v7573
        %v8270 = vpack.c.b16 %v7582, %v7574
        %v8271 = vpack.c.b16 %v7583, %v7575
        %v8272 = vpack.c.b16 %v7592, %v7584
        %v8273 = vpack.c.b16 %v7593, %v7585
        %v8274 = vpack.c.b16 %v7594, %v7586
        %v8275 = vpack.c.b16 %v7595, %v7587
        %v8276 = vpack.c.b16 %v7596, %v7588
        %v8277 = vpack.c.b16 %v7597, %v7589
        %v8278 = vpack.c.b16 %v7598, %v7590
        %v8279 = vpack.c.b16 %v7599, %v7591
        %v8280 = vpack.c.b16 %v7608, %v7600
        %v8281 = vpack.c.b16 %v7609, %v7601
        %v8282 = vpack.c.b16 %v7610, %v7602
        %v8283 = vpack.c.b16 %v7611, %v7603
        %v8284 = vpack.c.b16 %v7612, %v7604
        %v8285 = vpack.c.b16 %v7613, %v7605
        %v8286 = vpack.c.b16 %v7614, %v7606
        %v8287 = vpack.c.b16 %v7615, %v7607
        %v8288 = vpack.c.b16 %v7624, %v7616
        %v8289 = vpack.c.b16 %v7625, %v7617
        %v8290 = vpack.c.b16 %v7626, %v7618
        %v8291 = vpack.c.b16 %v7627, %v7619
        %v8292 = vpack.c.b16 %v7628, %v7620
        %v8293 = vpack.c.b16 %v7629, %v7621
        %v8294 = vpack.c.b16 %v7630, %v7622
        %v8295 = vpack.c.b16 %v7631, %v7623
        %v8296 = vpack.c.b16 %v7640, %v7632
        %v8297 = vpack.c.b16 %v7641, %v7633
        %v8298 = vpack.c.b16 %v7642, %v7634
        %v8299 = vpack.c.b16 %v7643, %v7635
        %v8300 = vpack.c.b16 %v7644, %v7636
        %v8301 = vpack.c.b16 %v7645, %v7637
        %v8302 = vpack.c.b16 %v7646, %v7638
        %v8303 = vpack.c.b16 %v7647, %v7639
        %v8304 = vpack.c.b16 %v7656, %v7648
        %v8305 = vpack.c.b16 %v7657, %v7649
        %v8306 = vpack.c.b16 %v7658, %v7650
        %v8307 = vpack.c.b16 %v7659, %v7651
        %v8308 = vpack.c.b16 %v7660, %v7652
        %v8309 = vpack.c.b16 %v7661, %v7653
        %v8310 = vpack.c.b16 %v7662, %v7654
        %v8311 = vpack.c.b16 %v7663, %v7655
        %v8312 = vpack.c.b16 %v7672, %v7664
        %v8313 = vpack.c.b16 %v7673, %v7665
        %v8314 = vpack.c.b16 %v7674, %v7666
        %v8315 = vpack.c.b16 %v7675, %v7667
        %v8316 = vpack.c.b16 %v7676, %v7668
        %v8317 = vpack.c.b16 %v7677, %v7669
        %v8318 = vpack.c.b16 %v7678, %v7670
        %v8319 = vpack.c.b16 %v7679, %v7671
        %v8320 = vpack.c.b16 %v7688, %v7680
        %v8321 = vpack.c.b16 %v7689, %v7681
        %v8322 = vpack.c.b16 %v7690, %v7682
        %v8323 = vpack.c.b16 %v7691, %v7683
        %v8324 = vpack.c.b16 %v7692, %v7684
        %v8325 = vpack.c.b16 %v7693, %v7685
        %v8326 = vpack.c.b16 %v7694, %v7686
        %v8327 = vpack.c.b16 %v7695, %v7687
        %v8328 = vpack.c.b16 %v7704, %v7696
        %v8329 = vpack.c.b16 %v7705, %v7697
        %v8330 = vpack.c.b16 %v7706, %v7698
        %v8331 = vpack.c.b16 %v7707, %v7699
        %v8332 = vpack.c.b16 %v7708, %v7700
        %v8333 = vpack.c.b16 %v7709, %v7701
        %v8334 = vpack.c.b16 %v7710, %v7702
        %v8335 = vpack.c.b16 %v7711, %v7703
        %v8336 = vpack.c.b16 %v7720, %v7712
        %v8337 = vpack.c.b16 %v7721, %v7713
        %v8338 = vpack.c.b16 %v7722, %v7714
        %v8339 = vpack.c.b16 %v7723, %v7715
        %v8340 = vpack.c.b16 %v7724, %v7716
        %v8341 = vpack.c.b16 %v7725, %v7717
        %v8342 = vpack.c.b16 %v7726, %v7718
        %v8343 = vpack.c.b16 %v7727, %v7719
        %v8344 = vpack.c.b16 %v7736, %v7728
        %v8345 = vpack.c.b16 %v7737, %v7729
        %v8346 = vpack.c.b16 %v7738, %v7730
        %v8347 = vpack.c.b16 %v7739, %v7731
        %v8348 = vpack.c.b16 %v7740, %v7732
        %v8349 = vpack.c.b16 %v7741, %v7733
        %v8350 = vpack.c.b16 %v7742, %v7734
        %v8351 = vpack.c.b16 %v7743, %v7735
        %v8352 = vpack.c.b16 %v7752, %v7744
        %v8353 = vpack.c.b16 %v7753, %v7745
        %v8354 = vpack.c.b16 %v7754, %v7746
        %v8355 = vpack.c.b16 %v7755, %v7747
        %v8356 = vpack.c.b16 %v7756, %v7748
        %v8357 = vpack.c.b16 %v7757, %v7749
        %v8358 = vpack.c.b16 %v7758, %v7750
        %v8359 = vpack.c.b16 %v7759, %v7751
        %v8360 = vpack.c.b16 %v7768, %v7760
        %v8361 = vpack.c.b16 %v7769, %v7761
        %v8362 = vpack.c.b16 %v7770, %v7762
        %v8363 = vpack.c.b16 %v7771, %v7763
        %v8364 = vpack.c.b16 %v7772, %v7764
        %v8365 = vpack.c.b16 %v7773, %v7765
        %v8366 = vpack.c.b16 %v7774, %v7766
        %v8367 = vpack.c.b16 %v7775, %v7767
        %v8368 = vpack.c.b16 %v7784, %v7776
        %v8369 = vpack.c.b16 %v7785, %v7777
        %v8370 = vpack.c.b16 %v7786, %v7778
        %v8371 = vpack.c.b16 %v7787, %v7779
        %v8372 = vpack.c.b16 %v7788, %v7780
        %v8373 = vpack.c.b16 %v7789, %v7781
        %v8374 = vpack.c.b16 %v7790, %v7782
        %v8375 = vpack.c.b16 %v7791, %v7783
        %v8376 = vpack.c.b16 %v7800, %v7792
        %v8377 = vpack.c.b16 %v7801, %v7793
        %v8378 = vpack.c.b16 %v7802, %v7794
        %v8379 = vpack.c.b16 %v7803, %v7795
        %v8380 = vpack.c.b16 %v7804, %v7796
        %v8381 = vpack.c.b16 %v7805, %v7797
        %v8382 = vpack.c.b16 %v7806, %v7798
        %v8383 = vpack.c.b16 %v7807, %v7799
        %v8384 = vpack.c.b16 %v7816, %v7808
        %v8385 = vpack.c.b16 %v7817, %v7809
        %v8386 = vpack.c.b16 %v7818, %v7810
        %v8387 = vpack.c.b16 %v7819, %v7811
        %v8388 = vpack.c.b16 %v7820, %v7812
        %v8389 = vpack.c.b16 %v7821, %v7813
        %v8390 = vpack.c.b16 %v7822, %v7814
        %v8391 = vpack.c.b16 %v7823, %v7815
        %v8392 = vpack.c.b16 %v7832, %v7824
        %v8393 = vpack.c.b16 %v7833, %v7825
        %v8394 = vpack.c.b16 %v7834, %v7826
        %v8395 = vpack.c.b16 %v7835, %v7827
        %v8396 = vpack.c.b16 %v7836, %v7828
        %v8397 = vpack.c.b16 %v7837, %v7829
        %v8398 = vpack.c.b16 %v7838, %v7830
        %v8399 = vpack.c.b16 %v7839, %v7831
        %v8400 = vpack.c.b16 %v7848, %v7840
        %v8401 = vpack.c.b16 %v7849, %v7841
        %v8402 = vpack.c.b16 %v7850, %v7842
        %v8403 = vpack.c.b16 %v7851, %v7843
        %v8404 = vpack.c.b16 %v7852, %v7844
        %v8405 = vpack.c.b16 %v7853, %v7845
        %v8406 = vpack.c.b16 %v7854, %v7846
        %v8407 = vpack.c.b16 %v7855, %v7847
        %v8408 = vpack.c.b16 %v7864, %v7856
        %v8409 = vpack.c.b16 %v7865, %v7857
        %v8410 = vpack.c.b16 %v7866, %v7858
        %v8411 = vpack.c.b16 %v7867, %v7859
        %v8412 = vpack.c.b16 %v7868, %v7860
        %v8413 = vpack.c.b16 %v7869, %v7861
        %v8414 = vpack.c.b16 %v7870, %v7862
        %v8415 = vpack.c.b16 %v7871, %v7863
        %v8416 = vpack.c.b16 %v7880, %v7872
        %v8417 = vpack.c.b16 %v7881, %v7873
        %v8418 = vpack.c.b16 %v7882, %v7874
        %v8419 = vpack.c.b16 %v7883, %v7875
        %v8420 = vpack.c.b16 %v7884, %v7876
        %v8421 = vpack.c.b16 %v7885, %v7877
        %v8422 = vpack.c.b16 %v7886, %v7878
        %v8423 = vpack.c.b16 %v7887, %v7879
        %v8424 = vpack.c.b16 %v7896, %v7888
        %v8425 = vpack.c.b16 %v7897, %v7889
        %v8426 = vpack.c.b16 %v7898, %v7890
        %v8427 = vpack.c.b16 %v7899, %v7891
        %v8428 = vpack.c.b16 %v7900, %v7892
        %v8429 = vpack.c.b16 %v7901, %v7893
        %v8430 = vpack.c.b16 %v7902, %v7894
        %v8431 = vpack.c.b16 %v7903, %v7895
        %v8432 = vpack.c.b16 %v7912, %v7904
        %v8433 = vpack.c.b16 %v7913, %v7905
        %v8434 = vpack.c.b16 %v7914, %v7906
        %v8435 = vpack.c.b16 %v7915, %v7907
        %v8436 = vpack.c.b16 %v7916, %v7908
        %v8437 = vpack.c.b16 %v7917, %v7909
        %v8438 = vpack.c.b16 %v7918, %v7910
        %v8439 = vpack.c.b16 %v7919, %v7911
        %v8440 = vpack.c.b16 %v7928, %v7920
        %v8441 = vpack.c.b16 %v7929, %v7921
        %v8442 = vpack.c.b16 %v7930, %v7922
        %v8443 = vpack.c.b16 %v7931, %v7923
        %v8444 = vpack.c.b16 %v7932, %v7924
        %v8445 = vpack.c.b16 %v7933, %v7925
        %v8446 = vpack.c.b16 %v7934, %v7926
        %v8447 = vpack.c.b16 %v7935, %v7927
        %8960 = vmatprep.subr.bf16.mxu0 %v7993
        %8961 = vmatpush1.bf16.msra.mxu0 %v7992
        %8962 = vmatprep.subr.bf16.mxu0 %v7985
        %8963 = vmatpush1.bf16.msra.mxu0 %v7984
        %8964 = vmatprep.subr.bf16.mxu0 %v7977
        %8965 = vmatpush1.bf16.msra.mxu0 %v7976
        %8966 = vmatprep.subr.bf16.mxu0 %v7969
        %8967 = vmatpush1.bf16.msra.mxu0 %v7968
        %8968 = vmatprep.subr.bf16.mxu0 %v7961
        %8969 = vmatpush1.bf16.msra.mxu0 %v7960
        %8970 = vmatprep.subr.bf16.mxu0 %v7953
        %8971 = vmatpush1.bf16.msra.mxu0 %v7952
        %8972 = vmatprep.subr.bf16.mxu0 %v7945
        %8973 = vmatpush1.bf16.msra.mxu0 %v7944
        %8974 = vmatprep.subr.bf16.mxu0 %v7937
        %8975 = vmatpush1.bf16.msra.mxu0 %v7936
        %8976 = vmatprep.subr.bf16.mxu0 %v8057
        %8977 = vmatpush2.bf16.msra.mxu0 %v8056
        %8978 = vmatprep.subr.bf16.mxu0 %v8049
        %8979 = vmatpush2.bf16.msra.mxu0 %v8048
        %8980 = vmatprep.subr.bf16.mxu0 %v8041
        %8981 = vmatpush2.bf16.msra.mxu0 %v8040
        %8982 = vmatprep.subr.bf16.mxu0 %v8033
        %8983 = vmatpush2.bf16.msra.mxu0 %v8032
        %8984 = vmatprep.subr.bf16.mxu0 %v8025
        %8985 = vmatpush2.bf16.msra.mxu0 %v8024
        %8986 = vmatprep.subr.bf16.mxu0 %v8017
        %8987 = vmatpush2.bf16.msra.mxu0 %v8016
        %8988 = vmatprep.subr.bf16.mxu0 %v8009
        %8989 = vmatpush2.bf16.msra.mxu0 %v8008
        %8990 = vmatprep.subr.bf16.mxu0 %v8001
        %8991 = vmatpush2.bf16.msra.mxu0 %v8000
        %8992 = vmatprep.mubr.bf16.mxu0 %v5839
        %8993 = vmatmul.mubr.bf16.gmra.mxu0 %v5838
        %v8994 = vpop.f32.mrf.mxu0
        %v8995 = vadd.f32 %v6363, %v8994
        %v8996 = vpop.f32.mrf.mxu0
        %v8997 = vadd.f32 %v6367, %v8996
        %v8998 = vpop.f32.mrf.mxu0
        %v8999 = vadd.f32 %v6363, %v8998
        %v9000 = vpop.f32.mrf.mxu0
        %v9001 = vadd.f32 %v6367, %v9000
        %9002 = vdwg.mxu0
        %9003 = vmatprep.subr.bf16.mxu0 %v8121
        %9004 = vmatpush1.bf16.msra.mxu0 %v8120
        %9005 = vmatprep.subr.bf16.mxu0 %v8113
        %9006 = vmatpush1.bf16.msra.mxu0 %v8112
        %9007 = vmatprep.subr.bf16.mxu0 %v8105
        %9008 = vmatpush1.bf16.msra.mxu0 %v8104
        %9009 = vmatprep.subr.bf16.mxu0 %v8097
        %9010 = vmatpush1.bf16.msra.mxu0 %v8096
        %9011 = vmatprep.subr.bf16.mxu0 %v8089
        %9012 = vmatpush1.bf16.msra.mxu0 %v8088
        %9013 = vmatprep.subr.bf16.mxu0 %v8081
        %9014 = vmatpush1.bf16.msra.mxu0 %v8080
        %9015 = vmatprep.subr.bf16.mxu0 %v8073
        %9016 = vmatpush1.bf16.msra.mxu0 %v8072
        %9017 = vmatprep.subr.bf16.mxu0 %v8065
        %9018 = vmatpush1.bf16.msra.mxu0 %v8064
        %9019 = vmatprep.subr.bf16.mxu0 %v8185
        %9020 = vmatpush2.bf16.msra.mxu0 %v8184
        %9021 = vmatprep.subr.bf16.mxu0 %v8177
        %9022 = vmatpush2.bf16.msra.mxu0 %v8176
        %9023 = vmatprep.subr.bf16.mxu0 %v8169
        %9024 = vmatpush2.bf16.msra.mxu0 %v8168
        %9025 = vmatprep.subr.bf16.mxu0 %v8161
        %9026 = vmatpush2.bf16.msra.mxu0 %v8160
        %9027 = vmatprep.subr.bf16.mxu0 %v8153
        %9028 = vmatpush2.bf16.msra.mxu0 %v8152
        %9029 = vmatprep.subr.bf16.mxu0 %v8145
        %9030 = vmatpush2.bf16.msra.mxu0 %v8144
        %9031 = vmatprep.subr.bf16.mxu0 %v8137
        %9032 = vmatpush2.bf16.msra.mxu0 %v8136
        %9033 = vmatprep.subr.bf16.mxu0 %v8129
        %9034 = vmatpush2.bf16.msra.mxu0 %v8128
        %9035 = vmatprep.mubr.bf16.mxu0 %v5841
        %9036 = vmatmul.mubr.bf16.gmra.mxu0 %v5840
        %v9037 = vpop.f32.mrf.mxu0
        %v9038 = vadd.f32 %v8995, %v9037
        %v9039 = vpop.f32.mrf.mxu0
        %v9040 = vadd.f32 %v8997, %v9039
        %v9041 = vpop.f32.mrf.mxu0
        %v9042 = vadd.f32 %v8999, %v9041
        %v9043 = vpop.f32.mrf.mxu0
        %v9044 = vadd.f32 %v9001, %v9043
        %9045 = vdwg.mxu0
        %9046 = vmatprep.subr.bf16.mxu0 %v8249
        %9047 = vmatpush1.bf16.msra.mxu0 %v8248
        %9048 = vmatprep.subr.bf16.mxu0 %v8241
        %9049 = vmatpush1.bf16.msra.mxu0 %v8240
        %9050 = vmatprep.subr.bf16.mxu0 %v8233
        %9051 = vmatpush1.bf16.msra.mxu0 %v8232
        %9052 = vmatprep.subr.bf16.mxu0 %v8225
        %9053 = vmatpush1.bf16.msra.mxu0 %v8224
        %9054 = vmatprep.subr.bf16.mxu0 %v8217
        %9055 = vmatpush1.bf16.msra.mxu0 %v8216
        %9056 = vmatprep.subr.bf16.mxu0 %v8209
        %9057 = vmatpush1.bf16.msra.mxu0 %v8208
        %9058 = vmatprep.subr.bf16.mxu0 %v8201
        %9059 = vmatpush1.bf16.msra.mxu0 %v8200
        %9060 = vmatprep.subr.bf16.mxu0 %v8193
        %9061 = vmatpush1.bf16.msra.mxu0 %v8192
        %9062 = vmatprep.subr.bf16.mxu0 %v8313
        %9063 = vmatpush2.bf16.msra.mxu0 %v8312
        %9064 = vmatprep.subr.bf16.mxu0 %v8305
        %9065 = vmatpush2.bf16.msra.mxu0 %v8304
        %9066 = vmatprep.subr.bf16.mxu0 %v8297
        %9067 = vmatpush2.bf16.msra.mxu0 %v8296
        %9068 = vmatprep.subr.bf16.mxu0 %v8289
        %9069 = vmatpush2.bf16.msra.mxu0 %v8288
        %9070 = vmatprep.subr.bf16.mxu0 %v8281
        %9071 = vmatpush2.bf16.msra.mxu0 %v8280
        %9072 = vmatprep.subr.bf16.mxu0 %v8273
        %9073 = vmatpush2.bf16.msra.mxu0 %v8272
        %9074 = vmatprep.subr.bf16.mxu0 %v8265
        %9075 = vmatpush2.bf16.msra.mxu0 %v8264
        %9076 = vmatprep.subr.bf16.mxu0 %v8257
        %9077 = vmatpush2.bf16.msra.mxu0 %v8256
        %9078 = vmatprep.mubr.bf16.mxu0 %v5843
        %9079 = vmatmul.mubr.bf16.gmra.mxu0 %v5842
        %v9080 = vpop.f32.mrf.mxu0
        %v9081 = vadd.f32 %v9038, %v9080
        %v9082 = vpop.f32.mrf.mxu0
        %v9083 = vadd.f32 %v9040, %v9082
        %v9084 = vpop.f32.mrf.mxu0
        %v9085 = vadd.f32 %v9042, %v9084
        %v9086 = vpop.f32.mrf.mxu0
        %v9087 = vadd.f32 %v9044, %v9086
        %9088 = vdwg.mxu0
        %9089 = vmatprep.subr.bf16.mxu0 %v8377
        %9090 = vmatpush1.bf16.msra.mxu0 %v8376
        %9091 = vmatprep.subr.bf16.mxu0 %v8369
        %9092 = vmatpush1.bf16.msra.mxu0 %v8368
        %9093 = vmatprep.subr.bf16.mxu0 %v8361
        %9094 = vmatpush1.bf16.msra.mxu0 %v8360
        %9095 = vmatprep.subr.bf16.mxu0 %v8353
        %9096 = vmatpush1.bf16.msra.mxu0 %v8352
        %9097 = vmatprep.subr.bf16.mxu0 %v8345
        %9098 = vmatpush1.bf16.msra.mxu0 %v8344
        %9099 = vmatprep.subr.bf16.mxu0 %v8337
        %9100 = vmatpush1.bf16.msra.mxu0 %v8336
        %9101 = vmatprep.subr.bf16.mxu0 %v8329
        %9102 = vmatpush1.bf16.msra.mxu0 %v8328
        %9103 = vmatprep.subr.bf16.mxu0 %v8321
        %9104 = vmatpush1.bf16.msra.mxu0 %v8320
        %9105 = vmatprep.subr.bf16.mxu0 %v8441
        %9106 = vmatpush2.bf16.msra.mxu0 %v8440
        %9107 = vmatprep.subr.bf16.mxu0 %v8433
        %9108 = vmatpush2.bf16.msra.mxu0 %v8432
        %9109 = vmatprep.subr.bf16.mxu0 %v8425
        %9110 = vmatpush2.bf16.msra.mxu0 %v8424
        %9111 = vmatprep.subr.bf16.mxu0 %v8417
        %9112 = vmatpush2.bf16.msra.mxu0 %v8416
        %9113 = vmatprep.subr.bf16.mxu0 %v8409
        %9114 = vmatpush2.bf16.msra.mxu0 %v8408
        %9115 = vmatprep.subr.bf16.mxu0 %v8401
        %9116 = vmatpush2.bf16.msra.mxu0 %v8400
        %9117 = vmatprep.subr.bf16.mxu0 %v8393
        %9118 = vmatpush2.bf16.msra.mxu0 %v8392
        %9119 = vmatprep.subr.bf16.mxu0 %v8385
        %9120 = vmatpush2.bf16.msra.mxu0 %v8384
        %9121 = vmatprep.mubr.bf16.mxu0 %v5845
        %9122 = vmatmul.mubr.bf16.gmra.mxu0 %v5844
        %v9123 = vpop.f32.mrf.mxu0
        %v9124 = vadd.f32 %v9081, %v9123
        %v9125 = vpop.f32.mrf.mxu0
        %v9126 = vadd.f32 %v9083, %v9125
        %v9127 = vpop.f32.mrf.mxu0
        %v9128 = vadd.f32 %v9085, %v9127
        %v9129 = vpop.f32.mrf.mxu0
        %v9130 = vadd.f32 %v9087, %v9129
        %9131 = vdwg.mxu0
        %9132 = vmatprep.subr.bf16.mxu0 %v7995
        %9133 = vmatpush1.bf16.msra.mxu0 %v7994
        %9134 = vmatprep.subr.bf16.mxu0 %v7987
        %9135 = vmatpush1.bf16.msra.mxu0 %v7986
        %9136 = vmatprep.subr.bf16.mxu0 %v7979
        %9137 = vmatpush1.bf16.msra.mxu0 %v7978
        %9138 = vmatprep.subr.bf16.mxu0 %v7971
        %9139 = vmatpush1.bf16.msra.mxu0 %v7970
        %9140 = vmatprep.subr.bf16.mxu0 %v7963
        %9141 = vmatpush1.bf16.msra.mxu0 %v7962
        %9142 = vmatprep.subr.bf16.mxu0 %v7955
        %9143 = vmatpush1.bf16.msra.mxu0 %v7954
        %9144 = vmatprep.subr.bf16.mxu0 %v7947
        %9145 = vmatpush1.bf16.msra.mxu0 %v7946
        %9146 = vmatprep.subr.bf16.mxu0 %v7939
        %9147 = vmatpush1.bf16.msra.mxu0 %v7938
        %9148 = vmatprep.subr.bf16.mxu0 %v8059
        %9149 = vmatpush2.bf16.msra.mxu0 %v8058
        %9150 = vmatprep.subr.bf16.mxu0 %v8051
        %9151 = vmatpush2.bf16.msra.mxu0 %v8050
        %9152 = vmatprep.subr.bf16.mxu0 %v8043
        %9153 = vmatpush2.bf16.msra.mxu0 %v8042
        %9154 = vmatprep.subr.bf16.mxu0 %v8035
        %9155 = vmatpush2.bf16.msra.mxu0 %v8034
        %9156 = vmatprep.subr.bf16.mxu0 %v8027
        %9157 = vmatpush2.bf16.msra.mxu0 %v8026
        %9158 = vmatprep.subr.bf16.mxu0 %v8019
        %9159 = vmatpush2.bf16.msra.mxu0 %v8018
        %9160 = vmatprep.subr.bf16.mxu0 %v8011
        %9161 = vmatpush2.bf16.msra.mxu0 %v8010
        %9162 = vmatprep.subr.bf16.mxu0 %v8003
        %9163 = vmatpush2.bf16.msra.mxu0 %v8002
        %9164 = vmatprep.mubr.bf16.mxu0 %v5839
        %9165 = vmatmul.mubr.bf16.gmra.mxu0 %v5838
        %v9166 = vpop.f32.mrf.mxu0
        %v9167 = vadd.f32 %v6371, %v9166
        %v9168 = vpop.f32.mrf.mxu0
        %v9169 = vadd.f32 %v6375, %v9168
        %v9170 = vpop.f32.mrf.mxu0
        %v9171 = vadd.f32 %v6371, %v9170
        %v9172 = vpop.f32.mrf.mxu0
        %v9173 = vadd.f32 %v6375, %v9172
        %9174 = vdwg.mxu0
        %9175 = vmatprep.subr.bf16.mxu0 %v8123
        %9176 = vmatpush1.bf16.msra.mxu0 %v8122
        %9177 = vmatprep.subr.bf16.mxu0 %v8115
        %9178 = vmatpush1.bf16.msra.mxu0 %v8114
        %9179 = vmatprep.subr.bf16.mxu0 %v8107
        %9180 = vmatpush1.bf16.msra.mxu0 %v8106
        %9181 = vmatprep.subr.bf16.mxu0 %v8099
        %9182 = vmatpush1.bf16.msra.mxu0 %v8098
        %9183 = vmatprep.subr.bf16.mxu0 %v8091
        %9184 = vmatpush1.bf16.msra.mxu0 %v8090
        %9185 = vmatprep.subr.bf16.mxu0 %v8083
        %9186 = vmatpush1.bf16.msra.mxu0 %v8082
        %9187 = vmatprep.subr.bf16.mxu0 %v8075
        %9188 = vmatpush1.bf16.msra.mxu0 %v8074
        %9189 = vmatprep.subr.bf16.mxu0 %v8067
        %9190 = vmatpush1.bf16.msra.mxu0 %v8066
        %9191 = vmatprep.subr.bf16.mxu0 %v8187
        %9192 = vmatpush2.bf16.msra.mxu0 %v8186
        %9193 = vmatprep.subr.bf16.mxu0 %v8179
        %9194 = vmatpush2.bf16.msra.mxu0 %v8178
        %9195 = vmatprep.subr.bf16.mxu0 %v8171
        %9196 = vmatpush2.bf16.msra.mxu0 %v8170
        %9197 = vmatprep.subr.bf16.mxu0 %v8163
        %9198 = vmatpush2.bf16.msra.mxu0 %v8162
        %9199 = vmatprep.subr.bf16.mxu0 %v8155
        %9200 = vmatpush2.bf16.msra.mxu0 %v8154
        %9201 = vmatprep.subr.bf16.mxu0 %v8147
        %9202 = vmatpush2.bf16.msra.mxu0 %v8146
        %9203 = vmatprep.subr.bf16.mxu0 %v8139
        %9204 = vmatpush2.bf16.msra.mxu0 %v8138
        %9205 = vmatprep.subr.bf16.mxu0 %v8131
        %9206 = vmatpush2.bf16.msra.mxu0 %v8130
        %9207 = vmatprep.mubr.bf16.mxu0 %v5841
        %9208 = vmatmul.mubr.bf16.gmra.mxu0 %v5840
        %v9209 = vpop.f32.mrf.mxu0
        %v9210 = vadd.f32 %v9167, %v9209
        %v9211 = vpop.f32.mrf.mxu0
        %v9212 = vadd.f32 %v9169, %v9211
        %v9213 = vpop.f32.mrf.mxu0
        %v9214 = vadd.f32 %v9171, %v9213
        %v9215 = vpop.f32.mrf.mxu0
        %v9216 = vadd.f32 %v9173, %v9215
        %9217 = vdwg.mxu0
        %9218 = vmatprep.subr.bf16.mxu0 %v8251
        %9219 = vmatpush1.bf16.msra.mxu0 %v8250
        %9220 = vmatprep.subr.bf16.mxu0 %v8243
        %9221 = vmatpush1.bf16.msra.mxu0 %v8242
        %9222 = vmatprep.subr.bf16.mxu0 %v8235
        %9223 = vmatpush1.bf16.msra.mxu0 %v8234
        %9224 = vmatprep.subr.bf16.mxu0 %v8227
        %9225 = vmatpush1.bf16.msra.mxu0 %v8226
        %9226 = vmatprep.subr.bf16.mxu0 %v8219
        %9227 = vmatpush1.bf16.msra.mxu0 %v8218
        %9228 = vmatprep.subr.bf16.mxu0 %v8211
        %9229 = vmatpush1.bf16.msra.mxu0 %v8210
        %9230 = vmatprep.subr.bf16.mxu0 %v8203
        %9231 = vmatpush1.bf16.msra.mxu0 %v8202
        %9232 = vmatprep.subr.bf16.mxu0 %v8195
        %9233 = vmatpush1.bf16.msra.mxu0 %v8194
        %9234 = vmatprep.subr.bf16.mxu0 %v8315
        %9235 = vmatpush2.bf16.msra.mxu0 %v8314
        %9236 = vmatprep.subr.bf16.mxu0 %v8307
        %9237 = vmatpush2.bf16.msra.mxu0 %v8306
        %9238 = vmatprep.subr.bf16.mxu0 %v8299
        %9239 = vmatpush2.bf16.msra.mxu0 %v8298
        %9240 = vmatprep.subr.bf16.mxu0 %v8291
        %9241 = vmatpush2.bf16.msra.mxu0 %v8290
        %9242 = vmatprep.subr.bf16.mxu0 %v8283
        %9243 = vmatpush2.bf16.msra.mxu0 %v8282
        %9244 = vmatprep.subr.bf16.mxu0 %v8275
        %9245 = vmatpush2.bf16.msra.mxu0 %v8274
        %9246 = vmatprep.subr.bf16.mxu0 %v8267
        %9247 = vmatpush2.bf16.msra.mxu0 %v8266
        %9248 = vmatprep.subr.bf16.mxu0 %v8259
        %9249 = vmatpush2.bf16.msra.mxu0 %v8258
        %9250 = vmatprep.mubr.bf16.mxu0 %v5843
        %9251 = vmatmul.mubr.bf16.gmra.mxu0 %v5842
        %v9252 = vpop.f32.mrf.mxu0
        %v9253 = vadd.f32 %v9210, %v9252
        %v9254 = vpop.f32.mrf.mxu0
        %v9255 = vadd.f32 %v9212, %v9254
        %v9256 = vpop.f32.mrf.mxu0
        %v9257 = vadd.f32 %v9214, %v9256
        %v9258 = vpop.f32.mrf.mxu0
        %v9259 = vadd.f32 %v9216, %v9258
        %9260 = vdwg.mxu0
        %9261 = vmatprep.subr.bf16.mxu0 %v8379
        %9262 = vmatpush1.bf16.msra.mxu0 %v8378
        %9263 = vmatprep.subr.bf16.mxu0 %v8371
        %9264 = vmatpush1.bf16.msra.mxu0 %v8370
        %9265 = vmatprep.subr.bf16.mxu0 %v8363
        %9266 = vmatpush1.bf16.msra.mxu0 %v8362
        %9267 = vmatprep.subr.bf16.mxu0 %v8355
        %9268 = vmatpush1.bf16.msra.mxu0 %v8354
        %9269 = vmatprep.subr.bf16.mxu0 %v8347
        %9270 = vmatpush1.bf16.msra.mxu0 %v8346
        %9271 = vmatprep.subr.bf16.mxu0 %v8339
        %9272 = vmatpush1.bf16.msra.mxu0 %v8338
        %9273 = vmatprep.subr.bf16.mxu0 %v8331
        %9274 = vmatpush1.bf16.msra.mxu0 %v8330
        %9275 = vmatprep.subr.bf16.mxu0 %v8323
        %9276 = vmatpush1.bf16.msra.mxu0 %v8322
        %9277 = vmatprep.subr.bf16.mxu0 %v8443
        %9278 = vmatpush2.bf16.msra.mxu0 %v8442
        %9279 = vmatprep.subr.bf16.mxu0 %v8435
        %9280 = vmatpush2.bf16.msra.mxu0 %v8434
        %9281 = vmatprep.subr.bf16.mxu0 %v8427
        %9282 = vmatpush2.bf16.msra.mxu0 %v8426
        %9283 = vmatprep.subr.bf16.mxu0 %v8419
        %9284 = vmatpush2.bf16.msra.mxu0 %v8418
        %9285 = vmatprep.subr.bf16.mxu0 %v8411
        %9286 = vmatpush2.bf16.msra.mxu0 %v8410
        %9287 = vmatprep.subr.bf16.mxu0 %v8403
        %9288 = vmatpush2.bf16.msra.mxu0 %v8402
        %9289 = vmatprep.subr.bf16.mxu0 %v8395
        %9290 = vmatpush2.bf16.msra.mxu0 %v8394
        %9291 = vmatprep.subr.bf16.mxu0 %v8387
        %9292 = vmatpush2.bf16.msra.mxu0 %v8386
        %9293 = vmatprep.mubr.bf16.mxu0 %v5845
        %9294 = vmatmul.mubr.bf16.gmra.mxu0 %v5844
        %v9295 = vpop.f32.mrf.mxu0
        %v9296 = vadd.f32 %v9253, %v9295
        %v9297 = vpop.f32.mrf.mxu0
        %v9298 = vadd.f32 %v9255, %v9297
        %v9299 = vpop.f32.mrf.mxu0
        %v9300 = vadd.f32 %v9257, %v9299
        %v9301 = vpop.f32.mrf.mxu0
        %v9302 = vadd.f32 %v9259, %v9301
        %9303 = vdwg.mxu0
        %9304 = vmatprep.subr.bf16.mxu0 %v7997
        %9305 = vmatpush1.bf16.msra.mxu0 %v7996
        %9306 = vmatprep.subr.bf16.mxu0 %v7989
        %9307 = vmatpush1.bf16.msra.mxu0 %v7988
        %9308 = vmatprep.subr.bf16.mxu0 %v7981
        %9309 = vmatpush1.bf16.msra.mxu0 %v7980
        %9310 = vmatprep.subr.bf16.mxu0 %v7973
        %9311 = vmatpush1.bf16.msra.mxu0 %v7972
        %9312 = vmatprep.subr.bf16.mxu0 %v7965
        %9313 = vmatpush1.bf16.msra.mxu0 %v7964
        %9314 = vmatprep.subr.bf16.mxu0 %v7957
        %9315 = vmatpush1.bf16.msra.mxu0 %v7956
        %9316 = vmatprep.subr.bf16.mxu0 %v7949
        %9317 = vmatpush1.bf16.msra.mxu0 %v7948
        %9318 = vmatprep.subr.bf16.mxu0 %v7941
        %9319 = vmatpush1.bf16.msra.mxu0 %v7940
        %9320 = vmatprep.subr.bf16.mxu0 %v8061
        %9321 = vmatpush2.bf16.msra.mxu0 %v8060
        %9322 = vmatprep.subr.bf16.mxu0 %v8053
        %9323 = vmatpush2.bf16.msra.mxu0 %v8052
        %9324 = vmatprep.subr.bf16.mxu0 %v8045
        %9325 = vmatpush2.bf16.msra.mxu0 %v8044
        %9326 = vmatprep.subr.bf16.mxu0 %v8037
        %9327 = vmatpush2.bf16.msra.mxu0 %v8036
        %9328 = vmatprep.subr.bf16.mxu0 %v8029
        %9329 = vmatpush2.bf16.msra.mxu0 %v8028
        %9330 = vmatprep.subr.bf16.mxu0 %v8021
        %9331 = vmatpush2.bf16.msra.mxu0 %v8020
        %9332 = vmatprep.subr.bf16.mxu0 %v8013
        %9333 = vmatpush2.bf16.msra.mxu0 %v8012
        %9334 = vmatprep.subr.bf16.mxu0 %v8005
        %9335 = vmatpush2.bf16.msra.mxu0 %v8004
        %9336 = vmatprep.mubr.bf16.mxu0 %v5839
        %9337 = vmatmul.mubr.bf16.gmra.mxu0 %v5838
        %v9338 = vpop.f32.mrf.mxu0
        %v9339 = vadd.f32 %v6379, %v9338
        %v9340 = vpop.f32.mrf.mxu0
        %v9341 = vadd.f32 %v6383, %v9340
        %v9342 = vpop.f32.mrf.mxu0
        %v9343 = vadd.f32 %v6379, %v9342
        %v9344 = vpop.f32.mrf.mxu0
        %v9345 = vadd.f32 %v6383, %v9344
        %9346 = vdwg.mxu0
        %9347 = vmatprep.subr.bf16.mxu0 %v8125
        %9348 = vmatpush1.bf16.msra.mxu0 %v8124
        %9349 = vmatprep.subr.bf16.mxu0 %v8117
        %9350 = vmatpush1.bf16.msra.mxu0 %v8116
        %9351 = vmatprep.subr.bf16.mxu0 %v8109
        %9352 = vmatpush1.bf16.msra.mxu0 %v8108
        %9353 = vmatprep.subr.bf16.mxu0 %v8101
        %9354 = vmatpush1.bf16.msra.mxu0 %v8100
        %9355 = vmatprep.subr.bf16.mxu0 %v8093
        %9356 = vmatpush1.bf16.msra.mxu0 %v8092
        %9357 = vmatprep.subr.bf16.mxu0 %v8085
        %9358 = vmatpush1.bf16.msra.mxu0 %v8084
        %9359 = vmatprep.subr.bf16.mxu0 %v8077
        %9360 = vmatpush1.bf16.msra.mxu0 %v8076
        %9361 = vmatprep.subr.bf16.mxu0 %v8069
        %9362 = vmatpush1.bf16.msra.mxu0 %v8068
        %9363 = vmatprep.subr.bf16.mxu0 %v8189
        %9364 = vmatpush2.bf16.msra.mxu0 %v8188
        %9365 = vmatprep.subr.bf16.mxu0 %v8181
        %9366 = vmatpush2.bf16.msra.mxu0 %v8180
        %9367 = vmatprep.subr.bf16.mxu0 %v8173
        %9368 = vmatpush2.bf16.msra.mxu0 %v8172
        %9369 = vmatprep.subr.bf16.mxu0 %v8165
        %9370 = vmatpush2.bf16.msra.mxu0 %v8164
        %9371 = vmatprep.subr.bf16.mxu0 %v8157
        %9372 = vmatpush2.bf16.msra.mxu0 %v8156
        %9373 = vmatprep.subr.bf16.mxu0 %v8149
        %9374 = vmatpush2.bf16.msra.mxu0 %v8148
        %9375 = vmatprep.subr.bf16.mxu0 %v8141
        %9376 = vmatpush2.bf16.msra.mxu0 %v8140
        %9377 = vmatprep.subr.bf16.mxu0 %v8133
        %9378 = vmatpush2.bf16.msra.mxu0 %v8132
        %9379 = vmatprep.mubr.bf16.mxu0 %v5841
        %9380 = vmatmul.mubr.bf16.gmra.mxu0 %v5840
        %v9381 = vpop.f32.mrf.mxu0
        %v9382 = vadd.f32 %v9339, %v9381
        %v9383 = vpop.f32.mrf.mxu0
        %v9384 = vadd.f32 %v9341, %v9383
        %v9385 = vpop.f32.mrf.mxu0
        %v9386 = vadd.f32 %v9343, %v9385
        %v9387 = vpop.f32.mrf.mxu0
        %v9388 = vadd.f32 %v9345, %v9387
        %9389 = vdwg.mxu0
        %9390 = vmatprep.subr.bf16.mxu0 %v8253
        %9391 = vmatpush1.bf16.msra.mxu0 %v8252
        %9392 = vmatprep.subr.bf16.mxu0 %v8245
        %9393 = vmatpush1.bf16.msra.mxu0 %v8244
        %9394 = vmatprep.subr.bf16.mxu0 %v8237
        %9395 = vmatpush1.bf16.msra.mxu0 %v8236
        %9396 = vmatprep.subr.bf16.mxu0 %v8229
        %9397 = vmatpush1.bf16.msra.mxu0 %v8228
        %9398 = vmatprep.subr.bf16.mxu0 %v8221
        %9399 = vmatpush1.bf16.msra.mxu0 %v8220
        %9400 = vmatprep.subr.bf16.mxu0 %v8213
        %9401 = vmatpush1.bf16.msra.mxu0 %v8212
        %9402 = vmatprep.subr.bf16.mxu0 %v8205
        %9403 = vmatpush1.bf16.msra.mxu0 %v8204
        %9404 = vmatprep.subr.bf16.mxu0 %v8197
        %9405 = vmatpush1.bf16.msra.mxu0 %v8196
        %9406 = vmatprep.subr.bf16.mxu0 %v8317
        %9407 = vmatpush2.bf16.msra.mxu0 %v8316
        %9408 = vmatprep.subr.bf16.mxu0 %v8309
        %9409 = vmatpush2.bf16.msra.mxu0 %v8308
        %9410 = vmatprep.subr.bf16.mxu0 %v8301
        %9411 = vmatpush2.bf16.msra.mxu0 %v8300
        %9412 = vmatprep.subr.bf16.mxu0 %v8293
        %9413 = vmatpush2.bf16.msra.mxu0 %v8292
        %9414 = vmatprep.subr.bf16.mxu0 %v8285
        %9415 = vmatpush2.bf16.msra.mxu0 %v8284
        %9416 = vmatprep.subr.bf16.mxu0 %v8277
        %9417 = vmatpush2.bf16.msra.mxu0 %v8276
        %9418 = vmatprep.subr.bf16.mxu0 %v8269
        %9419 = vmatpush2.bf16.msra.mxu0 %v8268
        %9420 = vmatprep.subr.bf16.mxu0 %v8261
        %9421 = vmatpush2.bf16.msra.mxu0 %v8260
        %9422 = vmatprep.mubr.bf16.mxu0 %v5843
        %9423 = vmatmul.mubr.bf16.gmra.mxu0 %v5842
        %v9424 = vpop.f32.mrf.mxu0
        %v9425 = vadd.f32 %v9382, %v9424
        %v9426 = vpop.f32.mrf.mxu0
        %v9427 = vadd.f32 %v9384, %v9426
        %v9428 = vpop.f32.mrf.mxu0
        %v9429 = vadd.f32 %v9386, %v9428
        %v9430 = vpop.f32.mrf.mxu0
        %v9431 = vadd.f32 %v9388, %v9430
        %9432 = vdwg.mxu0
        %9433 = vmatprep.subr.bf16.mxu0 %v8381
        %9434 = vmatpush1.bf16.msra.mxu0 %v8380
        %9435 = vmatprep.subr.bf16.mxu0 %v8373
        %9436 = vmatpush1.bf16.msra.mxu0 %v8372
        %9437 = vmatprep.subr.bf16.mxu0 %v8365
        %9438 = vmatpush1.bf16.msra.mxu0 %v8364
        %9439 = vmatprep.subr.bf16.mxu0 %v8357
        %9440 = vmatpush1.bf16.msra.mxu0 %v8356
        %9441 = vmatprep.subr.bf16.mxu0 %v8349
        %9442 = vmatpush1.bf16.msra.mxu0 %v8348
        %9443 = vmatprep.subr.bf16.mxu0 %v8341
        %9444 = vmatpush1.bf16.msra.mxu0 %v8340
        %9445 = vmatprep.subr.bf16.mxu0 %v8333
        %9446 = vmatpush1.bf16.msra.mxu0 %v8332
        %9447 = vmatprep.subr.bf16.mxu0 %v8325
        %9448 = vmatpush1.bf16.msra.mxu0 %v8324
        %9449 = vmatprep.subr.bf16.mxu0 %v8445
        %9450 = vmatpush2.bf16.msra.mxu0 %v8444
        %9451 = vmatprep.subr.bf16.mxu0 %v8437
        %9452 = vmatpush2.bf16.msra.mxu0 %v8436
        %9453 = vmatprep.subr.bf16.mxu0 %v8429
        %9454 = vmatpush2.bf16.msra.mxu0 %v8428
        %9455 = vmatprep.subr.bf16.mxu0 %v8421
        %9456 = vmatpush2.bf16.msra.mxu0 %v8420
        %9457 = vmatprep.subr.bf16.mxu0 %v8413
        %9458 = vmatpush2.bf16.msra.mxu0 %v8412
        %9459 = vmatprep.subr.bf16.mxu0 %v8405
        %9460 = vmatpush2.bf16.msra.mxu0 %v8404
        %9461 = vmatprep.subr.bf16.mxu0 %v8397
        %9462 = vmatpush2.bf16.msra.mxu0 %v8396
        %9463 = vmatprep.subr.bf16.mxu0 %v8389
        %9464 = vmatpush2.bf16.msra.mxu0 %v8388
        %9465 = vmatprep.mubr.bf16.mxu0 %v5845
        %9466 = vmatmul.mubr.bf16.gmra.mxu0 %v5844
        %v9467 = vpop.f32.mrf.mxu0
        %v9468 = vadd.f32 %v9425, %v9467
        %v9469 = vpop.f32.mrf.mxu0
        %v9470 = vadd.f32 %v9427, %v9469
        %v9471 = vpop.f32.mrf.mxu0
        %v9472 = vadd.f32 %v9429, %v9471
        %v9473 = vpop.f32.mrf.mxu0
        %v9474 = vadd.f32 %v9431, %v9473
        %9475 = vdwg.mxu0
        %9476 = vmatprep.subr.bf16.mxu0 %v7999
        %9477 = vmatpush1.bf16.msra.mxu0 %v7998
        %9478 = vmatprep.subr.bf16.mxu0 %v7991
        %9479 = vmatpush1.bf16.msra.mxu0 %v7990
        %9480 = vmatprep.subr.bf16.mxu0 %v7983
        %9481 = vmatpush1.bf16.msra.mxu0 %v7982
        %9482 = vmatprep.subr.bf16.mxu0 %v7975
        %9483 = vmatpush1.bf16.msra.mxu0 %v7974
        %9484 = vmatprep.subr.bf16.mxu0 %v7967
        %9485 = vmatpush1.bf16.msra.mxu0 %v7966
        %9486 = vmatprep.subr.bf16.mxu0 %v7959
        %9487 = vmatpush1.bf16.msra.mxu0 %v7958
        %9488 = vmatprep.subr.bf16.mxu0 %v7951
        %9489 = vmatpush1.bf16.msra.mxu0 %v7950
        %9490 = vmatprep.subr.bf16.mxu0 %v7943
        %9491 = vmatpush1.bf16.msra.mxu0 %v7942
        %9492 = vmatprep.subr.bf16.mxu0 %v8063
        %9493 = vmatpush2.bf16.msra.mxu0 %v8062
        %9494 = vmatprep.subr.bf16.mxu0 %v8055
        %9495 = vmatpush2.bf16.msra.mxu0 %v8054
        %9496 = vmatprep.subr.bf16.mxu0 %v8047
        %9497 = vmatpush2.bf16.msra.mxu0 %v8046
        %9498 = vmatprep.subr.bf16.mxu0 %v8039
        %9499 = vmatpush2.bf16.msra.mxu0 %v8038
        %9500 = vmatprep.subr.bf16.mxu0 %v8031
        %9501 = vmatpush2.bf16.msra.mxu0 %v8030
        %9502 = vmatprep.subr.bf16.mxu0 %v8023
        %9503 = vmatpush2.bf16.msra.mxu0 %v8022
        %9504 = vmatprep.subr.bf16.mxu0 %v8015
        %9505 = vmatpush2.bf16.msra.mxu0 %v8014
        %9506 = vmatprep.subr.bf16.mxu0 %v8007
        %9507 = vmatpush2.bf16.msra.mxu0 %v8006
        %9508 = vmatprep.mubr.bf16.mxu0 %v5839
        %9509 = vmatmul.mubr.bf16.gmra.mxu0 %v5838
        %v9510 = vpop.f32.mrf.mxu0
        %v9511 = vadd.f32 %v6387, %v9510
        %v9512 = vpop.f32.mrf.mxu0
        %v9513 = vadd.f32 %v6391, %v9512
        %v9514 = vpop.f32.mrf.mxu0
        %v9515 = vadd.f32 %v6387, %v9514
        %v9516 = vpop.f32.mrf.mxu0
        %v9517 = vadd.f32 %v6391, %v9516
        %9518 = vdwg.mxu0
        %9519 = vmatprep.subr.bf16.mxu0 %v8127
        %9520 = vmatpush1.bf16.msra.mxu0 %v8126
        %9521 = vmatprep.subr.bf16.mxu0 %v8119
        %9522 = vmatpush1.bf16.msra.mxu0 %v8118
        %9523 = vmatprep.subr.bf16.mxu0 %v8111
        %9524 = vmatpush1.bf16.msra.mxu0 %v8110
        %9525 = vmatprep.subr.bf16.mxu0 %v8103
        %9526 = vmatpush1.bf16.msra.mxu0 %v8102
        %9527 = vmatprep.subr.bf16.mxu0 %v8095
        %9528 = vmatpush1.bf16.msra.mxu0 %v8094
        %9529 = vmatprep.subr.bf16.mxu0 %v8087
        %9530 = vmatpush1.bf16.msra.mxu0 %v8086
        %9531 = vmatprep.subr.bf16.mxu0 %v8079
        %9532 = vmatpush1.bf16.msra.mxu0 %v8078
        %9533 = vmatprep.subr.bf16.mxu0 %v8071
        %9534 = vmatpush1.bf16.msra.mxu0 %v8070
        %9535 = vmatprep.subr.bf16.mxu0 %v8191
        %9536 = vmatpush2.bf16.msra.mxu0 %v8190
        %9537 = vmatprep.subr.bf16.mxu0 %v8183
        %9538 = vmatpush2.bf16.msra.mxu0 %v8182
        %9539 = vmatprep.subr.bf16.mxu0 %v8175
        %9540 = vmatpush2.bf16.msra.mxu0 %v8174
        %9541 = vmatprep.subr.bf16.mxu0 %v8167
        %9542 = vmatpush2.bf16.msra.mxu0 %v8166
        %9543 = vmatprep.subr.bf16.mxu0 %v8159
        %9544 = vmatpush2.bf16.msra.mxu0 %v8158
        %9545 = vmatprep.subr.bf16.mxu0 %v8151
        %9546 = vmatpush2.bf16.msra.mxu0 %v8150
        %9547 = vmatprep.subr.bf16.mxu0 %v8143
        %9548 = vmatpush2.bf16.msra.mxu0 %v8142
        %9549 = vmatprep.subr.bf16.mxu0 %v8135
        %9550 = vmatpush2.bf16.msra.mxu0 %v8134
        %9551 = vmatprep.mubr.bf16.mxu0 %v5841
        %9552 = vmatmul.mubr.bf16.gmra.mxu0 %v5840
        %v9553 = vpop.f32.mrf.mxu0
        %v9554 = vadd.f32 %v9511, %v9553
        %v9555 = vpop.f32.mrf.mxu0
        %v9556 = vadd.f32 %v9513, %v9555
        %v9557 = vpop.f32.mrf.mxu0
        %v9558 = vadd.f32 %v9515, %v9557
        %v9559 = vpop.f32.mrf.mxu0
        %v9560 = vadd.f32 %v9517, %v9559
        %9561 = vdwg.mxu0
        %9562 = vmatprep.subr.bf16.mxu0 %v8255
        %9563 = vmatpush1.bf16.msra.mxu0 %v8254
        %9564 = vmatprep.subr.bf16.mxu0 %v8247
        %9565 = vmatpush1.bf16.msra.mxu0 %v8246
        %9566 = vmatprep.subr.bf16.mxu0 %v8239
        %9567 = vmatpush1.bf16.msra.mxu0 %v8238
        %9568 = vmatprep.subr.bf16.mxu0 %v8231
        %9569 = vmatpush1.bf16.msra.mxu0 %v8230
        %9570 = vmatprep.subr.bf16.mxu0 %v8223
        %9571 = vmatpush1.bf16.msra.mxu0 %v8222
        %9572 = vmatprep.subr.bf16.mxu0 %v8215
        %9573 = vmatpush1.bf16.msra.mxu0 %v8214
        %9574 = vmatprep.subr.bf16.mxu0 %v8207
        %9575 = vmatpush1.bf16.msra.mxu0 %v8206
        %9576 = vmatprep.subr.bf16.mxu0 %v8199
        %9577 = vmatpush1.bf16.msra.mxu0 %v8198
        %9578 = vmatprep.subr.bf16.mxu0 %v8319
        %9579 = vmatpush2.bf16.msra.mxu0 %v8318
        %9580 = vmatprep.subr.bf16.mxu0 %v8311
        %9581 = vmatpush2.bf16.msra.mxu0 %v8310
        %9582 = vmatprep.subr.bf16.mxu0 %v8303
        %9583 = vmatpush2.bf16.msra.mxu0 %v8302
        %9584 = vmatprep.subr.bf16.mxu0 %v8295
        %9585 = vmatpush2.bf16.msra.mxu0 %v8294
        %9586 = vmatprep.subr.bf16.mxu0 %v8287
        %9587 = vmatpush2.bf16.msra.mxu0 %v8286
        %9588 = vmatprep.subr.bf16.mxu0 %v8279
        %9589 = vmatpush2.bf16.msra.mxu0 %v8278
        %9590 = vmatprep.subr.bf16.mxu0 %v8271
        %9591 = vmatpush2.bf16.msra.mxu0 %v8270
        %9592 = vmatprep.subr.bf16.mxu0 %v8263
        %9593 = vmatpush2.bf16.msra.mxu0 %v8262
        %9594 = vmatprep.mubr.bf16.mxu0 %v5843
        %9595 = vmatmul.mubr.bf16.gmra.mxu0 %v5842
        %v9596 = vpop.f32.mrf.mxu0
        %v9597 = vadd.f32 %v9554, %v9596
        %v9598 = vpop.f32.mrf.mxu0
        %v9599 = vadd.f32 %v9556, %v9598
        %v9600 = vpop.f32.mrf.mxu0
        %v9601 = vadd.f32 %v9558, %v9600
        %v9602 = vpop.f32.mrf.mxu0
        %v9603 = vadd.f32 %v9560, %v9602
        %9604 = vdwg.mxu0
        %9605 = vmatprep.subr.bf16.mxu0 %v8383
        %9606 = vmatpush1.bf16.msra.mxu0 %v8382
        %9607 = vmatprep.subr.bf16.mxu0 %v8375
        %9608 = vmatpush1.bf16.msra.mxu0 %v8374
        %9609 = vmatprep.subr.bf16.mxu0 %v8367
        %9610 = vmatpush1.bf16.msra.mxu0 %v8366
        %9611 = vmatprep.subr.bf16.mxu0 %v8359
        %9612 = vmatpush1.bf16.msra.mxu0 %v8358
        %9613 = vmatprep.subr.bf16.mxu0 %v8351
        %9614 = vmatpush1.bf16.msra.mxu0 %v8350
        %9615 = vmatprep.subr.bf16.mxu0 %v8343
        %9616 = vmatpush1.bf16.msra.mxu0 %v8342
        %9617 = vmatprep.subr.bf16.mxu0 %v8335
        %9618 = vmatpush1.bf16.msra.mxu0 %v8334
        %9619 = vmatprep.subr.bf16.mxu0 %v8327
        %9620 = vmatpush1.bf16.msra.mxu0 %v8326
        %9621 = vmatprep.subr.bf16.mxu0 %v8447
        %9622 = vmatpush2.bf16.msra.mxu0 %v8446
        %9623 = vmatprep.subr.bf16.mxu0 %v8439
        %9624 = vmatpush2.bf16.msra.mxu0 %v8438
        %9625 = vmatprep.subr.bf16.mxu0 %v8431
        %9626 = vmatpush2.bf16.msra.mxu0 %v8430
        %9627 = vmatprep.subr.bf16.mxu0 %v8423
        %9628 = vmatpush2.bf16.msra.mxu0 %v8422
        %9629 = vmatprep.subr.bf16.mxu0 %v8415
        %9630 = vmatpush2.bf16.msra.mxu0 %v8414
        %9631 = vmatprep.subr.bf16.mxu0 %v8407
        %9632 = vmatpush2.bf16.msra.mxu0 %v8406
        %9633 = vmatprep.subr.bf16.mxu0 %v8399
        %9634 = vmatpush2.bf16.msra.mxu0 %v8398
        %9635 = vmatprep.subr.bf16.mxu0 %v8391
        %9636 = vmatpush2.bf16.msra.mxu0 %v8390
        %9637 = vmatprep.mubr.bf16.mxu0 %v5845
        %9638 = vmatmul.mubr.bf16.gmra.mxu0 %v5844
        %v9639 = vpop.f32.mrf.mxu0
        %v9640 = vadd.f32 %v9597, %v9639
        %v9641 = vpop.f32.mrf.mxu0
        %v9642 = vadd.f32 %v9599, %v9641
        %v9643 = vpop.f32.mrf.mxu0
        %v9644 = vadd.f32 %v9601, %v9643
        %v9645 = vpop.f32.mrf.mxu0
        %v9646 = vadd.f32 %v9603, %v9645
        %9647 = vdwg.mxu0
        %v9648 = vmax.f32 %v9124, 0.0
        %v9649 = vmax.f32 %v9126, 0.0
        %v9650 = vmax.f32 %v9296, 0.0
        %v9651 = vmax.f32 %v9298, 0.0
        %v9652 = vmax.f32 %v9468, 0.0
        %v9653 = vmax.f32 %v9470, 0.0
        %v9654 = vmax.f32 %v9640, 0.0
        %v9655 = vmax.f32 %v9642, 0.0
        %v9656 = vmax.f32 %v9128, 0.0
        %v9657 = vmax.f32 %v9130, 0.0
        %v9658 = vmax.f32 %v9300, 0.0
        %v9659 = vmax.f32 %v9302, 0.0
        %v9660 = vmax.f32 %v9472, 0.0
        %v9661 = vmax.f32 %v9474, 0.0
        %v9662 = vmax.f32 %v9644, 0.0
        %v9663 = vmax.f32 %v9646, 0.0
        %v9664 = vpack.c.bf16 %v9656, %v9648
        %v9665 = vpack.c.bf16 %v9657, %v9649
        %v9666 = vpack.c.bf16 %v9658, %v9650
        %v9667 = vpack.c.bf16 %v9659, %v9651
        %v9668 = vpack.c.bf16 %v9660, %v9652
        %v9669 = vpack.c.bf16 %v9661, %v9653
        %v9670 = vpack.c.bf16 %v9662, %v9654
        %v9671 = vpack.c.bf16 %v9663, %v9655
        %v9672 = vld [vmem:[%s5] sm:$0xf]
        %v9673 = vld [vmem:[%s5 + $0x4] sm:$0xf]
        %v9674 = vld [vmem:[%s5 + $0x8] sm:$0xf]
        %v9675 = vld [vmem:[%s5 + $0xc] sm:$0xf]
        %v9676 = vld [vmem:[%s5 + $0x10] sm:$0xf]
        %v9677 = vld [vmem:[%s5 + $0x14] sm:$0xf]
        %v9678 = vld [vmem:[%s5 + $0x18] sm:$0xf]
        %v9679 = vld [vmem:[%s5 + $0x1c] sm:$0xf]
        %v9680 = vld [vmem:[%s5 + $0x20] sm:$0xf]
        %v9681 = vld [vmem:[%s5 + $0x24] sm:$0xf]
        %v9682 = vld [vmem:[%s5 + $0x28] sm:$0xf]
        %v9683 = vld [vmem:[%s5 + $0x2c] sm:$0xf]
        %v9684 = vld [vmem:[%s5 + $0x30] sm:$0xf]
        %v9685 = vld [vmem:[%s5 + $0x34] sm:$0xf]
        %v9686 = vld [vmem:[%s5 + $0x38] sm:$0xf]
        %v9687 = vld [vmem:[%s5 + $0x3c] sm:$0xf]
        %v9688 = vld [vmem:[%s5 + $0x40] sm:$0xf]
        %v9689 = vld [vmem:[%s5 + $0x44] sm:$0xf]
        %v9690 = vld [vmem:[%s5 + $0x48] sm:$0xf]
        %v9691 = vld [vmem:[%s5 + $0x4c] sm:$0xf]
        %v9692 = vld [vmem:[%s5 + $0x50] sm:$0xf]
        %v9693 = vld [vmem:[%s5 + $0x54] sm:$0xf]
        %v9694 = vld [vmem:[%s5 + $0x58] sm:$0xf]
        %v9695 = vld [vmem:[%s5 + $0x5c] sm:$0xf]
        %v9696 = vld [vmem:[%s5 + $0x60] sm:$0xf]
        %v9697 = vld [vmem:[%s5 + $0x64] sm:$0xf]
        %v9698 = vld [vmem:[%s5 + $0x68] sm:$0xf]
        %v9699 = vld [vmem:[%s5 + $0x6c] sm:$0xf]
        %v9700 = vld [vmem:[%s5 + $0x70] sm:$0xf]
        %v9701 = vld [vmem:[%s5 + $0x74] sm:$0xf]
        %v9702 = vld [vmem:[%s5 + $0x78] sm:$0xf]
        %v9703 = vld [vmem:[%s5 + $0x7c] sm:$0xf]
        %v9704 = vld [vmem:[%s5 + $0x80] sm:$0xf]
        %v9705 = vld [vmem:[%s5 + $0x84] sm:$0xf]
        %v9706 = vld [vmem:[%s5 + $0x88] sm:$0xf]
        %v9707 = vld [vmem:[%s5 + $0x8c] sm:$0xf]
        %v9708 = vld [vmem:[%s5 + $0x90] sm:$0xf]
        %v9709 = vld [vmem:[%s5 + $0x94] sm:$0xf]
        %v9710 = vld [vmem:[%s5 + $0x98] sm:$0xf]
        %v9711 = vld [vmem:[%s5 + $0x9c] sm:$0xf]
        %v9712 = vld [vmem:[%s5 + $0xa0] sm:$0xf]
        %v9713 = vld [vmem:[%s5 + $0xa4] sm:$0xf]
        %v9714 = vld [vmem:[%s5 + $0xa8] sm:$0xf]
        %v9715 = vld [vmem:[%s5 + $0xac] sm:$0xf]
        %v9716 = vld [vmem:[%s5 + $0xb0] sm:$0xf]
        %v9717 = vld [vmem:[%s5 + $0xb4] sm:$0xf]
        %v9718 = vld [vmem:[%s5 + $0xb8] sm:$0xf]
        %v9719 = vld [vmem:[%s5 + $0xbc] sm:$0xf]
        %v9720 = vld [vmem:[%s5 + $0xc0] sm:$0xf]
        %v9721 = vld [vmem:[%s5 + $0xc4] sm:$0xf]
        %v9722 = vld [vmem:[%s5 + $0xc8] sm:$0xf]
        %v9723 = vld [vmem:[%s5 + $0xcc] sm:$0xf]
        %v9724 = vld [vmem:[%s5 + $0xd0] sm:$0xf]
        %v9725 = vld [vmem:[%s5 + $0xd4] sm:$0xf]
        %v9726 = vld [vmem:[%s5 + $0xd8] sm:$0xf]
        %v9727 = vld [vmem:[%s5 + $0xdc] sm:$0xf]
        %v9728 = vld [vmem:[%s5 + $0xe0] sm:$0xf]
        %v9729 = vld [vmem:[%s5 + $0xe4] sm:$0xf]
        %v9730 = vld [vmem:[%s5 + $0xe8] sm:$0xf]
        %v9731 = vld [vmem:[%s5 + $0xec] sm:$0xf]
        %v9732 = vld [vmem:[%s5 + $0xf0] sm:$0xf]
        %v9733 = vld [vmem:[%s5 + $0xf4] sm:$0xf]
        %v9734 = vld [vmem:[%s5 + $0xf8] sm:$0xf]
        %v9735 = vld [vmem:[%s5 + $0xfc] sm:$0xf]
        %v9736 = vld [vmem:[%s5 + $0x100] sm:$0xf]
        %v9737 = vld [vmem:[%s5 + $0x104] sm:$0xf]
        %v9738 = vld [vmem:[%s5 + $0x108] sm:$0xf]
        %v9739 = vld [vmem:[%s5 + $0x10c] sm:$0xf]
        %v9740 = vld [vmem:[%s5 + $0x110] sm:$0xf]
        %v9741 = vld [vmem:[%s5 + $0x114] sm:$0xf]
        %v9742 = vld [vmem:[%s5 + $0x118] sm:$0xf]
        %v9743 = vld [vmem:[%s5 + $0x11c] sm:$0xf]
        %v9744 = vld [vmem:[%s5 + $0x120] sm:$0xf]
        %v9745 = vld [vmem:[%s5 + $0x124] sm:$0xf]
        %v9746 = vld [vmem:[%s5 + $0x128] sm:$0xf]
        %v9747 = vld [vmem:[%s5 + $0x12c] sm:$0xf]
        %v9748 = vld [vmem:[%s5 + $0x130] sm:$0xf]
        %v9749 = vld [vmem:[%s5 + $0x134] sm:$0xf]
        %v9750 = vld [vmem:[%s5 + $0x138] sm:$0xf]
        %v9751 = vld [vmem:[%s5 + $0x13c] sm:$0xf]
        %v9752 = vld [vmem:[%s5 + $0x140] sm:$0xf]
        %v9753 = vld [vmem:[%s5 + $0x144] sm:$0xf]
        %v9754 = vld [vmem:[%s5 + $0x148] sm:$0xf]
        %v9755 = vld [vmem:[%s5 + $0x14c] sm:$0xf]
        %v9756 = vld [vmem:[%s5 + $0x150] sm:$0xf]
        %v9757 = vld [vmem:[%s5 + $0x154] sm:$0xf]
        %v9758 = vld [vmem:[%s5 + $0x158] sm:$0xf]
        %v9759 = vld [vmem:[%s5 + $0x15c] sm:$0xf]
        %v9760 = vld [vmem:[%s5 + $0x160] sm:$0xf]
        %v9761 = vld [vmem:[%s5 + $0x164] sm:$0xf]
        %v9762 = vld [vmem:[%s5 + $0x168] sm:$0xf]
        %v9763 = vld [vmem:[%s5 + $0x16c] sm:$0xf]
        %v9764 = vld [vmem:[%s5 + $0x170] sm:$0xf]
        %v9765 = vld [vmem:[%s5 + $0x174] sm:$0xf]
        %v9766 = vld [vmem:[%s5 + $0x178] sm:$0xf]
        %v9767 = vld [vmem:[%s5 + $0x17c] sm:$0xf]
        %v9768 = vld [vmem:[%s5 + $0x180] sm:$0xf]
        %v9769 = vld [vmem:[%s5 + $0x184] sm:$0xf]
        %v9770 = vld [vmem:[%s5 + $0x188] sm:$0xf]
        %v9771 = vld [vmem:[%s5 + $0x18c] sm:$0xf]
        %v9772 = vld [vmem:[%s5 + $0x190] sm:$0xf]
        %v9773 = vld [vmem:[%s5 + $0x194] sm:$0xf]
        %v9774 = vld [vmem:[%s5 + $0x198] sm:$0xf]
        %v9775 = vld [vmem:[%s5 + $0x19c] sm:$0xf]
        %v9776 = vld [vmem:[%s5 + $0x1a0] sm:$0xf]
        %v9777 = vld [vmem:[%s5 + $0x1a4] sm:$0xf]
        %v9778 = vld [vmem:[%s5 + $0x1a8] sm:$0xf]
        %v9779 = vld [vmem:[%s5 + $0x1ac] sm:$0xf]
        %v9780 = vld [vmem:[%s5 + $0x1b0] sm:$0xf]
        %v9781 = vld [vmem:[%s5 + $0x1b4] sm:$0xf]
        %v9782 = vld [vmem:[%s5 + $0x1b8] sm:$0xf]
        %v9783 = vld [vmem:[%s5 + $0x1bc] sm:$0xf]
        %v9784 = vld [vmem:[%s5 + $0x1c0] sm:$0xf]
        %v9785 = vld [vmem:[%s5 + $0x1c4] sm:$0xf]
        %v9786 = vld [vmem:[%s5 + $0x1c8] sm:$0xf]
        %v9787 = vld [vmem:[%s5 + $0x1cc] sm:$0xf]
        %v9788 = vld [vmem:[%s5 + $0x1d0] sm:$0xf]
        %v9789 = vld [vmem:[%s5 + $0x1d4] sm:$0xf]
        %v9790 = vld [vmem:[%s5 + $0x1d8] sm:$0xf]
        %v9791 = vld [vmem:[%s5 + $0x1dc] sm:$0xf]
        %v9792 = vld [vmem:[%s5 + $0x1e0] sm:$0xf]
        %v9793 = vld [vmem:[%s5 + $0x1e4] sm:$0xf]
        %v9794 = vld [vmem:[%s5 + $0x1e8] sm:$0xf]
        %v9795 = vld [vmem:[%s5 + $0x1ec] sm:$0xf]
        %v9796 = vld [vmem:[%s5 + $0x1f0] sm:$0xf]
        %v9797 = vld [vmem:[%s5 + $0x1f4] sm:$0xf]
        %v9798 = vld [vmem:[%s5 + $0x1f8] sm:$0xf]
        %v9799 = vld [vmem:[%s5 + $0x1fc] sm:$0xf]
        %v9800 = vld [vmem:[#allocation8] sm:$0x1]
        %v9802 = vlaneseq
        %v9803 = vshrl.u32 %v9802, 7
        %v9804 = vsub.s32 0, %v9803
        %v9805 = vrot.slane %v9800, %v9804
        %v9935 = vunpack.c.l.b16 %v9672
        %v9936 = vunpack.c.l.b16 %v9673
        %v9937 = vunpack.c.l.b16 %v9674
        %v9938 = vunpack.c.l.b16 %v9675
        %v9939 = vunpack.c.l.b16 %v9676
        %v9940 = vunpack.c.l.b16 %v9677
        %v9941 = vunpack.c.l.b16 %v9678
        %v9942 = vunpack.c.l.b16 %v9679
        %v9943 = vunpack.c.l.b16 %v9680
        %v9944 = vunpack.c.l.b16 %v9681
        %v9945 = vunpack.c.l.b16 %v9682
        %v9946 = vunpack.c.l.b16 %v9683
        %v9947 = vunpack.c.l.b16 %v9684
        %v9948 = vunpack.c.l.b16 %v9685
        %v9949 = vunpack.c.l.b16 %v9686
        %v9950 = vunpack.c.l.b16 %v9687
        %v9951 = vunpack.c.l.b16 %v9688
        %v9952 = vunpack.c.l.b16 %v9689
        %v9953 = vunpack.c.l.b16 %v9690
        %v9954 = vunpack.c.l.b16 %v9691
        %v9955 = vunpack.c.l.b16 %v9692
        %v9956 = vunpack.c.l.b16 %v9693
        %v9957 = vunpack.c.l.b16 %v9694
        %v9958 = vunpack.c.l.b16 %v9695
        %v9959 = vunpack.c.l.b16 %v9696
        %v9960 = vunpack.c.l.b16 %v9697
        %v9961 = vunpack.c.l.b16 %v9698
        %v9962 = vunpack.c.l.b16 %v9699
        %v9963 = vunpack.c.l.b16 %v9700
        %v9964 = vunpack.c.l.b16 %v9701
        %v9965 = vunpack.c.l.b16 %v9702
        %v9966 = vunpack.c.l.b16 %v9703
        %v9967 = vunpack.c.l.b16 %v9704
        %v9968 = vunpack.c.l.b16 %v9705
        %v9969 = vunpack.c.l.b16 %v9706
        %v9970 = vunpack.c.l.b16 %v9707
        %v9971 = vunpack.c.l.b16 %v9708
        %v9972 = vunpack.c.l.b16 %v9709
        %v9973 = vunpack.c.l.b16 %v9710
        %v9974 = vunpack.c.l.b16 %v9711
        %v9975 = vunpack.c.l.b16 %v9712
        %v9976 = vunpack.c.l.b16 %v9713
        %v9977 = vunpack.c.l.b16 %v9714
        %v9978 = vunpack.c.l.b16 %v9715
        %v9979 = vunpack.c.l.b16 %v9716
        %v9980 = vunpack.c.l.b16 %v9717
        %v9981 = vunpack.c.l.b16 %v9718
        %v9982 = vunpack.c.l.b16 %v9719
        %v9983 = vunpack.c.l.b16 %v9720
        %v9984 = vunpack.c.l.b16 %v9721
        %v9985 = vunpack.c.l.b16 %v9722
        %v9986 = vunpack.c.l.b16 %v9723
        %v9987 = vunpack.c.l.b16 %v9724
        %v9988 = vunpack.c.l.b16 %v9725
        %v9989 = vunpack.c.l.b16 %v9726
        %v9990 = vunpack.c.l.b16 %v9727
        %v9991 = vunpack.c.l.b16 %v9728
        %v9992 = vunpack.c.l.b16 %v9729
        %v9993 = vunpack.c.l.b16 %v9730
        %v9994 = vunpack.c.l.b16 %v9731
        %v9995 = vunpack.c.l.b16 %v9732
        %v9996 = vunpack.c.l.b16 %v9733
        %v9997 = vunpack.c.l.b16 %v9734
        %v9998 = vunpack.c.l.b16 %v9735
        %v9999 = vunpack.c.l.b16 %v9736
        %v10000 = vunpack.c.l.b16 %v9737
        %v10001 = vunpack.c.l.b16 %v9738
        %v10002 = vunpack.c.l.b16 %v9739
        %v10003 = vunpack.c.l.b16 %v9740
        %v10004 = vunpack.c.l.b16 %v9741
        %v10005 = vunpack.c.l.b16 %v9742
        %v10006 = vunpack.c.l.b16 %v9743
        %v10007 = vunpack.c.l.b16 %v9744
        %v10008 = vunpack.c.l.b16 %v9745
        %v10009 = vunpack.c.l.b16 %v9746
        %v10010 = vunpack.c.l.b16 %v9747
        %v10011 = vunpack.c.l.b16 %v9748
        %v10012 = vunpack.c.l.b16 %v9749
        %v10013 = vunpack.c.l.b16 %v9750
        %v10014 = vunpack.c.l.b16 %v9751
        %v10015 = vunpack.c.l.b16 %v9752
        %v10016 = vunpack.c.l.b16 %v9753
        %v10017 = vunpack.c.l.b16 %v9754
        %v10018 = vunpack.c.l.b16 %v9755
        %v10019 = vunpack.c.l.b16 %v9756
        %v10020 = vunpack.c.l.b16 %v9757
        %v10021 = vunpack.c.l.b16 %v9758
        %v10022 = vunpack.c.l.b16 %v9759
        %v10023 = vunpack.c.l.b16 %v9760
        %v10024 = vunpack.c.l.b16 %v9761
        %v10025 = vunpack.c.l.b16 %v9762
        %v10026 = vunpack.c.l.b16 %v9763
        %v10027 = vunpack.c.l.b16 %v9764
        %v10028 = vunpack.c.l.b16 %v9765
        %v10029 = vunpack.c.l.b16 %v9766
        %v10030 = vunpack.c.l.b16 %v9767
        %v10031 = vunpack.c.l.b16 %v9768
        %v10032 = vunpack.c.l.b16 %v9769
        %v10033 = vunpack.c.l.b16 %v9770
        %v10034 = vunpack.c.l.b16 %v9771
        %v10035 = vunpack.c.l.b16 %v9772
        %v10036 = vunpack.c.l.b16 %v9773
        %v10037 = vunpack.c.l.b16 %v9774
        %v10038 = vunpack.c.l.b16 %v9775
        %v10039 = vunpack.c.l.b16 %v9776
        %v10040 = vunpack.c.l.b16 %v9777
        %v10041 = vunpack.c.l.b16 %v9778
        %v10042 = vunpack.c.l.b16 %v9779
        %v10043 = vunpack.c.l.b16 %v9780
        %v10044 = vunpack.c.l.b16 %v9781
        %v10045 = vunpack.c.l.b16 %v9782
        %v10046 = vunpack.c.l.b16 %v9783
        %v10047 = vunpack.c.l.b16 %v9784
        %v10048 = vunpack.c.l.b16 %v9785
        %v10049 = vunpack.c.l.b16 %v9786
        %v10050 = vunpack.c.l.b16 %v9787
        %v10051 = vunpack.c.l.b16 %v9788
        %v10052 = vunpack.c.l.b16 %v9789
        %v10053 = vunpack.c.l.b16 %v9790
        %v10054 = vunpack.c.l.b16 %v9791
        %v10055 = vunpack.c.l.b16 %v9792
        %v10056 = vunpack.c.l.b16 %v9793
        %v10057 = vunpack.c.l.b16 %v9794
        %v10058 = vunpack.c.l.b16 %v9795
        %v10059 = vunpack.c.l.b16 %v9796
        %v10060 = vunpack.c.l.b16 %v9797
        %v10061 = vunpack.c.l.b16 %v9798
        %v10062 = vunpack.c.l.b16 %v9799
        %v10063 = vpack.c.b16 %v9936, %v9935
        %v10064 = vpack.c.b16 %v9938, %v9937
        %v10065 = vpack.c.b16 %v9940, %v9939
        %v10066 = vpack.c.b16 %v9942, %v9941
        %v10067 = vpack.c.b16 %v9944, %v9943
        %v10068 = vpack.c.b16 %v9946, %v9945
        %v10069 = vpack.c.b16 %v9948, %v9947
        %v10070 = vpack.c.b16 %v9950, %v9949
        %v10071 = vpack.c.b16 %v9952, %v9951
        %v10072 = vpack.c.b16 %v9954, %v9953
        %v10073 = vpack.c.b16 %v9956, %v9955
        %v10074 = vpack.c.b16 %v9958, %v9957
        %v10075 = vpack.c.b16 %v9960, %v9959
        %v10076 = vpack.c.b16 %v9962, %v9961
        %v10077 = vpack.c.b16 %v9964, %v9963
        %v10078 = vpack.c.b16 %v9966, %v9965
        %v10079 = vpack.c.b16 %v9968, %v9967
        %v10080 = vpack.c.b16 %v9970, %v9969
        %v10081 = vpack.c.b16 %v9972, %v9971
        %v10082 = vpack.c.b16 %v9974, %v9973
        %v10083 = vpack.c.b16 %v9976, %v9975
        %v10084 = vpack.c.b16 %v9978, %v9977
        %v10085 = vpack.c.b16 %v9980, %v9979
        %v10086 = vpack.c.b16 %v9982, %v9981
        %v10087 = vpack.c.b16 %v9984, %v9983
        %v10088 = vpack.c.b16 %v9986, %v9985
        %v10089 = vpack.c.b16 %v9988, %v9987
        %v10090 = vpack.c.b16 %v9990, %v9989
        %v10091 = vpack.c.b16 %v9992, %v9991
        %v10092 = vpack.c.b16 %v9994, %v9993
        %v10093 = vpack.c.b16 %v9996, %v9995
        %v10094 = vpack.c.b16 %v9998, %v9997
        %v10095 = vpack.c.b16 %v10000, %v9999
        %v10096 = vpack.c.b16 %v10002, %v10001
        %v10097 = vpack.c.b16 %v10004, %v10003
        %v10098 = vpack.c.b16 %v10006, %v10005
        %v10099 = vpack.c.b16 %v10008, %v10007
        %v10100 = vpack.c.b16 %v10010, %v10009
        %v10101 = vpack.c.b16 %v10012, %v10011
        %v10102 = vpack.c.b16 %v10014, %v10013
        %v10103 = vpack.c.b16 %v10016, %v10015
        %v10104 = vpack.c.b16 %v10018, %v10017
        %v10105 = vpack.c.b16 %v10020, %v10019
        %v10106 = vpack.c.b16 %v10022, %v10021
        %v10107 = vpack.c.b16 %v10024, %v10023
        %v10108 = vpack.c.b16 %v10026, %v10025
        %v10109 = vpack.c.b16 %v10028, %v10027
        %v10110 = vpack.c.b16 %v10030, %v10029
        %v10111 = vpack.c.b16 %v10032, %v10031
        %v10112 = vpack.c.b16 %v10034, %v10033
        %v10113 = vpack.c.b16 %v10036, %v10035
        %v10114 = vpack.c.b16 %v10038, %v10037
        %v10115 = vpack.c.b16 %v10040, %v10039
        %v10116 = vpack.c.b16 %v10042, %v10041
        %v10117 = vpack.c.b16 %v10044, %v10043
        %v10118 = vpack.c.b16 %v10046, %v10045
        %v10119 = vpack.c.b16 %v10048, %v10047
        %v10120 = vpack.c.b16 %v10050, %v10049
        %v10121 = vpack.c.b16 %v10052, %v10051
        %v10122 = vpack.c.b16 %v10054, %v10053
        %v10123 = vpack.c.b16 %v10056, %v10055
        %v10124 = vpack.c.b16 %v10058, %v10057
        %v10125 = vpack.c.b16 %v10060, %v10059
        %v10126 = vpack.c.b16 %v10062, %v10061
        %10191 = vmatprep.subr.bf16.mxu0 0
        %10192 = vmatpush1.bf16.msra.mxu0 %v10070
        %10193 = vmatprep.subr.bf16.mxu0 0
        %10194 = vmatpush1.bf16.msra.mxu0 %v10069
        %10195 = vmatprep.subr.bf16.mxu0 0
        %10196 = vmatpush1.bf16.msra.mxu0 %v10068
        %10197 = vmatprep.subr.bf16.mxu0 0
        %10198 = vmatpush1.bf16.msra.mxu0 %v10067
        %10199 = vmatprep.subr.bf16.mxu0 0
        %10200 = vmatpush1.bf16.msra.mxu0 %v10066
        %10201 = vmatprep.subr.bf16.mxu0 0
        %10202 = vmatpush1.bf16.msra.mxu0 %v10065
        %10203 = vmatprep.subr.bf16.mxu0 0
        %10204 = vmatpush1.bf16.msra.mxu0 %v10064
        %10205 = vmatprep.subr.bf16.mxu0 0
        %10206 = vmatpush1.bf16.msra.mxu0 %v10063
        %10207 = vmatprep.subr.bf16.mxu0 0
        %10208 = vmatpush2.bf16.msra.mxu0 %v10078
        %10209 = vmatprep.subr.bf16.mxu0 0
        %10210 = vmatpush2.bf16.msra.mxu0 %v10077
        %10211 = vmatprep.subr.bf16.mxu0 0
        %10212 = vmatpush2.bf16.msra.mxu0 %v10076
        %10213 = vmatprep.subr.bf16.mxu0 0
        %10214 = vmatpush2.bf16.msra.mxu0 %v10075
        %10215 = vmatprep.subr.bf16.mxu0 0
        %10216 = vmatpush2.bf16.msra.mxu0 %v10074
        %10217 = vmatprep.subr.bf16.mxu0 0
        %10218 = vmatpush2.bf16.msra.mxu0 %v10073
        %10219 = vmatprep.subr.bf16.mxu0 0
        %10220 = vmatpush2.bf16.msra.mxu0 %v10072
        %10221 = vmatprep.subr.bf16.mxu0 0
        %10222 = vmatpush2.bf16.msra.mxu0 %v10071
        %10223 = vmatprep.mubr.bf16.mxu0 %v9665
        %10224 = vmatmul.mubr.bf16.gmra.mxu0 %v9664
        %v10225 = vpop.f32.mrf.mxu0
        %v10226 = vadd.f32 %v9805, %v10225
        %v10227 = vpop.f32.mrf.mxu0
        %v10228 = vpop.f32.mrf.mxu0
        %v10229 = vadd.f32 %v9805, %v10228
        %v10230 = vpop.f32.mrf.mxu0
        %10231 = vdwg.mxu0
        %10232 = vmatprep.subr.bf16.mxu0 0
        %10233 = vmatpush1.bf16.msra.mxu0 %v10086
        %10234 = vmatprep.subr.bf16.mxu0 0
        %10235 = vmatpush1.bf16.msra.mxu0 %v10085
        %10236 = vmatprep.subr.bf16.mxu0 0
        %10237 = vmatpush1.bf16.msra.mxu0 %v10084
        %10238 = vmatprep.subr.bf16.mxu0 0
        %10239 = vmatpush1.bf16.msra.mxu0 %v10083
        %10240 = vmatprep.subr.bf16.mxu0 0
        %10241 = vmatpush1.bf16.msra.mxu0 %v10082
        %10242 = vmatprep.subr.bf16.mxu0 0
        %10243 = vmatpush1.bf16.msra.mxu0 %v10081
        %10244 = vmatprep.subr.bf16.mxu0 0
        %10245 = vmatpush1.bf16.msra.mxu0 %v10080
        %10246 = vmatprep.subr.bf16.mxu0 0
        %10247 = vmatpush1.bf16.msra.mxu0 %v10079
        %10248 = vmatprep.subr.bf16.mxu0 0
        %10249 = vmatpush2.bf16.msra.mxu0 %v10094
        %10250 = vmatprep.subr.bf16.mxu0 0
        %10251 = vmatpush2.bf16.msra.mxu0 %v10093
        %10252 = vmatprep.subr.bf16.mxu0 0
        %10253 = vmatpush2.bf16.msra.mxu0 %v10092
        %10254 = vmatprep.subr.bf16.mxu0 0
        %10255 = vmatpush2.bf16.msra.mxu0 %v10091
        %10256 = vmatprep.subr.bf16.mxu0 0
        %10257 = vmatpush2.bf16.msra.mxu0 %v10090
        %10258 = vmatprep.subr.bf16.mxu0 0
        %10259 = vmatpush2.bf16.msra.mxu0 %v10089
        %10260 = vmatprep.subr.bf16.mxu0 0
        %10261 = vmatpush2.bf16.msra.mxu0 %v10088
        %10262 = vmatprep.subr.bf16.mxu0 0
        %10263 = vmatpush2.bf16.msra.mxu0 %v10087
        %10264 = vmatprep.mubr.bf16.mxu0 %v9667
        %10265 = vmatmul.mubr.bf16.gmra.mxu0 %v9666
        %v10266 = vpop.f32.mrf.mxu0
        %v10267 = vadd.f32 %v10226, %v10266
        %v10268 = vpop.f32.mrf.mxu0
        %v10269 = vpop.f32.mrf.mxu0
        %v10270 = vadd.f32 %v10229, %v10269
        %v10271 = vpop.f32.mrf.mxu0
        %10272 = vdwg.mxu0
        %10273 = vmatprep.subr.bf16.mxu0 0
        %10274 = vmatpush1.bf16.msra.mxu0 %v10102
        %10275 = vmatprep.subr.bf16.mxu0 0
        %10276 = vmatpush1.bf16.msra.mxu0 %v10101
        %10277 = vmatprep.subr.bf16.mxu0 0
        %10278 = vmatpush1.bf16.msra.mxu0 %v10100
        %10279 = vmatprep.subr.bf16.mxu0 0
        %10280 = vmatpush1.bf16.msra.mxu0 %v10099
        %10281 = vmatprep.subr.bf16.mxu0 0
        %10282 = vmatpush1.bf16.msra.mxu0 %v10098
        %10283 = vmatprep.subr.bf16.mxu0 0
        %10284 = vmatpush1.bf16.msra.mxu0 %v10097
        %10285 = vmatprep.subr.bf16.mxu0 0
        %10286 = vmatpush1.bf16.msra.mxu0 %v10096
        %10287 = vmatprep.subr.bf16.mxu0 0
        %10288 = vmatpush1.bf16.msra.mxu0 %v10095
        %10289 = vmatprep.subr.bf16.mxu0 0
        %10290 = vmatpush2.bf16.msra.mxu0 %v10110
        %10291 = vmatprep.subr.bf16.mxu0 0
        %10292 = vmatpush2.bf16.msra.mxu0 %v10109
        %10293 = vmatprep.subr.bf16.mxu0 0
        %10294 = vmatpush2.bf16.msra.mxu0 %v10108
        %10295 = vmatprep.subr.bf16.mxu0 0
        %10296 = vmatpush2.bf16.msra.mxu0 %v10107
        %10297 = vmatprep.subr.bf16.mxu0 0
        %10298 = vmatpush2.bf16.msra.mxu0 %v10106
        %10299 = vmatprep.subr.bf16.mxu0 0
        %10300 = vmatpush2.bf16.msra.mxu0 %v10105
        %10301 = vmatprep.subr.bf16.mxu0 0
        %10302 = vmatpush2.bf16.msra.mxu0 %v10104
        %10303 = vmatprep.subr.bf16.mxu0 0
        %10304 = vmatpush2.bf16.msra.mxu0 %v10103
        %10305 = vmatprep.mubr.bf16.mxu0 %v9669
        %10306 = vmatmul.mubr.bf16.gmra.mxu0 %v9668
        %v10307 = vpop.f32.mrf.mxu0
        %v10308 = vadd.f32 %v10267, %v10307
        %v10309 = vpop.f32.mrf.mxu0
        %v10310 = vpop.f32.mrf.mxu0
        %v10311 = vadd.f32 %v10270, %v10310
        %v10312 = vpop.f32.mrf.mxu0
        %10313 = vdwg.mxu0
        %10314 = vmatprep.subr.bf16.mxu0 0
        %10315 = vmatpush1.bf16.msra.mxu0 %v10118
        %10316 = vmatprep.subr.bf16.mxu0 0
        %10317 = vmatpush1.bf16.msra.mxu0 %v10117
        %10318 = vmatprep.subr.bf16.mxu0 0
        %10319 = vmatpush1.bf16.msra.mxu0 %v10116
        %10320 = vmatprep.subr.bf16.mxu0 0
        %10321 = vmatpush1.bf16.msra.mxu0 %v10115
        %10322 = vmatprep.subr.bf16.mxu0 0
        %10323 = vmatpush1.bf16.msra.mxu0 %v10114
        %10324 = vmatprep.subr.bf16.mxu0 0
        %10325 = vmatpush1.bf16.msra.mxu0 %v10113
        %10326 = vmatprep.subr.bf16.mxu0 0
        %10327 = vmatpush1.bf16.msra.mxu0 %v10112
        %10328 = vmatprep.subr.bf16.mxu0 0
        %10329 = vmatpush1.bf16.msra.mxu0 %v10111
        %10330 = vmatprep.subr.bf16.mxu0 0
        %10331 = vmatpush2.bf16.msra.mxu0 %v10126
        %10332 = vmatprep.subr.bf16.mxu0 0
        %10333 = vmatpush2.bf16.msra.mxu0 %v10125
        %10334 = vmatprep.subr.bf16.mxu0 0
        %10335 = vmatpush2.bf16.msra.mxu0 %v10124
        %10336 = vmatprep.subr.bf16.mxu0 0
        %10337 = vmatpush2.bf16.msra.mxu0 %v10123
        %10338 = vmatprep.subr.bf16.mxu0 0
        %10339 = vmatpush2.bf16.msra.mxu0 %v10122
        %10340 = vmatprep.subr.bf16.mxu0 0
        %10341 = vmatpush2.bf16.msra.mxu0 %v10121
        %10342 = vmatprep.subr.bf16.mxu0 0
        %10343 = vmatpush2.bf16.msra.mxu0 %v10120
        %10344 = vmatprep.subr.bf16.mxu0 0
        %10345 = vmatpush2.bf16.msra.mxu0 %v10119
        %10346 = vmatprep.mubr.bf16.mxu0 %v9671
        %10347 = vmatmul.mubr.bf16.gmra.mxu0 %v9670
        %v10348 = vpop.f32.mrf.mxu0
        %v10349 = vadd.f32 %v10308, %v10348
        %v10350 = vpop.f32.mrf.mxu0
        %v10351 = vpop.f32.mrf.mxu0
        %v10352 = vadd.f32 %v10311, %v10351
        %v10353 = vpop.f32.mrf.mxu0
        %10354 = vdwg.mxu0
        %vm10355 = vcmask 392192
        %10356 = vst.msk [vmem:[%s331] sm:$0xff] %vm10355, %v10349
        %10357 = vst.msk [vmem:[%s331 + $0x8] sm:$0xff] %vm10355, %v10352
        %p10358 = scmp.lt.s32.totalorder %s21, 1
        %s10359 = scalar_select %p10358, %s21, 1
        %s10360 = smul.addr %s10359, 2
        %s10361 = smul.addr %s10360, 8
        %s10362 = scalar_lea.vmem %s7, %s10361
        // Predicated region
        $region65: #{single_panoptic_deeplab_head.1} parent=47 // pred_check
          %p10363 = pneg %p191
        $region66: #{single_panoptic_deeplab_head.1} parent=47 // pred_check_branch
          %10365 = sbr.rel (%p10363) target = $region68
        $region67: #{single_panoptic_deeplab_head.1} parent=47 // pred_region
          _
        $region68: #{single_panoptic_deeplab_head.1} parent=47 // pred_fallthru
          _
      $region48: #{single_panoptic_deeplab_head.1} parent=5 // pred_fallthru
        _
      %p10366 = scmp.le.s32.totalorder 2, %s16
      // Predicated region
      $region69: #{single_panoptic_deeplab_head.1} parent=5 // pred_check
        %p10367 = pneg %p10366
      $region70: #{single_panoptic_deeplab_head.1} parent=5 // pred_check_branch
        %10369 = sbr.rel (%p10367) target = $region72
      $region71: #{single_panoptic_deeplab_head.1} parent=5 // pred_region
        %s10370 = ssub.s32 %s16, 2
        // Predicated region
        $region73: #{single_panoptic_deeplab_head.1} parent=71 // pred_check
          %p10371 = pneg %p197
        $region74: #{single_panoptic_deeplab_head.1} parent=71 // pred_check_branch
          %10373 = sbr.rel (%p10371) target = $region76
        $region75: #{single_panoptic_deeplab_head.1} parent=71 // pred_region
          %p10374 = scmp.lt.s32.totalorder %s22, 1
          %s10375 = scalar_select %p10374, %s22, 1
          %s10376 = smul.addr %s10375, 2
          %s10377 = smul.addr %s10376, 8
          %s10378 = scalar_lea.vmem %s7, %s10377
        $region76: #{single_panoptic_deeplab_head.1} parent=71 // pred_fallthru
          _
      $region72: #{single_panoptic_deeplab_head.1} parent=5 // pred_fallthru
        _
    $region6: #{single_panoptic_deeplab_head.1} parent=1 // loop_footer
      %s20 = sadd.s32 1, %s16
    $region7: #{single_panoptic_deeplab_head.1} parent=1 // loop_footer_branch
      %15 = sbr.rel target = $region3
    $region8: #{single_panoptic_deeplab_head.1} parent=1 // loop_exit
      _
    %10379 = vsyncpa [#allocation4], 1
    %s10380 = scalar_lea.sflag [#allocation4], 1
    %10381 = vsyncpa %s10380, 1
    %10382 = vsyncpa [#allocation6], 1
    %10383 = vsyncpa [#allocation9], 1

</llo_original>
